<compile_context>
chip_gen: v7x
topology: tpu7x:2x2x1
jax: 0.10.0
libtpu: 0.0.40
codegen_flags: <defaults>
</compile_context>

<pallas_src>
import functools

import jax
import jax.numpy as jnp
from jax.experimental import pallas as pl
from jax.experimental.pallas import tpu as pltpu

_VMEM_LIMIT = 32 * 1024 * 1024  # safe on v5e/v6e (128 MiB) and v7x (64 MiB)


def _round_up(x, m):
    return ((x + m - 1) // m) * m


# ----------------------------------------------------------------------------
# Pallas kernels
# ----------------------------------------------------------------------------
def _matmul_shift_relu_kernel(p_ref, w_ref, b_ref, o_ref):
    # p: [TM, K] bf16 patches, w: [K, Npad] bf16 (BN scale pre-folded),
    # b: [1, Npad] f32 folded BN shift.  f32 accumulate, ReLU, store bf16.
    acc = jnp.dot(p_ref[...], w_ref[...], preferred_element_type=jnp.float32)
    o_ref[...] = jnp.maximum(acc + b_ref[...], 0.0).astype(o_ref.dtype)


def _maxpool_kernel(p_ref, o_ref):
    # p: [9, TM, C] pooling windows; reduce over leading axis (VPU max chain).
    o_ref[...] = jnp.max(p_ref[...], axis=0)


def _avgpool_kernel(p_ref, r_ref, o_ref):
    # p: [9, TM, C] windows (zero padded), r: [TM, 1] reciprocal valid counts.
    s = jnp.sum(p_ref[...].astype(jnp.float32), axis=0)
    o_ref[...] = (s * r_ref[...]).astype(o_ref.dtype)


# ----------------------------------------------------------------------------
# Patch extraction (plain-JAX glue; bf16 activations keep the traffic low)
# ----------------------------------------------------------------------------
def _extract_patches(x, kh, kw, stride, padding):
    """Return (list of kh*kw shifted strided views [B,OH,OW,C], OH, OW)."""
    if padding > 0:
        x = jnp.pad(x, ((0, 0), (padding, padding), (padding, padding), (0, 0)))
    B, H, W, C = x.shape
    OH = (H - kh) // stride + 1
    OW = (W - kw) // stride + 1
    pats = []
    for i in range(kh):
        for j in range(kw):
            pats.append(
                x[:, i: i + stride * (OH - 1) + 1: stride,
                     j: j + stride * (OW - 1) + 1: stride, :])
    return pats, OH, OW


# ----------------------------------------------------------------------------
# Fused Conv2d(bias=False) + BatchNorm2d(eval) + ReLU
# ----------------------------------------------------------------------------
def conv_bn_relu(x, p, *, stride, padding, eps=1e-3, tm_max=256):
    w = p["w"]                               # [kh, kw, cin, cout] f32
    kh, kw, cin, cout = w.shape
    B = x.shape[0]

    if kh == 1 and kw == 1 and stride == 1 and padding == 0:
        OH, OW = x.shape[1], x.shape[2]
        P = x.reshape(B * OH * OW, cin)      # no im2col needed for 1x1
    else:
        pats, OH, OW = _extract_patches(x, kh, kw, stride, padding)
        P = jnp.stack(pats, axis=3).reshape(B * OH * OW, kh * kw * cin)
    M, K = P.shape

    # Fold BN (inference mode) into the weights; pass only the shift.
    scale = p["gamma"] / jnp.sqrt(p["var"] + eps)
    shift = (p["beta"] - p["mean"] * scale).astype(jnp.float32)
    w2 = (w * scale[None, None, None, :]).reshape(K, cout)

    n_pad = _round_up(cout, 128)             # lane-dense, unmasked stores
    tm = min(tm_max, _round_up(M, 16))
    m_pad = _round_up(M, tm)

    P = jnp.pad(P, ((0, m_pad - M), (0, 0))).astype(jnp.bfloat16)
    Wm = jnp.pad(w2, ((0, 0), (0, n_pad - cout))).astype(jnp.bfloat16)
    b = jnp.pad(shift, (0, n_pad - cout)).reshape(1, n_pad)

    cost = pl.CostEstimate(
        flops=2 * m_pad * K * n_pad,
        transcendentals=0,
        bytes_accessed=P.size * 2 + Wm.size * 2 + b.size * 4 + m_pad * n_pad * 2,
    )

    out = pl.pallas_call(
        _matmul_shift_relu_kernel,
        out_shape=jax.ShapeDtypeStruct((m_pad, n_pad), jnp.bfloat16),
        grid=(m_pad // tm,),
        in_specs=[
            pl.BlockSpec((tm, K), lambda i: (i, 0)),
            pl.BlockSpec((K, n_pad), lambda i: (0, 0)),
            pl.BlockSpec((1, n_pad), lambda i: (0, 0)),
        ],
        out_specs=pl.BlockSpec((tm, n_pad), lambda i: (i, 0)),
        compiler_params=pltpu.CompilerParams(
            dimension_semantics=("parallel",),
            vmem_limit_bytes=_VMEM_LIMIT),
        cost_estimate=cost,
    )(P, Wm, b)

    return out[:M, :cout].reshape(B, OH, OW, cout)


# ----------------------------------------------------------------------------
# Pooling
# ----------------------------------------------------------------------------
def maxpool_3x3_s2(x, tm_max=256):
    """MaxPool2d(kernel_size=3, stride=2, padding=0)."""
    B, H, W, C = x.shape
    pats, OH, OW = _extract_patches(x, 3, 3, 2, 0)
    M = B * OH * OW
    P = jnp.stack(pats, axis=0).reshape(9, M, C)

    tm = min(tm_max, _round_up(M, 16))
    m_pad = _round_up(M, tm)
    P = jnp.pad(P, ((0, 0), (0, m_pad - M), (0, 0)))

    out = pl.pallas_call(
        _maxpool_kernel,
        out_shape=jax.ShapeDtypeStruct((m_pad, C), x.dtype),
        grid=(m_pad // tm,),
        in_specs=[pl.BlockSpec((9, tm, C), lambda i: (0, i, 0))],
        out_specs=pl.BlockSpec((tm, C), lambda i: (i, 0)),
        compiler_params=pltpu.CompilerParams(
            dimension_semantics=("parallel",),
            vmem_limit_bytes=_VMEM_LIMIT),
    )(P)
    return out[:M].reshape(B, OH, OW, C)


def avgpool_3x3_s1_p1(x, tm_max=256):
    """AvgPool2d(3, stride=1, padding=1, count_include_pad=False)."""
    B, H, W, C = x.shape
    pats, OH, OW = _extract_patches(x, 3, 3, 1, 1)
    M = B * OH * OW
    P = jnp.stack(pats, axis=0).reshape(9, M, C)

    # Per-position count of in-bounds window elements (count_include_pad=False).
    ones = jnp.ones((1, H, W, 1), jnp.float32)
    cpats, _, _ = _extract_patches(ones, 3, 3, 1, 1)
    counts = sum(cpats)                               # [1, OH, OW, 1]
    recip = jnp.broadcast_to(1.0 / counts, (B, OH, OW, 1)).reshape(M, 1)

    tm = min(tm_max, _round_up(M, 16))
    m_pad = _round_up(M, tm)
    P = jnp.pad(P, ((0, 0), (0, m_pad - M), (0, 0)))
    recip = jnp.pad(recip, ((0, m_pad - M), (0, 0)))

    out = pl.pallas_call(
        _avgpool_kernel,
        out_shape=jax.ShapeDtypeStruct((m_pad, C), x.dtype),
        grid=(m_pad // tm,),
        in_specs=[
            pl.BlockSpec((9, tm, C), lambda i: (0, i, 0)),
            pl.BlockSpec((tm, 1), lambda i: (i, 0)),
        ],
        out_specs=pl.BlockSpec((tm, C), lambda i: (i, 0)),
        compiler_params=pltpu.CompilerParams(
            dimension_semantics=("parallel",),
            vmem_limit_bytes=_VMEM_LIMIT),
    )(P, recip)
    return out[:M].reshape(B, OH, OW, C)


# ----------------------------------------------------------------------------
# Parameter construction (deterministic, shapes follow the PyTorch __init__)
# ----------------------------------------------------------------------------
def _make_conv_bn_params(key, kh, kw, cin, cout):
    k_w, k_g, k_b, k_m, k_v = jax.random.split(key, 5)
    return dict(
        w=0.1 * jax.random.normal(k_w, (kh, kw, cin, cout), jnp.float32),
        gamma=1.0 + 0.1 * jax.random.normal(k_g, (cout,), jnp.float32),
        beta=0.1 * jax.random.normal(k_b, (cout,), jnp.float32),
        mean=0.1 * jax.random.normal(k_m, (cout,), jnp.float32),
        var=jnp.abs(1.0 + 0.1 * jax.random.normal(k_v, (cout,), jnp.float32)),
    )


def init_stem_params(key, in_channels):
    keys = jax.random.split(key, 12)
    return {
        # features
        "f0": _make_conv_bn_params(keys[0], 3, 3, in_channels, 32),
        "f1": _make_conv_bn_params(keys[1], 3, 3, 32, 32),
        "f2": _make_conv_bn_params(keys[2], 3, 3, 32, 64),
        "f4": _make_conv_bn_params(keys[3], 1, 1, 64, 80),
        "f5": _make_conv_bn_params(keys[4], 3, 3, 80, 192),
        # branches
        "b0": _make_conv_bn_params(keys[5], 1, 1, 192, 96),
        "b1_0": _make_conv_bn_params(keys[6], 1, 1, 192, 48),
        "b1_1": _make_conv_bn_params(keys[7], 5, 5, 48, 64),
        "b2_0": _make_conv_bn_params(keys[8], 1, 1, 192, 64),
        "b2_1": _make_conv_bn_params(keys[9], 3, 3, 64, 96),
        "b2_2": _make_conv_bn_params(keys[10], 3, 3, 96, 96),
        "b3_1": _make_conv_bn_params(keys[11], 1, 1, 192, 64),
    }


# ----------------------------------------------------------------------------
# Stem forward
# ----------------------------------------------------------------------------
def stem_forward(params, x_nchw):
    """x_nchw: [B, Cin, H, W] (PyTorch layout). Returns NCHW f32 output."""
    x = jnp.transpose(x_nchw, (0, 2, 3, 1)).astype(jnp.bfloat16)   # NHWC, bf16

    # features
    x = conv_bn_relu(x, params["f0"], stride=2, padding=0)   # 3x3  Cin -> 32
    x = conv_bn_relu(x, params["f1"], stride=1, padding=0)   # 3x3  32  -> 32
    x = conv_bn_relu(x, params["f2"], stride=1, padding=1)   # 3x3  32  -> 64
    x = maxpool_3x3_s2(x)
    x = conv_bn_relu(x, params["f4"], stride=1, padding=0)   # 1x1  64  -> 80
    x = conv_bn_relu(x, params["f5"], stride=1, padding=0)   # 3x3  80  -> 192
    x = maxpool_3x3_s2(x)

    # branch_0
    x0 = conv_bn_relu(x, params["b0"], stride=1, padding=0)     # 1x1 192 -> 96
    # branch_1
    x1 = conv_bn_relu(x, params["b1_0"], stride=1, padding=0)   # 1x1 192 -> 48
    x1 = conv_bn_relu(x1, params["b1_1"], stride=1, padding=2)  # 5x5 48  -> 64
    # branch_2
    x2 = conv_bn_relu(x, params["b2_0"], stride=1, padding=0)   # 1x1 192 -> 64
    x2 = conv_bn_relu(x2, params["b2_1"], stride=1, padding=1)  # 3x3 64  -> 96
    x2 = conv_bn_relu(x2, params["b2_2"], stride=1, padding=1)  # 3x3 96  -> 96
    # branch_3
    x3 = avgpool_3x3_s1_p1(x)
    x3 = conv_bn_relu(x3, params["b3_1"], stride=1, padding=0)  # 1x1 192 -> 64

    out = jnp.concatenate([x0, x1, x2, x3], axis=-1)   # channel concat
    return jnp.transpose(out, (0, 3, 1, 2)).astype(jnp.float32)  # -> NCHW


# ----------------------------------------------------------------------------
if __name__ == "__main__":
    # Smallest spatial size that survives the Stem's downsampling is ~27;
    # use 64x64 RGB so every stage has a nontrivial spatial extent.
    B, Cin, H, W = 2, 3, 64, 64

    key = jax.random.PRNGKey(0)
    k_params, k_x = jax.random.split(key)
    params = init_stem_params(k_params, Cin)
    x = jax.random.normal(k_x, (B, Cin, H, W), jnp.float32)

    fwd = jax.jit(functools.partial(stem_forward, params))
    out = fwd(x)
    jax.block_until_ready(out)

    # Expected: spatial 64->31->29->29->14->14->12->5, channels 96+64+96+64=320
    assert out.shape == (B, 320, 5, 5), out.shape
    assert bool(jnp.all(jnp.isfinite(out)))
    print("KERNEL_OK")
</pallas_src>

<mosaic_0001>
module attributes {stable_mosaic.version = 11 : i64} {
  func.func @_matmul_shift_relu_kernel(%arg0: i32, %arg1: memref<256x27xbf16, #tpu.memory_space<vmem>>, %arg2: memref<27x128xbf16, #tpu.memory_space<vmem>>, %arg3: memref<1x128xf32, #tpu.memory_space<vmem>>, %arg4: memref<256x128xbf16, #tpu.memory_space<vmem>>) attributes {dimension_semantics = [#tpu.dimension_semantics<parallel>], iteration_bounds = array<i64: 8>, scalar_prefetch = 0 : i64, scratch_operands = 0 : i64, tpu.core_type = #tpu.core_type<tc>, window_params = [{transform_indices = @transform_0, window_bounds = array<i64: 256, 27>}, {pipeline_mode = #tpu.pipeline_mode<synchronous>, transform_indices = @transform_1, window_bounds = array<i64: 27, 128>}, {pipeline_mode = #tpu.pipeline_mode<synchronous>, transform_indices = @transform_2, window_bounds = array<i64: 1, 128>}, {transform_indices = @transform_3, window_bounds = array<i64: 256, 128>}]} {
    %c0 = arith.constant 0 : index
    %c0_0 = arith.constant 0 : index
    %0 = vector.load %arg1[%c0, %c0_0] : memref<256x27xbf16, #tpu.memory_space<vmem>>, vector<256x27xbf16>
    %c0_1 = arith.constant 0 : index
    %c0_2 = arith.constant 0 : index
    %1 = vector.load %arg2[%c0_1, %c0_2] : memref<27x128xbf16, #tpu.memory_space<vmem>>, vector<27x128xbf16>
    %cst = arith.constant dense<0.000000e+00> : vector<256x128xf32>
    %2 = tpu.matmul %0, %1, %cst {dimension_numbers = #tpu.dot_dimension_numbers<[1], [0], [0], [1], [0, 0, 1, 1], [], []>} : vector<256x27xbf16>, vector<27x128xbf16>, vector<256x128xf32> -> vector<256x128xf32>
    %c0_3 = arith.constant 0 : index
    %c0_4 = arith.constant 0 : index
    %3 = vector.load %arg3[%c0_3, %c0_4] : memref<1x128xf32, #tpu.memory_space<vmem>>, vector<1x128xf32>
    %4 = vector.broadcast %3 : vector<1x128xf32> to vector<256x128xf32>
    %5 = arith.addf %2, %4 : vector<256x128xf32>
    %cst_5 = arith.constant 0.000000e+00 : f32
    %6 = vector.broadcast %cst_5 : f32 to vector<256x128xf32>
    %7 = arith.maximumf %5, %6 : vector<256x128xf32>
    %8 = arith.truncf %7 : vector<256x128xf32> to vector<256x128xbf16>
    %c0_6 = arith.constant 0 : index
    %c0_7 = arith.constant 0 : index
    %9 = vector.load %arg4[%c0_6, %c0_7] : memref<256x128xbf16, #tpu.memory_space<vmem>>, vector<256x128xbf16>
    tpu.vector_store %arg4[%c0_6, %c0_7], %8 {strides = array<i32>} : memref<256x128xbf16, #tpu.memory_space<vmem>>, vector<256x128xbf16>,
    return
  }
  func.func @transform_0(%arg0: i32) -> (i32, i32) {
    %c0_i32 = arith.constant 0 : i32
    %c0_i32_0 = arith.constant 0 : i32
    return %arg0, %c0_i32 : i32, i32
  }
  func.func @transform_1(%arg0: i32) -> (i32, i32) {
    %c0_i32 = arith.constant 0 : i32
    %c0_i32_0 = arith.constant 0 : i32
    %c0_i32_1 = arith.constant 0 : i32
    return %c0_i32, %c0_i32_0 : i32, i32
  }
  func.func @transform_2(%arg0: i32) -> (i32, i32) {
    %c0_i32 = arith.constant 0 : i32
    %c0_i32_0 = arith.constant 0 : i32
    %c0_i32_1 = arith.constant 0 : i32
    return %c0_i32, %c0_i32_0 : i32, i32
  }
  func.func @transform_3(%arg0: i32) -> (i32, i32) {
    %c0_i32 = arith.constant 0 : i32
    %c0_i32_0 = arith.constant 0 : i32
    return %arg0, %c0_i32 : i32, i32
  }
}

module attributes {stable_mosaic.version = 11 : i64} {
  func.func @_matmul_shift_relu_kernel(%arg0: i32, %arg1: memref<256x288xbf16, #tpu.memory_space<vmem>>, %arg2: memref<288x128xbf16, #tpu.memory_space<vmem>>, %arg3: memref<1x128xf32, #tpu.memory_space<vmem>>, %arg4: memref<256x128xbf16, #tpu.memory_space<vmem>>) attributes {dimension_semantics = [#tpu.dimension_semantics<parallel>], iteration_bounds = array<i64: 7>, scalar_prefetch = 0 : i64, scratch_operands = 0 : i64, tpu.core_type = #tpu.core_type<tc>, window_params = [{transform_indices = @transform_0, window_bounds = array<i64: 256, 288>}, {pipeline_mode = #tpu.pipeline_mode<synchronous>, transform_indices = @transform_1, window_bounds = array<i64: 288, 128>}, {pipeline_mode = #tpu.pipeline_mode<synchronous>, transform_indices = @transform_2, window_bounds = array<i64: 1, 128>}, {transform_indices = @transform_3, window_bounds = array<i64: 256, 128>}]} {
    %c0 = arith.constant 0 : index
    %c0_0 = arith.constant 0 : index
    %0 = vector.load %arg1[%c0, %c0_0] : memref<256x288xbf16, #tpu.memory_space<vmem>>, vector<256x288xbf16>
    %c0_1 = arith.constant 0 : index
    %c0_2 = arith.constant 0 : index
    %1 = vector.load %arg2[%c0_1, %c0_2] : memref<288x128xbf16, #tpu.memory_space<vmem>>, vector<288x128xbf16>
    %cst = arith.constant dense<0.000000e+00> : vector<256x128xf32>
    %2 = tpu.matmul %0, %1, %cst {dimension_numbers = #tpu.dot_dimension_numbers<[1], [0], [0], [1], [0, 0, 1, 1], [], []>} : vector<256x288xbf16>, vector<288x128xbf16>, vector<256x128xf32> -> vector<256x128xf32>
    %c0_3 = arith.constant 0 : index
    %c0_4 = arith.constant 0 : index
    %3 = vector.load %arg3[%c0_3, %c0_4] : memref<1x128xf32, #tpu.memory_space<vmem>>, vector<1x128xf32>
    %4 = vector.broadcast %3 : vector<1x128xf32> to vector<256x128xf32>
    %5 = arith.addf %2, %4 : vector<256x128xf32>
    %cst_5 = arith.constant 0.000000e+00 : f32
    %6 = vector.broadcast %cst_5 : f32 to vector<256x128xf32>
    %7 = arith.maximumf %5, %6 : vector<256x128xf32>
    %8 = arith.truncf %7 : vector<256x128xf32> to vector<256x128xbf16>
    %c0_6 = arith.constant 0 : index
    %c0_7 = arith.constant 0 : index
    %9 = vector.load %arg4[%c0_6, %c0_7] : memref<256x128xbf16, #tpu.memory_space<vmem>>, vector<256x128xbf16>
    tpu.vector_store %arg4[%c0_6, %c0_7], %8 {strides = array<i32>} : memref<256x128xbf16, #tpu.memory_space<vmem>>, vector<256x128xbf16>,
    return
  }
  func.func @transform_0(%arg0: i32) -> (i32, i32) {
    %c0_i32 = arith.constant 0 : i32
    %c0_i32_0 = arith.constant 0 : i32
    return %arg0, %c0_i32 : i32, i32
  }
  func.func @transform_1(%arg0: i32) -> (i32, i32) {
    %c0_i32 = arith.constant 0 : i32
    %c0_i32_0 = arith.constant 0 : i32
    %c0_i32_1 = arith.constant 0 : i32
    return %c0_i32, %c0_i32_0 : i32, i32
  }
  func.func @transform_2(%arg0: i32) -> (i32, i32) {
    %c0_i32 = arith.constant 0 : i32
    %c0_i32_0 = arith.constant 0 : i32
    %c0_i32_1 = arith.constant 0 : i32
    return %c0_i32, %c0_i32_0 : i32, i32
  }
  func.func @transform_3(%arg0: i32) -> (i32, i32) {
    %c0_i32 = arith.constant 0 : i32
    %c0_i32_0 = arith.constant 0 : i32
    return %arg0, %c0_i32 : i32, i32
  }
}

module attributes {stable_mosaic.version = 11 : i64} {
  func.func @_maxpool_kernel(%arg0: i32, %arg1: memref<9x256x64xbf16, #tpu.memory_space<vmem>>, %arg2: memref<256x64xbf16, #tpu.memory_space<vmem>>) attributes {dimension_semantics = [#tpu.dimension_semantics<parallel>], iteration_bounds = array<i64: 2>, scalar_prefetch = 0 : i64, scratch_operands = 0 : i64, tpu.core_type = #tpu.core_type<tc>, window_params = [{transform_indices = @transform_0, window_bounds = array<i64: 9, 256, 64>}, {transform_indices = @transform_1, window_bounds = array<i64: 256, 64>}]} {
    %c0 = arith.constant 0 : index
    %c0_0 = arith.constant 0 : index
    %c0_1 = arith.constant 0 : index
    %0 = vector.load %arg1[%c0, %c0_0, %c0_1] : memref<9x256x64xbf16, #tpu.memory_space<vmem>>, vector<9x256x64xbf16>
    %cst = arith.constant dense<0xFF80> : vector<256x64xbf16>
    %1 = vector.multi_reduction <maximumf>, %0, %cst [0] : vector<9x256x64xbf16> to vector<256x64xbf16>
    %c0_2 = arith.constant 0 : index
    %c0_3 = arith.constant 0 : index
    %2 = vector.load %arg2[%c0_2, %c0_3] : memref<256x64xbf16, #tpu.memory_space<vmem>>, vector<256x64xbf16>
    tpu.vector_store %arg2[%c0_2, %c0_3], %1 {strides = array<i32>} : memref<256x64xbf16, #tpu.memory_space<vmem>>, vector<256x64xbf16>,
    return
  }
  func.func @transform_0(%arg0: i32) -> (i32, i32, i32) {
    %c0_i32 = arith.constant 0 : i32
    %c0_i32_0 = arith.constant 0 : i32
    %c0_i32_1 = arith.constant 0 : i32
    return %c0_i32, %arg0, %c0_i32_0 : i32, i32, i32
  }
  func.func @transform_1(%arg0: i32) -> (i32, i32) {
    %c0_i32 = arith.constant 0 : i32
    %c0_i32_0 = arith.constant 0 : i32
    return %arg0, %c0_i32 : i32, i32
  }
}

module attributes {stable_mosaic.version = 11 : i64} {
  func.func @_matmul_shift_relu_kernel(%arg0: i32, %arg1: memref<256x64xbf16, #tpu.memory_space<vmem>>, %arg2: memref<64x128xbf16, #tpu.memory_space<vmem>>, %arg3: memref<1x128xf32, #tpu.memory_space<vmem>>, %arg4: memref<256x128xbf16, #tpu.memory_space<vmem>>) attributes {dimension_semantics = [#tpu.dimension_semantics<parallel>], iteration_bounds = array<i64: 2>, scalar_prefetch = 0 : i64, scratch_operands = 0 : i64, tpu.core_type = #tpu.core_type<tc>, window_params = [{transform_indices = @transform_0, window_bounds = array<i64: 256, 64>}, {pipeline_mode = #tpu.pipeline_mode<synchronous>, transform_indices = @transform_1, window_bounds = array<i64: 64, 128>}, {pipeline_mode = #tpu.pipeline_mode<synchronous>, transform_indices = @transform_2, window_bounds = array<i64: 1, 128>}, {transform_indices = @transform_3, window_bounds = array<i64: 256, 128>}]} {
    %c0 = arith.constant 0 : index
    %c0_0 = arith.constant 0 : index
    %0 = vector.load %arg1[%c0, %c0_0] : memref<256x64xbf16, #tpu.memory_space<vmem>>, vector<256x64xbf16>
    %c0_1 = arith.constant 0 : index
    %c0_2 = arith.constant 0 : index
    %1 = vector.load %arg2[%c0_1, %c0_2] : memref<64x128xbf16, #tpu.memory_space<vmem>>, vector<64x128xbf16>
    %cst = arith.constant dense<0.000000e+00> : vector<256x128xf32>
    %2 = tpu.matmul %0, %1, %cst {dimension_numbers = #tpu.dot_dimension_numbers<[1], [0], [0], [1], [0, 0, 1, 1], [], []>} : vector<256x64xbf16>, vector<64x128xbf16>, vector<256x128xf32> -> vector<256x128xf32>
    %c0_3 = arith.constant 0 : index
    %c0_4 = arith.constant 0 : index
    %3 = vector.load %arg3[%c0_3, %c0_4] : memref<1x128xf32, #tpu.memory_space<vmem>>, vector<1x128xf32>
    %4 = vector.broadcast %3 : vector<1x128xf32> to vector<256x128xf32>
    %5 = arith.addf %2, %4 : vector<256x128xf32>
    %cst_5 = arith.constant 0.000000e+00 : f32
    %6 = vector.broadcast %cst_5 : f32 to vector<256x128xf32>
    %7 = arith.maximumf %5, %6 : vector<256x128xf32>
    %8 = arith.truncf %7 : vector<256x128xf32> to vector<256x128xbf16>
    %c0_6 = arith.constant 0 : index
    %c0_7 = arith.constant 0 : index
    %9 = vector.load %arg4[%c0_6, %c0_7] : memref<256x128xbf16, #tpu.memory_space<vmem>>, vector<256x128xbf16>
    tpu.vector_store %arg4[%c0_6, %c0_7], %8 {strides = array<i32>} : memref<256x128xbf16, #tpu.memory_space<vmem>>, vector<256x128xbf16>,
    return
  }
  func.func @transform_0(%arg0: i32) -> (i32, i32) {
    %c0_i32 = arith.constant 0 : i32
    %c0_i32_0 = arith.constant 0 : i32
    return %arg0, %c0_i32 : i32, i32
  }
  func.func @transform_1(%arg0: i32) -> (i32, i32) {
    %c0_i32 = arith.constant 0 : i32
    %c0_i32_0 = arith.constant 0 : i32
    %c0_i32_1 = arith.constant 0 : i32
    return %c0_i32, %c0_i32_0 : i32, i32
  }
  func.func @transform_2(%arg0: i32) -> (i32, i32) {
    %c0_i32 = arith.constant 0 : i32
    %c0_i32_0 = arith.constant 0 : i32
    %c0_i32_1 = arith.constant 0 : i32
    return %c0_i32, %c0_i32_0 : i32, i32
  }
  func.func @transform_3(%arg0: i32) -> (i32, i32) {
    %c0_i32 = arith.constant 0 : i32
    %c0_i32_0 = arith.constant 0 : i32
    return %arg0, %c0_i32 : i32, i32
  }
}

module attributes {stable_mosaic.version = 11 : i64} {
  func.func @_matmul_shift_relu_kernel(%arg0: i32, %arg1: memref<256x720xbf16, #tpu.memory_space<vmem>>, %arg2: memref<720x256xbf16, #tpu.memory_space<vmem>>, %arg3: memref<1x256xf32, #tpu.memory_space<vmem>>, %arg4: memref<256x256xbf16, #tpu.memory_space<vmem>>) attributes {dimension_semantics = [#tpu.dimension_semantics<parallel>], iteration_bounds = array<i64: 2>, scalar_prefetch = 0 : i64, scratch_operands = 0 : i64, tpu.core_type = #tpu.core_type<tc>, window_params = [{transform_indices = @transform_0, window_bounds = array<i64: 256, 720>}, {pipeline_mode = #tpu.pipeline_mode<synchronous>, transform_indices = @transform_1, window_bounds = array<i64: 720, 256>}, {pipeline_mode = #tpu.pipeline_mode<synchronous>, transform_indices = @transform_2, window_bounds = array<i64: 1, 256>}, {transform_indices = @transform_3, window_bounds = array<i64: 256, 256>}]} {
    %c0 = arith.constant 0 : index
    %c0_0 = arith.constant 0 : index
    %0 = vector.load %arg1[%c0, %c0_0] : memref<256x720xbf16, #tpu.memory_space<vmem>>, vector<256x720xbf16>
    %c0_1 = arith.constant 0 : index
    %c0_2 = arith.constant 0 : index
    %1 = vector.load %arg2[%c0_1, %c0_2] : memref<720x256xbf16, #tpu.memory_space<vmem>>, vector<720x256xbf16>
    %cst = arith.constant dense<0.000000e+00> : vector<256x256xf32>
    %2 = tpu.matmul %0, %1, %cst {dimension_numbers = #tpu.dot_dimension_numbers<[1], [0], [0], [1], [0, 0, 1, 1], [], []>} : vector<256x720xbf16>, vector<720x256xbf16>, vector<256x256xf32> -> vector<256x256xf32>
    %c0_3 = arith.constant 0 : index
    %c0_4 = arith.constant 0 : index
    %3 = vector.load %arg3[%c0_3, %c0_4] : memref<1x256xf32, #tpu.memory_space<vmem>>, vector<1x256xf32>
    %4 = vector.broadcast %3 : vector<1x256xf32> to vector<256x256xf32>
    %5 = arith.addf %2, %4 : vector<256x256xf32>
    %cst_5 = arith.constant 0.000000e+00 : f32
    %6 = vector.broadcast %cst_5 : f32 to vector<256x256xf32>
    %7 = arith.maximumf %5, %6 : vector<256x256xf32>
    %8 = arith.truncf %7 : vector<256x256xf32> to vector<256x256xbf16>
    %c0_6 = arith.constant 0 : index
    %c0_7 = arith.constant 0 : index
    %9 = vector.load %arg4[%c0_6, %c0_7] : memref<256x256xbf16, #tpu.memory_space<vmem>>, vector<256x256xbf16>
    tpu.vector_store %arg4[%c0_6, %c0_7], %8 {strides = array<i32>} : memref<256x256xbf16, #tpu.memory_space<vmem>>, vector<256x256xbf16>,
    return
  }
  func.func @transform_0(%arg0: i32) -> (i32, i32) {
    %c0_i32 = arith.constant 0 : i32
    %c0_i32_0 = arith.constant 0 : i32
    return %arg0, %c0_i32 : i32, i32
  }
  func.func @transform_1(%arg0: i32) -> (i32, i32) {
    %c0_i32 = arith.constant 0 : i32
    %c0_i32_0 = arith.constant 0 : i32
    %c0_i32_1 = arith.constant 0 : i32
    return %c0_i32, %c0_i32_0 : i32, i32
  }
  func.func @transform_2(%arg0: i32) -> (i32, i32) {
    %c0_i32 = arith.constant 0 : i32
    %c0_i32_0 = arith.constant 0 : i32
    %c0_i32_1 = arith.constant 0 : i32
    return %c0_i32, %c0_i32_0 : i32, i32
  }
  func.func @transform_3(%arg0: i32) -> (i32, i32) {
    %c0_i32 = arith.constant 0 : i32
    %c0_i32_0 = arith.constant 0 : i32
    return %arg0, %c0_i32 : i32, i32
  }
}

module attributes {stable_mosaic.version = 11 : i64} {
  func.func @_maxpool_kernel(%arg0: i32, %arg1: memref<9x64x192xbf16, #tpu.memory_space<vmem>>, %arg2: memref<64x192xbf16, #tpu.memory_space<vmem>>) attributes {dimension_semantics = [#tpu.dimension_semantics<parallel>], iteration_bounds = array<i64: 1>, scalar_prefetch = 0 : i64, scratch_operands = 0 : i64, tpu.core_type = #tpu.core_type<tc>, window_params = [{transform_indices = @transform_0, window_bounds = array<i64: 9, 64, 192>}, {transform_indices = @transform_1, window_bounds = array<i64: 64, 192>}]} {
    %c0 = arith.constant 0 : index
    %c0_0 = arith.constant 0 : index
    %c0_1 = arith.constant 0 : index
    %0 = vector.load %arg1[%c0, %c0_0, %c0_1] : memref<9x64x192xbf16, #tpu.memory_space<vmem>>, vector<9x64x192xbf16>
    %cst = arith.constant dense<0xFF80> : vector<64x192xbf16>
    %1 = vector.multi_reduction <maximumf>, %0, %cst [0] : vector<9x64x192xbf16> to vector<64x192xbf16>
    %c0_2 = arith.constant 0 : index
    %c0_3 = arith.constant 0 : index
    %2 = vector.load %arg2[%c0_2, %c0_3] : memref<64x192xbf16, #tpu.memory_space<vmem>>, vector<64x192xbf16>
    tpu.vector_store %arg2[%c0_2, %c0_3], %1 {strides = array<i32>} : memref<64x192xbf16, #tpu.memory_space<vmem>>, vector<64x192xbf16>,
    return
  }
  func.func @transform_0(%arg0: i32) -> (i32, i32, i32) {
    %c0_i32 = arith.constant 0 : i32
    %c0_i32_0 = arith.constant 0 : i32
    %c0_i32_1 = arith.constant 0 : i32
    return %c0_i32, %arg0, %c0_i32_0 : i32, i32, i32
  }
  func.func @transform_1(%arg0: i32) -> (i32, i32) {
    %c0_i32 = arith.constant 0 : i32
    %c0_i32_0 = arith.constant 0 : i32
    return %arg0, %c0_i32 : i32, i32
  }
}

module attributes {stable_mosaic.version = 11 : i64} {
  func.func @_avgpool_kernel(%arg0: i32, %arg1: memref<9x64x192xbf16, #tpu.memory_space<vmem>>, %arg2: memref<64x1xf32, #tpu.memory_space<vmem>>, %arg3: memref<64x192xbf16, #tpu.memory_space<vmem>>) attributes {dimension_semantics = [#tpu.dimension_semantics<parallel>], iteration_bounds = array<i64: 1>, scalar_prefetch = 0 : i64, scratch_operands = 0 : i64, tpu.core_type = #tpu.core_type<tc>, window_params = [{transform_indices = @transform_0, window_bounds = array<i64: 9, 64, 192>}, {transform_indices = @transform_1, window_bounds = array<i64: 64, 1>}, {transform_indices = @transform_2, window_bounds = array<i64: 64, 192>}]} {
    %c0 = arith.constant 0 : index
    %c0_0 = arith.constant 0 : index
    %c0_1 = arith.constant 0 : index
    %0 = vector.load %arg1[%c0, %c0_0, %c0_1] : memref<9x64x192xbf16, #tpu.memory_space<vmem>>, vector<9x64x192xbf16>
    %1 = arith.extf %0 : vector<9x64x192xbf16> to vector<9x64x192xf32>
    %cst = arith.constant dense<0.000000e+00> : vector<64x192xf32>
    %2 = vector.multi_reduction <add>, %1, %cst [0] : vector<9x64x192xf32> to vector<64x192xf32>
    %c0_2 = arith.constant 0 : index
    %c0_3 = arith.constant 0 : index
    %3 = vector.load %arg2[%c0_2, %c0_3] : memref<64x1xf32, #tpu.memory_space<vmem>>, vector<64x1xf32>
    %4 = vector.broadcast %3 : vector<64x1xf32> to vector<64x192xf32>
    %5 = arith.mulf %2, %4 : vector<64x192xf32>
    %6 = arith.truncf %5 : vector<64x192xf32> to vector<64x192xbf16>
    %c0_4 = arith.constant 0 : index
    %c0_5 = arith.constant 0 : index
    %7 = vector.load %arg3[%c0_4, %c0_5] : memref<64x192xbf16, #tpu.memory_space<vmem>>, vector<64x192xbf16>
    tpu.vector_store %arg3[%c0_4, %c0_5], %6 {strides = array<i32>} : memref<64x192xbf16, #tpu.memory_space<vmem>>, vector<64x192xbf16>,
    return
  }
  func.func @transform_0(%arg0: i32) -> (i32, i32, i32) {
    %c0_i32 = arith.constant 0 : i32
    %c0_i32_0 = arith.constant 0 : i32
    %c0_i32_1 = arith.constant 0 : i32
    return %c0_i32, %arg0, %c0_i32_0 : i32, i32, i32
  }
  func.func @transform_1(%arg0: i32) -> (i32, i32) {
    %c0_i32 = arith.constant 0 : i32
    %c0_i32_0 = arith.constant 0 : i32
    return %arg0, %c0_i32 : i32, i32
  }
  func.func @transform_2(%arg0: i32) -> (i32, i32) {
    %c0_i32 = arith.constant 0 : i32
    %c0_i32_0 = arith.constant 0 : i32
    return %arg0, %c0_i32 : i32, i32
  }
}

module attributes {stable_mosaic.version = 11 : i64} {
  func.func @_matmul_shift_relu_kernel(%arg0: i32, %arg1: memref<64x192xbf16, #tpu.memory_space<vmem>>, %arg2: memref<192x128xbf16, #tpu.memory_space<vmem>>, %arg3: memref<1x128xf32, #tpu.memory_space<vmem>>, %arg4: memref<64x128xbf16, #tpu.memory_space<vmem>>) attributes {dimension_semantics = [#tpu.dimension_semantics<parallel>], iteration_bounds = array<i64: 1>, scalar_prefetch = 0 : i64, scratch_operands = 0 : i64, tpu.core_type = #tpu.core_type<tc>, window_params = [{transform_indices = @transform_0, window_bounds = array<i64: 64, 192>}, {pipeline_mode = #tpu.pipeline_mode<synchronous>, transform_indices = @transform_1, window_bounds = array<i64: 192, 128>}, {pipeline_mode = #tpu.pipeline_mode<synchronous>, transform_indices = @transform_2, window_bounds = array<i64: 1, 128>}, {transform_indices = @transform_3, window_bounds = array<i64: 64, 128>}]} {
    %c0 = arith.constant 0 : index
    %c0_0 = arith.constant 0 : index
    %0 = vector.load %arg1[%c0, %c0_0] : memref<64x192xbf16, #tpu.memory_space<vmem>>, vector<64x192xbf16>
    %c0_1 = arith.constant 0 : index
    %c0_2 = arith.constant 0 : index
    %1 = vector.load %arg2[%c0_1, %c0_2] : memref<192x128xbf16, #tpu.memory_space<vmem>>, vector<192x128xbf16>
    %cst = arith.constant dense<0.000000e+00> : vector<64x128xf32>
    %2 = tpu.matmul %0, %1, %cst {dimension_numbers = #tpu.dot_dimension_numbers<[1], [0], [0], [1], [0, 0, 1, 1], [], []>} : vector<64x192xbf16>, vector<192x128xbf16>, vector<64x128xf32> -> vector<64x128xf32>
    %c0_3 = arith.constant 0 : index
    %c0_4 = arith.constant 0 : index
    %3 = vector.load %arg3[%c0_3, %c0_4] : memref<1x128xf32, #tpu.memory_space<vmem>>, vector<1x128xf32>
    %4 = vector.broadcast %3 : vector<1x128xf32> to vector<64x128xf32>
    %5 = arith.addf %2, %4 : vector<64x128xf32>
    %cst_5 = arith.constant 0.000000e+00 : f32
    %6 = vector.broadcast %cst_5 : f32 to vector<64x128xf32>
    %7 = arith.maximumf %5, %6 : vector<64x128xf32>
    %8 = arith.truncf %7 : vector<64x128xf32> to vector<64x128xbf16>
    %c0_6 = arith.constant 0 : index
    %c0_7 = arith.constant 0 : index
    %9 = vector.load %arg4[%c0_6, %c0_7] : memref<64x128xbf16, #tpu.memory_space<vmem>>, vector<64x128xbf16>
    tpu.vector_store %arg4[%c0_6, %c0_7], %8 {strides = array<i32>} : memref<64x128xbf16, #tpu.memory_space<vmem>>, vector<64x128xbf16>,
    return
  }
  func.func @transform_0(%arg0: i32) -> (i32, i32) {
    %c0_i32 = arith.constant 0 : i32
    %c0_i32_0 = arith.constant 0 : i32
    return %arg0, %c0_i32 : i32, i32
  }
  func.func @transform_1(%arg0: i32) -> (i32, i32) {
    %c0_i32 = arith.constant 0 : i32
    %c0_i32_0 = arith.constant 0 : i32
    %c0_i32_1 = arith.constant 0 : i32
    return %c0_i32, %c0_i32_0 : i32, i32
  }
  func.func @transform_2(%arg0: i32) -> (i32, i32) {
    %c0_i32 = arith.constant 0 : i32
    %c0_i32_0 = arith.constant 0 : i32
    %c0_i32_1 = arith.constant 0 : i32
    return %c0_i32, %c0_i32_0 : i32, i32
  }
  func.func @transform_3(%arg0: i32) -> (i32, i32) {
    %c0_i32 = arith.constant 0 : i32
    %c0_i32_0 = arith.constant 0 : i32
    return %arg0, %c0_i32 : i32, i32
  }
}

module attributes {stable_mosaic.version = 11 : i64} {
  func.func @_matmul_shift_relu_kernel(%arg0: i32, %arg1: memref<64x1200xbf16, #tpu.memory_space<vmem>>, %arg2: memref<1200x128xbf16, #tpu.memory_space<vmem>>, %arg3: memref<1x128xf32, #tpu.memory_space<vmem>>, %arg4: memref<64x128xbf16, #tpu.memory_space<vmem>>) attributes {dimension_semantics = [#tpu.dimension_semantics<parallel>], iteration_bounds = array<i64: 1>, scalar_prefetch = 0 : i64, scratch_operands = 0 : i64, tpu.core_type = #tpu.core_type<tc>, window_params = [{transform_indices = @transform_0, window_bounds = array<i64: 64, 1200>}, {pipeline_mode = #tpu.pipeline_mode<synchronous>, transform_indices = @transform_1, window_bounds = array<i64: 1200, 128>}, {pipeline_mode = #tpu.pipeline_mode<synchronous>, transform_indices = @transform_2, window_bounds = array<i64: 1, 128>}, {transform_indices = @transform_3, window_bounds = array<i64: 64, 128>}]} {
    %c0 = arith.constant 0 : index
    %c0_0 = arith.constant 0 : index
    %0 = vector.load %arg1[%c0, %c0_0] : memref<64x1200xbf16, #tpu.memory_space<vmem>>, vector<64x1200xbf16>
    %c0_1 = arith.constant 0 : index
    %c0_2 = arith.constant 0 : index
    %1 = vector.load %arg2[%c0_1, %c0_2] : memref<1200x128xbf16, #tpu.memory_space<vmem>>, vector<1200x128xbf16>
    %cst = arith.constant dense<0.000000e+00> : vector<64x128xf32>
    %2 = tpu.matmul %0, %1, %cst {dimension_numbers = #tpu.dot_dimension_numbers<[1], [0], [0], [1], [0, 0, 1, 1], [], []>} : vector<64x1200xbf16>, vector<1200x128xbf16>, vector<64x128xf32> -> vector<64x128xf32>
    %c0_3 = arith.constant 0 : index
    %c0_4 = arith.constant 0 : index
    %3 = vector.load %arg3[%c0_3, %c0_4] : memref<1x128xf32, #tpu.memory_space<vmem>>, vector<1x128xf32>
    %4 = vector.broadcast %3 : vector<1x128xf32> to vector<64x128xf32>
    %5 = arith.addf %2, %4 : vector<64x128xf32>
    %cst_5 = arith.constant 0.000000e+00 : f32
    %6 = vector.broadcast %cst_5 : f32 to vector<64x128xf32>
    %7 = arith.maximumf %5, %6 : vector<64x128xf32>
    %8 = arith.truncf %7 : vector<64x128xf32> to vector<64x128xbf16>
    %c0_6 = arith.constant 0 : index
    %c0_7 = arith.constant 0 : index
    %9 = vector.load %arg4[%c0_6, %c0_7] : memref<64x128xbf16, #tpu.memory_space<vmem>>, vector<64x128xbf16>
    tpu.vector_store %arg4[%c0_6, %c0_7], %8 {strides = array<i32>} : memref<64x128xbf16, #tpu.memory_space<vmem>>, vector<64x128xbf16>,
    return
  }
  func.func @transform_0(%arg0: i32) -> (i32, i32) {
    %c0_i32 = arith.constant 0 : i32
    %c0_i32_0 = arith.constant 0 : i32
    return %arg0, %c0_i32 : i32, i32
  }
  func.func @transform_1(%arg0: i32) -> (i32, i32) {
    %c0_i32 = arith.constant 0 : i32
    %c0_i32_0 = arith.constant 0 : i32
    %c0_i32_1 = arith.constant 0 : i32
    return %c0_i32, %c0_i32_0 : i32, i32
  }
  func.func @transform_2(%arg0: i32) -> (i32, i32) {
    %c0_i32 = arith.constant 0 : i32
    %c0_i32_0 = arith.constant 0 : i32
    %c0_i32_1 = arith.constant 0 : i32
    return %c0_i32, %c0_i32_0 : i32, i32
  }
  func.func @transform_3(%arg0: i32) -> (i32, i32) {
    %c0_i32 = arith.constant 0 : i32
    %c0_i32_0 = arith.constant 0 : i32
    return %arg0, %c0_i32 : i32, i32
  }
}

module attributes {stable_mosaic.version = 11 : i64} {
  func.func @_matmul_shift_relu_kernel(%arg0: i32, %arg1: memref<64x576xbf16, #tpu.memory_space<vmem>>, %arg2: memref<576x128xbf16, #tpu.memory_space<vmem>>, %arg3: memref<1x128xf32, #tpu.memory_space<vmem>>, %arg4: memref<64x128xbf16, #tpu.memory_space<vmem>>) attributes {dimension_semantics = [#tpu.dimension_semantics<parallel>], iteration_bounds = array<i64: 1>, scalar_prefetch = 0 : i64, scratch_operands = 0 : i64, tpu.core_type = #tpu.core_type<tc>, window_params = [{transform_indices = @transform_0, window_bounds = array<i64: 64, 576>}, {pipeline_mode = #tpu.pipeline_mode<synchronous>, transform_indices = @transform_1, window_bounds = array<i64: 576, 128>}, {pipeline_mode = #tpu.pipeline_mode<synchronous>, transform_indices = @transform_2, window_bounds = array<i64: 1, 128>}, {transform_indices = @transform_3, window_bounds = array<i64: 64, 128>}]} {
    %c0 = arith.constant 0 : index
    %c0_0 = arith.constant 0 : index
    %0 = vector.load %arg1[%c0, %c0_0] : memref<64x576xbf16, #tpu.memory_space<vmem>>, vector<64x576xbf16>
    %c0_1 = arith.constant 0 : index
    %c0_2 = arith.constant 0 : index
    %1 = vector.load %arg2[%c0_1, %c0_2] : memref<576x128xbf16, #tpu.memory_space<vmem>>, vector<576x128xbf16>
    %cst = arith.constant dense<0.000000e+00> : vector<64x128xf32>
    %2 = tpu.matmul %0, %1, %cst {dimension_numbers = #tpu.dot_dimension_numbers<[1], [0], [0], [1], [0, 0, 1, 1], [], []>} : vector<64x576xbf16>, vector<576x128xbf16>, vector<64x128xf32> -> vector<64x128xf32>
    %c0_3 = arith.constant 0 : index
    %c0_4 = arith.constant 0 : index
    %3 = vector.load %arg3[%c0_3, %c0_4] : memref<1x128xf32, #tpu.memory_space<vmem>>, vector<1x128xf32>
    %4 = vector.broadcast %3 : vector<1x128xf32> to vector<64x128xf32>
    %5 = arith.addf %2, %4 : vector<64x128xf32>
    %cst_5 = arith.constant 0.000000e+00 : f32
    %6 = vector.broadcast %cst_5 : f32 to vector<64x128xf32>
    %7 = arith.maximumf %5, %6 : vector<64x128xf32>
    %8 = arith.truncf %7 : vector<64x128xf32> to vector<64x128xbf16>
    %c0_6 = arith.constant 0 : index
    %c0_7 = arith.constant 0 : index
    %9 = vector.load %arg4[%c0_6, %c0_7] : memref<64x128xbf16, #tpu.memory_space<vmem>>, vector<64x128xbf16>
    tpu.vector_store %arg4[%c0_6, %c0_7], %8 {strides = array<i32>} : memref<64x128xbf16, #tpu.memory_space<vmem>>, vector<64x128xbf16>,
    return
  }
  func.func @transform_0(%arg0: i32) -> (i32, i32) {
    %c0_i32 = arith.constant 0 : i32
    %c0_i32_0 = arith.constant 0 : i32
    return %arg0, %c0_i32 : i32, i32
  }
  func.func @transform_1(%arg0: i32) -> (i32, i32) {
    %c0_i32 = arith.constant 0 : i32
    %c0_i32_0 = arith.constant 0 : i32
    %c0_i32_1 = arith.constant 0 : i32
    return %c0_i32, %c0_i32_0 : i32, i32
  }
  func.func @transform_2(%arg0: i32) -> (i32, i32) {
    %c0_i32 = arith.constant 0 : i32
    %c0_i32_0 = arith.constant 0 : i32
    %c0_i32_1 = arith.constant 0 : i32
    return %c0_i32, %c0_i32_0 : i32, i32
  }
  func.func @transform_3(%arg0: i32) -> (i32, i32) {
    %c0_i32 = arith.constant 0 : i32
    %c0_i32_0 = arith.constant 0 : i32
    return %arg0, %c0_i32 : i32, i32
  }
}

module attributes {stable_mosaic.version = 11 : i64} {
  func.func @_matmul_shift_relu_kernel(%arg0: i32, %arg1: memref<64x864xbf16, #tpu.memory_space<vmem>>, %arg2: memref<864x128xbf16, #tpu.memory_space<vmem>>, %arg3: memref<1x128xf32, #tpu.memory_space<vmem>>, %arg4: memref<64x128xbf16, #tpu.memory_space<vmem>>) attributes {dimension_semantics = [#tpu.dimension_semantics<parallel>], iteration_bounds = array<i64: 1>, scalar_prefetch = 0 : i64, scratch_operands = 0 : i64, tpu.core_type = #tpu.core_type<tc>, window_params = [{transform_indices = @transform_0, window_bounds = array<i64: 64, 864>}, {pipeline_mode = #tpu.pipeline_mode<synchronous>, transform_indices = @transform_1, window_bounds = array<i64: 864, 128>}, {pipeline_mode = #tpu.pipeline_mode<synchronous>, transform_indices = @transform_2, window_bounds = array<i64: 1, 128>}, {transform_indices = @transform_3, window_bounds = array<i64: 64, 128>}]} {
    %c0 = arith.constant 0 : index
    %c0_0 = arith.constant 0 : index
    %0 = vector.load %arg1[%c0, %c0_0] : memref<64x864xbf16, #tpu.memory_space<vmem>>, vector<64x864xbf16>
    %c0_1 = arith.constant 0 : index
    %c0_2 = arith.constant 0 : index
    %1 = vector.load %arg2[%c0_1, %c0_2] : memref<864x128xbf16, #tpu.memory_space<vmem>>, vector<864x128xbf16>
    %cst = arith.constant dense<0.000000e+00> : vector<64x128xf32>
    %2 = tpu.matmul %0, %1, %cst {dimension_numbers = #tpu.dot_dimension_numbers<[1], [0], [0], [1], [0, 0, 1, 1], [], []>} : vector<64x864xbf16>, vector<864x128xbf16>, vector<64x128xf32> -> vector<64x128xf32>
    %c0_3 = arith.constant 0 : index
    %c0_4 = arith.constant 0 : index
    %3 = vector.load %arg3[%c0_3, %c0_4] : memref<1x128xf32, #tpu.memory_space<vmem>>, vector<1x128xf32>
    %4 = vector.broadcast %3 : vector<1x128xf32> to vector<64x128xf32>
    %5 = arith.addf %2, %4 : vector<64x128xf32>
    %cst_5 = arith.constant 0.000000e+00 : f32
    %6 = vector.broadcast %cst_5 : f32 to vector<64x128xf32>
    %7 = arith.maximumf %5, %6 : vector<64x128xf32>
    %8 = arith.truncf %7 : vector<64x128xf32> to vector<64x128xbf16>
    %c0_6 = arith.constant 0 : index
    %c0_7 = arith.constant 0 : index
    %9 = vector.load %arg4[%c0_6, %c0_7] : memref<64x128xbf16, #tpu.memory_space<vmem>>, vector<64x128xbf16>
    tpu.vector_store %arg4[%c0_6, %c0_7], %8 {strides = array<i32>} : memref<64x128xbf16, #tpu.memory_space<vmem>>, vector<64x128xbf16>,
    return
  }
  func.func @transform_0(%arg0: i32) -> (i32, i32) {
    %c0_i32 = arith.constant 0 : i32
    %c0_i32_0 = arith.constant 0 : i32
    return %arg0, %c0_i32 : i32, i32
  }
  func.func @transform_1(%arg0: i32) -> (i32, i32) {
    %c0_i32 = arith.constant 0 : i32
    %c0_i32_0 = arith.constant 0 : i32
    %c0_i32_1 = arith.constant 0 : i32
    return %c0_i32, %c0_i32_0 : i32, i32
  }
  func.func @transform_2(%arg0: i32) -> (i32, i32) {
    %c0_i32 = arith.constant 0 : i32
    %c0_i32_0 = arith.constant 0 : i32
    %c0_i32_1 = arith.constant 0 : i32
    return %c0_i32, %c0_i32_0 : i32, i32
  }
  func.func @transform_3(%arg0: i32) -> (i32, i32) {
    %c0_i32 = arith.constant 0 : i32
    %c0_i32_0 = arith.constant 0 : i32
    return %arg0, %c0_i32 : i32, i32
  }
}

</mosaic_0001>

<llo_original>
// kernel: stem_forward.15
$region0: #{stem_forward.15}
  #allocation0 [shape = 'u32[]', space=smem, size = 0x4, offset = 0x4, fixed_abs, tag = 'smem constant byte address 0x4 - core index']
  #allocation1 [shape = 'u32[144,128]{1,0:T(1,128)}', space=vmem, size = 0x12000, scoped, tag = 'internal scratch']
  %s0 = inlined_call_operand.vmem [shape: bf16[2048,27], index: 0, kind: input, shape index: {}]
  %s1 = inlined_call_operand.vmem [shape: bf16[27,128], index: 1, kind: input, shape index: {}]
  %s2 = inlined_call_operand.vmem [shape: f32[1,128], index: 2, kind: input, shape index: {}]
  %s3 = inlined_call_operand.vmem [shape: bf16[2048,128], index: 3, kind: output, shape index: {}]
  %s4 = sld [smem:[#allocation0]]
  $region45: #{stem_forward.15} parent=0
    _
  %s6 = ssub.s32 1, %s4
  %s7 = scalar_select 0, %s6, %s4
  loop: start=0, step=1, limit=10
  $region2: #{stem_forward.15} parent=0 // loop_pre_header
    _
  $region3: #{stem_forward.15} parent=0 // loop_header
    %s9 = sphi 0, %s13
    %p10 = scmp.ge.s32.totalorder %s9, 10
    %s19 = sphi 0, %s21
    %s22 = sphi 0, %s19
    %s23 = sphi 0, %s22
    %s39 = sphi 0, %s23
    %s43 = sphi 0, %s43
    %s45 = sphi 0, %s43
    %s46 = sphi 0, %s45
    %s60 = sphi 0, %s46
    %s64 = sphi 0, %s64
    %s66 = sphi 0, %s64
    %s67 = sphi 0, %s66
    %s81 = sphi 0, %s67
    %s87 = sphi 0, %s89
    %s90 = sphi 0, %s87
    %s91 = sphi 0, %s90
    %s107 = sphi 0, %s91
  $region4: #{stem_forward.15} parent=0 // loop_header_branch
    %12 = sbr.rel (%p10) target = $region8
  $region5: #{stem_forward.15} parent=0 // loop_body
    %s14 = ssub.s32 %s9, 1
    %s15 = ssub.s32 %s9, 2
    %s16 = sadd.s32 %s9, 1
    %s17 = ssub.s32 %s9, %s16
    %p18 = scmp.eq.s32.totalorder %s17, 0
    %s20 = sadd.s32 %s19, 1
    %s21 = scalar_select %p18, %s19, %s20
    %p24 = pneg %p18
    %p25 = scmp.eq.s32.totalorder %s9, 7
    %p26 = por %p24, %p25
    %p27 = scmp.ne.s32.totalorder %s19, %s22
    %p28 = scmp.eq.s32.totalorder %s9, 0
    %p29 = por %p27, %p28
    %p30 = scmp.ne.s32.totalorder %s19, %s22
    %p31 = scmp.eq.s32.totalorder %s14, 7
    %p32 = por %p30, %p31
    %p33 = scmp.ne.s32.totalorder %s22, %s23
    %p34 = scmp.eq.s32.totalorder %s14, 0
    %p35 = por %p33, %p34
    %p36 = scmp.ne.s32.totalorder %s22, %s23
    %p37 = scmp.eq.s32.totalorder %s15, 7
    %p38 = por %p36, %p37
    %p40 = scmp.ne.s32.totalorder %s23, %s39
    %p41 = scmp.eq.s32.totalorder %s15, 0
    %p42 = por %p40, %p41
    %s44 = sadd.s32 %s43, 1
    %p47 = scmp.eq.s32.totalorder %s9, 7
    %p48 = scmp.ne.s32.totalorder %s43, %s45
    %p49 = scmp.eq.s32.totalorder %s9, 0
    %p50 = por %p48, %p49
    %p51 = scmp.ne.s32.totalorder %s43, %s45
    %p52 = scmp.eq.s32.totalorder %s14, 7
    %p53 = por %p51, %p52
    %p54 = scmp.ne.s32.totalorder %s45, %s46
    %p55 = scmp.eq.s32.totalorder %s14, 0
    %p56 = por %p54, %p55
    %p57 = scmp.ne.s32.totalorder %s45, %s46
    %p58 = scmp.eq.s32.totalorder %s15, 7
    %p59 = por %p57, %p58
    %p61 = scmp.ne.s32.totalorder %s46, %s60
    %p62 = scmp.eq.s32.totalorder %s15, 0
    %p63 = por %p61, %p62
    %s65 = sadd.s32 %s64, 1
    %p68 = scmp.eq.s32.totalorder %s9, 7
    %p69 = scmp.ne.s32.totalorder %s64, %s66
    %p70 = scmp.eq.s32.totalorder %s9, 0
    %p71 = por %p69, %p70
    %p72 = scmp.ne.s32.totalorder %s64, %s66
    %p73 = scmp.eq.s32.totalorder %s14, 7
    %p74 = por %p72, %p73
    %p75 = scmp.ne.s32.totalorder %s66, %s67
    %p76 = scmp.eq.s32.totalorder %s14, 0
    %p77 = por %p75, %p76
    %p78 = scmp.ne.s32.totalorder %s66, %s67
    %p79 = scmp.eq.s32.totalorder %s15, 7
    %p80 = por %p78, %p79
    %p82 = scmp.ne.s32.totalorder %s67, %s81
    %p83 = scmp.eq.s32.totalorder %s15, 0
    %p84 = por %p82, %p83
    %s85 = ssub.s32 %s9, %s16
    %p86 = scmp.eq.s32.totalorder %s85, 0
    %s88 = sadd.s32 %s87, 1
    %s89 = scalar_select %p86, %s87, %s88
    %p92 = pneg %p86
    %p93 = scmp.eq.s32.totalorder %s9, 7
    %p94 = por %p92, %p93
    %p95 = scmp.ne.s32.totalorder %s87, %s90
    %p96 = scmp.eq.s32.totalorder %s9, 0
    %p97 = por %p95, %p96
    %p98 = scmp.ne.s32.totalorder %s87, %s90
    %p99 = scmp.eq.s32.totalorder %s14, 7
    %p100 = por %p98, %p99
    %p101 = scmp.ne.s32.totalorder %s90, %s91
    %p102 = scmp.eq.s32.totalorder %s14, 0
    %p103 = por %p101, %p102
    %p104 = scmp.ne.s32.totalorder %s90, %s91
    %p105 = scmp.eq.s32.totalorder %s15, 7
    %p106 = por %p104, %p105
    %p108 = scmp.ne.s32.totalorder %s91, %s107
    %p109 = scmp.eq.s32.totalorder %s15, 0
    %p110 = por %p108, %p109
    %p111 = scmp.le.s32.totalorder 1, %s9
    %p112 = scmp.lt.s32.totalorder %s9, 9
    %p113 = pnand %p111, %p112
    %p114 = pneg %p113
    // Predicated region
    $region9: #{stem_forward.15} parent=5 // pred_check
      _
    $region10: #{stem_forward.15} parent=5 // pred_check_branch
      %116 = sbr.rel (%p113) target = $region12
    $region11: #{stem_forward.15} parent=5 // pred_region
      %s117 = ssub.s32 %s9, 1
      // Predicated region
      $region13: #{stem_forward.15} parent=11 // pred_check
        %p118 = pneg %p56
      $region14: #{stem_forward.15} parent=11 // pred_check_branch
        %120 = sbr.rel (%p118) target = $region16
      $region15: #{stem_forward.15} parent=11 // pred_region
        _
      $region16: #{stem_forward.15} parent=11 // pred_fallthru
        _
      // Predicated region
      $region17: #{stem_forward.15} parent=11 // pred_check
        %p121 = pneg %p77
      $region18: #{stem_forward.15} parent=11 // pred_check_branch
        %123 = sbr.rel (%p121) target = $region20
      $region19: #{stem_forward.15} parent=11 // pred_region
        _
      $region20: #{stem_forward.15} parent=11 // pred_fallthru
        _
    $region12: #{stem_forward.15} parent=5 // pred_fallthru
      _
    %p124 = scmp.lt.s32.totalorder %s9, 8
    // Predicated region
    $region21: #{stem_forward.15} parent=5 // pred_check
      %p125 = pneg %p124
    $region22: #{stem_forward.15} parent=5 // pred_check_branch
      %127 = sbr.rel (%p125) target = $region24
    $region23: #{stem_forward.15} parent=5 // pred_region
      // Predicated region
      $region25: #{stem_forward.15} parent=23 // pred_check
        %p128 = pneg %p29
      $region26: #{stem_forward.15} parent=23 // pred_check_branch
        %130 = sbr.rel (%p128) target = $region28
      $region27: #{stem_forward.15} parent=23 // pred_region
        %s131 = smul.u32 32, %s9
        %p132 = scmp.lt.s32.totalorder %s131, 255
        %s133 = scalar_select %p132, %s131, 255
        %s134 = smul.addr %s133, 4
        %s135 = scalar_lea.vmem %s0, %s134
        %s136 = smul.u32 32, %s9
      $region28: #{stem_forward.15} parent=23 // pred_fallthru
        _
    $region24: #{stem_forward.15} parent=5 // pred_fallthru
      _
    %p137 = scmp.le.s32.totalorder 1, %s9
    %p138 = scmp.lt.s32.totalorder %s9, 9
    %p139 = pnand %p137, %p138
    %p140 = pneg %p139
    // Predicated region
    $region29: #{stem_forward.15} parent=5 // pred_check
      _
    $region30: #{stem_forward.15} parent=5 // pred_check_branch
      %142 = sbr.rel (%p139) target = $region32
    $region31: #{stem_forward.15} parent=5 // pred_region
      %s143 = ssub.s32 %s9, 1
      %s144 = smul.u32 32, %s14
      %p145 = scmp.lt.s32.totalorder %s144, 255
      %s146 = scalar_select %p145, %s144, 255
      %s147 = smul.addr %s146, 4
      %s148 = scalar_lea.vmem %s0, %s147
      %p149 = pneg %p35
      %p150 = pneg %p32
      %p151 = pneg %p56
      %p152 = pneg %p53
      %p153 = pneg %p77
      %p154 = pneg %p74
      %p155 = pneg %p103
      %p156 = pneg %p100
      %s157 = smul.u32 32, %s14
      %p158 = scmp.lt.s32.totalorder %s157, 255
      %s159 = scalar_select %p158, %s157, 255
      %s160 = smul.addr %s159, 4
      %s161 = scalar_lea.vmem %s3, %s160
      %s162 = smul.u32 32, %s14
      %p163 = scmp.lt.s32.totalorder %s162, 255
      %s164 = scalar_select %p163, %s162, 255
      %s165 = smul.addr %s164, 4
      %s166 = scalar_lea.vmem %s0, %s165
      %s167 = smul.u32 32, %s14
      %s168 = smul.u32 32, %s14
      %p169 = scmp.lt.s32.totalorder %s168, 255
      %s170 = scalar_select %p169, %s168, 255
      %s171 = smul.addr %s170, 4
      %s172 = scalar_lea.vmem %s3, %s171
      %s173 = smul.u32 32, %s14
      %v175 = vld [vmem:[%s166] sm:$0xf]
      %v176 = vld [vmem:[%s166 + $0x4] sm:$0xf]
      %v177 = vld [vmem:[%s166 + $0x8] sm:$0xf]
      %v178 = vld [vmem:[%s166 + $0xc] sm:$0xf]
      %v179 = vld [vmem:[%s166 + $0x10] sm:$0xf]
      %v180 = vld [vmem:[%s166 + $0x14] sm:$0xf]
      %v181 = vld [vmem:[%s166 + $0x18] sm:$0xf]
      %v182 = vld [vmem:[%s166 + $0x1c] sm:$0xf]
      %v183 = vld [vmem:[%s166 + $0x20] sm:$0xf]
      %v184 = vld [vmem:[%s166 + $0x24] sm:$0xf]
      %v185 = vld [vmem:[%s166 + $0x28] sm:$0xf]
      %v186 = vld [vmem:[%s166 + $0x2c] sm:$0xf]
      %v187 = vld [vmem:[%s166 + $0x30] sm:$0xf]
      %v188 = vld [vmem:[%s166 + $0x34] sm:$0xf]
      %v189 = vld [vmem:[%s166 + $0x38] sm:$0xf]
      %v190 = vld [vmem:[%s166 + $0x3c] sm:$0xf]
      %v191 = vld [vmem:[%s166 + $0x40] sm:$0xf]
      %v192 = vld [vmem:[%s166 + $0x44] sm:$0xf]
      %v193 = vld [vmem:[%s166 + $0x48] sm:$0xf]
      %v194 = vld [vmem:[%s166 + $0x4c] sm:$0xf]
      %v195 = vld [vmem:[%s166 + $0x50] sm:$0xf]
      %v196 = vld [vmem:[%s166 + $0x54] sm:$0xf]
      %v197 = vld [vmem:[%s166 + $0x58] sm:$0xf]
      %v198 = vld [vmem:[%s166 + $0x5c] sm:$0xf]
      %v199 = vld [vmem:[%s166 + $0x60] sm:$0xf]
      %v200 = vld [vmem:[%s166 + $0x64] sm:$0xf]
      %v201 = vld [vmem:[%s166 + $0x68] sm:$0xf]
      %v202 = vld [vmem:[%s166 + $0x6c] sm:$0xf]
      %v203 = vld [vmem:[%s166 + $0x70] sm:$0xf]
      %v204 = vld [vmem:[%s166 + $0x74] sm:$0xf]
      %v205 = vld [vmem:[%s166 + $0x78] sm:$0xf]
      %v206 = vld [vmem:[%s166 + $0x7c] sm:$0xf]
      %v207 = vld [vmem:[%s1] sm:$0xf]
      %v208 = vld [vmem:[%s1 + $0x4] sm:$0xf]
      %v209 = vld [vmem:[%s1 + $0x8] sm:$0xf]
      %v210 = vld [vmem:[%s1 + $0xc] sm:$0x3]
      %v211 = vld [vmem:[%s2] sm:$0x1]
      %v213 = vlaneseq
      %v214 = vshrl.u32 %v213, 7
      %v215 = vsub.s32 0, %v214
      %v216 = vrot.slane %v211, %v215
      %v250 = vunpack.c.l.b16 %v175
      %v251 = vunpack.c.l.b16 %v176
      %v252 = vunpack.c.l.b16 %v177
      %v253 = vunpack.c.l.b16 %v178
      %v254 = vunpack.c.l.b16 %v179
      %v255 = vunpack.c.l.b16 %v180
      %v256 = vunpack.c.l.b16 %v181
      %v257 = vunpack.c.l.b16 %v182
      %v258 = vunpack.c.l.b16 %v183
      %v259 = vunpack.c.l.b16 %v184
      %v260 = vunpack.c.l.b16 %v185
      %v261 = vunpack.c.l.b16 %v186
      %v262 = vunpack.c.l.b16 %v187
      %v263 = vunpack.c.l.b16 %v188
      %v264 = vunpack.c.l.b16 %v189
      %v265 = vunpack.c.l.b16 %v190
      %v266 = vunpack.c.l.b16 %v191
      %v267 = vunpack.c.l.b16 %v192
      %v268 = vunpack.c.l.b16 %v193
      %v269 = vunpack.c.l.b16 %v194
      %v270 = vunpack.c.l.b16 %v195
      %v271 = vunpack.c.l.b16 %v196
      %v272 = vunpack.c.l.b16 %v197
      %v273 = vunpack.c.l.b16 %v198
      %v274 = vunpack.c.l.b16 %v199
      %v275 = vunpack.c.l.b16 %v200
      %v276 = vunpack.c.l.b16 %v201
      %v277 = vunpack.c.l.b16 %v202
      %v278 = vunpack.c.l.b16 %v203
      %v279 = vunpack.c.l.b16 %v204
      %v280 = vunpack.c.l.b16 %v205
      %v281 = vunpack.c.l.b16 %v206
      %v282 = vpack.c.b16 %v251, %v250
      %v283 = vpack.c.b16 %v253, %v252
      %v284 = vpack.c.b16 %v255, %v254
      %v285 = vpack.c.b16 %v257, %v256
      %v286 = vpack.c.b16 %v259, %v258
      %v287 = vpack.c.b16 %v261, %v260
      %v288 = vpack.c.b16 %v263, %v262
      %v289 = vpack.c.b16 %v265, %v264
      %v290 = vpack.c.b16 %v267, %v266
      %v291 = vpack.c.b16 %v269, %v268
      %v292 = vpack.c.b16 %v271, %v270
      %v293 = vpack.c.b16 %v273, %v272
      %v294 = vpack.c.b16 %v275, %v274
      %v295 = vpack.c.b16 %v277, %v276
      %v296 = vpack.c.b16 %v279, %v278
      %v297 = vpack.c.b16 %v281, %v280
      %v302 = vunpack.c.l.b16 %v207
      %v303 = vunpack.c.l.b16 %v208
      %v304 = vunpack.c.l.b16 %v209
      %v305 = vunpack.c.l.b16 %v210
      %v306 = vpack.c.b16 %v303, %v302
      %v307 = vpack.c.b16 %v305, %v304
      %vm309 = vcmask 220160
      %v311 = vsel %vm309, %v282, 0
      %v314 = vsel %vm309, %v283, 0
      %v317 = vsel %vm309, %v284, 0
      %v320 = vsel %vm309, %v285, 0
      %v323 = vsel %vm309, %v286, 0
      %v326 = vsel %vm309, %v287, 0
      %v329 = vsel %vm309, %v288, 0
      %v332 = vsel %vm309, %v289, 0
      %v335 = vsel %vm309, %v290, 0
      %v338 = vsel %vm309, %v291, 0
      %v341 = vsel %vm309, %v292, 0
      %v344 = vsel %vm309, %v293, 0
      %v347 = vsel %vm309, %v294, 0
      %v350 = vsel %vm309, %v295, 0
      %v353 = vsel %vm309, %v296, 0
      %v356 = vsel %vm309, %v297, 0
      %vm358 = vcmask 1044480
      %vm359 = vcmask 1045504
      %v360 = vsel %vm358, 4294967295, 65535
      %v361 = vsel %vm359, %v360, 0
      %v363 = vand.u32 %v307, %v361
      %365 = vmatprep.subr.bf16.mxu0 0
      %366 = vmatpush1.bf16.msra.mxu0 %v306
      %367 = vmatprep.subr.bf16.mxu0 0
      %368 = vmatpush1.bf16.msra.mxu0 %v363
      %369 = vmatprep.subr.bf16.mxu0 0
      %370 = vmatpush1.bf16.msra.mxu0 0
      %371 = vmatprep.subr.bf16.mxu0 0
      %372 = vmatpush1.bf16.msra.mxu0 0
      %373 = vmatprep.subr.bf16.mxu0 0
      %374 = vmatpush1.bf16.msra.mxu0 0
      %375 = vmatprep.subr.bf16.mxu0 0
      %376 = vmatpush1.bf16.msra.mxu0 0
      %377 = vmatprep.subr.bf16.mxu0 0
      %378 = vmatpush1.bf16.msra.mxu0 0
      %379 = vmatprep.subr.bf16.mxu0 0
      %380 = vmatpush1.bf16.msra.mxu0 0
      %381 = vmatprep.subr.bf16.mxu0 0
      %382 = vmatpush1.bf16.msra.mxu0 0
      %383 = vmatprep.subr.bf16.mxu0 0
      %384 = vmatpush1.bf16.msra.mxu0 0
      %385 = vmatprep.subr.bf16.mxu0 0
      %386 = vmatpush1.bf16.msra.mxu0 0
      %387 = vmatprep.subr.bf16.mxu0 0
      %388 = vmatpush1.bf16.msra.mxu0 0
      %389 = vmatprep.subr.bf16.mxu0 0
      %390 = vmatpush1.bf16.msra.mxu0 0
      %391 = vmatprep.subr.bf16.mxu0 0
      %392 = vmatpush1.bf16.msra.mxu0 0
      %393 = vmatprep.subr.bf16.mxu0 0
      %394 = vmatpush1.bf16.msra.mxu0 0
      %395 = vmatprep.subr.bf16.mxu0 0
      %396 = vmatpush1.bf16.msra.mxu0 0
      %397 = vmatprep.mubr.bf16.mxu0 0
      %398 = vmatmul.mubr.bf16.gmra.mrb[0].mxu0 %v311
      %v399 = vpop.f32.mrb[0].mxu0
      %v400 = vadd.f32 %v216, %v399
      %v401 = vpop.f32.mrb[0].mxu0
      %v402 = vpop.f32.mrb[0].mxu0
      %v403 = vadd.f32 %v216, %v402
      %v404 = vpop.f32.mrb[0].mxu0
      %405 = vmatprep.mubr.bf16.mxu0 0
      %406 = vmatmul.mubr.bf16.gmra.mrb[0].mxu0 %v314
      %v407 = vpop.f32.mrb[0].mxu0
      %v408 = vadd.f32 %v216, %v407
      %v409 = vpop.f32.mrb[0].mxu0
      %v410 = vpop.f32.mrb[0].mxu0
      %v411 = vadd.f32 %v216, %v410
      %v412 = vpop.f32.mrb[0].mxu0
      %413 = vmatprep.mubr.bf16.mxu0 0
      %414 = vmatmul.mubr.bf16.gmra.mrb[0].mxu0 %v317
      %v415 = vpop.f32.mrb[0].mxu0
      %v416 = vadd.f32 %v216, %v415
      %v417 = vpop.f32.mrb[0].mxu0
      %v418 = vpop.f32.mrb[0].mxu0
      %v419 = vadd.f32 %v216, %v418
      %v420 = vpop.f32.mrb[0].mxu0
      %421 = vmatprep.mubr.bf16.mxu0 0
      %422 = vmatmul.mubr.bf16.gmra.mrb[0].mxu0 %v320
      %v423 = vpop.f32.mrb[0].mxu0
      %v424 = vadd.f32 %v216, %v423
      %v425 = vpop.f32.mrb[0].mxu0
      %v426 = vpop.f32.mrb[0].mxu0
      %v427 = vadd.f32 %v216, %v426
      %v428 = vpop.f32.mrb[0].mxu0
      %429 = vmatprep.mubr.bf16.mxu0 0
      %430 = vmatmul.mubr.bf16.gmra.mrb[0].mxu0 %v323
      %v431 = vpop.f32.mrb[0].mxu0
      %v432 = vadd.f32 %v216, %v431
      %v433 = vpop.f32.mrb[0].mxu0
      %v434 = vpop.f32.mrb[0].mxu0
      %v435 = vadd.f32 %v216, %v434
      %v436 = vpop.f32.mrb[0].mxu0
      %437 = vmatprep.mubr.bf16.mxu0 0
      %438 = vmatmul.mubr.bf16.gmra.mrb[0].mxu0 %v326
      %v439 = vpop.f32.mrb[0].mxu0
      %v440 = vadd.f32 %v216, %v439
      %v441 = vpop.f32.mrb[0].mxu0
      %v442 = vpop.f32.mrb[0].mxu0
      %v443 = vadd.f32 %v216, %v442
      %v444 = vpop.f32.mrb[0].mxu0
      %445 = vmatprep.mubr.bf16.mxu0 0
      %446 = vmatmul.mubr.bf16.gmra.mrb[0].mxu0 %v329
      %v447 = vpop.f32.mrb[0].mxu0
      %v448 = vadd.f32 %v216, %v447
      %v449 = vpop.f32.mrb[0].mxu0
      %v450 = vpop.f32.mrb[0].mxu0
      %v451 = vadd.f32 %v216, %v450
      %v452 = vpop.f32.mrb[0].mxu0
      %453 = vmatprep.mubr.bf16.mxu0 0
      %454 = vmatmul.mubr.bf16.gmra.mrb[0].mxu0 %v332
      %v455 = vpop.f32.mrb[0].mxu0
      %v456 = vadd.f32 %v216, %v455
      %v457 = vpop.f32.mrb[0].mxu0
      %v458 = vpop.f32.mrb[0].mxu0
      %v459 = vadd.f32 %v216, %v458
      %v460 = vpop.f32.mrb[0].mxu0
      %461 = vmatprep.mubr.bf16.mxu0 0
      %462 = vmatmul.mubr.bf16.gmra.mrb[0].mxu0 %v335
      %v463 = vpop.f32.mrb[0].mxu0
      %v464 = vadd.f32 %v216, %v463
      %v465 = vpop.f32.mrb[0].mxu0
      %v466 = vpop.f32.mrb[0].mxu0
      %v467 = vadd.f32 %v216, %v466
      %v468 = vpop.f32.mrb[0].mxu0
      %469 = vmatprep.mubr.bf16.mxu0 0
      %470 = vmatmul.mubr.bf16.gmra.mrb[0].mxu0 %v338
      %v471 = vpop.f32.mrb[0].mxu0
      %v472 = vadd.f32 %v216, %v471
      %v473 = vpop.f32.mrb[0].mxu0
      %v474 = vpop.f32.mrb[0].mxu0
      %v475 = vadd.f32 %v216, %v474
      %v476 = vpop.f32.mrb[0].mxu0
      %477 = vmatprep.mubr.bf16.mxu0 0
      %478 = vmatmul.mubr.bf16.gmra.mrb[0].mxu0 %v341
      %v479 = vpop.f32.mrb[0].mxu0
      %v480 = vadd.f32 %v216, %v479
      %v481 = vpop.f32.mrb[0].mxu0
      %v482 = vpop.f32.mrb[0].mxu0
      %v483 = vadd.f32 %v216, %v482
      %v484 = vpop.f32.mrb[0].mxu0
      %485 = vmatprep.mubr.bf16.mxu0 0
      %486 = vmatmul.mubr.bf16.gmra.mrb[0].mxu0 %v344
      %v487 = vpop.f32.mrb[0].mxu0
      %v488 = vadd.f32 %v216, %v487
      %v489 = vpop.f32.mrb[0].mxu0
      %v490 = vpop.f32.mrb[0].mxu0
      %v491 = vadd.f32 %v216, %v490
      %v492 = vpop.f32.mrb[0].mxu0
      %493 = vmatprep.mubr.bf16.mxu0 0
      %494 = vmatmul.mubr.bf16.gmra.mrb[0].mxu0 %v347
      %v495 = vpop.f32.mrb[0].mxu0
      %v496 = vadd.f32 %v216, %v495
      %v497 = vpop.f32.mrb[0].mxu0
      %v498 = vpop.f32.mrb[0].mxu0
      %v499 = vadd.f32 %v216, %v498
      %v500 = vpop.f32.mrb[0].mxu0
      %501 = vmatprep.mubr.bf16.mxu0 0
      %502 = vmatmul.mubr.bf16.gmra.mrb[0].mxu0 %v350
      %v503 = vpop.f32.mrb[0].mxu0
      %v504 = vadd.f32 %v216, %v503
      %v505 = vpop.f32.mrb[0].mxu0
      %v506 = vpop.f32.mrb[0].mxu0
      %v507 = vadd.f32 %v216, %v506
      %v508 = vpop.f32.mrb[0].mxu0
      %509 = vmatprep.mubr.bf16.mxu0 0
      %510 = vmatmul.mubr.bf16.gmra.mrb[0].mxu0 %v353
      %v511 = vpop.f32.mrb[0].mxu0
      %v512 = vadd.f32 %v216, %v511
      %v513 = vpop.f32.mrb[0].mxu0
      %v514 = vpop.f32.mrb[0].mxu0
      %v515 = vadd.f32 %v216, %v514
      %v516 = vpop.f32.mrb[0].mxu0
      %517 = vmatprep.mubr.bf16.mxu0 0
      %518 = vmatmul.mubr.bf16.gmra.mrb[0].mxu0 %v356
      %v519 = vpop.f32.mrb[0].mxu0
      %v520 = vadd.f32 %v216, %v519
      %v521 = vpop.f32.mrb[0].mxu0
      %v522 = vpop.f32.mrb[0].mxu0
      %v523 = vadd.f32 %v216, %v522
      %v524 = vpop.f32.mrb[0].mxu0
      %525 = vdwg.mxu0
      %v526 = vmax.f32 %v400, 0.0
      %v527 = vmax.f32 %v403, 0.0
      %v528 = vmax.f32 %v408, 0.0
      %v529 = vmax.f32 %v411, 0.0
      %v530 = vmax.f32 %v416, 0.0
      %v531 = vmax.f32 %v419, 0.0
      %v532 = vmax.f32 %v424, 0.0
      %v533 = vmax.f32 %v427, 0.0
      %v534 = vmax.f32 %v432, 0.0
      %v535 = vmax.f32 %v435, 0.0
      %v536 = vmax.f32 %v440, 0.0
      %v537 = vmax.f32 %v443, 0.0
      %v538 = vmax.f32 %v448, 0.0
      %v539 = vmax.f32 %v451, 0.0
      %v540 = vmax.f32 %v456, 0.0
      %v541 = vmax.f32 %v459, 0.0
      %v542 = vmax.f32 %v464, 0.0
      %v543 = vmax.f32 %v467, 0.0
      %v544 = vmax.f32 %v472, 0.0
      %v545 = vmax.f32 %v475, 0.0
      %v546 = vmax.f32 %v480, 0.0
      %v547 = vmax.f32 %v483, 0.0
      %v548 = vmax.f32 %v488, 0.0
      %v549 = vmax.f32 %v491, 0.0
      %v550 = vmax.f32 %v496, 0.0
      %v551 = vmax.f32 %v499, 0.0
      %v552 = vmax.f32 %v504, 0.0
      %v553 = vmax.f32 %v507, 0.0
      %v554 = vmax.f32 %v512, 0.0
      %v555 = vmax.f32 %v515, 0.0
      %v556 = vmax.f32 %v520, 0.0
      %v557 = vmax.f32 %v523, 0.0
      %v558 = vpack.c.bf16 %v527, %v526
      %v559 = vpack.c.bf16 %v529, %v528
      %v560 = vpack.c.bf16 %v531, %v530
      %v561 = vpack.c.bf16 %v533, %v532
      %v562 = vpack.c.bf16 %v535, %v534
      %v563 = vpack.c.bf16 %v537, %v536
      %v564 = vpack.c.bf16 %v539, %v538
      %v565 = vpack.c.bf16 %v541, %v540
      %v566 = vpack.c.bf16 %v543, %v542
      %v567 = vpack.c.bf16 %v545, %v544
      %v568 = vpack.c.bf16 %v547, %v546
      %v569 = vpack.c.bf16 %v549, %v548
      %v570 = vpack.c.bf16 %v551, %v550
      %v571 = vpack.c.bf16 %v553, %v552
      %v572 = vpack.c.bf16 %v555, %v554
      %v573 = vpack.c.bf16 %v557, %v556
      %v590 = vunpack.c.l.b16 %v558
      %v591 = vunpack.c.h.b16 %v558
      %v592 = vunpack.c.l.b16 %v559
      %v593 = vunpack.c.h.b16 %v559
      %v594 = vunpack.c.l.b16 %v560
      %v595 = vunpack.c.h.b16 %v560
      %v596 = vunpack.c.l.b16 %v561
      %v597 = vunpack.c.h.b16 %v561
      %v598 = vunpack.c.l.b16 %v562
      %v599 = vunpack.c.h.b16 %v562
      %v600 = vunpack.c.l.b16 %v563
      %v601 = vunpack.c.h.b16 %v563
      %v602 = vunpack.c.l.b16 %v564
      %v603 = vunpack.c.h.b16 %v564
      %v604 = vunpack.c.l.b16 %v565
      %v605 = vunpack.c.h.b16 %v565
      %v606 = vunpack.c.l.b16 %v566
      %v607 = vunpack.c.h.b16 %v566
      %v608 = vunpack.c.l.b16 %v567
      %v609 = vunpack.c.h.b16 %v567
      %v610 = vunpack.c.l.b16 %v568
      %v611 = vunpack.c.h.b16 %v568
      %v612 = vunpack.c.l.b16 %v569
      %v613 = vunpack.c.h.b16 %v569
      %v614 = vunpack.c.l.b16 %v570
      %v615 = vunpack.c.h.b16 %v570
      %v616 = vunpack.c.l.b16 %v571
      %v617 = vunpack.c.h.b16 %v571
      %v618 = vunpack.c.l.b16 %v572
      %v619 = vunpack.c.h.b16 %v572
      %v620 = vunpack.c.l.b16 %v573
      %v621 = vunpack.c.h.b16 %v573
      %v622 = vpack.c.b16 %v590, %v590
      %v623 = vpack.c.b16 %v591, %v591
      %v624 = vpack.c.b16 %v592, %v592
      %v625 = vpack.c.b16 %v593, %v593
      %v626 = vpack.c.b16 %v594, %v594
      %v627 = vpack.c.b16 %v595, %v595
      %v628 = vpack.c.b16 %v596, %v596
      %v629 = vpack.c.b16 %v597, %v597
      %v630 = vpack.c.b16 %v598, %v598
      %v631 = vpack.c.b16 %v599, %v599
      %v632 = vpack.c.b16 %v600, %v600
      %v633 = vpack.c.b16 %v601, %v601
      %v634 = vpack.c.b16 %v602, %v602
      %v635 = vpack.c.b16 %v603, %v603
      %v636 = vpack.c.b16 %v604, %v604
      %v637 = vpack.c.b16 %v605, %v605
      %v638 = vpack.c.b16 %v606, %v606
      %v639 = vpack.c.b16 %v607, %v607
      %v640 = vpack.c.b16 %v608, %v608
      %v641 = vpack.c.b16 %v609, %v609
      %v642 = vpack.c.b16 %v610, %v610
      %v643 = vpack.c.b16 %v611, %v611
      %v644 = vpack.c.b16 %v612, %v612
      %v645 = vpack.c.b16 %v613, %v613
      %v646 = vpack.c.b16 %v614, %v614
      %v647 = vpack.c.b16 %v615, %v615
      %v648 = vpack.c.b16 %v616, %v616
      %v649 = vpack.c.b16 %v617, %v617
      %v650 = vpack.c.b16 %v618, %v618
      %v651 = vpack.c.b16 %v619, %v619
      %v652 = vpack.c.b16 %v620, %v620
      %v653 = vpack.c.b16 %v621, %v621
      %686 = vst [vmem:[%s172] sm:$0xf] %v622
      %687 = vst [vmem:[%s172 + $0x4] sm:$0xf] %v623
      %688 = vst [vmem:[%s172 + $0x8] sm:$0xf] %v624
      %689 = vst [vmem:[%s172 + $0xc] sm:$0xf] %v625
      %690 = vst [vmem:[%s172 + $0x10] sm:$0xf] %v626
      %691 = vst [vmem:[%s172 + $0x14] sm:$0xf] %v627
      %692 = vst [vmem:[%s172 + $0x18] sm:$0xf] %v628
      %693 = vst [vmem:[%s172 + $0x1c] sm:$0xf] %v629
      %694 = vst [vmem:[%s172 + $0x20] sm:$0xf] %v630
      %695 = vst [vmem:[%s172 + $0x24] sm:$0xf] %v631
      %696 = vst [vmem:[%s172 + $0x28] sm:$0xf] %v632
      %697 = vst [vmem:[%s172 + $0x2c] sm:$0xf] %v633
      %698 = vst [vmem:[%s172 + $0x30] sm:$0xf] %v634
      %699 = vst [vmem:[%s172 + $0x34] sm:$0xf] %v635
      %700 = vst [vmem:[%s172 + $0x38] sm:$0xf] %v636
      %701 = vst [vmem:[%s172 + $0x3c] sm:$0xf] %v637
      %702 = vst [vmem:[%s172 + $0x40] sm:$0xf] %v638
      %703 = vst [vmem:[%s172 + $0x44] sm:$0xf] %v639
      %704 = vst [vmem:[%s172 + $0x48] sm:$0xf] %v640
      %705 = vst [vmem:[%s172 + $0x4c] sm:$0xf] %v641
      %706 = vst [vmem:[%s172 + $0x50] sm:$0xf] %v642
      %707 = vst [vmem:[%s172 + $0x54] sm:$0xf] %v643
      %708 = vst [vmem:[%s172 + $0x58] sm:$0xf] %v644
      %709 = vst [vmem:[%s172 + $0x5c] sm:$0xf] %v645
      %710 = vst [vmem:[%s172 + $0x60] sm:$0xf] %v646
      %711 = vst [vmem:[%s172 + $0x64] sm:$0xf] %v647
      %712 = vst [vmem:[%s172 + $0x68] sm:$0xf] %v648
      %713 = vst [vmem:[%s172 + $0x6c] sm:$0xf] %v649
      %714 = vst [vmem:[%s172 + $0x70] sm:$0xf] %v650
      %715 = vst [vmem:[%s172 + $0x74] sm:$0xf] %v651
      %716 = vst [vmem:[%s172 + $0x78] sm:$0xf] %v652
      %717 = vst [vmem:[%s172 + $0x7c] sm:$0xf] %v653
      %s718 = smul.u32 32, %s14
      %p719 = scmp.lt.s32.totalorder %s718, 255
      %s720 = scalar_select %p719, %s718, 255
      %s721 = smul.addr %s720, 4
      %s722 = scalar_lea.vmem %s3, %s721
      // Predicated region
      $region33: #{stem_forward.15} parent=31 // pred_check
        %p723 = pneg %p100
      $region34: #{stem_forward.15} parent=31 // pred_check_branch
        %725 = sbr.rel (%p723) target = $region36
      $region35: #{stem_forward.15} parent=31 // pred_region
        %s726 = smul.u32 32, %s14
      $region36: #{stem_forward.15} parent=31 // pred_fallthru
        _
    $region32: #{stem_forward.15} parent=5 // pred_fallthru
      _
    %p727 = scmp.le.s32.totalorder 2, %s9
    // Predicated region
    $region37: #{stem_forward.15} parent=5 // pred_check
      %p728 = pneg %p727
    $region38: #{stem_forward.15} parent=5 // pred_check_branch
      %730 = sbr.rel (%p728) target = $region40
    $region39: #{stem_forward.15} parent=5 // pred_region
      %s731 = ssub.s32 %s9, 2
      // Predicated region
      $region41: #{stem_forward.15} parent=39 // pred_check
        %p732 = pneg %p106
      $region42: #{stem_forward.15} parent=39 // pred_check_branch
        %734 = sbr.rel (%p732) target = $region44
      $region43: #{stem_forward.15} parent=39 // pred_region
        %s735 = smul.u32 32, %s15
        %p736 = scmp.lt.s32.totalorder %s735, 255
        %s737 = scalar_select %p736, %s735, 255
        %s738 = smul.addr %s737, 4
        %s739 = scalar_lea.vmem %s3, %s738
      $region44: #{stem_forward.15} parent=39 // pred_fallthru
        _
    $region40: #{stem_forward.15} parent=5 // pred_fallthru
      _
  $region6: #{stem_forward.15} parent=0 // loop_footer
    %s13 = sadd.s32 1, %s9
  $region7: #{stem_forward.15} parent=0 // loop_footer_branch
    %8 = sbr.rel target = $region3
  $region8: #{stem_forward.15} parent=0 // loop_exit
    _

// kernel: stem_forward.16
$region0: #{stem_forward.16}
  #allocation0 [shape = 'u32[]', space=smem, size = 0x4, offset = 0x4, fixed_abs, tag = 'smem constant byte address 0x4 - core index']
  #allocation1 [shape = 'u32[144,128]{1,0:T(1,128)}', space=vmem, size = 0x12000, scoped, tag = 'internal scratch']
  %s0 = inlined_call_operand.vmem [shape: bf16[1792,288], index: 0, kind: input, shape index: {}]
  %s1 = inlined_call_operand.vmem [shape: bf16[288,128], index: 1, kind: input, shape index: {}]
  %s2 = inlined_call_operand.vmem [shape: f32[1,128], index: 2, kind: input, shape index: {}]
  %s3 = inlined_call_operand.vmem [shape: bf16[1792,128], index: 3, kind: output, shape index: {}]
  %s4 = sld [smem:[#allocation0]]
  $region45: #{stem_forward.16} parent=0
    _
  %s6 = ssub.s32 1, %s4
  %s7 = scalar_select 0, %s6, %s4
  loop: start=0, step=1, limit=9
  $region2: #{stem_forward.16} parent=0 // loop_pre_header
    _
  $region3: #{stem_forward.16} parent=0 // loop_header
    %s9 = sphi 0, %s13
    %p10 = scmp.ge.s32.totalorder %s9, 9
    %s19 = sphi 0, %s21
    %s22 = sphi 0, %s19
    %s23 = sphi 0, %s22
    %s39 = sphi 0, %s23
    %s43 = sphi 0, %s43
    %s45 = sphi 0, %s43
    %s46 = sphi 0, %s45
    %s60 = sphi 0, %s46
    %s64 = sphi 0, %s64
    %s66 = sphi 0, %s64
    %s67 = sphi 0, %s66
    %s81 = sphi 0, %s67
    %s87 = sphi 0, %s89
    %s90 = sphi 0, %s87
    %s91 = sphi 0, %s90
    %s107 = sphi 0, %s91
  $region4: #{stem_forward.16} parent=0 // loop_header_branch
    %12 = sbr.rel (%p10) target = $region8
  $region5: #{stem_forward.16} parent=0 // loop_body
    %s14 = ssub.s32 %s9, 1
    %s15 = ssub.s32 %s9, 2
    %s16 = sadd.s32 %s9, 1
    %s17 = ssub.s32 %s9, %s16
    %p18 = scmp.eq.s32.totalorder %s17, 0
    %s20 = sadd.s32 %s19, 1
    %s21 = scalar_select %p18, %s19, %s20
    %p24 = pneg %p18
    %p25 = scmp.eq.s32.totalorder %s9, 6
    %p26 = por %p24, %p25
    %p27 = scmp.ne.s32.totalorder %s19, %s22
    %p28 = scmp.eq.s32.totalorder %s9, 0
    %p29 = por %p27, %p28
    %p30 = scmp.ne.s32.totalorder %s19, %s22
    %p31 = scmp.eq.s32.totalorder %s14, 6
    %p32 = por %p30, %p31
    %p33 = scmp.ne.s32.totalorder %s22, %s23
    %p34 = scmp.eq.s32.totalorder %s14, 0
    %p35 = por %p33, %p34
    %p36 = scmp.ne.s32.totalorder %s22, %s23
    %p37 = scmp.eq.s32.totalorder %s15, 6
    %p38 = por %p36, %p37
    %p40 = scmp.ne.s32.totalorder %s23, %s39
    %p41 = scmp.eq.s32.totalorder %s15, 0
    %p42 = por %p40, %p41
    %s44 = sadd.s32 %s43, 1
    %p47 = scmp.eq.s32.totalorder %s9, 6
    %p48 = scmp.ne.s32.totalorder %s43, %s45
    %p49 = scmp.eq.s32.totalorder %s9, 0
    %p50 = por %p48, %p49
    %p51 = scmp.ne.s32.totalorder %s43, %s45
    %p52 = scmp.eq.s32.totalorder %s14, 6
    %p53 = por %p51, %p52
    %p54 = scmp.ne.s32.totalorder %s45, %s46
    %p55 = scmp.eq.s32.totalorder %s14, 0
    %p56 = por %p54, %p55
    %p57 = scmp.ne.s32.totalorder %s45, %s46
    %p58 = scmp.eq.s32.totalorder %s15, 6
    %p59 = por %p57, %p58
    %p61 = scmp.ne.s32.totalorder %s46, %s60
    %p62 = scmp.eq.s32.totalorder %s15, 0
    %p63 = por %p61, %p62
    %s65 = sadd.s32 %s64, 1
    %p68 = scmp.eq.s32.totalorder %s9, 6
    %p69 = scmp.ne.s32.totalorder %s64, %s66
    %p70 = scmp.eq.s32.totalorder %s9, 0
    %p71 = por %p69, %p70
    %p72 = scmp.ne.s32.totalorder %s64, %s66
    %p73 = scmp.eq.s32.totalorder %s14, 6
    %p74 = por %p72, %p73
    %p75 = scmp.ne.s32.totalorder %s66, %s67
    %p76 = scmp.eq.s32.totalorder %s14, 0
    %p77 = por %p75, %p76
    %p78 = scmp.ne.s32.totalorder %s66, %s67
    %p79 = scmp.eq.s32.totalorder %s15, 6
    %p80 = por %p78, %p79
    %p82 = scmp.ne.s32.totalorder %s67, %s81
    %p83 = scmp.eq.s32.totalorder %s15, 0
    %p84 = por %p82, %p83
    %s85 = ssub.s32 %s9, %s16
    %p86 = scmp.eq.s32.totalorder %s85, 0
    %s88 = sadd.s32 %s87, 1
    %s89 = scalar_select %p86, %s87, %s88
    %p92 = pneg %p86
    %p93 = scmp.eq.s32.totalorder %s9, 6
    %p94 = por %p92, %p93
    %p95 = scmp.ne.s32.totalorder %s87, %s90
    %p96 = scmp.eq.s32.totalorder %s9, 0
    %p97 = por %p95, %p96
    %p98 = scmp.ne.s32.totalorder %s87, %s90
    %p99 = scmp.eq.s32.totalorder %s14, 6
    %p100 = por %p98, %p99
    %p101 = scmp.ne.s32.totalorder %s90, %s91
    %p102 = scmp.eq.s32.totalorder %s14, 0
    %p103 = por %p101, %p102
    %p104 = scmp.ne.s32.totalorder %s90, %s91
    %p105 = scmp.eq.s32.totalorder %s15, 6
    %p106 = por %p104, %p105
    %p108 = scmp.ne.s32.totalorder %s91, %s107
    %p109 = scmp.eq.s32.totalorder %s15, 0
    %p110 = por %p108, %p109
    %p111 = scmp.le.s32.totalorder 1, %s9
    %p112 = scmp.lt.s32.totalorder %s9, 8
    %p113 = pnand %p111, %p112
    %p114 = pneg %p113
    // Predicated region
    $region9: #{stem_forward.16} parent=5 // pred_check
      _
    $region10: #{stem_forward.16} parent=5 // pred_check_branch
      %116 = sbr.rel (%p113) target = $region12
    $region11: #{stem_forward.16} parent=5 // pred_region
      %s117 = ssub.s32 %s9, 1
      // Predicated region
      $region13: #{stem_forward.16} parent=11 // pred_check
        %p118 = pneg %p56
      $region14: #{stem_forward.16} parent=11 // pred_check_branch
        %120 = sbr.rel (%p118) target = $region16
      $region15: #{stem_forward.16} parent=11 // pred_region
        _
      $region16: #{stem_forward.16} parent=11 // pred_fallthru
        _
      // Predicated region
      $region17: #{stem_forward.16} parent=11 // pred_check
        %p121 = pneg %p77
      $region18: #{stem_forward.16} parent=11 // pred_check_branch
        %123 = sbr.rel (%p121) target = $region20
      $region19: #{stem_forward.16} parent=11 // pred_region
        _
      $region20: #{stem_forward.16} parent=11 // pred_fallthru
        _
    $region12: #{stem_forward.16} parent=5 // pred_fallthru
      _
    %p124 = scmp.lt.s32.totalorder %s9, 7
    // Predicated region
    $region21: #{stem_forward.16} parent=5 // pred_check
      %p125 = pneg %p124
    $region22: #{stem_forward.16} parent=5 // pred_check_branch
      %127 = sbr.rel (%p125) target = $region24
    $region23: #{stem_forward.16} parent=5 // pred_region
      // Predicated region
      $region25: #{stem_forward.16} parent=23 // pred_check
        %p128 = pneg %p29
      $region26: #{stem_forward.16} parent=23 // pred_check_branch
        %130 = sbr.rel (%p128) target = $region28
      $region27: #{stem_forward.16} parent=23 // pred_region
        %s131 = smul.u32 32, %s9
        %p132 = scmp.lt.s32.totalorder %s131, 223
        %s133 = scalar_select %p132, %s131, 223
        %s134 = smul.addr %s133, 3
        %s135 = smul.addr %s134, 4
        %s136 = scalar_lea.vmem %s0, %s135
        %s137 = smul.u32 32, %s9
      $region28: #{stem_forward.16} parent=23 // pred_fallthru
        _
    $region24: #{stem_forward.16} parent=5 // pred_fallthru
      _
    %p138 = scmp.le.s32.totalorder 1, %s9
    %p139 = scmp.lt.s32.totalorder %s9, 8
    %p140 = pnand %p138, %p139
    %p141 = pneg %p140
    // Predicated region
    $region29: #{stem_forward.16} parent=5 // pred_check
      _
    $region30: #{stem_forward.16} parent=5 // pred_check_branch
      %143 = sbr.rel (%p140) target = $region32
    $region31: #{stem_forward.16} parent=5 // pred_region
      %s144 = ssub.s32 %s9, 1
      %s145 = smul.u32 32, %s14
      %p146 = scmp.lt.s32.totalorder %s145, 223
      %s147 = scalar_select %p146, %s145, 223
      %s148 = smul.addr %s147, 3
      %s149 = smul.addr %s148, 4
      %s150 = scalar_lea.vmem %s0, %s149
      %p151 = pneg %p35
      %p152 = pneg %p32
      %p153 = pneg %p56
      %p154 = pneg %p53
      %p155 = pneg %p77
      %p156 = pneg %p74
      %p157 = pneg %p103
      %p158 = pneg %p100
      %s159 = smul.u32 32, %s14
      %p160 = scmp.lt.s32.totalorder %s159, 223
      %s161 = scalar_select %p160, %s159, 223
      %s162 = smul.addr %s161, 4
      %s163 = scalar_lea.vmem %s3, %s162
      %s164 = smul.u32 32, %s14
      %p165 = scmp.lt.s32.totalorder %s164, 223
      %s166 = scalar_select %p165, %s164, 223
      %s167 = smul.addr %s166, 3
      %s168 = smul.addr %s167, 4
      %s169 = scalar_lea.vmem %s0, %s168
      %s170 = smul.u32 32, %s14
      %s171 = smul.u32 32, %s14
      %p172 = scmp.lt.s32.totalorder %s171, 223
      %s173 = scalar_select %p172, %s171, 223
      %s174 = smul.addr %s173, 4
      %s175 = scalar_lea.vmem %s3, %s174
      %s176 = smul.u32 32, %s14
      %v178 = vld [vmem:[%s169] sm:$0xff]
      %v179 = vld [vmem:[%s169 + $0x8] sm:$0xf]
      %v180 = vld [vmem:[%s169 + $0xc] sm:$0xff]
      %v181 = vld [vmem:[%s169 + $0x14] sm:$0xf]
      %v182 = vld [vmem:[%s169 + $0x18] sm:$0xff]
      %v183 = vld [vmem:[%s169 + $0x20] sm:$0xf]
      %v184 = vld [vmem:[%s169 + $0x24] sm:$0xff]
      %v185 = vld [vmem:[%s169 + $0x2c] sm:$0xf]
      %v186 = vld [vmem:[%s169 + $0x30] sm:$0xff]
      %v187 = vld [vmem:[%s169 + $0x38] sm:$0xf]
      %v188 = vld [vmem:[%s169 + $0x3c] sm:$0xff]
      %v189 = vld [vmem:[%s169 + $0x44] sm:$0xf]
      %v190 = vld [vmem:[%s169 + $0x48] sm:$0xff]
      %v191 = vld [vmem:[%s169 + $0x50] sm:$0xf]
      %v192 = vld [vmem:[%s169 + $0x54] sm:$0xff]
      %v193 = vld [vmem:[%s169 + $0x5c] sm:$0xf]
      %v194 = vld [vmem:[%s169 + $0x60] sm:$0xff]
      %v195 = vld [vmem:[%s169 + $0x68] sm:$0xf]
      %v196 = vld [vmem:[%s169 + $0x6c] sm:$0xff]
      %v197 = vld [vmem:[%s169 + $0x74] sm:$0xf]
      %v198 = vld [vmem:[%s169 + $0x78] sm:$0xff]
      %v199 = vld [vmem:[%s169 + $0x80] sm:$0xf]
      %v200 = vld [vmem:[%s169 + $0x84] sm:$0xff]
      %v201 = vld [vmem:[%s169 + $0x8c] sm:$0xf]
      %v202 = vld [vmem:[%s169 + $0x90] sm:$0xff]
      %v203 = vld [vmem:[%s169 + $0x98] sm:$0xf]
      %v204 = vld [vmem:[%s169 + $0x9c] sm:$0xff]
      %v205 = vld [vmem:[%s169 + $0xa4] sm:$0xf]
      %v206 = vld [vmem:[%s169 + $0xa8] sm:$0xff]
      %v207 = vld [vmem:[%s169 + $0xb0] sm:$0xf]
      %v208 = vld [vmem:[%s169 + $0xb4] sm:$0xff]
      %v209 = vld [vmem:[%s169 + $0xbc] sm:$0xf]
      %v210 = vld [vmem:[%s169 + $0xc0] sm:$0xff]
      %v211 = vld [vmem:[%s169 + $0xc8] sm:$0xf]
      %v212 = vld [vmem:[%s169 + $0xcc] sm:$0xff]
      %v213 = vld [vmem:[%s169 + $0xd4] sm:$0xf]
      %v214 = vld [vmem:[%s169 + $0xd8] sm:$0xff]
      %v215 = vld [vmem:[%s169 + $0xe0] sm:$0xf]
      %v216 = vld [vmem:[%s169 + $0xe4] sm:$0xff]
      %v217 = vld [vmem:[%s169 + $0xec] sm:$0xf]
      %v218 = vld [vmem:[%s169 + $0xf0] sm:$0xff]
      %v219 = vld [vmem:[%s169 + $0xf8] sm:$0xf]
      %v220 = vld [vmem:[%s169 + $0xfc] sm:$0xff]
      %v221 = vld [vmem:[%s169 + $0x104] sm:$0xf]
      %v222 = vld [vmem:[%s169 + $0x108] sm:$0xff]
      %v223 = vld [vmem:[%s169 + $0x110] sm:$0xf]
      %v224 = vld [vmem:[%s169 + $0x114] sm:$0xff]
      %v225 = vld [vmem:[%s169 + $0x11c] sm:$0xf]
      %v226 = vld [vmem:[%s169 + $0x120] sm:$0xff]
      %v227 = vld [vmem:[%s169 + $0x128] sm:$0xf]
      %v228 = vld [vmem:[%s169 + $0x12c] sm:$0xff]
      %v229 = vld [vmem:[%s169 + $0x134] sm:$0xf]
      %v230 = vld [vmem:[%s169 + $0x138] sm:$0xff]
      %v231 = vld [vmem:[%s169 + $0x140] sm:$0xf]
      %v232 = vld [vmem:[%s169 + $0x144] sm:$0xff]
      %v233 = vld [vmem:[%s169 + $0x14c] sm:$0xf]
      %v234 = vld [vmem:[%s169 + $0x150] sm:$0xff]
      %v235 = vld [vmem:[%s169 + $0x158] sm:$0xf]
      %v236 = vld [vmem:[%s169 + $0x15c] sm:$0xff]
      %v237 = vld [vmem:[%s169 + $0x164] sm:$0xf]
      %v238 = vld [vmem:[%s169 + $0x168] sm:$0xff]
      %v239 = vld [vmem:[%s169 + $0x170] sm:$0xf]
      %v240 = vld [vmem:[%s169 + $0x174] sm:$0xff]
      %v241 = vld [vmem:[%s169 + $0x17c] sm:$0xf]
      %v242 = vld [vmem:[%s1] sm:$0xf]
      %v243 = vld [vmem:[%s1 + $0x4] sm:$0xf]
      %v244 = vld [vmem:[%s1 + $0x8] sm:$0xf]
      %v245 = vld [vmem:[%s1 + $0xc] sm:$0xf]
      %v246 = vld [vmem:[%s1 + $0x10] sm:$0xf]
      %v247 = vld [vmem:[%s1 + $0x14] sm:$0xf]
      %v248 = vld [vmem:[%s1 + $0x18] sm:$0xf]
      %v249 = vld [vmem:[%s1 + $0x1c] sm:$0xf]
      %v250 = vld [vmem:[%s1 + $0x20] sm:$0xf]
      %v251 = vld [vmem:[%s1 + $0x24] sm:$0xf]
      %v252 = vld [vmem:[%s1 + $0x28] sm:$0xf]
      %v253 = vld [vmem:[%s1 + $0x2c] sm:$0xf]
      %v254 = vld [vmem:[%s1 + $0x30] sm:$0xf]
      %v255 = vld [vmem:[%s1 + $0x34] sm:$0xf]
      %v256 = vld [vmem:[%s1 + $0x38] sm:$0xf]
      %v257 = vld [vmem:[%s1 + $0x3c] sm:$0xf]
      %v258 = vld [vmem:[%s1 + $0x40] sm:$0xf]
      %v259 = vld [vmem:[%s1 + $0x44] sm:$0xf]
      %v260 = vld [vmem:[%s1 + $0x48] sm:$0xf]
      %v261 = vld [vmem:[%s1 + $0x4c] sm:$0xf]
      %v262 = vld [vmem:[%s1 + $0x50] sm:$0xf]
      %v263 = vld [vmem:[%s1 + $0x54] sm:$0xf]
      %v264 = vld [vmem:[%s1 + $0x58] sm:$0xf]
      %v265 = vld [vmem:[%s1 + $0x5c] sm:$0xf]
      %v266 = vld [vmem:[%s1 + $0x60] sm:$0xf]
      %v267 = vld [vmem:[%s1 + $0x64] sm:$0xf]
      %v268 = vld [vmem:[%s1 + $0x68] sm:$0xf]
      %v269 = vld [vmem:[%s1 + $0x6c] sm:$0xf]
      %v270 = vld [vmem:[%s1 + $0x70] sm:$0xf]
      %v271 = vld [vmem:[%s1 + $0x74] sm:$0xf]
      %v272 = vld [vmem:[%s1 + $0x78] sm:$0xf]
      %v273 = vld [vmem:[%s1 + $0x7c] sm:$0xf]
      %v274 = vld [vmem:[%s1 + $0x80] sm:$0xf]
      %v275 = vld [vmem:[%s1 + $0x84] sm:$0xf]
      %v276 = vld [vmem:[%s1 + $0x88] sm:$0xf]
      %v277 = vld [vmem:[%s1 + $0x8c] sm:$0xf]
      %v278 = vld [vmem:[%s2] sm:$0x1]
      %v280 = vlaneseq
      %v281 = vshrl.u32 %v280, 7
      %v282 = vsub.s32 0, %v281
      %v283 = vrot.slane %v278, %v282
      %v349 = vunpack.c.l.b16 %v178
      %v350 = vunpack.c.h.b16 %v178
      %v351 = vunpack.c.l.b16 %v179
      %v352 = vunpack.c.l.b16 %v180
      %v353 = vunpack.c.h.b16 %v180
      %v354 = vunpack.c.l.b16 %v181
      %v355 = vunpack.c.l.b16 %v182
      %v356 = vunpack.c.h.b16 %v182
      %v357 = vunpack.c.l.b16 %v183
      %v358 = vunpack.c.l.b16 %v184
      %v359 = vunpack.c.h.b16 %v184
      %v360 = vunpack.c.l.b16 %v185
      %v361 = vunpack.c.l.b16 %v186
      %v362 = vunpack.c.h.b16 %v186
      %v363 = vunpack.c.l.b16 %v187
      %v364 = vunpack.c.l.b16 %v188
      %v365 = vunpack.c.h.b16 %v188
      %v366 = vunpack.c.l.b16 %v189
      %v367 = vunpack.c.l.b16 %v190
      %v368 = vunpack.c.h.b16 %v190
      %v369 = vunpack.c.l.b16 %v191
      %v370 = vunpack.c.l.b16 %v192
      %v371 = vunpack.c.h.b16 %v192
      %v372 = vunpack.c.l.b16 %v193
      %v373 = vunpack.c.l.b16 %v194
      %v374 = vunpack.c.h.b16 %v194
      %v375 = vunpack.c.l.b16 %v195
      %v376 = vunpack.c.l.b16 %v196
      %v377 = vunpack.c.h.b16 %v196
      %v378 = vunpack.c.l.b16 %v197
      %v379 = vunpack.c.l.b16 %v198
      %v380 = vunpack.c.h.b16 %v198
      %v381 = vunpack.c.l.b16 %v199
      %v382 = vunpack.c.l.b16 %v200
      %v383 = vunpack.c.h.b16 %v200
      %v384 = vunpack.c.l.b16 %v201
      %v385 = vunpack.c.l.b16 %v202
      %v386 = vunpack.c.h.b16 %v202
      %v387 = vunpack.c.l.b16 %v203
      %v388 = vunpack.c.l.b16 %v204
      %v389 = vunpack.c.h.b16 %v204
      %v390 = vunpack.c.l.b16 %v205
      %v391 = vunpack.c.l.b16 %v206
      %v392 = vunpack.c.h.b16 %v206
      %v393 = vunpack.c.l.b16 %v207
      %v394 = vunpack.c.l.b16 %v208
      %v395 = vunpack.c.h.b16 %v208
      %v396 = vunpack.c.l.b16 %v209
      %v397 = vunpack.c.l.b16 %v210
      %v398 = vunpack.c.h.b16 %v210
      %v399 = vunpack.c.l.b16 %v211
      %v400 = vunpack.c.l.b16 %v212
      %v401 = vunpack.c.h.b16 %v212
      %v402 = vunpack.c.l.b16 %v213
      %v403 = vunpack.c.l.b16 %v214
      %v404 = vunpack.c.h.b16 %v214
      %v405 = vunpack.c.l.b16 %v215
      %v406 = vunpack.c.l.b16 %v216
      %v407 = vunpack.c.h.b16 %v216
      %v408 = vunpack.c.l.b16 %v217
      %v409 = vunpack.c.l.b16 %v218
      %v410 = vunpack.c.h.b16 %v218
      %v411 = vunpack.c.l.b16 %v219
      %v412 = vunpack.c.l.b16 %v220
      %v413 = vunpack.c.h.b16 %v220
      %v414 = vunpack.c.l.b16 %v221
      %v415 = vunpack.c.l.b16 %v222
      %v416 = vunpack.c.h.b16 %v222
      %v417 = vunpack.c.l.b16 %v223
      %v418 = vunpack.c.l.b16 %v224
      %v419 = vunpack.c.h.b16 %v224
      %v420 = vunpack.c.l.b16 %v225
      %v421 = vunpack.c.l.b16 %v226
      %v422 = vunpack.c.h.b16 %v226
      %v423 = vunpack.c.l.b16 %v227
      %v424 = vunpack.c.l.b16 %v228
      %v425 = vunpack.c.h.b16 %v228
      %v426 = vunpack.c.l.b16 %v229
      %v427 = vunpack.c.l.b16 %v230
      %v428 = vunpack.c.h.b16 %v230
      %v429 = vunpack.c.l.b16 %v231
      %v430 = vunpack.c.l.b16 %v232
      %v431 = vunpack.c.h.b16 %v232
      %v432 = vunpack.c.l.b16 %v233
      %v433 = vunpack.c.l.b16 %v234
      %v434 = vunpack.c.h.b16 %v234
      %v435 = vunpack.c.l.b16 %v235
      %v436 = vunpack.c.l.b16 %v236
      %v437 = vunpack.c.h.b16 %v236
      %v438 = vunpack.c.l.b16 %v237
      %v439 = vunpack.c.l.b16 %v238
      %v440 = vunpack.c.h.b16 %v238
      %v441 = vunpack.c.l.b16 %v239
      %v442 = vunpack.c.l.b16 %v240
      %v443 = vunpack.c.h.b16 %v240
      %v444 = vunpack.c.l.b16 %v241
      %v445 = vpack.c.b16 %v352, %v349
      %v446 = vpack.c.b16 %v353, %v350
      %v447 = vpack.c.b16 %v354, %v351
      %v448 = vpack.c.b16 %v358, %v355
      %v449 = vpack.c.b16 %v359, %v356
      %v450 = vpack.c.b16 %v360, %v357
      %v451 = vpack.c.b16 %v364, %v361
      %v452 = vpack.c.b16 %v365, %v362
      %v453 = vpack.c.b16 %v366, %v363
      %v454 = vpack.c.b16 %v370, %v367
      %v455 = vpack.c.b16 %v371, %v368
      %v456 = vpack.c.b16 %v372, %v369
      %v457 = vpack.c.b16 %v376, %v373
      %v458 = vpack.c.b16 %v377, %v374
      %v459 = vpack.c.b16 %v378, %v375
      %v460 = vpack.c.b16 %v382, %v379
      %v461 = vpack.c.b16 %v383, %v380
      %v462 = vpack.c.b16 %v384, %v381
      %v463 = vpack.c.b16 %v388, %v385
      %v464 = vpack.c.b16 %v389, %v386
      %v465 = vpack.c.b16 %v390, %v387
      %v466 = vpack.c.b16 %v394, %v391
      %v467 = vpack.c.b16 %v395, %v392
      %v468 = vpack.c.b16 %v396, %v393
      %v469 = vpack.c.b16 %v400, %v397
      %v470 = vpack.c.b16 %v401, %v398
      %v471 = vpack.c.b16 %v402, %v399
      %v472 = vpack.c.b16 %v406, %v403
      %v473 = vpack.c.b16 %v407, %v404
      %v474 = vpack.c.b16 %v408, %v405
      %v475 = vpack.c.b16 %v412, %v409
      %v476 = vpack.c.b16 %v413, %v410
      %v477 = vpack.c.b16 %v414, %v411
      %v478 = vpack.c.b16 %v418, %v415
      %v479 = vpack.c.b16 %v419, %v416
      %v480 = vpack.c.b16 %v420, %v417
      %v481 = vpack.c.b16 %v424, %v421
      %v482 = vpack.c.b16 %v425, %v422
      %v483 = vpack.c.b16 %v426, %v423
      %v484 = vpack.c.b16 %v430, %v427
      %v485 = vpack.c.b16 %v431, %v428
      %v486 = vpack.c.b16 %v432, %v429
      %v487 = vpack.c.b16 %v436, %v433
      %v488 = vpack.c.b16 %v437, %v434
      %v489 = vpack.c.b16 %v438, %v435
      %v490 = vpack.c.b16 %v442, %v439
      %v491 = vpack.c.b16 %v443, %v440
      %v492 = vpack.c.b16 %v444, %v441
      %v561 = vunpack.c.l.b16 %v242
      %v562 = vunpack.c.l.b16 %v243
      %v563 = vunpack.c.l.b16 %v244
      %v564 = vunpack.c.l.b16 %v245
      %v565 = vunpack.c.l.b16 %v246
      %v566 = vunpack.c.l.b16 %v247
      %v567 = vunpack.c.l.b16 %v248
      %v568 = vunpack.c.l.b16 %v249
      %v569 = vunpack.c.l.b16 %v250
      %v570 = vunpack.c.l.b16 %v251
      %v571 = vunpack.c.l.b16 %v252
      %v572 = vunpack.c.l.b16 %v253
      %v573 = vunpack.c.l.b16 %v254
      %v574 = vunpack.c.l.b16 %v255
      %v575 = vunpack.c.l.b16 %v256
      %v576 = vunpack.c.l.b16 %v257
      %v577 = vunpack.c.l.b16 %v258
      %v578 = vunpack.c.l.b16 %v259
      %v579 = vunpack.c.l.b16 %v260
      %v580 = vunpack.c.l.b16 %v261
      %v581 = vunpack.c.l.b16 %v262
      %v582 = vunpack.c.l.b16 %v263
      %v583 = vunpack.c.l.b16 %v264
      %v584 = vunpack.c.l.b16 %v265
      %v585 = vunpack.c.l.b16 %v266
      %v586 = vunpack.c.l.b16 %v267
      %v587 = vunpack.c.l.b16 %v268
      %v588 = vunpack.c.l.b16 %v269
      %v589 = vunpack.c.l.b16 %v270
      %v590 = vunpack.c.l.b16 %v271
      %v591 = vunpack.c.l.b16 %v272
      %v592 = vunpack.c.l.b16 %v273
      %v593 = vunpack.c.l.b16 %v274
      %v594 = vunpack.c.l.b16 %v275
      %v595 = vunpack.c.l.b16 %v276
      %v596 = vunpack.c.l.b16 %v277
      %v597 = vpack.c.b16 %v562, %v561
      %v598 = vpack.c.b16 %v564, %v563
      %v599 = vpack.c.b16 %v566, %v565
      %v600 = vpack.c.b16 %v568, %v567
      %v601 = vpack.c.b16 %v570, %v569
      %v602 = vpack.c.b16 %v572, %v571
      %v603 = vpack.c.b16 %v574, %v573
      %v604 = vpack.c.b16 %v576, %v575
      %v605 = vpack.c.b16 %v578, %v577
      %v606 = vpack.c.b16 %v580, %v579
      %v607 = vpack.c.b16 %v582, %v581
      %v608 = vpack.c.b16 %v584, %v583
      %v609 = vpack.c.b16 %v586, %v585
      %v610 = vpack.c.b16 %v588, %v587
      %v611 = vpack.c.b16 %v590, %v589
      %v612 = vpack.c.b16 %v592, %v591
      %v613 = vpack.c.b16 %v594, %v593
      %v614 = vpack.c.b16 %v596, %v595
      %vm633 = vcmask 261120
      %v635 = vsel %vm633, %v447, 0
      %v638 = vsel %vm633, %v450, 0
      %v641 = vsel %vm633, %v453, 0
      %v644 = vsel %vm633, %v456, 0
      %v647 = vsel %vm633, %v459, 0
      %v650 = vsel %vm633, %v462, 0
      %v653 = vsel %vm633, %v465, 0
      %v656 = vsel %vm633, %v468, 0
      %v659 = vsel %vm633, %v471, 0
      %v662 = vsel %vm633, %v474, 0
      %v665 = vsel %vm633, %v477, 0
      %v668 = vsel %vm633, %v480, 0
      %v671 = vsel %vm633, %v483, 0
      %v674 = vsel %vm633, %v486, 0
      %v677 = vsel %vm633, %v489, 0
      %v680 = vsel %vm633, %v492, 0
      %682 = vmatprep.subr.bf16.mxu0 0
      %683 = vmatpush1.bf16.msra.mxu0 %v597
      %684 = vmatprep.subr.bf16.mxu0 0
      %685 = vmatpush1.bf16.msra.mxu0 %v598
      %686 = vmatprep.subr.bf16.mxu0 0
      %687 = vmatpush1.bf16.msra.mxu0 %v599
      %688 = vmatprep.subr.bf16.mxu0 0
      %689 = vmatpush1.bf16.msra.mxu0 %v600
      %690 = vmatprep.subr.bf16.mxu0 0
      %691 = vmatpush1.bf16.msra.mxu0 %v601
      %692 = vmatprep.subr.bf16.mxu0 0
      %693 = vmatpush1.bf16.msra.mxu0 %v602
      %694 = vmatprep.subr.bf16.mxu0 0
      %695 = vmatpush1.bf16.msra.mxu0 %v603
      %696 = vmatprep.subr.bf16.mxu0 0
      %697 = vmatpush1.bf16.msra.mxu0 %v604
      %698 = vmatprep.subr.bf16.mxu0 0
      %699 = vmatpush1.bf16.msra.mxu0 %v605
      %700 = vmatprep.subr.bf16.mxu0 0
      %701 = vmatpush1.bf16.msra.mxu0 %v606
      %702 = vmatprep.subr.bf16.mxu0 0
      %703 = vmatpush1.bf16.msra.mxu0 %v607
      %704 = vmatprep.subr.bf16.mxu0 0
      %705 = vmatpush1.bf16.msra.mxu0 %v608
      %706 = vmatprep.subr.bf16.mxu0 0
      %707 = vmatpush1.bf16.msra.mxu0 %v609
      %708 = vmatprep.subr.bf16.mxu0 0
      %709 = vmatpush1.bf16.msra.mxu0 %v610
      %710 = vmatprep.subr.bf16.mxu0 0
      %711 = vmatpush1.bf16.msra.mxu0 %v611
      %712 = vmatprep.subr.bf16.mxu0 0
      %713 = vmatpush1.bf16.msra.mxu0 %v612
      %714 = vmatprep.mubr.bf16.mxu0 %v446
      %715 = vmatmul.mubr.bf16.gmra.mrb[0].mxu0 %v445
      %v716 = vpop.f32.mrb[0].mxu0
      %v717 = vadd.f32 %v283, %v716
      %v718 = vpop.f32.mrb[0].mxu0
      %v719 = vpop.f32.mrb[0].mxu0
      %v720 = vadd.f32 %v283, %v719
      %v721 = vpop.f32.mrb[0].mxu0
      %722 = vmatprep.mubr.bf16.mxu0 %v449
      %723 = vmatmul.mubr.bf16.gmra.mrb[0].mxu0 %v448
      %v724 = vpop.f32.mrb[0].mxu0
      %v725 = vadd.f32 %v283, %v724
      %v726 = vpop.f32.mrb[0].mxu0
      %v727 = vpop.f32.mrb[0].mxu0
      %v728 = vadd.f32 %v283, %v727
      %v729 = vpop.f32.mrb[0].mxu0
      %730 = vmatprep.mubr.bf16.mxu0 %v452
      %731 = vmatmul.mubr.bf16.gmra.mrb[0].mxu0 %v451
      %v732 = vpop.f32.mrb[0].mxu0
      %v733 = vadd.f32 %v283, %v732
      %v734 = vpop.f32.mrb[0].mxu0
      %v735 = vpop.f32.mrb[0].mxu0
      %v736 = vadd.f32 %v283, %v735
      %v737 = vpop.f32.mrb[0].mxu0
      %738 = vmatprep.mubr.bf16.mxu0 %v455
      %739 = vmatmul.mubr.bf16.gmra.mrb[0].mxu0 %v454
      %v740 = vpop.f32.mrb[0].mxu0
      %v741 = vadd.f32 %v283, %v740
      %v742 = vpop.f32.mrb[0].mxu0
      %v743 = vpop.f32.mrb[0].mxu0
      %v744 = vadd.f32 %v283, %v743
      %v745 = vpop.f32.mrb[0].mxu0
      %746 = vmatprep.mubr.bf16.mxu0 %v458
      %747 = vmatmul.mubr.bf16.gmra.mrb[0].mxu0 %v457
      %v748 = vpop.f32.mrb[0].mxu0
      %v749 = vadd.f32 %v283, %v748
      %v750 = vpop.f32.mrb[0].mxu0
      %v751 = vpop.f32.mrb[0].mxu0
      %v752 = vadd.f32 %v283, %v751
      %v753 = vpop.f32.mrb[0].mxu0
      %754 = vmatprep.mubr.bf16.mxu0 %v461
      %755 = vmatmul.mubr.bf16.gmra.mrb[0].mxu0 %v460
      %v756 = vpop.f32.mrb[0].mxu0
      %v757 = vadd.f32 %v283, %v756
      %v758 = vpop.f32.mrb[0].mxu0
      %v759 = vpop.f32.mrb[0].mxu0
      %v760 = vadd.f32 %v283, %v759
      %v761 = vpop.f32.mrb[0].mxu0
      %762 = vmatprep.mubr.bf16.mxu0 %v464
      %763 = vmatmul.mubr.bf16.gmra.mrb[0].mxu0 %v463
      %v764 = vpop.f32.mrb[0].mxu0
      %v765 = vadd.f32 %v283, %v764
      %v766 = vpop.f32.mrb[0].mxu0
      %v767 = vpop.f32.mrb[0].mxu0
      %v768 = vadd.f32 %v283, %v767
      %v769 = vpop.f32.mrb[0].mxu0
      %770 = vmatprep.mubr.bf16.mxu0 %v467
      %771 = vmatmul.mubr.bf16.gmra.mrb[0].mxu0 %v466
      %v772 = vpop.f32.mrb[0].mxu0
      %v773 = vadd.f32 %v283, %v772
      %v774 = vpop.f32.mrb[0].mxu0
      %v775 = vpop.f32.mrb[0].mxu0
      %v776 = vadd.f32 %v283, %v775
      %v777 = vpop.f32.mrb[0].mxu0
      %778 = vmatprep.mubr.bf16.mxu0 %v470
      %779 = vmatmul.mubr.bf16.gmra.mrb[0].mxu0 %v469
      %v780 = vpop.f32.mrb[0].mxu0
      %v781 = vadd.f32 %v283, %v780
      %v782 = vpop.f32.mrb[0].mxu0
      %v783 = vpop.f32.mrb[0].mxu0
      %v784 = vadd.f32 %v283, %v783
      %v785 = vpop.f32.mrb[0].mxu0
      %786 = vmatprep.mubr.bf16.mxu0 %v473
      %787 = vmatmul.mubr.bf16.gmra.mrb[0].mxu0 %v472
      %v788 = vpop.f32.mrb[0].mxu0
      %v789 = vadd.f32 %v283, %v788
      %v790 = vpop.f32.mrb[0].mxu0
      %v791 = vpop.f32.mrb[0].mxu0
      %v792 = vadd.f32 %v283, %v791
      %v793 = vpop.f32.mrb[0].mxu0
      %794 = vmatprep.mubr.bf16.mxu0 %v476
      %795 = vmatmul.mubr.bf16.gmra.mrb[0].mxu0 %v475
      %v796 = vpop.f32.mrb[0].mxu0
      %v797 = vadd.f32 %v283, %v796
      %v798 = vpop.f32.mrb[0].mxu0
      %v799 = vpop.f32.mrb[0].mxu0
      %v800 = vadd.f32 %v283, %v799
      %v801 = vpop.f32.mrb[0].mxu0
      %802 = vmatprep.mubr.bf16.mxu0 %v479
      %803 = vmatmul.mubr.bf16.gmra.mrb[0].mxu0 %v478
      %v804 = vpop.f32.mrb[0].mxu0
      %v805 = vadd.f32 %v283, %v804
      %v806 = vpop.f32.mrb[0].mxu0
      %v807 = vpop.f32.mrb[0].mxu0
      %v808 = vadd.f32 %v283, %v807
      %v809 = vpop.f32.mrb[0].mxu0
      %810 = vmatprep.mubr.bf16.mxu0 %v482
      %811 = vmatmul.mubr.bf16.gmra.mrb[0].mxu0 %v481
      %v812 = vpop.f32.mrb[0].mxu0
      %v813 = vadd.f32 %v283, %v812
      %v814 = vpop.f32.mrb[0].mxu0
      %v815 = vpop.f32.mrb[0].mxu0
      %v816 = vadd.f32 %v283, %v815
      %v817 = vpop.f32.mrb[0].mxu0
      %818 = vmatprep.mubr.bf16.mxu0 %v485
      %819 = vmatmul.mubr.bf16.gmra.mrb[0].mxu0 %v484
      %v820 = vpop.f32.mrb[0].mxu0
      %v821 = vadd.f32 %v283, %v820
      %v822 = vpop.f32.mrb[0].mxu0
      %v823 = vpop.f32.mrb[0].mxu0
      %v824 = vadd.f32 %v283, %v823
      %v825 = vpop.f32.mrb[0].mxu0
      %826 = vmatprep.mubr.bf16.mxu0 %v488
      %827 = vmatmul.mubr.bf16.gmra.mrb[0].mxu0 %v487
      %v828 = vpop.f32.mrb[0].mxu0
      %v829 = vadd.f32 %v283, %v828
      %v830 = vpop.f32.mrb[0].mxu0
      %v831 = vpop.f32.mrb[0].mxu0
      %v832 = vadd.f32 %v283, %v831
      %v833 = vpop.f32.mrb[0].mxu0
      %834 = vmatprep.mubr.bf16.mxu0 %v491
      %835 = vmatmul.mubr.bf16.gmra.mrb[0].mxu0 %v490
      %v836 = vpop.f32.mrb[0].mxu0
      %v837 = vadd.f32 %v283, %v836
      %v838 = vpop.f32.mrb[0].mxu0
      %v839 = vpop.f32.mrb[0].mxu0
      %v840 = vadd.f32 %v283, %v839
      %v841 = vpop.f32.mrb[0].mxu0
      %842 = vdwg.mxu0
      %843 = vmatprep.subr.bf16.mxu0 0
      %844 = vmatpush1.bf16.msra.mxu0 %v613
      %845 = vmatprep.subr.bf16.mxu0 0
      %846 = vmatpush1.bf16.msra.mxu0 %v614
      %847 = vmatprep.subr.bf16.mxu0 0
      %848 = vmatpush1.bf16.msra.mxu0 0
      %849 = vmatprep.subr.bf16.mxu0 0
      %850 = vmatpush1.bf16.msra.mxu0 0
      %851 = vmatprep.subr.bf16.mxu0 0
      %852 = vmatpush1.bf16.msra.mxu0 0
      %853 = vmatprep.subr.bf16.mxu0 0
      %854 = vmatpush1.bf16.msra.mxu0 0
      %855 = vmatprep.subr.bf16.mxu0 0
      %856 = vmatpush1.bf16.msra.mxu0 0
      %857 = vmatprep.subr.bf16.mxu0 0
      %858 = vmatpush1.bf16.msra.mxu0 0
      %859 = vmatprep.subr.bf16.mxu0 0
      %860 = vmatpush1.bf16.msra.mxu0 0
      %861 = vmatprep.subr.bf16.mxu0 0
      %862 = vmatpush1.bf16.msra.mxu0 0
      %863 = vmatprep.subr.bf16.mxu0 0
      %864 = vmatpush1.bf16.msra.mxu0 0
      %865 = vmatprep.subr.bf16.mxu0 0
      %866 = vmatpush1.bf16.msra.mxu0 0
      %867 = vmatprep.subr.bf16.mxu0 0
      %868 = vmatpush1.bf16.msra.mxu0 0
      %869 = vmatprep.subr.bf16.mxu0 0
      %870 = vmatpush1.bf16.msra.mxu0 0
      %871 = vmatprep.subr.bf16.mxu0 0
      %872 = vmatpush1.bf16.msra.mxu0 0
      %873 = vmatprep.subr.bf16.mxu0 0
      %874 = vmatpush1.bf16.msra.mxu0 0
      %875 = vmatprep.mubr.bf16.mxu0 0
      %876 = vmatmul.mubr.bf16.gmra.mrb[0].mxu0 %v635
      %v877 = vpop.f32.mrb[0].mxu0
      %v878 = vadd.f32 %v717, %v877
      %v879 = vpop.f32.mrb[0].mxu0
      %v880 = vpop.f32.mrb[0].mxu0
      %v881 = vadd.f32 %v720, %v880
      %v882 = vpop.f32.mrb[0].mxu0
      %883 = vmatprep.mubr.bf16.mxu0 0
      %884 = vmatmul.mubr.bf16.gmra.mrb[0].mxu0 %v638
      %v885 = vpop.f32.mrb[0].mxu0
      %v886 = vadd.f32 %v725, %v885
      %v887 = vpop.f32.mrb[0].mxu0
      %v888 = vpop.f32.mrb[0].mxu0
      %v889 = vadd.f32 %v728, %v888
      %v890 = vpop.f32.mrb[0].mxu0
      %891 = vmatprep.mubr.bf16.mxu0 0
      %892 = vmatmul.mubr.bf16.gmra.mrb[0].mxu0 %v641
      %v893 = vpop.f32.mrb[0].mxu0
      %v894 = vadd.f32 %v733, %v893
      %v895 = vpop.f32.mrb[0].mxu0
      %v896 = vpop.f32.mrb[0].mxu0
      %v897 = vadd.f32 %v736, %v896
      %v898 = vpop.f32.mrb[0].mxu0
      %899 = vmatprep.mubr.bf16.mxu0 0
      %900 = vmatmul.mubr.bf16.gmra.mrb[0].mxu0 %v644
      %v901 = vpop.f32.mrb[0].mxu0
      %v902 = vadd.f32 %v741, %v901
      %v903 = vpop.f32.mrb[0].mxu0
      %v904 = vpop.f32.mrb[0].mxu0
      %v905 = vadd.f32 %v744, %v904
      %v906 = vpop.f32.mrb[0].mxu0
      %907 = vmatprep.mubr.bf16.mxu0 0
      %908 = vmatmul.mubr.bf16.gmra.mrb[0].mxu0 %v647
      %v909 = vpop.f32.mrb[0].mxu0
      %v910 = vadd.f32 %v749, %v909
      %v911 = vpop.f32.mrb[0].mxu0
      %v912 = vpop.f32.mrb[0].mxu0
      %v913 = vadd.f32 %v752, %v912
      %v914 = vpop.f32.mrb[0].mxu0
      %915 = vmatprep.mubr.bf16.mxu0 0
      %916 = vmatmul.mubr.bf16.gmra.mrb[0].mxu0 %v650
      %v917 = vpop.f32.mrb[0].mxu0
      %v918 = vadd.f32 %v757, %v917
      %v919 = vpop.f32.mrb[0].mxu0
      %v920 = vpop.f32.mrb[0].mxu0
      %v921 = vadd.f32 %v760, %v920
      %v922 = vpop.f32.mrb[0].mxu0
      %923 = vmatprep.mubr.bf16.mxu0 0
      %924 = vmatmul.mubr.bf16.gmra.mrb[0].mxu0 %v653
      %v925 = vpop.f32.mrb[0].mxu0
      %v926 = vadd.f32 %v765, %v925
      %v927 = vpop.f32.mrb[0].mxu0
      %v928 = vpop.f32.mrb[0].mxu0
      %v929 = vadd.f32 %v768, %v928
      %v930 = vpop.f32.mrb[0].mxu0
      %931 = vmatprep.mubr.bf16.mxu0 0
      %932 = vmatmul.mubr.bf16.gmra.mrb[0].mxu0 %v656
      %v933 = vpop.f32.mrb[0].mxu0
      %v934 = vadd.f32 %v773, %v933
      %v935 = vpop.f32.mrb[0].mxu0
      %v936 = vpop.f32.mrb[0].mxu0
      %v937 = vadd.f32 %v776, %v936
      %v938 = vpop.f32.mrb[0].mxu0
      %939 = vmatprep.mubr.bf16.mxu0 0
      %940 = vmatmul.mubr.bf16.gmra.mrb[0].mxu0 %v659
      %v941 = vpop.f32.mrb[0].mxu0
      %v942 = vadd.f32 %v781, %v941
      %v943 = vpop.f32.mrb[0].mxu0
      %v944 = vpop.f32.mrb[0].mxu0
      %v945 = vadd.f32 %v784, %v944
      %v946 = vpop.f32.mrb[0].mxu0
      %947 = vmatprep.mubr.bf16.mxu0 0
      %948 = vmatmul.mubr.bf16.gmra.mrb[0].mxu0 %v662
      %v949 = vpop.f32.mrb[0].mxu0
      %v950 = vadd.f32 %v789, %v949
      %v951 = vpop.f32.mrb[0].mxu0
      %v952 = vpop.f32.mrb[0].mxu0
      %v953 = vadd.f32 %v792, %v952
      %v954 = vpop.f32.mrb[0].mxu0
      %955 = vmatprep.mubr.bf16.mxu0 0
      %956 = vmatmul.mubr.bf16.gmra.mrb[0].mxu0 %v665
      %v957 = vpop.f32.mrb[0].mxu0
      %v958 = vadd.f32 %v797, %v957
      %v959 = vpop.f32.mrb[0].mxu0
      %v960 = vpop.f32.mrb[0].mxu0
      %v961 = vadd.f32 %v800, %v960
      %v962 = vpop.f32.mrb[0].mxu0
      %963 = vmatprep.mubr.bf16.mxu0 0
      %964 = vmatmul.mubr.bf16.gmra.mrb[0].mxu0 %v668
      %v965 = vpop.f32.mrb[0].mxu0
      %v966 = vadd.f32 %v805, %v965
      %v967 = vpop.f32.mrb[0].mxu0
      %v968 = vpop.f32.mrb[0].mxu0
      %v969 = vadd.f32 %v808, %v968
      %v970 = vpop.f32.mrb[0].mxu0
      %971 = vmatprep.mubr.bf16.mxu0 0
      %972 = vmatmul.mubr.bf16.gmra.mrb[0].mxu0 %v671
      %v973 = vpop.f32.mrb[0].mxu0
      %v974 = vadd.f32 %v813, %v973
      %v975 = vpop.f32.mrb[0].mxu0
      %v976 = vpop.f32.mrb[0].mxu0
      %v977 = vadd.f32 %v816, %v976
      %v978 = vpop.f32.mrb[0].mxu0
      %979 = vmatprep.mubr.bf16.mxu0 0
      %980 = vmatmul.mubr.bf16.gmra.mrb[0].mxu0 %v674
      %v981 = vpop.f32.mrb[0].mxu0
      %v982 = vadd.f32 %v821, %v981
      %v983 = vpop.f32.mrb[0].mxu0
      %v984 = vpop.f32.mrb[0].mxu0
      %v985 = vadd.f32 %v824, %v984
      %v986 = vpop.f32.mrb[0].mxu0
      %987 = vmatprep.mubr.bf16.mxu0 0
      %988 = vmatmul.mubr.bf16.gmra.mrb[0].mxu0 %v677
      %v989 = vpop.f32.mrb[0].mxu0
      %v990 = vadd.f32 %v829, %v989
      %v991 = vpop.f32.mrb[0].mxu0
      %v992 = vpop.f32.mrb[0].mxu0
      %v993 = vadd.f32 %v832, %v992
      %v994 = vpop.f32.mrb[0].mxu0
      %995 = vmatprep.mubr.bf16.mxu0 0
      %996 = vmatmul.mubr.bf16.gmra.mrb[0].mxu0 %v680
      %v997 = vpop.f32.mrb[0].mxu0
      %v998 = vadd.f32 %v837, %v997
      %v999 = vpop.f32.mrb[0].mxu0
      %v1000 = vpop.f32.mrb[0].mxu0
      %v1001 = vadd.f32 %v840, %v1000
      %v1002 = vpop.f32.mrb[0].mxu0
      %1003 = vdwg.mxu0
      %v1004 = vmax.f32 %v878, 0.0
      %v1005 = vmax.f32 %v881, 0.0
      %v1006 = vmax.f32 %v886, 0.0
      %v1007 = vmax.f32 %v889, 0.0
      %v1008 = vmax.f32 %v894, 0.0
      %v1009 = vmax.f32 %v897, 0.0
      %v1010 = vmax.f32 %v902, 0.0
      %v1011 = vmax.f32 %v905, 0.0
      %v1012 = vmax.f32 %v910, 0.0
      %v1013 = vmax.f32 %v913, 0.0
      %v1014 = vmax.f32 %v918, 0.0
      %v1015 = vmax.f32 %v921, 0.0
      %v1016 = vmax.f32 %v926, 0.0
      %v1017 = vmax.f32 %v929, 0.0
      %v1018 = vmax.f32 %v934, 0.0
      %v1019 = vmax.f32 %v937, 0.0
      %v1020 = vmax.f32 %v942, 0.0
      %v1021 = vmax.f32 %v945, 0.0
      %v1022 = vmax.f32 %v950, 0.0
      %v1023 = vmax.f32 %v953, 0.0
      %v1024 = vmax.f32 %v958, 0.0
      %v1025 = vmax.f32 %v961, 0.0
      %v1026 = vmax.f32 %v966, 0.0
      %v1027 = vmax.f32 %v969, 0.0
      %v1028 = vmax.f32 %v974, 0.0
      %v1029 = vmax.f32 %v977, 0.0
      %v1030 = vmax.f32 %v982, 0.0
      %v1031 = vmax.f32 %v985, 0.0
      %v1032 = vmax.f32 %v990, 0.0
      %v1033 = vmax.f32 %v993, 0.0
      %v1034 = vmax.f32 %v998, 0.0
      %v1035 = vmax.f32 %v1001, 0.0
      %v1036 = vpack.c.bf16 %v1005, %v1004
      %v1037 = vpack.c.bf16 %v1007, %v1006
      %v1038 = vpack.c.bf16 %v1009, %v1008
      %v1039 = vpack.c.bf16 %v1011, %v1010
      %v1040 = vpack.c.bf16 %v1013, %v1012
      %v1041 = vpack.c.bf16 %v1015, %v1014
      %v1042 = vpack.c.bf16 %v1017, %v1016
      %v1043 = vpack.c.bf16 %v1019, %v1018
      %v1044 = vpack.c.bf16 %v1021, %v1020
      %v1045 = vpack.c.bf16 %v1023, %v1022
      %v1046 = vpack.c.bf16 %v1025, %v1024
      %v1047 = vpack.c.bf16 %v1027, %v1026
      %v1048 = vpack.c.bf16 %v1029, %v1028
      %v1049 = vpack.c.bf16 %v1031, %v1030
      %v1050 = vpack.c.bf16 %v1033, %v1032
      %v1051 = vpack.c.bf16 %v1035, %v1034
      %v1068 = vunpack.c.l.b16 %v1036
      %v1069 = vunpack.c.h.b16 %v1036
      %v1070 = vunpack.c.l.b16 %v1037
      %v1071 = vunpack.c.h.b16 %v1037
      %v1072 = vunpack.c.l.b16 %v1038
      %v1073 = vunpack.c.h.b16 %v1038
      %v1074 = vunpack.c.l.b16 %v1039
      %v1075 = vunpack.c.h.b16 %v1039
      %v1076 = vunpack.c.l.b16 %v1040
      %v1077 = vunpack.c.h.b16 %v1040
      %v1078 = vunpack.c.l.b16 %v1041
      %v1079 = vunpack.c.h.b16 %v1041
      %v1080 = vunpack.c.l.b16 %v1042
      %v1081 = vunpack.c.h.b16 %v1042
      %v1082 = vunpack.c.l.b16 %v1043
      %v1083 = vunpack.c.h.b16 %v1043
      %v1084 = vunpack.c.l.b16 %v1044
      %v1085 = vunpack.c.h.b16 %v1044
      %v1086 = vunpack.c.l.b16 %v1045
      %v1087 = vunpack.c.h.b16 %v1045
      %v1088 = vunpack.c.l.b16 %v1046
      %v1089 = vunpack.c.h.b16 %v1046
      %v1090 = vunpack.c.l.b16 %v1047
      %v1091 = vunpack.c.h.b16 %v1047
      %v1092 = vunpack.c.l.b16 %v1048
      %v1093 = vunpack.c.h.b16 %v1048
      %v1094 = vunpack.c.l.b16 %v1049
      %v1095 = vunpack.c.h.b16 %v1049
      %v1096 = vunpack.c.l.b16 %v1050
      %v1097 = vunpack.c.h.b16 %v1050
      %v1098 = vunpack.c.l.b16 %v1051
      %v1099 = vunpack.c.h.b16 %v1051
      %v1100 = vpack.c.b16 %v1068, %v1068
      %v1101 = vpack.c.b16 %v1069, %v1069
      %v1102 = vpack.c.b16 %v1070, %v1070
      %v1103 = vpack.c.b16 %v1071, %v1071
      %v1104 = vpack.c.b16 %v1072, %v1072
      %v1105 = vpack.c.b16 %v1073, %v1073
      %v1106 = vpack.c.b16 %v1074, %v1074
      %v1107 = vpack.c.b16 %v1075, %v1075
      %v1108 = vpack.c.b16 %v1076, %v1076
      %v1109 = vpack.c.b16 %v1077, %v1077
      %v1110 = vpack.c.b16 %v1078, %v1078
      %v1111 = vpack.c.b16 %v1079, %v1079
      %v1112 = vpack.c.b16 %v1080, %v1080
      %v1113 = vpack.c.b16 %v1081, %v1081
      %v1114 = vpack.c.b16 %v1082, %v1082
      %v1115 = vpack.c.b16 %v1083, %v1083
      %v1116 = vpack.c.b16 %v1084, %v1084
      %v1117 = vpack.c.b16 %v1085, %v1085
      %v1118 = vpack.c.b16 %v1086, %v1086
      %v1119 = vpack.c.b16 %v1087, %v1087
      %v1120 = vpack.c.b16 %v1088, %v1088
      %v1121 = vpack.c.b16 %v1089, %v1089
      %v1122 = vpack.c.b16 %v1090, %v1090
      %v1123 = vpack.c.b16 %v1091, %v1091
      %v1124 = vpack.c.b16 %v1092, %v1092
      %v1125 = vpack.c.b16 %v1093, %v1093
      %v1126 = vpack.c.b16 %v1094, %v1094
      %v1127 = vpack.c.b16 %v1095, %v1095
      %v1128 = vpack.c.b16 %v1096, %v1096
      %v1129 = vpack.c.b16 %v1097, %v1097
      %v1130 = vpack.c.b16 %v1098, %v1098
      %v1131 = vpack.c.b16 %v1099, %v1099
      %1164 = vst [vmem:[%s175] sm:$0xf] %v1100
      %1165 = vst [vmem:[%s175 + $0x4] sm:$0xf] %v1101
      %1166 = vst [vmem:[%s175 + $0x8] sm:$0xf] %v1102
      %1167 = vst [vmem:[%s175 + $0xc] sm:$0xf] %v1103
      %1168 = vst [vmem:[%s175 + $0x10] sm:$0xf] %v1104
      %1169 = vst [vmem:[%s175 + $0x14] sm:$0xf] %v1105
      %1170 = vst [vmem:[%s175 + $0x18] sm:$0xf] %v1106
      %1171 = vst [vmem:[%s175 + $0x1c] sm:$0xf] %v1107
      %1172 = vst [vmem:[%s175 + $0x20] sm:$0xf] %v1108
      %1173 = vst [vmem:[%s175 + $0x24] sm:$0xf] %v1109
      %1174 = vst [vmem:[%s175 + $0x28] sm:$0xf] %v1110
      %1175 = vst [vmem:[%s175 + $0x2c] sm:$0xf] %v1111
      %1176 = vst [vmem:[%s175 + $0x30] sm:$0xf] %v1112
      %1177 = vst [vmem:[%s175 + $0x34] sm:$0xf] %v1113
      %1178 = vst [vmem:[%s175 + $0x38] sm:$0xf] %v1114
      %1179 = vst [vmem:[%s175 + $0x3c] sm:$0xf] %v1115
      %1180 = vst [vmem:[%s175 + $0x40] sm:$0xf] %v1116
      %1181 = vst [vmem:[%s175 + $0x44] sm:$0xf] %v1117
      %1182 = vst [vmem:[%s175 + $0x48] sm:$0xf] %v1118
      %1183 = vst [vmem:[%s175 + $0x4c] sm:$0xf] %v1119
      %1184 = vst [vmem:[%s175 + $0x50] sm:$0xf] %v1120
      %1185 = vst [vmem:[%s175 + $0x54] sm:$0xf] %v1121
      %1186 = vst [vmem:[%s175 + $0x58] sm:$0xf] %v1122
      %1187 = vst [vmem:[%s175 + $0x5c] sm:$0xf] %v1123
      %1188 = vst [vmem:[%s175 + $0x60] sm:$0xf] %v1124
      %1189 = vst [vmem:[%s175 + $0x64] sm:$0xf] %v1125
      %1190 = vst [vmem:[%s175 + $0x68] sm:$0xf] %v1126
      %1191 = vst [vmem:[%s175 + $0x6c] sm:$0xf] %v1127
      %1192 = vst [vmem:[%s175 + $0x70] sm:$0xf] %v1128
      %1193 = vst [vmem:[%s175 + $0x74] sm:$0xf] %v1129
      %1194 = vst [vmem:[%s175 + $0x78] sm:$0xf] %v1130
      %1195 = vst [vmem:[%s175 + $0x7c] sm:$0xf] %v1131
      %s1196 = smul.u32 32, %s14
      %p1197 = scmp.lt.s32.totalorder %s1196, 223
      %s1198 = scalar_select %p1197, %s1196, 223
      %s1199 = smul.addr %s1198, 4
      %s1200 = scalar_lea.vmem %s3, %s1199
      // Predicated region
      $region33: #{stem_forward.16} parent=31 // pred_check
        %p1201 = pneg %p100
      $region34: #{stem_forward.16} parent=31 // pred_check_branch
        %1203 = sbr.rel (%p1201) target = $region36
      $region35: #{stem_forward.16} parent=31 // pred_region
        %s1204 = smul.u32 32, %s14
      $region36: #{stem_forward.16} parent=31 // pred_fallthru
        _
    $region32: #{stem_forward.16} parent=5 // pred_fallthru
      _
    %p1205 = scmp.le.s32.totalorder 2, %s9
    // Predicated region
    $region37: #{stem_forward.16} parent=5 // pred_check
      %p1206 = pneg %p1205
    $region38: #{stem_forward.16} parent=5 // pred_check_branch
      %1208 = sbr.rel (%p1206) target = $region40
    $region39: #{stem_forward.16} parent=5 // pred_region
      %s1209 = ssub.s32 %s9, 2
      // Predicated region
      $region41: #{stem_forward.16} parent=39 // pred_check
        %p1210 = pneg %p106
      $region42: #{stem_forward.16} parent=39 // pred_check_branch
        %1212 = sbr.rel (%p1210) target = $region44
      $region43: #{stem_forward.16} parent=39 // pred_region
        %s1213 = smul.u32 32, %s15
        %p1214 = scmp.lt.s32.totalorder %s1213, 223
        %s1215 = scalar_select %p1214, %s1213, 223
        %s1216 = smul.addr %s1215, 4
        %s1217 = scalar_lea.vmem %s3, %s1216
      $region44: #{stem_forward.16} parent=39 // pred_fallthru
        _
    $region40: #{stem_forward.16} parent=5 // pred_fallthru
      _
  $region6: #{stem_forward.16} parent=0 // loop_footer
    %s13 = sadd.s32 1, %s9
  $region7: #{stem_forward.16} parent=0 // loop_footer_branch
    %8 = sbr.rel target = $region3
  $region8: #{stem_forward.16} parent=0 // loop_exit
    _

// kernel: stem_forward.19
$region0: #{stem_forward.19}
  #allocation0 [shape = 'u32[]', space=smem, size = 0x4, offset = 0x4, fixed_abs, tag = 'smem constant byte address 0x4 - core index']
  #allocation1 [shape = 'u32[144,128]{1,0:T(1,128)}', space=vmem, size = 0x12000, scoped, tag = 'internal scratch']
  %s0 = inlined_call_operand.vmem [shape: bf16[512,64], index: 0, kind: input, shape index: {}]
  %s1 = inlined_call_operand.vmem [shape: bf16[64,128], index: 1, kind: input, shape index: {}]
  %s2 = inlined_call_operand.vmem [shape: f32[1,128], index: 2, kind: input, shape index: {}]
  %s3 = inlined_call_operand.vmem [shape: bf16[512,128], index: 3, kind: output, shape index: {}]
  %s4 = sld [smem:[#allocation0]]
  $region45: #{stem_forward.19} parent=0
    _
  %s6 = ssub.s32 1, %s4
  %s7 = scalar_select 0, %s6, %s4
  loop: start=0, step=1, limit=4
  $region2: #{stem_forward.19} parent=0 // loop_pre_header
    _
  $region3: #{stem_forward.19} parent=0 // loop_header
    %s9 = sphi 0, %s13
    %p10 = scmp.ge.s32.totalorder %s9, 4
    %s19 = sphi 0, %s21
    %s22 = sphi 0, %s19
    %s23 = sphi 0, %s22
    %s39 = sphi 0, %s23
    %s43 = sphi 0, %s43
    %s45 = sphi 0, %s43
    %s46 = sphi 0, %s45
    %s60 = sphi 0, %s46
    %s64 = sphi 0, %s64
    %s66 = sphi 0, %s64
    %s67 = sphi 0, %s66
    %s81 = sphi 0, %s67
    %s87 = sphi 0, %s89
    %s90 = sphi 0, %s87
    %s91 = sphi 0, %s90
    %s107 = sphi 0, %s91
  $region4: #{stem_forward.19} parent=0 // loop_header_branch
    %12 = sbr.rel (%p10) target = $region8
  $region5: #{stem_forward.19} parent=0 // loop_body
    %s14 = ssub.s32 %s9, 1
    %s15 = ssub.s32 %s9, 2
    %s16 = sadd.s32 %s9, 1
    %s17 = ssub.s32 %s9, %s16
    %p18 = scmp.eq.s32.totalorder %s17, 0
    %s20 = sadd.s32 %s19, 1
    %s21 = scalar_select %p18, %s19, %s20
    %p24 = pneg %p18
    %p25 = scmp.eq.s32.totalorder %s9, 1
    %p26 = por %p24, %p25
    %p27 = scmp.ne.s32.totalorder %s19, %s22
    %p28 = scmp.eq.s32.totalorder %s9, 0
    %p29 = por %p27, %p28
    %p30 = scmp.ne.s32.totalorder %s19, %s22
    %p31 = scmp.eq.s32.totalorder %s14, 1
    %p32 = por %p30, %p31
    %p33 = scmp.ne.s32.totalorder %s22, %s23
    %p34 = scmp.eq.s32.totalorder %s14, 0
    %p35 = por %p33, %p34
    %p36 = scmp.ne.s32.totalorder %s22, %s23
    %p37 = scmp.eq.s32.totalorder %s15, 1
    %p38 = por %p36, %p37
    %p40 = scmp.ne.s32.totalorder %s23, %s39
    %p41 = scmp.eq.s32.totalorder %s15, 0
    %p42 = por %p40, %p41
    %s44 = sadd.s32 %s43, 1
    %p47 = scmp.eq.s32.totalorder %s9, 1
    %p48 = scmp.ne.s32.totalorder %s43, %s45
    %p49 = scmp.eq.s32.totalorder %s9, 0
    %p50 = por %p48, %p49
    %p51 = scmp.ne.s32.totalorder %s43, %s45
    %p52 = scmp.eq.s32.totalorder %s14, 1
    %p53 = por %p51, %p52
    %p54 = scmp.ne.s32.totalorder %s45, %s46
    %p55 = scmp.eq.s32.totalorder %s14, 0
    %p56 = por %p54, %p55
    %p57 = scmp.ne.s32.totalorder %s45, %s46
    %p58 = scmp.eq.s32.totalorder %s15, 1
    %p59 = por %p57, %p58
    %p61 = scmp.ne.s32.totalorder %s46, %s60
    %p62 = scmp.eq.s32.totalorder %s15, 0
    %p63 = por %p61, %p62
    %s65 = sadd.s32 %s64, 1
    %p68 = scmp.eq.s32.totalorder %s9, 1
    %p69 = scmp.ne.s32.totalorder %s64, %s66
    %p70 = scmp.eq.s32.totalorder %s9, 0
    %p71 = por %p69, %p70
    %p72 = scmp.ne.s32.totalorder %s64, %s66
    %p73 = scmp.eq.s32.totalorder %s14, 1
    %p74 = por %p72, %p73
    %p75 = scmp.ne.s32.totalorder %s66, %s67
    %p76 = scmp.eq.s32.totalorder %s14, 0
    %p77 = por %p75, %p76
    %p78 = scmp.ne.s32.totalorder %s66, %s67
    %p79 = scmp.eq.s32.totalorder %s15, 1
    %p80 = por %p78, %p79
    %p82 = scmp.ne.s32.totalorder %s67, %s81
    %p83 = scmp.eq.s32.totalorder %s15, 0
    %p84 = por %p82, %p83
    %s85 = ssub.s32 %s9, %s16
    %p86 = scmp.eq.s32.totalorder %s85, 0
    %s88 = sadd.s32 %s87, 1
    %s89 = scalar_select %p86, %s87, %s88
    %p92 = pneg %p86
    %p93 = scmp.eq.s32.totalorder %s9, 1
    %p94 = por %p92, %p93
    %p95 = scmp.ne.s32.totalorder %s87, %s90
    %p96 = scmp.eq.s32.totalorder %s9, 0
    %p97 = por %p95, %p96
    %p98 = scmp.ne.s32.totalorder %s87, %s90
    %p99 = scmp.eq.s32.totalorder %s14, 1
    %p100 = por %p98, %p99
    %p101 = scmp.ne.s32.totalorder %s90, %s91
    %p102 = scmp.eq.s32.totalorder %s14, 0
    %p103 = por %p101, %p102
    %p104 = scmp.ne.s32.totalorder %s90, %s91
    %p105 = scmp.eq.s32.totalorder %s15, 1
    %p106 = por %p104, %p105
    %p108 = scmp.ne.s32.totalorder %s91, %s107
    %p109 = scmp.eq.s32.totalorder %s15, 0
    %p110 = por %p108, %p109
    %p111 = scmp.le.s32.totalorder 1, %s9
    %p112 = scmp.lt.s32.totalorder %s9, 3
    %p113 = pnand %p111, %p112
    %p114 = pneg %p113
    // Predicated region
    $region9: #{stem_forward.19} parent=5 // pred_check
      _
    $region10: #{stem_forward.19} parent=5 // pred_check_branch
      %116 = sbr.rel (%p113) target = $region12
    $region11: #{stem_forward.19} parent=5 // pred_region
      %s117 = ssub.s32 %s9, 1
      // Predicated region
      $region13: #{stem_forward.19} parent=11 // pred_check
        %p118 = pneg %p56
      $region14: #{stem_forward.19} parent=11 // pred_check_branch
        %120 = sbr.rel (%p118) target = $region16
      $region15: #{stem_forward.19} parent=11 // pred_region
        _
      $region16: #{stem_forward.19} parent=11 // pred_fallthru
        _
      // Predicated region
      $region17: #{stem_forward.19} parent=11 // pred_check
        %p121 = pneg %p77
      $region18: #{stem_forward.19} parent=11 // pred_check_branch
        %123 = sbr.rel (%p121) target = $region20
      $region19: #{stem_forward.19} parent=11 // pred_region
        _
      $region20: #{stem_forward.19} parent=11 // pred_fallthru
        _
    $region12: #{stem_forward.19} parent=5 // pred_fallthru
      _
    %p124 = scmp.lt.s32.totalorder %s9, 2
    // Predicated region
    $region21: #{stem_forward.19} parent=5 // pred_check
      %p125 = pneg %p124
    $region22: #{stem_forward.19} parent=5 // pred_check_branch
      %127 = sbr.rel (%p125) target = $region24
    $region23: #{stem_forward.19} parent=5 // pred_region
      // Predicated region
      $region25: #{stem_forward.19} parent=23 // pred_check
        %p128 = pneg %p29
      $region26: #{stem_forward.19} parent=23 // pred_check_branch
        %130 = sbr.rel (%p128) target = $region28
      $region27: #{stem_forward.19} parent=23 // pred_region
        %s131 = smul.u32 32, %s9
        %p132 = scmp.lt.s32.totalorder %s131, 63
        %s133 = scalar_select %p132, %s131, 63
        %s134 = smul.addr %s133, 4
        %s135 = scalar_lea.vmem %s0, %s134
        %s136 = smul.u32 32, %s9
      $region28: #{stem_forward.19} parent=23 // pred_fallthru
        _
    $region24: #{stem_forward.19} parent=5 // pred_fallthru
      _
    %p137 = scmp.le.s32.totalorder 1, %s9
    %p138 = scmp.lt.s32.totalorder %s9, 3
    %p139 = pnand %p137, %p138
    %p140 = pneg %p139
    // Predicated region
    $region29: #{stem_forward.19} parent=5 // pred_check
      _
    $region30: #{stem_forward.19} parent=5 // pred_check_branch
      %142 = sbr.rel (%p139) target = $region32
    $region31: #{stem_forward.19} parent=5 // pred_region
      %s143 = ssub.s32 %s9, 1
      %s144 = smul.u32 32, %s14
      %p145 = scmp.lt.s32.totalorder %s144, 63
      %s146 = scalar_select %p145, %s144, 63
      %s147 = smul.addr %s146, 4
      %s148 = scalar_lea.vmem %s0, %s147
      %p149 = pneg %p35
      %p150 = pneg %p32
      %p151 = pneg %p56
      %p152 = pneg %p53
      %p153 = pneg %p77
      %p154 = pneg %p74
      %p155 = pneg %p103
      %p156 = pneg %p100
      %s157 = smul.u32 32, %s14
      %p158 = scmp.lt.s32.totalorder %s157, 63
      %s159 = scalar_select %p158, %s157, 63
      %s160 = smul.addr %s159, 4
      %s161 = scalar_lea.vmem %s3, %s160
      %s162 = smul.u32 32, %s14
      %p163 = scmp.lt.s32.totalorder %s162, 63
      %s164 = scalar_select %p163, %s162, 63
      %s165 = smul.addr %s164, 4
      %s166 = scalar_lea.vmem %s0, %s165
      %s167 = smul.u32 32, %s14
      %s168 = smul.u32 32, %s14
      %p169 = scmp.lt.s32.totalorder %s168, 63
      %s170 = scalar_select %p169, %s168, 63
      %s171 = smul.addr %s170, 4
      %s172 = scalar_lea.vmem %s3, %s171
      %s173 = smul.u32 32, %s14
      %v175 = vld [vmem:[%s166] sm:$0xf]
      %v176 = vld [vmem:[%s166 + $0x4] sm:$0xf]
      %v177 = vld [vmem:[%s166 + $0x8] sm:$0xf]
      %v178 = vld [vmem:[%s166 + $0xc] sm:$0xf]
      %v179 = vld [vmem:[%s166 + $0x10] sm:$0xf]
      %v180 = vld [vmem:[%s166 + $0x14] sm:$0xf]
      %v181 = vld [vmem:[%s166 + $0x18] sm:$0xf]
      %v182 = vld [vmem:[%s166 + $0x1c] sm:$0xf]
      %v183 = vld [vmem:[%s166 + $0x20] sm:$0xf]
      %v184 = vld [vmem:[%s166 + $0x24] sm:$0xf]
      %v185 = vld [vmem:[%s166 + $0x28] sm:$0xf]
      %v186 = vld [vmem:[%s166 + $0x2c] sm:$0xf]
      %v187 = vld [vmem:[%s166 + $0x30] sm:$0xf]
      %v188 = vld [vmem:[%s166 + $0x34] sm:$0xf]
      %v189 = vld [vmem:[%s166 + $0x38] sm:$0xf]
      %v190 = vld [vmem:[%s166 + $0x3c] sm:$0xf]
      %v191 = vld [vmem:[%s166 + $0x40] sm:$0xf]
      %v192 = vld [vmem:[%s166 + $0x44] sm:$0xf]
      %v193 = vld [vmem:[%s166 + $0x48] sm:$0xf]
      %v194 = vld [vmem:[%s166 + $0x4c] sm:$0xf]
      %v195 = vld [vmem:[%s166 + $0x50] sm:$0xf]
      %v196 = vld [vmem:[%s166 + $0x54] sm:$0xf]
      %v197 = vld [vmem:[%s166 + $0x58] sm:$0xf]
      %v198 = vld [vmem:[%s166 + $0x5c] sm:$0xf]
      %v199 = vld [vmem:[%s166 + $0x60] sm:$0xf]
      %v200 = vld [vmem:[%s166 + $0x64] sm:$0xf]
      %v201 = vld [vmem:[%s166 + $0x68] sm:$0xf]
      %v202 = vld [vmem:[%s166 + $0x6c] sm:$0xf]
      %v203 = vld [vmem:[%s166 + $0x70] sm:$0xf]
      %v204 = vld [vmem:[%s166 + $0x74] sm:$0xf]
      %v205 = vld [vmem:[%s166 + $0x78] sm:$0xf]
      %v206 = vld [vmem:[%s166 + $0x7c] sm:$0xf]
      %v207 = vld [vmem:[%s1] sm:$0xf]
      %v208 = vld [vmem:[%s1 + $0x4] sm:$0xf]
      %v209 = vld [vmem:[%s1 + $0x8] sm:$0xf]
      %v210 = vld [vmem:[%s1 + $0xc] sm:$0xf]
      %v211 = vld [vmem:[%s1 + $0x10] sm:$0xf]
      %v212 = vld [vmem:[%s1 + $0x14] sm:$0xf]
      %v213 = vld [vmem:[%s1 + $0x18] sm:$0xf]
      %v214 = vld [vmem:[%s1 + $0x1c] sm:$0xf]
      %v215 = vld [vmem:[%s2] sm:$0x1]
      %v217 = vlaneseq
      %v218 = vshrl.u32 %v217, 7
      %v219 = vsub.s32 0, %v218
      %v220 = vrot.slane %v215, %v219
      %v254 = vunpack.c.l.b16 %v175
      %v255 = vunpack.c.l.b16 %v176
      %v256 = vunpack.c.l.b16 %v177
      %v257 = vunpack.c.l.b16 %v178
      %v258 = vunpack.c.l.b16 %v179
      %v259 = vunpack.c.l.b16 %v180
      %v260 = vunpack.c.l.b16 %v181
      %v261 = vunpack.c.l.b16 %v182
      %v262 = vunpack.c.l.b16 %v183
      %v263 = vunpack.c.l.b16 %v184
      %v264 = vunpack.c.l.b16 %v185
      %v265 = vunpack.c.l.b16 %v186
      %v266 = vunpack.c.l.b16 %v187
      %v267 = vunpack.c.l.b16 %v188
      %v268 = vunpack.c.l.b16 %v189
      %v269 = vunpack.c.l.b16 %v190
      %v270 = vunpack.c.l.b16 %v191
      %v271 = vunpack.c.l.b16 %v192
      %v272 = vunpack.c.l.b16 %v193
      %v273 = vunpack.c.l.b16 %v194
      %v274 = vunpack.c.l.b16 %v195
      %v275 = vunpack.c.l.b16 %v196
      %v276 = vunpack.c.l.b16 %v197
      %v277 = vunpack.c.l.b16 %v198
      %v278 = vunpack.c.l.b16 %v199
      %v279 = vunpack.c.l.b16 %v200
      %v280 = vunpack.c.l.b16 %v201
      %v281 = vunpack.c.l.b16 %v202
      %v282 = vunpack.c.l.b16 %v203
      %v283 = vunpack.c.l.b16 %v204
      %v284 = vunpack.c.l.b16 %v205
      %v285 = vunpack.c.l.b16 %v206
      %v286 = vpack.c.b16 %v255, %v254
      %v287 = vpack.c.b16 %v257, %v256
      %v288 = vpack.c.b16 %v259, %v258
      %v289 = vpack.c.b16 %v261, %v260
      %v290 = vpack.c.b16 %v263, %v262
      %v291 = vpack.c.b16 %v265, %v264
      %v292 = vpack.c.b16 %v267, %v266
      %v293 = vpack.c.b16 %v269, %v268
      %v294 = vpack.c.b16 %v271, %v270
      %v295 = vpack.c.b16 %v273, %v272
      %v296 = vpack.c.b16 %v275, %v274
      %v297 = vpack.c.b16 %v277, %v276
      %v298 = vpack.c.b16 %v279, %v278
      %v299 = vpack.c.b16 %v281, %v280
      %v300 = vpack.c.b16 %v283, %v282
      %v301 = vpack.c.b16 %v285, %v284
      %v310 = vunpack.c.l.b16 %v207
      %v311 = vunpack.c.l.b16 %v208
      %v312 = vunpack.c.l.b16 %v209
      %v313 = vunpack.c.l.b16 %v210
      %v314 = vunpack.c.l.b16 %v211
      %v315 = vunpack.c.l.b16 %v212
      %v316 = vunpack.c.l.b16 %v213
      %v317 = vunpack.c.l.b16 %v214
      %v318 = vpack.c.b16 %v311, %v310
      %v319 = vpack.c.b16 %v313, %v312
      %v320 = vpack.c.b16 %v315, %v314
      %v321 = vpack.c.b16 %v317, %v316
      %vm326 = vcmask 523264
      %v328 = vsel %vm326, %v286, 0
      %v331 = vsel %vm326, %v287, 0
      %v334 = vsel %vm326, %v288, 0
      %v337 = vsel %vm326, %v289, 0
      %v340 = vsel %vm326, %v290, 0
      %v343 = vsel %vm326, %v291, 0
      %v346 = vsel %vm326, %v292, 0
      %v349 = vsel %vm326, %v293, 0
      %v352 = vsel %vm326, %v294, 0
      %v355 = vsel %vm326, %v295, 0
      %v358 = vsel %vm326, %v296, 0
      %v361 = vsel %vm326, %v297, 0
      %v364 = vsel %vm326, %v298, 0
      %v367 = vsel %vm326, %v299, 0
      %v370 = vsel %vm326, %v300, 0
      %v373 = vsel %vm326, %v301, 0
      %375 = vmatprep.subr.bf16.mxu0 0
      %376 = vmatpush1.bf16.msra.mxu0 %v318
      %377 = vmatprep.subr.bf16.mxu0 0
      %378 = vmatpush1.bf16.msra.mxu0 %v319
      %379 = vmatprep.subr.bf16.mxu0 0
      %380 = vmatpush1.bf16.msra.mxu0 %v320
      %381 = vmatprep.subr.bf16.mxu0 0
      %382 = vmatpush1.bf16.msra.mxu0 %v321
      %383 = vmatprep.subr.bf16.mxu0 0
      %384 = vmatpush1.bf16.msra.mxu0 0
      %385 = vmatprep.subr.bf16.mxu0 0
      %386 = vmatpush1.bf16.msra.mxu0 0
      %387 = vmatprep.subr.bf16.mxu0 0
      %388 = vmatpush1.bf16.msra.mxu0 0
      %389 = vmatprep.subr.bf16.mxu0 0
      %390 = vmatpush1.bf16.msra.mxu0 0
      %391 = vmatprep.subr.bf16.mxu0 0
      %392 = vmatpush1.bf16.msra.mxu0 0
      %393 = vmatprep.subr.bf16.mxu0 0
      %394 = vmatpush1.bf16.msra.mxu0 0
      %395 = vmatprep.subr.bf16.mxu0 0
      %396 = vmatpush1.bf16.msra.mxu0 0
      %397 = vmatprep.subr.bf16.mxu0 0
      %398 = vmatpush1.bf16.msra.mxu0 0
      %399 = vmatprep.subr.bf16.mxu0 0
      %400 = vmatpush1.bf16.msra.mxu0 0
      %401 = vmatprep.subr.bf16.mxu0 0
      %402 = vmatpush1.bf16.msra.mxu0 0
      %403 = vmatprep.subr.bf16.mxu0 0
      %404 = vmatpush1.bf16.msra.mxu0 0
      %405 = vmatprep.subr.bf16.mxu0 0
      %406 = vmatpush1.bf16.msra.mxu0 0
      %407 = vmatprep.mubr.bf16.mxu0 0
      %408 = vmatmul.mubr.bf16.gmra.mrb[0].mxu0 %v328
      %v409 = vpop.f32.mrb[0].mxu0
      %v410 = vadd.f32 %v220, %v409
      %v411 = vpop.f32.mrb[0].mxu0
      %v412 = vpop.f32.mrb[0].mxu0
      %v413 = vadd.f32 %v220, %v412
      %v414 = vpop.f32.mrb[0].mxu0
      %415 = vmatprep.mubr.bf16.mxu0 0
      %416 = vmatmul.mubr.bf16.gmra.mrb[0].mxu0 %v331
      %v417 = vpop.f32.mrb[0].mxu0
      %v418 = vadd.f32 %v220, %v417
      %v419 = vpop.f32.mrb[0].mxu0
      %v420 = vpop.f32.mrb[0].mxu0
      %v421 = vadd.f32 %v220, %v420
      %v422 = vpop.f32.mrb[0].mxu0
      %423 = vmatprep.mubr.bf16.mxu0 0
      %424 = vmatmul.mubr.bf16.gmra.mrb[0].mxu0 %v334
      %v425 = vpop.f32.mrb[0].mxu0
      %v426 = vadd.f32 %v220, %v425
      %v427 = vpop.f32.mrb[0].mxu0
      %v428 = vpop.f32.mrb[0].mxu0
      %v429 = vadd.f32 %v220, %v428
      %v430 = vpop.f32.mrb[0].mxu0
      %431 = vmatprep.mubr.bf16.mxu0 0
      %432 = vmatmul.mubr.bf16.gmra.mrb[0].mxu0 %v337
      %v433 = vpop.f32.mrb[0].mxu0
      %v434 = vadd.f32 %v220, %v433
      %v435 = vpop.f32.mrb[0].mxu0
      %v436 = vpop.f32.mrb[0].mxu0
      %v437 = vadd.f32 %v220, %v436
      %v438 = vpop.f32.mrb[0].mxu0
      %439 = vmatprep.mubr.bf16.mxu0 0
      %440 = vmatmul.mubr.bf16.gmra.mrb[0].mxu0 %v340
      %v441 = vpop.f32.mrb[0].mxu0
      %v442 = vadd.f32 %v220, %v441
      %v443 = vpop.f32.mrb[0].mxu0
      %v444 = vpop.f32.mrb[0].mxu0
      %v445 = vadd.f32 %v220, %v444
      %v446 = vpop.f32.mrb[0].mxu0
      %447 = vmatprep.mubr.bf16.mxu0 0
      %448 = vmatmul.mubr.bf16.gmra.mrb[0].mxu0 %v343
      %v449 = vpop.f32.mrb[0].mxu0
      %v450 = vadd.f32 %v220, %v449
      %v451 = vpop.f32.mrb[0].mxu0
      %v452 = vpop.f32.mrb[0].mxu0
      %v453 = vadd.f32 %v220, %v452
      %v454 = vpop.f32.mrb[0].mxu0
      %455 = vmatprep.mubr.bf16.mxu0 0
      %456 = vmatmul.mubr.bf16.gmra.mrb[0].mxu0 %v346
      %v457 = vpop.f32.mrb[0].mxu0
      %v458 = vadd.f32 %v220, %v457
      %v459 = vpop.f32.mrb[0].mxu0
      %v460 = vpop.f32.mrb[0].mxu0
      %v461 = vadd.f32 %v220, %v460
      %v462 = vpop.f32.mrb[0].mxu0
      %463 = vmatprep.mubr.bf16.mxu0 0
      %464 = vmatmul.mubr.bf16.gmra.mrb[0].mxu0 %v349
      %v465 = vpop.f32.mrb[0].mxu0
      %v466 = vadd.f32 %v220, %v465
      %v467 = vpop.f32.mrb[0].mxu0
      %v468 = vpop.f32.mrb[0].mxu0
      %v469 = vadd.f32 %v220, %v468
      %v470 = vpop.f32.mrb[0].mxu0
      %471 = vmatprep.mubr.bf16.mxu0 0
      %472 = vmatmul.mubr.bf16.gmra.mrb[0].mxu0 %v352
      %v473 = vpop.f32.mrb[0].mxu0
      %v474 = vadd.f32 %v220, %v473
      %v475 = vpop.f32.mrb[0].mxu0
      %v476 = vpop.f32.mrb[0].mxu0
      %v477 = vadd.f32 %v220, %v476
      %v478 = vpop.f32.mrb[0].mxu0
      %479 = vmatprep.mubr.bf16.mxu0 0
      %480 = vmatmul.mubr.bf16.gmra.mrb[0].mxu0 %v355
      %v481 = vpop.f32.mrb[0].mxu0
      %v482 = vadd.f32 %v220, %v481
      %v483 = vpop.f32.mrb[0].mxu0
      %v484 = vpop.f32.mrb[0].mxu0
      %v485 = vadd.f32 %v220, %v484
      %v486 = vpop.f32.mrb[0].mxu0
      %487 = vmatprep.mubr.bf16.mxu0 0
      %488 = vmatmul.mubr.bf16.gmra.mrb[0].mxu0 %v358
      %v489 = vpop.f32.mrb[0].mxu0
      %v490 = vadd.f32 %v220, %v489
      %v491 = vpop.f32.mrb[0].mxu0
      %v492 = vpop.f32.mrb[0].mxu0
      %v493 = vadd.f32 %v220, %v492
      %v494 = vpop.f32.mrb[0].mxu0
      %495 = vmatprep.mubr.bf16.mxu0 0
      %496 = vmatmul.mubr.bf16.gmra.mrb[0].mxu0 %v361
      %v497 = vpop.f32.mrb[0].mxu0
      %v498 = vadd.f32 %v220, %v497
      %v499 = vpop.f32.mrb[0].mxu0
      %v500 = vpop.f32.mrb[0].mxu0
      %v501 = vadd.f32 %v220, %v500
      %v502 = vpop.f32.mrb[0].mxu0
      %503 = vmatprep.mubr.bf16.mxu0 0
      %504 = vmatmul.mubr.bf16.gmra.mrb[0].mxu0 %v364
      %v505 = vpop.f32.mrb[0].mxu0
      %v506 = vadd.f32 %v220, %v505
      %v507 = vpop.f32.mrb[0].mxu0
      %v508 = vpop.f32.mrb[0].mxu0
      %v509 = vadd.f32 %v220, %v508
      %v510 = vpop.f32.mrb[0].mxu0
      %511 = vmatprep.mubr.bf16.mxu0 0
      %512 = vmatmul.mubr.bf16.gmra.mrb[0].mxu0 %v367
      %v513 = vpop.f32.mrb[0].mxu0
      %v514 = vadd.f32 %v220, %v513
      %v515 = vpop.f32.mrb[0].mxu0
      %v516 = vpop.f32.mrb[0].mxu0
      %v517 = vadd.f32 %v220, %v516
      %v518 = vpop.f32.mrb[0].mxu0
      %519 = vmatprep.mubr.bf16.mxu0 0
      %520 = vmatmul.mubr.bf16.gmra.mrb[0].mxu0 %v370
      %v521 = vpop.f32.mrb[0].mxu0
      %v522 = vadd.f32 %v220, %v521
      %v523 = vpop.f32.mrb[0].mxu0
      %v524 = vpop.f32.mrb[0].mxu0
      %v525 = vadd.f32 %v220, %v524
      %v526 = vpop.f32.mrb[0].mxu0
      %527 = vmatprep.mubr.bf16.mxu0 0
      %528 = vmatmul.mubr.bf16.gmra.mrb[0].mxu0 %v373
      %v529 = vpop.f32.mrb[0].mxu0
      %v530 = vadd.f32 %v220, %v529
      %v531 = vpop.f32.mrb[0].mxu0
      %v532 = vpop.f32.mrb[0].mxu0
      %v533 = vadd.f32 %v220, %v532
      %v534 = vpop.f32.mrb[0].mxu0
      %535 = vdwg.mxu0
      %v536 = vmax.f32 %v410, 0.0
      %v537 = vmax.f32 %v413, 0.0
      %v538 = vmax.f32 %v418, 0.0
      %v539 = vmax.f32 %v421, 0.0
      %v540 = vmax.f32 %v426, 0.0
      %v541 = vmax.f32 %v429, 0.0
      %v542 = vmax.f32 %v434, 0.0
      %v543 = vmax.f32 %v437, 0.0
      %v544 = vmax.f32 %v442, 0.0
      %v545 = vmax.f32 %v445, 0.0
      %v546 = vmax.f32 %v450, 0.0
      %v547 = vmax.f32 %v453, 0.0
      %v548 = vmax.f32 %v458, 0.0
      %v549 = vmax.f32 %v461, 0.0
      %v550 = vmax.f32 %v466, 0.0
      %v551 = vmax.f32 %v469, 0.0
      %v552 = vmax.f32 %v474, 0.0
      %v553 = vmax.f32 %v477, 0.0
      %v554 = vmax.f32 %v482, 0.0
      %v555 = vmax.f32 %v485, 0.0
      %v556 = vmax.f32 %v490, 0.0
      %v557 = vmax.f32 %v493, 0.0
      %v558 = vmax.f32 %v498, 0.0
      %v559 = vmax.f32 %v501, 0.0
      %v560 = vmax.f32 %v506, 0.0
      %v561 = vmax.f32 %v509, 0.0
      %v562 = vmax.f32 %v514, 0.0
      %v563 = vmax.f32 %v517, 0.0
      %v564 = vmax.f32 %v522, 0.0
      %v565 = vmax.f32 %v525, 0.0
      %v566 = vmax.f32 %v530, 0.0
      %v567 = vmax.f32 %v533, 0.0
      %v568 = vpack.c.bf16 %v537, %v536
      %v569 = vpack.c.bf16 %v539, %v538
      %v570 = vpack.c.bf16 %v541, %v540
      %v571 = vpack.c.bf16 %v543, %v542
      %v572 = vpack.c.bf16 %v545, %v544
      %v573 = vpack.c.bf16 %v547, %v546
      %v574 = vpack.c.bf16 %v549, %v548
      %v575 = vpack.c.bf16 %v551, %v550
      %v576 = vpack.c.bf16 %v553, %v552
      %v577 = vpack.c.bf16 %v555, %v554
      %v578 = vpack.c.bf16 %v557, %v556
      %v579 = vpack.c.bf16 %v559, %v558
      %v580 = vpack.c.bf16 %v561, %v560
      %v581 = vpack.c.bf16 %v563, %v562
      %v582 = vpack.c.bf16 %v565, %v564
      %v583 = vpack.c.bf16 %v567, %v566
      %v600 = vunpack.c.l.b16 %v568
      %v601 = vunpack.c.h.b16 %v568
      %v602 = vunpack.c.l.b16 %v569
      %v603 = vunpack.c.h.b16 %v569
      %v604 = vunpack.c.l.b16 %v570
      %v605 = vunpack.c.h.b16 %v570
      %v606 = vunpack.c.l.b16 %v571
      %v607 = vunpack.c.h.b16 %v571
      %v608 = vunpack.c.l.b16 %v572
      %v609 = vunpack.c.h.b16 %v572
      %v610 = vunpack.c.l.b16 %v573
      %v611 = vunpack.c.h.b16 %v573
      %v612 = vunpack.c.l.b16 %v574
      %v613 = vunpack.c.h.b16 %v574
      %v614 = vunpack.c.l.b16 %v575
      %v615 = vunpack.c.h.b16 %v575
      %v616 = vunpack.c.l.b16 %v576
      %v617 = vunpack.c.h.b16 %v576
      %v618 = vunpack.c.l.b16 %v577
      %v619 = vunpack.c.h.b16 %v577
      %v620 = vunpack.c.l.b16 %v578
      %v621 = vunpack.c.h.b16 %v578
      %v622 = vunpack.c.l.b16 %v579
      %v623 = vunpack.c.h.b16 %v579
      %v624 = vunpack.c.l.b16 %v580
      %v625 = vunpack.c.h.b16 %v580
      %v626 = vunpack.c.l.b16 %v581
      %v627 = vunpack.c.h.b16 %v581
      %v628 = vunpack.c.l.b16 %v582
      %v629 = vunpack.c.h.b16 %v582
      %v630 = vunpack.c.l.b16 %v583
      %v631 = vunpack.c.h.b16 %v583
      %v632 = vpack.c.b16 %v600, %v600
      %v633 = vpack.c.b16 %v601, %v601
      %v634 = vpack.c.b16 %v602, %v602
      %v635 = vpack.c.b16 %v603, %v603
      %v636 = vpack.c.b16 %v604, %v604
      %v637 = vpack.c.b16 %v605, %v605
      %v638 = vpack.c.b16 %v606, %v606
      %v639 = vpack.c.b16 %v607, %v607
      %v640 = vpack.c.b16 %v608, %v608
      %v641 = vpack.c.b16 %v609, %v609
      %v642 = vpack.c.b16 %v610, %v610
      %v643 = vpack.c.b16 %v611, %v611
      %v644 = vpack.c.b16 %v612, %v612
      %v645 = vpack.c.b16 %v613, %v613
      %v646 = vpack.c.b16 %v614, %v614
      %v647 = vpack.c.b16 %v615, %v615
      %v648 = vpack.c.b16 %v616, %v616
      %v649 = vpack.c.b16 %v617, %v617
      %v650 = vpack.c.b16 %v618, %v618
      %v651 = vpack.c.b16 %v619, %v619
      %v652 = vpack.c.b16 %v620, %v620
      %v653 = vpack.c.b16 %v621, %v621
      %v654 = vpack.c.b16 %v622, %v622
      %v655 = vpack.c.b16 %v623, %v623
      %v656 = vpack.c.b16 %v624, %v624
      %v657 = vpack.c.b16 %v625, %v625
      %v658 = vpack.c.b16 %v626, %v626
      %v659 = vpack.c.b16 %v627, %v627
      %v660 = vpack.c.b16 %v628, %v628
      %v661 = vpack.c.b16 %v629, %v629
      %v662 = vpack.c.b16 %v630, %v630
      %v663 = vpack.c.b16 %v631, %v631
      %696 = vst [vmem:[%s172] sm:$0xf] %v632
      %697 = vst [vmem:[%s172 + $0x4] sm:$0xf] %v633
      %698 = vst [vmem:[%s172 + $0x8] sm:$0xf] %v634
      %699 = vst [vmem:[%s172 + $0xc] sm:$0xf] %v635
      %700 = vst [vmem:[%s172 + $0x10] sm:$0xf] %v636
      %701 = vst [vmem:[%s172 + $0x14] sm:$0xf] %v637
      %702 = vst [vmem:[%s172 + $0x18] sm:$0xf] %v638
      %703 = vst [vmem:[%s172 + $0x1c] sm:$0xf] %v639
      %704 = vst [vmem:[%s172 + $0x20] sm:$0xf] %v640
      %705 = vst [vmem:[%s172 + $0x24] sm:$0xf] %v641
      %706 = vst [vmem:[%s172 + $0x28] sm:$0xf] %v642
      %707 = vst [vmem:[%s172 + $0x2c] sm:$0xf] %v643
      %708 = vst [vmem:[%s172 + $0x30] sm:$0xf] %v644
      %709 = vst [vmem:[%s172 + $0x34] sm:$0xf] %v645
      %710 = vst [vmem:[%s172 + $0x38] sm:$0xf] %v646
      %711 = vst [vmem:[%s172 + $0x3c] sm:$0xf] %v647
      %712 = vst [vmem:[%s172 + $0x40] sm:$0xf] %v648
      %713 = vst [vmem:[%s172 + $0x44] sm:$0xf] %v649
      %714 = vst [vmem:[%s172 + $0x48] sm:$0xf] %v650
      %715 = vst [vmem:[%s172 + $0x4c] sm:$0xf] %v651
      %716 = vst [vmem:[%s172 + $0x50] sm:$0xf] %v652
      %717 = vst [vmem:[%s172 + $0x54] sm:$0xf] %v653
      %718 = vst [vmem:[%s172 + $0x58] sm:$0xf] %v654
      %719 = vst [vmem:[%s172 + $0x5c] sm:$0xf] %v655
      %720 = vst [vmem:[%s172 + $0x60] sm:$0xf] %v656
      %721 = vst [vmem:[%s172 + $0x64] sm:$0xf] %v657
      %722 = vst [vmem:[%s172 + $0x68] sm:$0xf] %v658
      %723 = vst [vmem:[%s172 + $0x6c] sm:$0xf] %v659
      %724 = vst [vmem:[%s172 + $0x70] sm:$0xf] %v660
      %725 = vst [vmem:[%s172 + $0x74] sm:$0xf] %v661
      %726 = vst [vmem:[%s172 + $0x78] sm:$0xf] %v662
      %727 = vst [vmem:[%s172 + $0x7c] sm:$0xf] %v663
      %s728 = smul.u32 32, %s14
      %p729 = scmp.lt.s32.totalorder %s728, 63
      %s730 = scalar_select %p729, %s728, 63
      %s731 = smul.addr %s730, 4
      %s732 = scalar_lea.vmem %s3, %s731
      // Predicated region
      $region33: #{stem_forward.19} parent=31 // pred_check
        %p733 = pneg %p100
      $region34: #{stem_forward.19} parent=31 // pred_check_branch
        %735 = sbr.rel (%p733) target = $region36
      $region35: #{stem_forward.19} parent=31 // pred_region
        %s736 = smul.u32 32, %s14
      $region36: #{stem_forward.19} parent=31 // pred_fallthru
        _
    $region32: #{stem_forward.19} parent=5 // pred_fallthru
      _
    %p737 = scmp.le.s32.totalorder 2, %s9
    // Predicated region
    $region37: #{stem_forward.19} parent=5 // pred_check
      %p738 = pneg %p737
    $region38: #{stem_forward.19} parent=5 // pred_check_branch
      %740 = sbr.rel (%p738) target = $region40
    $region39: #{stem_forward.19} parent=5 // pred_region
      %s741 = ssub.s32 %s9, 2
      // Predicated region
      $region41: #{stem_forward.19} parent=39 // pred_check
        %p742 = pneg %p106
      $region42: #{stem_forward.19} parent=39 // pred_check_branch
        %744 = sbr.rel (%p742) target = $region44
      $region43: #{stem_forward.19} parent=39 // pred_region
        %s745 = smul.u32 32, %s15
        %p746 = scmp.lt.s32.totalorder %s745, 63
        %s747 = scalar_select %p746, %s745, 63
        %s748 = smul.addr %s747, 4
        %s749 = scalar_lea.vmem %s3, %s748
      $region44: #{stem_forward.19} parent=39 // pred_fallthru
        _
    $region40: #{stem_forward.19} parent=5 // pred_fallthru
      _
  $region6: #{stem_forward.19} parent=0 // loop_footer
    %s13 = sadd.s32 1, %s9
  $region7: #{stem_forward.19} parent=0 // loop_footer_branch
    %8 = sbr.rel target = $region3
  $region8: #{stem_forward.19} parent=0 // loop_exit
    _

// kernel: stem_forward.18
$region0: #{stem_forward.18}
  #allocation0 [shape = 'u32[]', space=smem, size = 0x4, offset = 0x4, fixed_abs, tag = 'smem constant byte address 0x4 - core index']
  #allocation1 [shape = 'u32[144,128]{1,0:T(1,128)}', space=vmem, size = 0x12000, scoped, tag = 'internal scratch']
  %s0 = inlined_call_operand.vmem [shape: bf16[9,512,64], index: 0, kind: input, shape index: {}]
  %s1 = inlined_call_operand.vmem [shape: bf16[512,64], index: 1, kind: output, shape index: {}]
  %s2 = sld [smem:[#allocation0]]
  $region78: #{stem_forward.18} parent=0
    _
  %s4 = ssub.s32 1, %s2
  %s5 = scalar_select 0, %s4, %s2
  $region1: #{stem_forward.18} parent=0
    #allocation2 [shape = 'u8[1179648]{0}', space=vmem, size = 0x120000, scoped, tag = 'input window, operand 0']
    loop: start=0, step=1, limit=4
    $region2: #{stem_forward.18} parent=1 // loop_pre_header
      _
    $region3: #{stem_forward.18} parent=1 // loop_header
      %s7 = sphi 0, %s11
      %p8 = scmp.ge.s32.totalorder %s7, 4
      %s17 = sphi 0, %s19
      %s20 = sphi 0, %s17
      %s21 = sphi 0, %s20
      %s37 = sphi 0, %s21
      %s43 = sphi 0, %s45
      %s46 = sphi 0, %s43
      %s47 = sphi 0, %s46
      %s63 = sphi 0, %s47
    $region4: #{stem_forward.18} parent=1 // loop_header_branch
      %10 = sbr.rel (%p8) target = $region8
    $region5: #{stem_forward.18} parent=1 // loop_body
      %s12 = ssub.s32 %s7, 1
      %s13 = ssub.s32 %s7, 2
      %s14 = sadd.s32 %s7, 1
      %s15 = ssub.s32 %s7, %s14
      %p16 = scmp.eq.s32.totalorder %s15, 0
      %s18 = sadd.s32 %s17, 1
      %s19 = scalar_select %p16, %s17, %s18
      %p22 = pneg %p16
      %p23 = scmp.eq.s32.totalorder %s7, 1
      %p24 = por %p22, %p23
      %p25 = scmp.ne.s32.totalorder %s17, %s20
      %p26 = scmp.eq.s32.totalorder %s7, 0
      %p27 = por %p25, %p26
      %p28 = scmp.ne.s32.totalorder %s17, %s20
      %p29 = scmp.eq.s32.totalorder %s12, 1
      %p30 = por %p28, %p29
      %p31 = scmp.ne.s32.totalorder %s20, %s21
      %p32 = scmp.eq.s32.totalorder %s12, 0
      %p33 = por %p31, %p32
      %p34 = scmp.ne.s32.totalorder %s20, %s21
      %p35 = scmp.eq.s32.totalorder %s13, 1
      %p36 = por %p34, %p35
      %p38 = scmp.ne.s32.totalorder %s21, %s37
      %p39 = scmp.eq.s32.totalorder %s13, 0
      %p40 = por %p38, %p39
      %s41 = ssub.s32 %s7, %s14
      %p42 = scmp.eq.s32.totalorder %s41, 0
      %s44 = sadd.s32 %s43, 1
      %s45 = scalar_select %p42, %s43, %s44
      %p48 = pneg %p42
      %p49 = scmp.eq.s32.totalorder %s7, 1
      %p50 = por %p48, %p49
      %p51 = scmp.ne.s32.totalorder %s43, %s46
      %p52 = scmp.eq.s32.totalorder %s7, 0
      %p53 = por %p51, %p52
      %p54 = scmp.ne.s32.totalorder %s43, %s46
      %p55 = scmp.eq.s32.totalorder %s12, 1
      %p56 = por %p54, %p55
      %p57 = scmp.ne.s32.totalorder %s46, %s47
      %p58 = scmp.eq.s32.totalorder %s12, 0
      %p59 = por %p57, %p58
      %p60 = scmp.ne.s32.totalorder %s46, %s47
      %p61 = scmp.eq.s32.totalorder %s13, 1
      %p62 = por %p60, %p61
      %p64 = scmp.ne.s32.totalorder %s47, %s63
      %p65 = scmp.eq.s32.totalorder %s13, 0
      %p66 = por %p64, %p65
      %p67 = scmp.le.s32.totalorder 1, %s7
      %p68 = scmp.lt.s32.totalorder %s7, 3
      %p69 = pnand %p67, %p68
      %p70 = pneg %p69
      // Predicated region
      $region9: #{stem_forward.18} parent=5 // pred_check
        _
      $region10: #{stem_forward.18} parent=5 // pred_check_branch
        %72 = sbr.rel (%p69) target = $region12
      $region11: #{stem_forward.18} parent=5 // pred_region
        %s73 = ssub.s32 %s7, 1
      $region12: #{stem_forward.18} parent=5 // pred_fallthru
        _
      %p74 = scmp.lt.s32.totalorder %s7, 2
      // Predicated region
      $region13: #{stem_forward.18} parent=5 // pred_check
        %p75 = pneg %p74
      $region14: #{stem_forward.18} parent=5 // pred_check_branch
        %77 = sbr.rel (%p75) target = $region16
      $region15: #{stem_forward.18} parent=5 // pred_region
        // Predicated region
        $region17: #{stem_forward.18} parent=15 // pred_check
          %p78 = pneg %p27
        $region18: #{stem_forward.18} parent=15 // pred_check_branch
          %80 = sbr.rel (%p78) target = $region20
        $region19: #{stem_forward.18} parent=15 // pred_region
          %s81 = sand.u32 %s17, 1
          %s82 = sand.u32 %s17, 1
          %s83 = smul.addr %s82, 1152
          %s84 = scalar_lea.vmem [#allocation2], %s83
          %s85 = smul.u32 32, %s7
          %s86 = smul.addr %s85, 4
          %s87 = scalar_lea.vmem %s0, %s86
          // Predicated region
          $region21: #{stem_forward.18} parent=19 // pred_check
            _
          $region22: #{stem_forward.18} parent=19 // pred_check_branch
            %89 = sbr.rel (0) target = $region24
          $region23: #{stem_forward.18} parent=19 // pred_region
            // Predicated region
            $region25: #{stem_forward.18} parent=23 // pred_check
              _
            $region26: #{stem_forward.18} parent=23 // pred_check_branch
              %91 = sbr.rel target = $region28
            $region27: #{stem_forward.18} parent=23 // pred_region
              // Predicated region
              $region40: #{stem_forward.18} parent=27 // pred_check
                _
              $region41: #{stem_forward.18} parent=27 // pred_check_branch
                %680 = sbr.rel (0) target = $region43
              $region42: #{stem_forward.18} parent=27 // pred_region
                loop: start=0, step=1, limit=1
                $region44: #{stem_forward.18} parent=42 // loop_pre_header
                  _
                $region45: #{stem_forward.18} parent=42 // loop_header
                  %s682 = sphi 0, %s686
                  %p683 = scmp.ge.s32.totalorder %s682, 1
                  %s687 = sphi %s87, %s87
                  %s688 = sphi %s84, %s84
                $region46: #{stem_forward.18} parent=42 // loop_header_branch
                  %685 = sbr.rel (%p683) target = $region50
                $region47: #{stem_forward.18} parent=42 // loop_body
                  _
                $region48: #{stem_forward.18} parent=42 // loop_footer
                  %s686 = sadd.s32 1, %s682
                $region49: #{stem_forward.18} parent=42 // loop_footer_branch
                  %681 = sbr.rel target = $region45
                $region50: #{stem_forward.18} parent=42 // loop_exit
                  _
                loop: start=0, step=1, limit=1
                $region51: #{stem_forward.18} parent=42 // loop_pre_header
                  _
                $region52: #{stem_forward.18} parent=42 // loop_header
                  %s691 = sphi 0, %s695
                  %p692 = scmp.ge.s32.totalorder %s691, 1
                  %s696 = sphi %s87, %s87
                  %s697 = sphi %s84, %s84
                $region53: #{stem_forward.18} parent=42 // loop_header_branch
                  %694 = sbr.rel (%p692) target = $region57
                $region54: #{stem_forward.18} parent=42 // loop_body
                  %v698 = vld [vmem:[%s696] sm:$0xf]
                  %699 = vst [vmem:[%s697] sm:$0xf] %v698
                  %v700 = vld [vmem:[%s696 + $0x4] sm:$0xf]
                  %701 = vst [vmem:[%s697 + $0x4] sm:$0xf] %v700
                  %v702 = vld [vmem:[%s696 + $0x8] sm:$0xf]
                  %703 = vst [vmem:[%s697 + $0x8] sm:$0xf] %v702
                  %v704 = vld [vmem:[%s696 + $0xc] sm:$0xf]
                  %705 = vst [vmem:[%s697 + $0xc] sm:$0xf] %v704
                  %v706 = vld [vmem:[%s696 + $0x10] sm:$0xf]
                  %707 = vst [vmem:[%s697 + $0x10] sm:$0xf] %v706
                  %v708 = vld [vmem:[%s696 + $0x14] sm:$0xf]
                  %709 = vst [vmem:[%s697 + $0x14] sm:$0xf] %v708
                  %v710 = vld [vmem:[%s696 + $0x18] sm:$0xf]
                  %711 = vst [vmem:[%s697 + $0x18] sm:$0xf] %v710
                  %v712 = vld [vmem:[%s696 + $0x1c] sm:$0xf]
                  %713 = vst [vmem:[%s697 + $0x1c] sm:$0xf] %v712
                  %v714 = vld [vmem:[%s696 + $0x20] sm:$0xf]
                  %715 = vst [vmem:[%s697 + $0x20] sm:$0xf] %v714
                  %v716 = vld [vmem:[%s696 + $0x24] sm:$0xf]
                  %717 = vst [vmem:[%s697 + $0x24] sm:$0xf] %v716
                  %v718 = vld [vmem:[%s696 + $0x28] sm:$0xf]
                  %719 = vst [vmem:[%s697 + $0x28] sm:$0xf] %v718
                  %v720 = vld [vmem:[%s696 + $0x2c] sm:$0xf]
                  %721 = vst [vmem:[%s697 + $0x2c] sm:$0xf] %v720
                  %v722 = vld [vmem:[%s696 + $0x30] sm:$0xf]
                  %723 = vst [vmem:[%s697 + $0x30] sm:$0xf] %v722
                  %v724 = vld [vmem:[%s696 + $0x34] sm:$0xf]
                  %725 = vst [vmem:[%s697 + $0x34] sm:$0xf] %v724
                  %v726 = vld [vmem:[%s696 + $0x38] sm:$0xf]
                  %727 = vst [vmem:[%s697 + $0x38] sm:$0xf] %v726
                  %v728 = vld [vmem:[%s696 + $0x3c] sm:$0xf]
                  %729 = vst [vmem:[%s697 + $0x3c] sm:$0xf] %v728
                  %v730 = vld [vmem:[%s696 + $0x40] sm:$0xf]
                  %731 = vst [vmem:[%s697 + $0x40] sm:$0xf] %v730
                  %v732 = vld [vmem:[%s696 + $0x44] sm:$0xf]
                  %733 = vst [vmem:[%s697 + $0x44] sm:$0xf] %v732
                  %v734 = vld [vmem:[%s696 + $0x48] sm:$0xf]
                  %735 = vst [vmem:[%s697 + $0x48] sm:$0xf] %v734
                  %v736 = vld [vmem:[%s696 + $0x4c] sm:$0xf]
                  %737 = vst [vmem:[%s697 + $0x4c] sm:$0xf] %v736
                  %v738 = vld [vmem:[%s696 + $0x50] sm:$0xf]
                  %739 = vst [vmem:[%s697 + $0x50] sm:$0xf] %v738
                  %v740 = vld [vmem:[%s696 + $0x54] sm:$0xf]
                  %741 = vst [vmem:[%s697 + $0x54] sm:$0xf] %v740
                  %v742 = vld [vmem:[%s696 + $0x58] sm:$0xf]
                  %743 = vst [vmem:[%s697 + $0x58] sm:$0xf] %v742
                  %v744 = vld [vmem:[%s696 + $0x5c] sm:$0xf]
                  %745 = vst [vmem:[%s697 + $0x5c] sm:$0xf] %v744
                  %v746 = vld [vmem:[%s696 + $0x60] sm:$0xf]
                  %747 = vst [vmem:[%s697 + $0x60] sm:$0xf] %v746
                  %v748 = vld [vmem:[%s696 + $0x64] sm:$0xf]
                  %749 = vst [vmem:[%s697 + $0x64] sm:$0xf] %v748
                  %v750 = vld [vmem:[%s696 + $0x68] sm:$0xf]
                  %751 = vst [vmem:[%s697 + $0x68] sm:$0xf] %v750
                  %v752 = vld [vmem:[%s696 + $0x6c] sm:$0xf]
                  %753 = vst [vmem:[%s697 + $0x6c] sm:$0xf] %v752
                  %v754 = vld [vmem:[%s696 + $0x70] sm:$0xf]
                  %755 = vst [vmem:[%s697 + $0x70] sm:$0xf] %v754
                  %v756 = vld [vmem:[%s696 + $0x74] sm:$0xf]
                  %757 = vst [vmem:[%s697 + $0x74] sm:$0xf] %v756
                  %v758 = vld [vmem:[%s696 + $0x78] sm:$0xf]
                  %759 = vst [vmem:[%s697 + $0x78] sm:$0xf] %v758
                  %v760 = vld [vmem:[%s696 + $0x7c] sm:$0xf]
                  %761 = vst [vmem:[%s697 + $0x7c] sm:$0xf] %v760
                  %v762 = vld [vmem:[%s696 + $0x100] sm:$0xf]
                  %763 = vst [vmem:[%s697 + $0x80] sm:$0xf] %v762
                  %v764 = vld [vmem:[%s696 + $0x104] sm:$0xf]
                  %765 = vst [vmem:[%s697 + $0x84] sm:$0xf] %v764
                  %v766 = vld [vmem:[%s696 + $0x108] sm:$0xf]
                  %767 = vst [vmem:[%s697 + $0x88] sm:$0xf] %v766
                  %v768 = vld [vmem:[%s696 + $0x10c] sm:$0xf]
                  %769 = vst [vmem:[%s697 + $0x8c] sm:$0xf] %v768
                  %v770 = vld [vmem:[%s696 + $0x110] sm:$0xf]
                  %771 = vst [vmem:[%s697 + $0x90] sm:$0xf] %v770
                  %v772 = vld [vmem:[%s696 + $0x114] sm:$0xf]
                  %773 = vst [vmem:[%s697 + $0x94] sm:$0xf] %v772
                  %v774 = vld [vmem:[%s696 + $0x118] sm:$0xf]
                  %775 = vst [vmem:[%s697 + $0x98] sm:$0xf] %v774
                  %v776 = vld [vmem:[%s696 + $0x11c] sm:$0xf]
                  %777 = vst [vmem:[%s697 + $0x9c] sm:$0xf] %v776
                  %v778 = vld [vmem:[%s696 + $0x120] sm:$0xf]
                  %779 = vst [vmem:[%s697 + $0xa0] sm:$0xf] %v778
                  %v780 = vld [vmem:[%s696 + $0x124] sm:$0xf]
                  %781 = vst [vmem:[%s697 + $0xa4] sm:$0xf] %v780
                  %v782 = vld [vmem:[%s696 + $0x128] sm:$0xf]
                  %783 = vst [vmem:[%s697 + $0xa8] sm:$0xf] %v782
                  %v784 = vld [vmem:[%s696 + $0x12c] sm:$0xf]
                  %785 = vst [vmem:[%s697 + $0xac] sm:$0xf] %v784
                  %v786 = vld [vmem:[%s696 + $0x130] sm:$0xf]
                  %787 = vst [vmem:[%s697 + $0xb0] sm:$0xf] %v786
                  %v788 = vld [vmem:[%s696 + $0x134] sm:$0xf]
                  %789 = vst [vmem:[%s697 + $0xb4] sm:$0xf] %v788
                  %v790 = vld [vmem:[%s696 + $0x138] sm:$0xf]
                  %791 = vst [vmem:[%s697 + $0xb8] sm:$0xf] %v790
                  %v792 = vld [vmem:[%s696 + $0x13c] sm:$0xf]
                  %793 = vst [vmem:[%s697 + $0xbc] sm:$0xf] %v792
                  %v794 = vld [vmem:[%s696 + $0x140] sm:$0xf]
                  %795 = vst [vmem:[%s697 + $0xc0] sm:$0xf] %v794
                  %v796 = vld [vmem:[%s696 + $0x144] sm:$0xf]
                  %797 = vst [vmem:[%s697 + $0xc4] sm:$0xf] %v796
                  %v798 = vld [vmem:[%s696 + $0x148] sm:$0xf]
                  %799 = vst [vmem:[%s697 + $0xc8] sm:$0xf] %v798
                  %v800 = vld [vmem:[%s696 + $0x14c] sm:$0xf]
                  %801 = vst [vmem:[%s697 + $0xcc] sm:$0xf] %v800
                  %v802 = vld [vmem:[%s696 + $0x150] sm:$0xf]
                  %803 = vst [vmem:[%s697 + $0xd0] sm:$0xf] %v802
                  %v804 = vld [vmem:[%s696 + $0x154] sm:$0xf]
                  %805 = vst [vmem:[%s697 + $0xd4] sm:$0xf] %v804
                  %v806 = vld [vmem:[%s696 + $0x158] sm:$0xf]
                  %807 = vst [vmem:[%s697 + $0xd8] sm:$0xf] %v806
                  %v808 = vld [vmem:[%s696 + $0x15c] sm:$0xf]
                  %809 = vst [vmem:[%s697 + $0xdc] sm:$0xf] %v808
                  %v810 = vld [vmem:[%s696 + $0x160] sm:$0xf]
                  %811 = vst [vmem:[%s697 + $0xe0] sm:$0xf] %v810
                  %v812 = vld [vmem:[%s696 + $0x164] sm:$0xf]
                  %813 = vst [vmem:[%s697 + $0xe4] sm:$0xf] %v812
                  %v814 = vld [vmem:[%s696 + $0x168] sm:$0xf]
                  %815 = vst [vmem:[%s697 + $0xe8] sm:$0xf] %v814
                  %v816 = vld [vmem:[%s696 + $0x16c] sm:$0xf]
                  %817 = vst [vmem:[%s697 + $0xec] sm:$0xf] %v816
                  %v818 = vld [vmem:[%s696 + $0x170] sm:$0xf]
                  %819 = vst [vmem:[%s697 + $0xf0] sm:$0xf] %v818
                  %v820 = vld [vmem:[%s696 + $0x174] sm:$0xf]
                  %821 = vst [vmem:[%s697 + $0xf4] sm:$0xf] %v820
                  %v822 = vld [vmem:[%s696 + $0x178] sm:$0xf]
                  %823 = vst [vmem:[%s697 + $0xf8] sm:$0xf] %v822
                  %v824 = vld [vmem:[%s696 + $0x17c] sm:$0xf]
                  %825 = vst [vmem:[%s697 + $0xfc] sm:$0xf] %v824
                  %v826 = vld [vmem:[%s696 + $0x200] sm:$0xf]
                  %827 = vst [vmem:[%s697 + $0x100] sm:$0xf] %v826
                  %v828 = vld [vmem:[%s696 + $0x204] sm:$0xf]
                  %829 = vst [vmem:[%s697 + $0x104] sm:$0xf] %v828
                  %v830 = vld [vmem:[%s696 + $0x208] sm:$0xf]
                  %831 = vst [vmem:[%s697 + $0x108] sm:$0xf] %v830
                  %v832 = vld [vmem:[%s696 + $0x20c] sm:$0xf]
                  %833 = vst [vmem:[%s697 + $0x10c] sm:$0xf] %v832
                  %v834 = vld [vmem:[%s696 + $0x210] sm:$0xf]
                  %835 = vst [vmem:[%s697 + $0x110] sm:$0xf] %v834
                  %v836 = vld [vmem:[%s696 + $0x214] sm:$0xf]
                  %837 = vst [vmem:[%s697 + $0x114] sm:$0xf] %v836
                  %v838 = vld [vmem:[%s696 + $0x218] sm:$0xf]
                  %839 = vst [vmem:[%s697 + $0x118] sm:$0xf] %v838
                  %v840 = vld [vmem:[%s696 + $0x21c] sm:$0xf]
                  %841 = vst [vmem:[%s697 + $0x11c] sm:$0xf] %v840
                  %v842 = vld [vmem:[%s696 + $0x220] sm:$0xf]
                  %843 = vst [vmem:[%s697 + $0x120] sm:$0xf] %v842
                  %v844 = vld [vmem:[%s696 + $0x224] sm:$0xf]
                  %845 = vst [vmem:[%s697 + $0x124] sm:$0xf] %v844
                  %v846 = vld [vmem:[%s696 + $0x228] sm:$0xf]
                  %847 = vst [vmem:[%s697 + $0x128] sm:$0xf] %v846
                  %v848 = vld [vmem:[%s696 + $0x22c] sm:$0xf]
                  %849 = vst [vmem:[%s697 + $0x12c] sm:$0xf] %v848
                  %v850 = vld [vmem:[%s696 + $0x230] sm:$0xf]
                  %851 = vst [vmem:[%s697 + $0x130] sm:$0xf] %v850
                  %v852 = vld [vmem:[%s696 + $0x234] sm:$0xf]
                  %853 = vst [vmem:[%s697 + $0x134] sm:$0xf] %v852
                  %v854 = vld [vmem:[%s696 + $0x238] sm:$0xf]
                  %855 = vst [vmem:[%s697 + $0x138] sm:$0xf] %v854
                  %v856 = vld [vmem:[%s696 + $0x23c] sm:$0xf]
                  %857 = vst [vmem:[%s697 + $0x13c] sm:$0xf] %v856
                  %v858 = vld [vmem:[%s696 + $0x240] sm:$0xf]
                  %859 = vst [vmem:[%s697 + $0x140] sm:$0xf] %v858
                  %v860 = vld [vmem:[%s696 + $0x244] sm:$0xf]
                  %861 = vst [vmem:[%s697 + $0x144] sm:$0xf] %v860
                  %v862 = vld [vmem:[%s696 + $0x248] sm:$0xf]
                  %863 = vst [vmem:[%s697 + $0x148] sm:$0xf] %v862
                  %v864 = vld [vmem:[%s696 + $0x24c] sm:$0xf]
                  %865 = vst [vmem:[%s697 + $0x14c] sm:$0xf] %v864
                  %v866 = vld [vmem:[%s696 + $0x250] sm:$0xf]
                  %867 = vst [vmem:[%s697 + $0x150] sm:$0xf] %v866
                  %v868 = vld [vmem:[%s696 + $0x254] sm:$0xf]
                  %869 = vst [vmem:[%s697 + $0x154] sm:$0xf] %v868
                  %v870 = vld [vmem:[%s696 + $0x258] sm:$0xf]
                  %871 = vst [vmem:[%s697 + $0x158] sm:$0xf] %v870
                  %v872 = vld [vmem:[%s696 + $0x25c] sm:$0xf]
                  %873 = vst [vmem:[%s697 + $0x15c] sm:$0xf] %v872
                  %v874 = vld [vmem:[%s696 + $0x260] sm:$0xf]
                  %875 = vst [vmem:[%s697 + $0x160] sm:$0xf] %v874
                  %v876 = vld [vmem:[%s696 + $0x264] sm:$0xf]
                  %877 = vst [vmem:[%s697 + $0x164] sm:$0xf] %v876
                  %v878 = vld [vmem:[%s696 + $0x268] sm:$0xf]
                  %879 = vst [vmem:[%s697 + $0x168] sm:$0xf] %v878
                  %v880 = vld [vmem:[%s696 + $0x26c] sm:$0xf]
                  %881 = vst [vmem:[%s697 + $0x16c] sm:$0xf] %v880
                  %v882 = vld [vmem:[%s696 + $0x270] sm:$0xf]
                  %883 = vst [vmem:[%s697 + $0x170] sm:$0xf] %v882
                  %v884 = vld [vmem:[%s696 + $0x274] sm:$0xf]
                  %885 = vst [vmem:[%s697 + $0x174] sm:$0xf] %v884
                  %v886 = vld [vmem:[%s696 + $0x278] sm:$0xf]
                  %887 = vst [vmem:[%s697 + $0x178] sm:$0xf] %v886
                  %v888 = vld [vmem:[%s696 + $0x27c] sm:$0xf]
                  %889 = vst [vmem:[%s697 + $0x17c] sm:$0xf] %v888
                  %v890 = vld [vmem:[%s696 + $0x300] sm:$0xf]
                  %891 = vst [vmem:[%s697 + $0x180] sm:$0xf] %v890
                  %v892 = vld [vmem:[%s696 + $0x304] sm:$0xf]
                  %893 = vst [vmem:[%s697 + $0x184] sm:$0xf] %v892
                  %v894 = vld [vmem:[%s696 + $0x308] sm:$0xf]
                  %895 = vst [vmem:[%s697 + $0x188] sm:$0xf] %v894
                  %v896 = vld [vmem:[%s696 + $0x30c] sm:$0xf]
                  %897 = vst [vmem:[%s697 + $0x18c] sm:$0xf] %v896
                  %v898 = vld [vmem:[%s696 + $0x310] sm:$0xf]
                  %899 = vst [vmem:[%s697 + $0x190] sm:$0xf] %v898
                  %v900 = vld [vmem:[%s696 + $0x314] sm:$0xf]
                  %901 = vst [vmem:[%s697 + $0x194] sm:$0xf] %v900
                  %v902 = vld [vmem:[%s696 + $0x318] sm:$0xf]
                  %903 = vst [vmem:[%s697 + $0x198] sm:$0xf] %v902
                  %v904 = vld [vmem:[%s696 + $0x31c] sm:$0xf]
                  %905 = vst [vmem:[%s697 + $0x19c] sm:$0xf] %v904
                  %v906 = vld [vmem:[%s696 + $0x320] sm:$0xf]
                  %907 = vst [vmem:[%s697 + $0x1a0] sm:$0xf] %v906
                  %v908 = vld [vmem:[%s696 + $0x324] sm:$0xf]
                  %909 = vst [vmem:[%s697 + $0x1a4] sm:$0xf] %v908
                  %v910 = vld [vmem:[%s696 + $0x328] sm:$0xf]
                  %911 = vst [vmem:[%s697 + $0x1a8] sm:$0xf] %v910
                  %v912 = vld [vmem:[%s696 + $0x32c] sm:$0xf]
                  %913 = vst [vmem:[%s697 + $0x1ac] sm:$0xf] %v912
                  %v914 = vld [vmem:[%s696 + $0x330] sm:$0xf]
                  %915 = vst [vmem:[%s697 + $0x1b0] sm:$0xf] %v914
                  %v916 = vld [vmem:[%s696 + $0x334] sm:$0xf]
                  %917 = vst [vmem:[%s697 + $0x1b4] sm:$0xf] %v916
                  %v918 = vld [vmem:[%s696 + $0x338] sm:$0xf]
                  %919 = vst [vmem:[%s697 + $0x1b8] sm:$0xf] %v918
                  %v920 = vld [vmem:[%s696 + $0x33c] sm:$0xf]
                  %921 = vst [vmem:[%s697 + $0x1bc] sm:$0xf] %v920
                  %v922 = vld [vmem:[%s696 + $0x340] sm:$0xf]
                  %923 = vst [vmem:[%s697 + $0x1c0] sm:$0xf] %v922
                  %v924 = vld [vmem:[%s696 + $0x344] sm:$0xf]
                  %925 = vst [vmem:[%s697 + $0x1c4] sm:$0xf] %v924
                  %v926 = vld [vmem:[%s696 + $0x348] sm:$0xf]
                  %927 = vst [vmem:[%s697 + $0x1c8] sm:$0xf] %v926
                  %v928 = vld [vmem:[%s696 + $0x34c] sm:$0xf]
                  %929 = vst [vmem:[%s697 + $0x1cc] sm:$0xf] %v928
                  %v930 = vld [vmem:[%s696 + $0x350] sm:$0xf]
                  %931 = vst [vmem:[%s697 + $0x1d0] sm:$0xf] %v930
                  %v932 = vld [vmem:[%s696 + $0x354] sm:$0xf]
                  %933 = vst [vmem:[%s697 + $0x1d4] sm:$0xf] %v932
                  %v934 = vld [vmem:[%s696 + $0x358] sm:$0xf]
                  %935 = vst [vmem:[%s697 + $0x1d8] sm:$0xf] %v934
                  %v936 = vld [vmem:[%s696 + $0x35c] sm:$0xf]
                  %937 = vst [vmem:[%s697 + $0x1dc] sm:$0xf] %v936
                  %v938 = vld [vmem:[%s696 + $0x360] sm:$0xf]
                  %939 = vst [vmem:[%s697 + $0x1e0] sm:$0xf] %v938
                  %v940 = vld [vmem:[%s696 + $0x364] sm:$0xf]
                  %941 = vst [vmem:[%s697 + $0x1e4] sm:$0xf] %v940
                  %v942 = vld [vmem:[%s696 + $0x368] sm:$0xf]
                  %943 = vst [vmem:[%s697 + $0x1e8] sm:$0xf] %v942
                  %v944 = vld [vmem:[%s696 + $0x36c] sm:$0xf]
                  %945 = vst [vmem:[%s697 + $0x1ec] sm:$0xf] %v944
                  %v946 = vld [vmem:[%s696 + $0x370] sm:$0xf]
                  %947 = vst [vmem:[%s697 + $0x1f0] sm:$0xf] %v946
                  %v948 = vld [vmem:[%s696 + $0x374] sm:$0xf]
                  %949 = vst [vmem:[%s697 + $0x1f4] sm:$0xf] %v948
                  %v950 = vld [vmem:[%s696 + $0x378] sm:$0xf]
                  %951 = vst [vmem:[%s697 + $0x1f8] sm:$0xf] %v950
                  %v952 = vld [vmem:[%s696 + $0x37c] sm:$0xf]
                  %953 = vst [vmem:[%s697 + $0x1fc] sm:$0xf] %v952
                  %v954 = vld [vmem:[%s696 + $0x400] sm:$0xf]
                  %955 = vst [vmem:[%s697 + $0x200] sm:$0xf] %v954
                  %v956 = vld [vmem:[%s696 + $0x404] sm:$0xf]
                  %957 = vst [vmem:[%s697 + $0x204] sm:$0xf] %v956
                  %v958 = vld [vmem:[%s696 + $0x408] sm:$0xf]
                  %959 = vst [vmem:[%s697 + $0x208] sm:$0xf] %v958
                  %v960 = vld [vmem:[%s696 + $0x40c] sm:$0xf]
                  %961 = vst [vmem:[%s697 + $0x20c] sm:$0xf] %v960
                  %v962 = vld [vmem:[%s696 + $0x410] sm:$0xf]
                  %963 = vst [vmem:[%s697 + $0x210] sm:$0xf] %v962
                  %v964 = vld [vmem:[%s696 + $0x414] sm:$0xf]
                  %965 = vst [vmem:[%s697 + $0x214] sm:$0xf] %v964
                  %v966 = vld [vmem:[%s696 + $0x418] sm:$0xf]
                  %967 = vst [vmem:[%s697 + $0x218] sm:$0xf] %v966
                  %v968 = vld [vmem:[%s696 + $0x41c] sm:$0xf]
                  %969 = vst [vmem:[%s697 + $0x21c] sm:$0xf] %v968
                  %v970 = vld [vmem:[%s696 + $0x420] sm:$0xf]
                  %971 = vst [vmem:[%s697 + $0x220] sm:$0xf] %v970
                  %v972 = vld [vmem:[%s696 + $0x424] sm:$0xf]
                  %973 = vst [vmem:[%s697 + $0x224] sm:$0xf] %v972
                  %v974 = vld [vmem:[%s696 + $0x428] sm:$0xf]
                  %975 = vst [vmem:[%s697 + $0x228] sm:$0xf] %v974
                  %v976 = vld [vmem:[%s696 + $0x42c] sm:$0xf]
                  %977 = vst [vmem:[%s697 + $0x22c] sm:$0xf] %v976
                  %v978 = vld [vmem:[%s696 + $0x430] sm:$0xf]
                  %979 = vst [vmem:[%s697 + $0x230] sm:$0xf] %v978
                  %v980 = vld [vmem:[%s696 + $0x434] sm:$0xf]
                  %981 = vst [vmem:[%s697 + $0x234] sm:$0xf] %v980
                  %v982 = vld [vmem:[%s696 + $0x438] sm:$0xf]
                  %983 = vst [vmem:[%s697 + $0x238] sm:$0xf] %v982
                  %v984 = vld [vmem:[%s696 + $0x43c] sm:$0xf]
                  %985 = vst [vmem:[%s697 + $0x23c] sm:$0xf] %v984
                  %v986 = vld [vmem:[%s696 + $0x440] sm:$0xf]
                  %987 = vst [vmem:[%s697 + $0x240] sm:$0xf] %v986
                  %v988 = vld [vmem:[%s696 + $0x444] sm:$0xf]
                  %989 = vst [vmem:[%s697 + $0x244] sm:$0xf] %v988
                  %v990 = vld [vmem:[%s696 + $0x448] sm:$0xf]
                  %991 = vst [vmem:[%s697 + $0x248] sm:$0xf] %v990
                  %v992 = vld [vmem:[%s696 + $0x44c] sm:$0xf]
                  %993 = vst [vmem:[%s697 + $0x24c] sm:$0xf] %v992
                  %v994 = vld [vmem:[%s696 + $0x450] sm:$0xf]
                  %995 = vst [vmem:[%s697 + $0x250] sm:$0xf] %v994
                  %v996 = vld [vmem:[%s696 + $0x454] sm:$0xf]
                  %997 = vst [vmem:[%s697 + $0x254] sm:$0xf] %v996
                  %v998 = vld [vmem:[%s696 + $0x458] sm:$0xf]
                  %999 = vst [vmem:[%s697 + $0x258] sm:$0xf] %v998
                  %v1000 = vld [vmem:[%s696 + $0x45c] sm:$0xf]
                  %1001 = vst [vmem:[%s697 + $0x25c] sm:$0xf] %v1000
                  %v1002 = vld [vmem:[%s696 + $0x460] sm:$0xf]
                  %1003 = vst [vmem:[%s697 + $0x260] sm:$0xf] %v1002
                  %v1004 = vld [vmem:[%s696 + $0x464] sm:$0xf]
                  %1005 = vst [vmem:[%s697 + $0x264] sm:$0xf] %v1004
                  %v1006 = vld [vmem:[%s696 + $0x468] sm:$0xf]
                  %1007 = vst [vmem:[%s697 + $0x268] sm:$0xf] %v1006
                  %v1008 = vld [vmem:[%s696 + $0x46c] sm:$0xf]
                  %1009 = vst [vmem:[%s697 + $0x26c] sm:$0xf] %v1008
                  %v1010 = vld [vmem:[%s696 + $0x470] sm:$0xf]
                  %1011 = vst [vmem:[%s697 + $0x270] sm:$0xf] %v1010
                  %v1012 = vld [vmem:[%s696 + $0x474] sm:$0xf]
                  %1013 = vst [vmem:[%s697 + $0x274] sm:$0xf] %v1012
                  %v1014 = vld [vmem:[%s696 + $0x478] sm:$0xf]
                  %1015 = vst [vmem:[%s697 + $0x278] sm:$0xf] %v1014
                  %v1016 = vld [vmem:[%s696 + $0x47c] sm:$0xf]
                  %1017 = vst [vmem:[%s697 + $0x27c] sm:$0xf] %v1016
                  %v1018 = vld [vmem:[%s696 + $0x500] sm:$0xf]
                  %1019 = vst [vmem:[%s697 + $0x280] sm:$0xf] %v1018
                  %v1020 = vld [vmem:[%s696 + $0x504] sm:$0xf]
                  %1021 = vst [vmem:[%s697 + $0x284] sm:$0xf] %v1020
                  %v1022 = vld [vmem:[%s696 + $0x508] sm:$0xf]
                  %1023 = vst [vmem:[%s697 + $0x288] sm:$0xf] %v1022
                  %v1024 = vld [vmem:[%s696 + $0x50c] sm:$0xf]
                  %1025 = vst [vmem:[%s697 + $0x28c] sm:$0xf] %v1024
                  %v1026 = vld [vmem:[%s696 + $0x510] sm:$0xf]
                  %1027 = vst [vmem:[%s697 + $0x290] sm:$0xf] %v1026
                  %v1028 = vld [vmem:[%s696 + $0x514] sm:$0xf]
                  %1029 = vst [vmem:[%s697 + $0x294] sm:$0xf] %v1028
                  %v1030 = vld [vmem:[%s696 + $0x518] sm:$0xf]
                  %1031 = vst [vmem:[%s697 + $0x298] sm:$0xf] %v1030
                  %v1032 = vld [vmem:[%s696 + $0x51c] sm:$0xf]
                  %1033 = vst [vmem:[%s697 + $0x29c] sm:$0xf] %v1032
                  %v1034 = vld [vmem:[%s696 + $0x520] sm:$0xf]
                  %1035 = vst [vmem:[%s697 + $0x2a0] sm:$0xf] %v1034
                  %v1036 = vld [vmem:[%s696 + $0x524] sm:$0xf]
                  %1037 = vst [vmem:[%s697 + $0x2a4] sm:$0xf] %v1036
                  %v1038 = vld [vmem:[%s696 + $0x528] sm:$0xf]
                  %1039 = vst [vmem:[%s697 + $0x2a8] sm:$0xf] %v1038
                  %v1040 = vld [vmem:[%s696 + $0x52c] sm:$0xf]
                  %1041 = vst [vmem:[%s697 + $0x2ac] sm:$0xf] %v1040
                  %v1042 = vld [vmem:[%s696 + $0x530] sm:$0xf]
                  %1043 = vst [vmem:[%s697 + $0x2b0] sm:$0xf] %v1042
                  %v1044 = vld [vmem:[%s696 + $0x534] sm:$0xf]
                  %1045 = vst [vmem:[%s697 + $0x2b4] sm:$0xf] %v1044
                  %v1046 = vld [vmem:[%s696 + $0x538] sm:$0xf]
                  %1047 = vst [vmem:[%s697 + $0x2b8] sm:$0xf] %v1046
                  %v1048 = vld [vmem:[%s696 + $0x53c] sm:$0xf]
                  %1049 = vst [vmem:[%s697 + $0x2bc] sm:$0xf] %v1048
                  %v1050 = vld [vmem:[%s696 + $0x540] sm:$0xf]
                  %1051 = vst [vmem:[%s697 + $0x2c0] sm:$0xf] %v1050
                  %v1052 = vld [vmem:[%s696 + $0x544] sm:$0xf]
                  %1053 = vst [vmem:[%s697 + $0x2c4] sm:$0xf] %v1052
                  %v1054 = vld [vmem:[%s696 + $0x548] sm:$0xf]
                  %1055 = vst [vmem:[%s697 + $0x2c8] sm:$0xf] %v1054
                  %v1056 = vld [vmem:[%s696 + $0x54c] sm:$0xf]
                  %1057 = vst [vmem:[%s697 + $0x2cc] sm:$0xf] %v1056
                  %v1058 = vld [vmem:[%s696 + $0x550] sm:$0xf]
                  %1059 = vst [vmem:[%s697 + $0x2d0] sm:$0xf] %v1058
                  %v1060 = vld [vmem:[%s696 + $0x554] sm:$0xf]
                  %1061 = vst [vmem:[%s697 + $0x2d4] sm:$0xf] %v1060
                  %v1062 = vld [vmem:[%s696 + $0x558] sm:$0xf]
                  %1063 = vst [vmem:[%s697 + $0x2d8] sm:$0xf] %v1062
                  %v1064 = vld [vmem:[%s696 + $0x55c] sm:$0xf]
                  %1065 = vst [vmem:[%s697 + $0x2dc] sm:$0xf] %v1064
                  %v1066 = vld [vmem:[%s696 + $0x560] sm:$0xf]
                  %1067 = vst [vmem:[%s697 + $0x2e0] sm:$0xf] %v1066
                  %v1068 = vld [vmem:[%s696 + $0x564] sm:$0xf]
                  %1069 = vst [vmem:[%s697 + $0x2e4] sm:$0xf] %v1068
                  %v1070 = vld [vmem:[%s696 + $0x568] sm:$0xf]
                  %1071 = vst [vmem:[%s697 + $0x2e8] sm:$0xf] %v1070
                  %v1072 = vld [vmem:[%s696 + $0x56c] sm:$0xf]
                  %1073 = vst [vmem:[%s697 + $0x2ec] sm:$0xf] %v1072
                  %v1074 = vld [vmem:[%s696 + $0x570] sm:$0xf]
                  %1075 = vst [vmem:[%s697 + $0x2f0] sm:$0xf] %v1074
                  %v1076 = vld [vmem:[%s696 + $0x574] sm:$0xf]
                  %1077 = vst [vmem:[%s697 + $0x2f4] sm:$0xf] %v1076
                  %v1078 = vld [vmem:[%s696 + $0x578] sm:$0xf]
                  %1079 = vst [vmem:[%s697 + $0x2f8] sm:$0xf] %v1078
                  %v1080 = vld [vmem:[%s696 + $0x57c] sm:$0xf]
                  %1081 = vst [vmem:[%s697 + $0x2fc] sm:$0xf] %v1080
                  %v1082 = vld [vmem:[%s696 + $0x600] sm:$0xf]
                  %1083 = vst [vmem:[%s697 + $0x300] sm:$0xf] %v1082
                  %v1084 = vld [vmem:[%s696 + $0x604] sm:$0xf]
                  %1085 = vst [vmem:[%s697 + $0x304] sm:$0xf] %v1084
                  %v1086 = vld [vmem:[%s696 + $0x608] sm:$0xf]
                  %1087 = vst [vmem:[%s697 + $0x308] sm:$0xf] %v1086
                  %v1088 = vld [vmem:[%s696 + $0x60c] sm:$0xf]
                  %1089 = vst [vmem:[%s697 + $0x30c] sm:$0xf] %v1088
                  %v1090 = vld [vmem:[%s696 + $0x610] sm:$0xf]
                  %1091 = vst [vmem:[%s697 + $0x310] sm:$0xf] %v1090
                  %v1092 = vld [vmem:[%s696 + $0x614] sm:$0xf]
                  %1093 = vst [vmem:[%s697 + $0x314] sm:$0xf] %v1092
                  %v1094 = vld [vmem:[%s696 + $0x618] sm:$0xf]
                  %1095 = vst [vmem:[%s697 + $0x318] sm:$0xf] %v1094
                  %v1096 = vld [vmem:[%s696 + $0x61c] sm:$0xf]
                  %1097 = vst [vmem:[%s697 + $0x31c] sm:$0xf] %v1096
                  %v1098 = vld [vmem:[%s696 + $0x620] sm:$0xf]
                  %1099 = vst [vmem:[%s697 + $0x320] sm:$0xf] %v1098
                  %v1100 = vld [vmem:[%s696 + $0x624] sm:$0xf]
                  %1101 = vst [vmem:[%s697 + $0x324] sm:$0xf] %v1100
                  %v1102 = vld [vmem:[%s696 + $0x628] sm:$0xf]
                  %1103 = vst [vmem:[%s697 + $0x328] sm:$0xf] %v1102
                  %v1104 = vld [vmem:[%s696 + $0x62c] sm:$0xf]
                  %1105 = vst [vmem:[%s697 + $0x32c] sm:$0xf] %v1104
                  %v1106 = vld [vmem:[%s696 + $0x630] sm:$0xf]
                  %1107 = vst [vmem:[%s697 + $0x330] sm:$0xf] %v1106
                  %v1108 = vld [vmem:[%s696 + $0x634] sm:$0xf]
                  %1109 = vst [vmem:[%s697 + $0x334] sm:$0xf] %v1108
                  %v1110 = vld [vmem:[%s696 + $0x638] sm:$0xf]
                  %1111 = vst [vmem:[%s697 + $0x338] sm:$0xf] %v1110
                  %v1112 = vld [vmem:[%s696 + $0x63c] sm:$0xf]
                  %1113 = vst [vmem:[%s697 + $0x33c] sm:$0xf] %v1112
                  %v1114 = vld [vmem:[%s696 + $0x640] sm:$0xf]
                  %1115 = vst [vmem:[%s697 + $0x340] sm:$0xf] %v1114
                  %v1116 = vld [vmem:[%s696 + $0x644] sm:$0xf]
                  %1117 = vst [vmem:[%s697 + $0x344] sm:$0xf] %v1116
                  %v1118 = vld [vmem:[%s696 + $0x648] sm:$0xf]
                  %1119 = vst [vmem:[%s697 + $0x348] sm:$0xf] %v1118
                  %v1120 = vld [vmem:[%s696 + $0x64c] sm:$0xf]
                  %1121 = vst [vmem:[%s697 + $0x34c] sm:$0xf] %v1120
                  %v1122 = vld [vmem:[%s696 + $0x650] sm:$0xf]
                  %1123 = vst [vmem:[%s697 + $0x350] sm:$0xf] %v1122
                  %v1124 = vld [vmem:[%s696 + $0x654] sm:$0xf]
                  %1125 = vst [vmem:[%s697 + $0x354] sm:$0xf] %v1124
                  %v1126 = vld [vmem:[%s696 + $0x658] sm:$0xf]
                  %1127 = vst [vmem:[%s697 + $0x358] sm:$0xf] %v1126
                  %v1128 = vld [vmem:[%s696 + $0x65c] sm:$0xf]
                  %1129 = vst [vmem:[%s697 + $0x35c] sm:$0xf] %v1128
                  %v1130 = vld [vmem:[%s696 + $0x660] sm:$0xf]
                  %1131 = vst [vmem:[%s697 + $0x360] sm:$0xf] %v1130
                  %v1132 = vld [vmem:[%s696 + $0x664] sm:$0xf]
                  %1133 = vst [vmem:[%s697 + $0x364] sm:$0xf] %v1132
                  %v1134 = vld [vmem:[%s696 + $0x668] sm:$0xf]
                  %1135 = vst [vmem:[%s697 + $0x368] sm:$0xf] %v1134
                  %v1136 = vld [vmem:[%s696 + $0x66c] sm:$0xf]
                  %1137 = vst [vmem:[%s697 + $0x36c] sm:$0xf] %v1136
                  %v1138 = vld [vmem:[%s696 + $0x670] sm:$0xf]
                  %1139 = vst [vmem:[%s697 + $0x370] sm:$0xf] %v1138
                  %v1140 = vld [vmem:[%s696 + $0x674] sm:$0xf]
                  %1141 = vst [vmem:[%s697 + $0x374] sm:$0xf] %v1140
                  %v1142 = vld [vmem:[%s696 + $0x678] sm:$0xf]
                  %1143 = vst [vmem:[%s697 + $0x378] sm:$0xf] %v1142
                  %v1144 = vld [vmem:[%s696 + $0x67c] sm:$0xf]
                  %1145 = vst [vmem:[%s697 + $0x37c] sm:$0xf] %v1144
                  %v1146 = vld [vmem:[%s696 + $0x700] sm:$0xf]
                  %1147 = vst [vmem:[%s697 + $0x380] sm:$0xf] %v1146
                  %v1148 = vld [vmem:[%s696 + $0x704] sm:$0xf]
                  %1149 = vst [vmem:[%s697 + $0x384] sm:$0xf] %v1148
                  %v1150 = vld [vmem:[%s696 + $0x708] sm:$0xf]
                  %1151 = vst [vmem:[%s697 + $0x388] sm:$0xf] %v1150
                  %v1152 = vld [vmem:[%s696 + $0x70c] sm:$0xf]
                  %1153 = vst [vmem:[%s697 + $0x38c] sm:$0xf] %v1152
                  %v1154 = vld [vmem:[%s696 + $0x710] sm:$0xf]
                  %1155 = vst [vmem:[%s697 + $0x390] sm:$0xf] %v1154
                  %v1156 = vld [vmem:[%s696 + $0x714] sm:$0xf]
                  %1157 = vst [vmem:[%s697 + $0x394] sm:$0xf] %v1156
                  %v1158 = vld [vmem:[%s696 + $0x718] sm:$0xf]
                  %1159 = vst [vmem:[%s697 + $0x398] sm:$0xf] %v1158
                  %v1160 = vld [vmem:[%s696 + $0x71c] sm:$0xf]
                  %1161 = vst [vmem:[%s697 + $0x39c] sm:$0xf] %v1160
                  %v1162 = vld [vmem:[%s696 + $0x720] sm:$0xf]
                  %1163 = vst [vmem:[%s697 + $0x3a0] sm:$0xf] %v1162
                  %v1164 = vld [vmem:[%s696 + $0x724] sm:$0xf]
                  %1165 = vst [vmem:[%s697 + $0x3a4] sm:$0xf] %v1164
                  %v1166 = vld [vmem:[%s696 + $0x728] sm:$0xf]
                  %1167 = vst [vmem:[%s697 + $0x3a8] sm:$0xf] %v1166
                  %v1168 = vld [vmem:[%s696 + $0x72c] sm:$0xf]
                  %1169 = vst [vmem:[%s697 + $0x3ac] sm:$0xf] %v1168
                  %v1170 = vld [vmem:[%s696 + $0x730] sm:$0xf]
                  %1171 = vst [vmem:[%s697 + $0x3b0] sm:$0xf] %v1170
                  %v1172 = vld [vmem:[%s696 + $0x734] sm:$0xf]
                  %1173 = vst [vmem:[%s697 + $0x3b4] sm:$0xf] %v1172
                  %v1174 = vld [vmem:[%s696 + $0x738] sm:$0xf]
                  %1175 = vst [vmem:[%s697 + $0x3b8] sm:$0xf] %v1174
                  %v1176 = vld [vmem:[%s696 + $0x73c] sm:$0xf]
                  %1177 = vst [vmem:[%s697 + $0x3bc] sm:$0xf] %v1176
                  %v1178 = vld [vmem:[%s696 + $0x740] sm:$0xf]
                  %1179 = vst [vmem:[%s697 + $0x3c0] sm:$0xf] %v1178
                  %v1180 = vld [vmem:[%s696 + $0x744] sm:$0xf]
                  %1181 = vst [vmem:[%s697 + $0x3c4] sm:$0xf] %v1180
                  %v1182 = vld [vmem:[%s696 + $0x748] sm:$0xf]
                  %1183 = vst [vmem:[%s697 + $0x3c8] sm:$0xf] %v1182
                  %v1184 = vld [vmem:[%s696 + $0x74c] sm:$0xf]
                  %1185 = vst [vmem:[%s697 + $0x3cc] sm:$0xf] %v1184
                  %v1186 = vld [vmem:[%s696 + $0x750] sm:$0xf]
                  %1187 = vst [vmem:[%s697 + $0x3d0] sm:$0xf] %v1186
                  %v1188 = vld [vmem:[%s696 + $0x754] sm:$0xf]
                  %1189 = vst [vmem:[%s697 + $0x3d4] sm:$0xf] %v1188
                  %v1190 = vld [vmem:[%s696 + $0x758] sm:$0xf]
                  %1191 = vst [vmem:[%s697 + $0x3d8] sm:$0xf] %v1190
                  %v1192 = vld [vmem:[%s696 + $0x75c] sm:$0xf]
                  %1193 = vst [vmem:[%s697 + $0x3dc] sm:$0xf] %v1192
                  %v1194 = vld [vmem:[%s696 + $0x760] sm:$0xf]
                  %1195 = vst [vmem:[%s697 + $0x3e0] sm:$0xf] %v1194
                  %v1196 = vld [vmem:[%s696 + $0x764] sm:$0xf]
                  %1197 = vst [vmem:[%s697 + $0x3e4] sm:$0xf] %v1196
                  %v1198 = vld [vmem:[%s696 + $0x768] sm:$0xf]
                  %1199 = vst [vmem:[%s697 + $0x3e8] sm:$0xf] %v1198
                  %v1200 = vld [vmem:[%s696 + $0x76c] sm:$0xf]
                  %1201 = vst [vmem:[%s697 + $0x3ec] sm:$0xf] %v1200
                  %v1202 = vld [vmem:[%s696 + $0x770] sm:$0xf]
                  %1203 = vst [vmem:[%s697 + $0x3f0] sm:$0xf] %v1202
                  %v1204 = vld [vmem:[%s696 + $0x774] sm:$0xf]
                  %1205 = vst [vmem:[%s697 + $0x3f4] sm:$0xf] %v1204
                  %v1206 = vld [vmem:[%s696 + $0x778] sm:$0xf]
                  %1207 = vst [vmem:[%s697 + $0x3f8] sm:$0xf] %v1206
                  %v1208 = vld [vmem:[%s696 + $0x77c] sm:$0xf]
                  %1209 = vst [vmem:[%s697 + $0x3fc] sm:$0xf] %v1208
                  %v1210 = vld [vmem:[%s696 + $0x800] sm:$0xf]
                  %1211 = vst [vmem:[%s697 + $0x400] sm:$0xf] %v1210
                  %v1212 = vld [vmem:[%s696 + $0x804] sm:$0xf]
                  %1213 = vst [vmem:[%s697 + $0x404] sm:$0xf] %v1212
                  %v1214 = vld [vmem:[%s696 + $0x808] sm:$0xf]
                  %1215 = vst [vmem:[%s697 + $0x408] sm:$0xf] %v1214
                  %v1216 = vld [vmem:[%s696 + $0x80c] sm:$0xf]
                  %1217 = vst [vmem:[%s697 + $0x40c] sm:$0xf] %v1216
                  %v1218 = vld [vmem:[%s696 + $0x810] sm:$0xf]
                  %1219 = vst [vmem:[%s697 + $0x410] sm:$0xf] %v1218
                  %v1220 = vld [vmem:[%s696 + $0x814] sm:$0xf]
                  %1221 = vst [vmem:[%s697 + $0x414] sm:$0xf] %v1220
                  %v1222 = vld [vmem:[%s696 + $0x818] sm:$0xf]
                  %1223 = vst [vmem:[%s697 + $0x418] sm:$0xf] %v1222
                  %v1224 = vld [vmem:[%s696 + $0x81c] sm:$0xf]
                  %1225 = vst [vmem:[%s697 + $0x41c] sm:$0xf] %v1224
                  %v1226 = vld [vmem:[%s696 + $0x820] sm:$0xf]
                  %1227 = vst [vmem:[%s697 + $0x420] sm:$0xf] %v1226
                  %v1228 = vld [vmem:[%s696 + $0x824] sm:$0xf]
                  %1229 = vst [vmem:[%s697 + $0x424] sm:$0xf] %v1228
                  %v1230 = vld [vmem:[%s696 + $0x828] sm:$0xf]
                  %1231 = vst [vmem:[%s697 + $0x428] sm:$0xf] %v1230
                  %v1232 = vld [vmem:[%s696 + $0x82c] sm:$0xf]
                  %1233 = vst [vmem:[%s697 + $0x42c] sm:$0xf] %v1232
                  %v1234 = vld [vmem:[%s696 + $0x830] sm:$0xf]
                  %1235 = vst [vmem:[%s697 + $0x430] sm:$0xf] %v1234
                  %v1236 = vld [vmem:[%s696 + $0x834] sm:$0xf]
                  %1237 = vst [vmem:[%s697 + $0x434] sm:$0xf] %v1236
                  %v1238 = vld [vmem:[%s696 + $0x838] sm:$0xf]
                  %1239 = vst [vmem:[%s697 + $0x438] sm:$0xf] %v1238
                  %v1240 = vld [vmem:[%s696 + $0x83c] sm:$0xf]
                  %1241 = vst [vmem:[%s697 + $0x43c] sm:$0xf] %v1240
                  %v1242 = vld [vmem:[%s696 + $0x840] sm:$0xf]
                  %1243 = vst [vmem:[%s697 + $0x440] sm:$0xf] %v1242
                  %v1244 = vld [vmem:[%s696 + $0x844] sm:$0xf]
                  %1245 = vst [vmem:[%s697 + $0x444] sm:$0xf] %v1244
                  %v1246 = vld [vmem:[%s696 + $0x848] sm:$0xf]
                  %1247 = vst [vmem:[%s697 + $0x448] sm:$0xf] %v1246
                  %v1248 = vld [vmem:[%s696 + $0x84c] sm:$0xf]
                  %1249 = vst [vmem:[%s697 + $0x44c] sm:$0xf] %v1248
                  %v1250 = vld [vmem:[%s696 + $0x850] sm:$0xf]
                  %1251 = vst [vmem:[%s697 + $0x450] sm:$0xf] %v1250
                  %v1252 = vld [vmem:[%s696 + $0x854] sm:$0xf]
                  %1253 = vst [vmem:[%s697 + $0x454] sm:$0xf] %v1252
                  %v1254 = vld [vmem:[%s696 + $0x858] sm:$0xf]
                  %1255 = vst [vmem:[%s697 + $0x458] sm:$0xf] %v1254
                  %v1256 = vld [vmem:[%s696 + $0x85c] sm:$0xf]
                  %1257 = vst [vmem:[%s697 + $0x45c] sm:$0xf] %v1256
                  %v1258 = vld [vmem:[%s696 + $0x860] sm:$0xf]
                  %1259 = vst [vmem:[%s697 + $0x460] sm:$0xf] %v1258
                  %v1260 = vld [vmem:[%s696 + $0x864] sm:$0xf]
                  %1261 = vst [vmem:[%s697 + $0x464] sm:$0xf] %v1260
                  %v1262 = vld [vmem:[%s696 + $0x868] sm:$0xf]
                  %1263 = vst [vmem:[%s697 + $0x468] sm:$0xf] %v1262
                  %v1264 = vld [vmem:[%s696 + $0x86c] sm:$0xf]
                  %1265 = vst [vmem:[%s697 + $0x46c] sm:$0xf] %v1264
                  %v1266 = vld [vmem:[%s696 + $0x870] sm:$0xf]
                  %1267 = vst [vmem:[%s697 + $0x470] sm:$0xf] %v1266
                  %v1268 = vld [vmem:[%s696 + $0x874] sm:$0xf]
                  %1269 = vst [vmem:[%s697 + $0x474] sm:$0xf] %v1268
                  %v1270 = vld [vmem:[%s696 + $0x878] sm:$0xf]
                  %1271 = vst [vmem:[%s697 + $0x478] sm:$0xf] %v1270
                  %v1272 = vld [vmem:[%s696 + $0x87c] sm:$0xf]
                  %1273 = vst [vmem:[%s697 + $0x47c] sm:$0xf] %v1272
                $region55: #{stem_forward.18} parent=42 // loop_footer
                  %s695 = sadd.s32 1, %s691
                $region56: #{stem_forward.18} parent=42 // loop_footer_branch
                  %690 = sbr.rel target = $region52
                $region57: #{stem_forward.18} parent=42 // loop_exit
                  _
              $region43: #{stem_forward.18} parent=27 // pred_fallthru
                _
            $region28: #{stem_forward.18} parent=23 // pred_fallthru
              _
            // Predicated region
            $region29: #{stem_forward.18} parent=23 // pred_check
              _
            $region30: #{stem_forward.18} parent=23 // pred_check_branch
              %93 = sbr.rel (0) target = $region32
            $region31: #{stem_forward.18} parent=23 // pred_region
              loop: start=0, step=1, limit=1
              $region33: #{stem_forward.18} parent=31 // loop_pre_header
                _
              $region34: #{stem_forward.18} parent=31 // loop_header
                %s96 = sphi 0, %s100
                %p97 = scmp.ge.s32.totalorder %s96, 1
                %s101 = sphi %s87, %s87
                %s102 = sphi %s84, %s84
              $region35: #{stem_forward.18} parent=31 // loop_header_branch
                %99 = sbr.rel (%p97) target = $region39
              $region36: #{stem_forward.18} parent=31 // loop_body
                %v103 = vld [vmem:[%s101] sm:$0xf]
                %104 = vst [vmem:[%s102] sm:$0xf] %v103
                %v105 = vld [vmem:[%s101 + $0x4] sm:$0xf]
                %106 = vst [vmem:[%s102 + $0x4] sm:$0xf] %v105
                %v107 = vld [vmem:[%s101 + $0x8] sm:$0xf]
                %108 = vst [vmem:[%s102 + $0x8] sm:$0xf] %v107
                %v109 = vld [vmem:[%s101 + $0xc] sm:$0xf]
                %110 = vst [vmem:[%s102 + $0xc] sm:$0xf] %v109
                %v111 = vld [vmem:[%s101 + $0x10] sm:$0xf]
                %112 = vst [vmem:[%s102 + $0x10] sm:$0xf] %v111
                %v113 = vld [vmem:[%s101 + $0x14] sm:$0xf]
                %114 = vst [vmem:[%s102 + $0x14] sm:$0xf] %v113
                %v115 = vld [vmem:[%s101 + $0x18] sm:$0xf]
                %116 = vst [vmem:[%s102 + $0x18] sm:$0xf] %v115
                %v117 = vld [vmem:[%s101 + $0x1c] sm:$0xf]
                %118 = vst [vmem:[%s102 + $0x1c] sm:$0xf] %v117
                %v119 = vld [vmem:[%s101 + $0x20] sm:$0xf]
                %120 = vst [vmem:[%s102 + $0x20] sm:$0xf] %v119
                %v121 = vld [vmem:[%s101 + $0x24] sm:$0xf]
                %122 = vst [vmem:[%s102 + $0x24] sm:$0xf] %v121
                %v123 = vld [vmem:[%s101 + $0x28] sm:$0xf]
                %124 = vst [vmem:[%s102 + $0x28] sm:$0xf] %v123
                %v125 = vld [vmem:[%s101 + $0x2c] sm:$0xf]
                %126 = vst [vmem:[%s102 + $0x2c] sm:$0xf] %v125
                %v127 = vld [vmem:[%s101 + $0x30] sm:$0xf]
                %128 = vst [vmem:[%s102 + $0x30] sm:$0xf] %v127
                %v129 = vld [vmem:[%s101 + $0x34] sm:$0xf]
                %130 = vst [vmem:[%s102 + $0x34] sm:$0xf] %v129
                %v131 = vld [vmem:[%s101 + $0x38] sm:$0xf]
                %132 = vst [vmem:[%s102 + $0x38] sm:$0xf] %v131
                %v133 = vld [vmem:[%s101 + $0x3c] sm:$0xf]
                %134 = vst [vmem:[%s102 + $0x3c] sm:$0xf] %v133
                %v135 = vld [vmem:[%s101 + $0x40] sm:$0xf]
                %136 = vst [vmem:[%s102 + $0x40] sm:$0xf] %v135
                %v137 = vld [vmem:[%s101 + $0x44] sm:$0xf]
                %138 = vst [vmem:[%s102 + $0x44] sm:$0xf] %v137
                %v139 = vld [vmem:[%s101 + $0x48] sm:$0xf]
                %140 = vst [vmem:[%s102 + $0x48] sm:$0xf] %v139
                %v141 = vld [vmem:[%s101 + $0x4c] sm:$0xf]
                %142 = vst [vmem:[%s102 + $0x4c] sm:$0xf] %v141
                %v143 = vld [vmem:[%s101 + $0x50] sm:$0xf]
                %144 = vst [vmem:[%s102 + $0x50] sm:$0xf] %v143
                %v145 = vld [vmem:[%s101 + $0x54] sm:$0xf]
                %146 = vst [vmem:[%s102 + $0x54] sm:$0xf] %v145
                %v147 = vld [vmem:[%s101 + $0x58] sm:$0xf]
                %148 = vst [vmem:[%s102 + $0x58] sm:$0xf] %v147
                %v149 = vld [vmem:[%s101 + $0x5c] sm:$0xf]
                %150 = vst [vmem:[%s102 + $0x5c] sm:$0xf] %v149
                %v151 = vld [vmem:[%s101 + $0x60] sm:$0xf]
                %152 = vst [vmem:[%s102 + $0x60] sm:$0xf] %v151
                %v153 = vld [vmem:[%s101 + $0x64] sm:$0xf]
                %154 = vst [vmem:[%s102 + $0x64] sm:$0xf] %v153
                %v155 = vld [vmem:[%s101 + $0x68] sm:$0xf]
                %156 = vst [vmem:[%s102 + $0x68] sm:$0xf] %v155
                %v157 = vld [vmem:[%s101 + $0x6c] sm:$0xf]
                %158 = vst [vmem:[%s102 + $0x6c] sm:$0xf] %v157
                %v159 = vld [vmem:[%s101 + $0x70] sm:$0xf]
                %160 = vst [vmem:[%s102 + $0x70] sm:$0xf] %v159
                %v161 = vld [vmem:[%s101 + $0x74] sm:$0xf]
                %162 = vst [vmem:[%s102 + $0x74] sm:$0xf] %v161
                %v163 = vld [vmem:[%s101 + $0x78] sm:$0xf]
                %164 = vst [vmem:[%s102 + $0x78] sm:$0xf] %v163
                %v165 = vld [vmem:[%s101 + $0x7c] sm:$0xf]
                %166 = vst [vmem:[%s102 + $0x7c] sm:$0xf] %v165
                %v167 = vld [vmem:[%s101 + $0x100] sm:$0xf]
                %168 = vst [vmem:[%s102 + $0x80] sm:$0xf] %v167
                %v169 = vld [vmem:[%s101 + $0x104] sm:$0xf]
                %170 = vst [vmem:[%s102 + $0x84] sm:$0xf] %v169
                %v171 = vld [vmem:[%s101 + $0x108] sm:$0xf]
                %172 = vst [vmem:[%s102 + $0x88] sm:$0xf] %v171
                %v173 = vld [vmem:[%s101 + $0x10c] sm:$0xf]
                %174 = vst [vmem:[%s102 + $0x8c] sm:$0xf] %v173
                %v175 = vld [vmem:[%s101 + $0x110] sm:$0xf]
                %176 = vst [vmem:[%s102 + $0x90] sm:$0xf] %v175
                %v177 = vld [vmem:[%s101 + $0x114] sm:$0xf]
                %178 = vst [vmem:[%s102 + $0x94] sm:$0xf] %v177
                %v179 = vld [vmem:[%s101 + $0x118] sm:$0xf]
                %180 = vst [vmem:[%s102 + $0x98] sm:$0xf] %v179
                %v181 = vld [vmem:[%s101 + $0x11c] sm:$0xf]
                %182 = vst [vmem:[%s102 + $0x9c] sm:$0xf] %v181
                %v183 = vld [vmem:[%s101 + $0x120] sm:$0xf]
                %184 = vst [vmem:[%s102 + $0xa0] sm:$0xf] %v183
                %v185 = vld [vmem:[%s101 + $0x124] sm:$0xf]
                %186 = vst [vmem:[%s102 + $0xa4] sm:$0xf] %v185
                %v187 = vld [vmem:[%s101 + $0x128] sm:$0xf]
                %188 = vst [vmem:[%s102 + $0xa8] sm:$0xf] %v187
                %v189 = vld [vmem:[%s101 + $0x12c] sm:$0xf]
                %190 = vst [vmem:[%s102 + $0xac] sm:$0xf] %v189
                %v191 = vld [vmem:[%s101 + $0x130] sm:$0xf]
                %192 = vst [vmem:[%s102 + $0xb0] sm:$0xf] %v191
                %v193 = vld [vmem:[%s101 + $0x134] sm:$0xf]
                %194 = vst [vmem:[%s102 + $0xb4] sm:$0xf] %v193
                %v195 = vld [vmem:[%s101 + $0x138] sm:$0xf]
                %196 = vst [vmem:[%s102 + $0xb8] sm:$0xf] %v195
                %v197 = vld [vmem:[%s101 + $0x13c] sm:$0xf]
                %198 = vst [vmem:[%s102 + $0xbc] sm:$0xf] %v197
                %v199 = vld [vmem:[%s101 + $0x140] sm:$0xf]
                %200 = vst [vmem:[%s102 + $0xc0] sm:$0xf] %v199
                %v201 = vld [vmem:[%s101 + $0x144] sm:$0xf]
                %202 = vst [vmem:[%s102 + $0xc4] sm:$0xf] %v201
                %v203 = vld [vmem:[%s101 + $0x148] sm:$0xf]
                %204 = vst [vmem:[%s102 + $0xc8] sm:$0xf] %v203
                %v205 = vld [vmem:[%s101 + $0x14c] sm:$0xf]
                %206 = vst [vmem:[%s102 + $0xcc] sm:$0xf] %v205
                %v207 = vld [vmem:[%s101 + $0x150] sm:$0xf]
                %208 = vst [vmem:[%s102 + $0xd0] sm:$0xf] %v207
                %v209 = vld [vmem:[%s101 + $0x154] sm:$0xf]
                %210 = vst [vmem:[%s102 + $0xd4] sm:$0xf] %v209
                %v211 = vld [vmem:[%s101 + $0x158] sm:$0xf]
                %212 = vst [vmem:[%s102 + $0xd8] sm:$0xf] %v211
                %v213 = vld [vmem:[%s101 + $0x15c] sm:$0xf]
                %214 = vst [vmem:[%s102 + $0xdc] sm:$0xf] %v213
                %v215 = vld [vmem:[%s101 + $0x160] sm:$0xf]
                %216 = vst [vmem:[%s102 + $0xe0] sm:$0xf] %v215
                %v217 = vld [vmem:[%s101 + $0x164] sm:$0xf]
                %218 = vst [vmem:[%s102 + $0xe4] sm:$0xf] %v217
                %v219 = vld [vmem:[%s101 + $0x168] sm:$0xf]
                %220 = vst [vmem:[%s102 + $0xe8] sm:$0xf] %v219
                %v221 = vld [vmem:[%s101 + $0x16c] sm:$0xf]
                %222 = vst [vmem:[%s102 + $0xec] sm:$0xf] %v221
                %v223 = vld [vmem:[%s101 + $0x170] sm:$0xf]
                %224 = vst [vmem:[%s102 + $0xf0] sm:$0xf] %v223
                %v225 = vld [vmem:[%s101 + $0x174] sm:$0xf]
                %226 = vst [vmem:[%s102 + $0xf4] sm:$0xf] %v225
                %v227 = vld [vmem:[%s101 + $0x178] sm:$0xf]
                %228 = vst [vmem:[%s102 + $0xf8] sm:$0xf] %v227
                %v229 = vld [vmem:[%s101 + $0x17c] sm:$0xf]
                %230 = vst [vmem:[%s102 + $0xfc] sm:$0xf] %v229
                %v231 = vld [vmem:[%s101 + $0x200] sm:$0xf]
                %232 = vst [vmem:[%s102 + $0x100] sm:$0xf] %v231
                %v233 = vld [vmem:[%s101 + $0x204] sm:$0xf]
                %234 = vst [vmem:[%s102 + $0x104] sm:$0xf] %v233
                %v235 = vld [vmem:[%s101 + $0x208] sm:$0xf]
                %236 = vst [vmem:[%s102 + $0x108] sm:$0xf] %v235
                %v237 = vld [vmem:[%s101 + $0x20c] sm:$0xf]
                %238 = vst [vmem:[%s102 + $0x10c] sm:$0xf] %v237
                %v239 = vld [vmem:[%s101 + $0x210] sm:$0xf]
                %240 = vst [vmem:[%s102 + $0x110] sm:$0xf] %v239
                %v241 = vld [vmem:[%s101 + $0x214] sm:$0xf]
                %242 = vst [vmem:[%s102 + $0x114] sm:$0xf] %v241
                %v243 = vld [vmem:[%s101 + $0x218] sm:$0xf]
                %244 = vst [vmem:[%s102 + $0x118] sm:$0xf] %v243
                %v245 = vld [vmem:[%s101 + $0x21c] sm:$0xf]
                %246 = vst [vmem:[%s102 + $0x11c] sm:$0xf] %v245
                %v247 = vld [vmem:[%s101 + $0x220] sm:$0xf]
                %248 = vst [vmem:[%s102 + $0x120] sm:$0xf] %v247
                %v249 = vld [vmem:[%s101 + $0x224] sm:$0xf]
                %250 = vst [vmem:[%s102 + $0x124] sm:$0xf] %v249
                %v251 = vld [vmem:[%s101 + $0x228] sm:$0xf]
                %252 = vst [vmem:[%s102 + $0x128] sm:$0xf] %v251
                %v253 = vld [vmem:[%s101 + $0x22c] sm:$0xf]
                %254 = vst [vmem:[%s102 + $0x12c] sm:$0xf] %v253
                %v255 = vld [vmem:[%s101 + $0x230] sm:$0xf]
                %256 = vst [vmem:[%s102 + $0x130] sm:$0xf] %v255
                %v257 = vld [vmem:[%s101 + $0x234] sm:$0xf]
                %258 = vst [vmem:[%s102 + $0x134] sm:$0xf] %v257
                %v259 = vld [vmem:[%s101 + $0x238] sm:$0xf]
                %260 = vst [vmem:[%s102 + $0x138] sm:$0xf] %v259
                %v261 = vld [vmem:[%s101 + $0x23c] sm:$0xf]
                %262 = vst [vmem:[%s102 + $0x13c] sm:$0xf] %v261
                %v263 = vld [vmem:[%s101 + $0x240] sm:$0xf]
                %264 = vst [vmem:[%s102 + $0x140] sm:$0xf] %v263
                %v265 = vld [vmem:[%s101 + $0x244] sm:$0xf]
                %266 = vst [vmem:[%s102 + $0x144] sm:$0xf] %v265
                %v267 = vld [vmem:[%s101 + $0x248] sm:$0xf]
                %268 = vst [vmem:[%s102 + $0x148] sm:$0xf] %v267
                %v269 = vld [vmem:[%s101 + $0x24c] sm:$0xf]
                %270 = vst [vmem:[%s102 + $0x14c] sm:$0xf] %v269
                %v271 = vld [vmem:[%s101 + $0x250] sm:$0xf]
                %272 = vst [vmem:[%s102 + $0x150] sm:$0xf] %v271
                %v273 = vld [vmem:[%s101 + $0x254] sm:$0xf]
                %274 = vst [vmem:[%s102 + $0x154] sm:$0xf] %v273
                %v275 = vld [vmem:[%s101 + $0x258] sm:$0xf]
                %276 = vst [vmem:[%s102 + $0x158] sm:$0xf] %v275
                %v277 = vld [vmem:[%s101 + $0x25c] sm:$0xf]
                %278 = vst [vmem:[%s102 + $0x15c] sm:$0xf] %v277
                %v279 = vld [vmem:[%s101 + $0x260] sm:$0xf]
                %280 = vst [vmem:[%s102 + $0x160] sm:$0xf] %v279
                %v281 = vld [vmem:[%s101 + $0x264] sm:$0xf]
                %282 = vst [vmem:[%s102 + $0x164] sm:$0xf] %v281
                %v283 = vld [vmem:[%s101 + $0x268] sm:$0xf]
                %284 = vst [vmem:[%s102 + $0x168] sm:$0xf] %v283
                %v285 = vld [vmem:[%s101 + $0x26c] sm:$0xf]
                %286 = vst [vmem:[%s102 + $0x16c] sm:$0xf] %v285
                %v287 = vld [vmem:[%s101 + $0x270] sm:$0xf]
                %288 = vst [vmem:[%s102 + $0x170] sm:$0xf] %v287
                %v289 = vld [vmem:[%s101 + $0x274] sm:$0xf]
                %290 = vst [vmem:[%s102 + $0x174] sm:$0xf] %v289
                %v291 = vld [vmem:[%s101 + $0x278] sm:$0xf]
                %292 = vst [vmem:[%s102 + $0x178] sm:$0xf] %v291
                %v293 = vld [vmem:[%s101 + $0x27c] sm:$0xf]
                %294 = vst [vmem:[%s102 + $0x17c] sm:$0xf] %v293
                %v295 = vld [vmem:[%s101 + $0x300] sm:$0xf]
                %296 = vst [vmem:[%s102 + $0x180] sm:$0xf] %v295
                %v297 = vld [vmem:[%s101 + $0x304] sm:$0xf]
                %298 = vst [vmem:[%s102 + $0x184] sm:$0xf] %v297
                %v299 = vld [vmem:[%s101 + $0x308] sm:$0xf]
                %300 = vst [vmem:[%s102 + $0x188] sm:$0xf] %v299
                %v301 = vld [vmem:[%s101 + $0x30c] sm:$0xf]
                %302 = vst [vmem:[%s102 + $0x18c] sm:$0xf] %v301
                %v303 = vld [vmem:[%s101 + $0x310] sm:$0xf]
                %304 = vst [vmem:[%s102 + $0x190] sm:$0xf] %v303
                %v305 = vld [vmem:[%s101 + $0x314] sm:$0xf]
                %306 = vst [vmem:[%s102 + $0x194] sm:$0xf] %v305
                %v307 = vld [vmem:[%s101 + $0x318] sm:$0xf]
                %308 = vst [vmem:[%s102 + $0x198] sm:$0xf] %v307
                %v309 = vld [vmem:[%s101 + $0x31c] sm:$0xf]
                %310 = vst [vmem:[%s102 + $0x19c] sm:$0xf] %v309
                %v311 = vld [vmem:[%s101 + $0x320] sm:$0xf]
                %312 = vst [vmem:[%s102 + $0x1a0] sm:$0xf] %v311
                %v313 = vld [vmem:[%s101 + $0x324] sm:$0xf]
                %314 = vst [vmem:[%s102 + $0x1a4] sm:$0xf] %v313
                %v315 = vld [vmem:[%s101 + $0x328] sm:$0xf]
                %316 = vst [vmem:[%s102 + $0x1a8] sm:$0xf] %v315
                %v317 = vld [vmem:[%s101 + $0x32c] sm:$0xf]
                %318 = vst [vmem:[%s102 + $0x1ac] sm:$0xf] %v317
                %v319 = vld [vmem:[%s101 + $0x330] sm:$0xf]
                %320 = vst [vmem:[%s102 + $0x1b0] sm:$0xf] %v319
                %v321 = vld [vmem:[%s101 + $0x334] sm:$0xf]
                %322 = vst [vmem:[%s102 + $0x1b4] sm:$0xf] %v321
                %v323 = vld [vmem:[%s101 + $0x338] sm:$0xf]
                %324 = vst [vmem:[%s102 + $0x1b8] sm:$0xf] %v323
                %v325 = vld [vmem:[%s101 + $0x33c] sm:$0xf]
                %326 = vst [vmem:[%s102 + $0x1bc] sm:$0xf] %v325
                %v327 = vld [vmem:[%s101 + $0x340] sm:$0xf]
                %328 = vst [vmem:[%s102 + $0x1c0] sm:$0xf] %v327
                %v329 = vld [vmem:[%s101 + $0x344] sm:$0xf]
                %330 = vst [vmem:[%s102 + $0x1c4] sm:$0xf] %v329
                %v331 = vld [vmem:[%s101 + $0x348] sm:$0xf]
                %332 = vst [vmem:[%s102 + $0x1c8] sm:$0xf] %v331
                %v333 = vld [vmem:[%s101 + $0x34c] sm:$0xf]
                %334 = vst [vmem:[%s102 + $0x1cc] sm:$0xf] %v333
                %v335 = vld [vmem:[%s101 + $0x350] sm:$0xf]
                %336 = vst [vmem:[%s102 + $0x1d0] sm:$0xf] %v335
                %v337 = vld [vmem:[%s101 + $0x354] sm:$0xf]
                %338 = vst [vmem:[%s102 + $0x1d4] sm:$0xf] %v337
                %v339 = vld [vmem:[%s101 + $0x358] sm:$0xf]
                %340 = vst [vmem:[%s102 + $0x1d8] sm:$0xf] %v339
                %v341 = vld [vmem:[%s101 + $0x35c] sm:$0xf]
                %342 = vst [vmem:[%s102 + $0x1dc] sm:$0xf] %v341
                %v343 = vld [vmem:[%s101 + $0x360] sm:$0xf]
                %344 = vst [vmem:[%s102 + $0x1e0] sm:$0xf] %v343
                %v345 = vld [vmem:[%s101 + $0x364] sm:$0xf]
                %346 = vst [vmem:[%s102 + $0x1e4] sm:$0xf] %v345
                %v347 = vld [vmem:[%s101 + $0x368] sm:$0xf]
                %348 = vst [vmem:[%s102 + $0x1e8] sm:$0xf] %v347
                %v349 = vld [vmem:[%s101 + $0x36c] sm:$0xf]
                %350 = vst [vmem:[%s102 + $0x1ec] sm:$0xf] %v349
                %v351 = vld [vmem:[%s101 + $0x370] sm:$0xf]
                %352 = vst [vmem:[%s102 + $0x1f0] sm:$0xf] %v351
                %v353 = vld [vmem:[%s101 + $0x374] sm:$0xf]
                %354 = vst [vmem:[%s102 + $0x1f4] sm:$0xf] %v353
                %v355 = vld [vmem:[%s101 + $0x378] sm:$0xf]
                %356 = vst [vmem:[%s102 + $0x1f8] sm:$0xf] %v355
                %v357 = vld [vmem:[%s101 + $0x37c] sm:$0xf]
                %358 = vst [vmem:[%s102 + $0x1fc] sm:$0xf] %v357
                %v359 = vld [vmem:[%s101 + $0x400] sm:$0xf]
                %360 = vst [vmem:[%s102 + $0x200] sm:$0xf] %v359
                %v361 = vld [vmem:[%s101 + $0x404] sm:$0xf]
                %362 = vst [vmem:[%s102 + $0x204] sm:$0xf] %v361
                %v363 = vld [vmem:[%s101 + $0x408] sm:$0xf]
                %364 = vst [vmem:[%s102 + $0x208] sm:$0xf] %v363
                %v365 = vld [vmem:[%s101 + $0x40c] sm:$0xf]
                %366 = vst [vmem:[%s102 + $0x20c] sm:$0xf] %v365
                %v367 = vld [vmem:[%s101 + $0x410] sm:$0xf]
                %368 = vst [vmem:[%s102 + $0x210] sm:$0xf] %v367
                %v369 = vld [vmem:[%s101 + $0x414] sm:$0xf]
                %370 = vst [vmem:[%s102 + $0x214] sm:$0xf] %v369
                %v371 = vld [vmem:[%s101 + $0x418] sm:$0xf]
                %372 = vst [vmem:[%s102 + $0x218] sm:$0xf] %v371
                %v373 = vld [vmem:[%s101 + $0x41c] sm:$0xf]
                %374 = vst [vmem:[%s102 + $0x21c] sm:$0xf] %v373
                %v375 = vld [vmem:[%s101 + $0x420] sm:$0xf]
                %376 = vst [vmem:[%s102 + $0x220] sm:$0xf] %v375
                %v377 = vld [vmem:[%s101 + $0x424] sm:$0xf]
                %378 = vst [vmem:[%s102 + $0x224] sm:$0xf] %v377
                %v379 = vld [vmem:[%s101 + $0x428] sm:$0xf]
                %380 = vst [vmem:[%s102 + $0x228] sm:$0xf] %v379
                %v381 = vld [vmem:[%s101 + $0x42c] sm:$0xf]
                %382 = vst [vmem:[%s102 + $0x22c] sm:$0xf] %v381
                %v383 = vld [vmem:[%s101 + $0x430] sm:$0xf]
                %384 = vst [vmem:[%s102 + $0x230] sm:$0xf] %v383
                %v385 = vld [vmem:[%s101 + $0x434] sm:$0xf]
                %386 = vst [vmem:[%s102 + $0x234] sm:$0xf] %v385
                %v387 = vld [vmem:[%s101 + $0x438] sm:$0xf]
                %388 = vst [vmem:[%s102 + $0x238] sm:$0xf] %v387
                %v389 = vld [vmem:[%s101 + $0x43c] sm:$0xf]
                %390 = vst [vmem:[%s102 + $0x23c] sm:$0xf] %v389
                %v391 = vld [vmem:[%s101 + $0x440] sm:$0xf]
                %392 = vst [vmem:[%s102 + $0x240] sm:$0xf] %v391
                %v393 = vld [vmem:[%s101 + $0x444] sm:$0xf]
                %394 = vst [vmem:[%s102 + $0x244] sm:$0xf] %v393
                %v395 = vld [vmem:[%s101 + $0x448] sm:$0xf]
                %396 = vst [vmem:[%s102 + $0x248] sm:$0xf] %v395
                %v397 = vld [vmem:[%s101 + $0x44c] sm:$0xf]
                %398 = vst [vmem:[%s102 + $0x24c] sm:$0xf] %v397
                %v399 = vld [vmem:[%s101 + $0x450] sm:$0xf]
                %400 = vst [vmem:[%s102 + $0x250] sm:$0xf] %v399
                %v401 = vld [vmem:[%s101 + $0x454] sm:$0xf]
                %402 = vst [vmem:[%s102 + $0x254] sm:$0xf] %v401
                %v403 = vld [vmem:[%s101 + $0x458] sm:$0xf]
                %404 = vst [vmem:[%s102 + $0x258] sm:$0xf] %v403
                %v405 = vld [vmem:[%s101 + $0x45c] sm:$0xf]
                %406 = vst [vmem:[%s102 + $0x25c] sm:$0xf] %v405
                %v407 = vld [vmem:[%s101 + $0x460] sm:$0xf]
                %408 = vst [vmem:[%s102 + $0x260] sm:$0xf] %v407
                %v409 = vld [vmem:[%s101 + $0x464] sm:$0xf]
                %410 = vst [vmem:[%s102 + $0x264] sm:$0xf] %v409
                %v411 = vld [vmem:[%s101 + $0x468] sm:$0xf]
                %412 = vst [vmem:[%s102 + $0x268] sm:$0xf] %v411
                %v413 = vld [vmem:[%s101 + $0x46c] sm:$0xf]
                %414 = vst [vmem:[%s102 + $0x26c] sm:$0xf] %v413
                %v415 = vld [vmem:[%s101 + $0x470] sm:$0xf]
                %416 = vst [vmem:[%s102 + $0x270] sm:$0xf] %v415
                %v417 = vld [vmem:[%s101 + $0x474] sm:$0xf]
                %418 = vst [vmem:[%s102 + $0x274] sm:$0xf] %v417
                %v419 = vld [vmem:[%s101 + $0x478] sm:$0xf]
                %420 = vst [vmem:[%s102 + $0x278] sm:$0xf] %v419
                %v421 = vld [vmem:[%s101 + $0x47c] sm:$0xf]
                %422 = vst [vmem:[%s102 + $0x27c] sm:$0xf] %v421
                %v423 = vld [vmem:[%s101 + $0x500] sm:$0xf]
                %424 = vst [vmem:[%s102 + $0x280] sm:$0xf] %v423
                %v425 = vld [vmem:[%s101 + $0x504] sm:$0xf]
                %426 = vst [vmem:[%s102 + $0x284] sm:$0xf] %v425
                %v427 = vld [vmem:[%s101 + $0x508] sm:$0xf]
                %428 = vst [vmem:[%s102 + $0x288] sm:$0xf] %v427
                %v429 = vld [vmem:[%s101 + $0x50c] sm:$0xf]
                %430 = vst [vmem:[%s102 + $0x28c] sm:$0xf] %v429
                %v431 = vld [vmem:[%s101 + $0x510] sm:$0xf]
                %432 = vst [vmem:[%s102 + $0x290] sm:$0xf] %v431
                %v433 = vld [vmem:[%s101 + $0x514] sm:$0xf]
                %434 = vst [vmem:[%s102 + $0x294] sm:$0xf] %v433
                %v435 = vld [vmem:[%s101 + $0x518] sm:$0xf]
                %436 = vst [vmem:[%s102 + $0x298] sm:$0xf] %v435
                %v437 = vld [vmem:[%s101 + $0x51c] sm:$0xf]
                %438 = vst [vmem:[%s102 + $0x29c] sm:$0xf] %v437
                %v439 = vld [vmem:[%s101 + $0x520] sm:$0xf]
                %440 = vst [vmem:[%s102 + $0x2a0] sm:$0xf] %v439
                %v441 = vld [vmem:[%s101 + $0x524] sm:$0xf]
                %442 = vst [vmem:[%s102 + $0x2a4] sm:$0xf] %v441
                %v443 = vld [vmem:[%s101 + $0x528] sm:$0xf]
                %444 = vst [vmem:[%s102 + $0x2a8] sm:$0xf] %v443
                %v445 = vld [vmem:[%s101 + $0x52c] sm:$0xf]
                %446 = vst [vmem:[%s102 + $0x2ac] sm:$0xf] %v445
                %v447 = vld [vmem:[%s101 + $0x530] sm:$0xf]
                %448 = vst [vmem:[%s102 + $0x2b0] sm:$0xf] %v447
                %v449 = vld [vmem:[%s101 + $0x534] sm:$0xf]
                %450 = vst [vmem:[%s102 + $0x2b4] sm:$0xf] %v449
                %v451 = vld [vmem:[%s101 + $0x538] sm:$0xf]
                %452 = vst [vmem:[%s102 + $0x2b8] sm:$0xf] %v451
                %v453 = vld [vmem:[%s101 + $0x53c] sm:$0xf]
                %454 = vst [vmem:[%s102 + $0x2bc] sm:$0xf] %v453
                %v455 = vld [vmem:[%s101 + $0x540] sm:$0xf]
                %456 = vst [vmem:[%s102 + $0x2c0] sm:$0xf] %v455
                %v457 = vld [vmem:[%s101 + $0x544] sm:$0xf]
                %458 = vst [vmem:[%s102 + $0x2c4] sm:$0xf] %v457
                %v459 = vld [vmem:[%s101 + $0x548] sm:$0xf]
                %460 = vst [vmem:[%s102 + $0x2c8] sm:$0xf] %v459
                %v461 = vld [vmem:[%s101 + $0x54c] sm:$0xf]
                %462 = vst [vmem:[%s102 + $0x2cc] sm:$0xf] %v461
                %v463 = vld [vmem:[%s101 + $0x550] sm:$0xf]
                %464 = vst [vmem:[%s102 + $0x2d0] sm:$0xf] %v463
                %v465 = vld [vmem:[%s101 + $0x554] sm:$0xf]
                %466 = vst [vmem:[%s102 + $0x2d4] sm:$0xf] %v465
                %v467 = vld [vmem:[%s101 + $0x558] sm:$0xf]
                %468 = vst [vmem:[%s102 + $0x2d8] sm:$0xf] %v467
                %v469 = vld [vmem:[%s101 + $0x55c] sm:$0xf]
                %470 = vst [vmem:[%s102 + $0x2dc] sm:$0xf] %v469
                %v471 = vld [vmem:[%s101 + $0x560] sm:$0xf]
                %472 = vst [vmem:[%s102 + $0x2e0] sm:$0xf] %v471
                %v473 = vld [vmem:[%s101 + $0x564] sm:$0xf]
                %474 = vst [vmem:[%s102 + $0x2e4] sm:$0xf] %v473
                %v475 = vld [vmem:[%s101 + $0x568] sm:$0xf]
                %476 = vst [vmem:[%s102 + $0x2e8] sm:$0xf] %v475
                %v477 = vld [vmem:[%s101 + $0x56c] sm:$0xf]
                %478 = vst [vmem:[%s102 + $0x2ec] sm:$0xf] %v477
                %v479 = vld [vmem:[%s101 + $0x570] sm:$0xf]
                %480 = vst [vmem:[%s102 + $0x2f0] sm:$0xf] %v479
                %v481 = vld [vmem:[%s101 + $0x574] sm:$0xf]
                %482 = vst [vmem:[%s102 + $0x2f4] sm:$0xf] %v481
                %v483 = vld [vmem:[%s101 + $0x578] sm:$0xf]
                %484 = vst [vmem:[%s102 + $0x2f8] sm:$0xf] %v483
                %v485 = vld [vmem:[%s101 + $0x57c] sm:$0xf]
                %486 = vst [vmem:[%s102 + $0x2fc] sm:$0xf] %v485
                %v487 = vld [vmem:[%s101 + $0x600] sm:$0xf]
                %488 = vst [vmem:[%s102 + $0x300] sm:$0xf] %v487
                %v489 = vld [vmem:[%s101 + $0x604] sm:$0xf]
                %490 = vst [vmem:[%s102 + $0x304] sm:$0xf] %v489
                %v491 = vld [vmem:[%s101 + $0x608] sm:$0xf]
                %492 = vst [vmem:[%s102 + $0x308] sm:$0xf] %v491
                %v493 = vld [vmem:[%s101 + $0x60c] sm:$0xf]
                %494 = vst [vmem:[%s102 + $0x30c] sm:$0xf] %v493
                %v495 = vld [vmem:[%s101 + $0x610] sm:$0xf]
                %496 = vst [vmem:[%s102 + $0x310] sm:$0xf] %v495
                %v497 = vld [vmem:[%s101 + $0x614] sm:$0xf]
                %498 = vst [vmem:[%s102 + $0x314] sm:$0xf] %v497
                %v499 = vld [vmem:[%s101 + $0x618] sm:$0xf]
                %500 = vst [vmem:[%s102 + $0x318] sm:$0xf] %v499
                %v501 = vld [vmem:[%s101 + $0x61c] sm:$0xf]
                %502 = vst [vmem:[%s102 + $0x31c] sm:$0xf] %v501
                %v503 = vld [vmem:[%s101 + $0x620] sm:$0xf]
                %504 = vst [vmem:[%s102 + $0x320] sm:$0xf] %v503
                %v505 = vld [vmem:[%s101 + $0x624] sm:$0xf]
                %506 = vst [vmem:[%s102 + $0x324] sm:$0xf] %v505
                %v507 = vld [vmem:[%s101 + $0x628] sm:$0xf]
                %508 = vst [vmem:[%s102 + $0x328] sm:$0xf] %v507
                %v509 = vld [vmem:[%s101 + $0x62c] sm:$0xf]
                %510 = vst [vmem:[%s102 + $0x32c] sm:$0xf] %v509
                %v511 = vld [vmem:[%s101 + $0x630] sm:$0xf]
                %512 = vst [vmem:[%s102 + $0x330] sm:$0xf] %v511
                %v513 = vld [vmem:[%s101 + $0x634] sm:$0xf]
                %514 = vst [vmem:[%s102 + $0x334] sm:$0xf] %v513
                %v515 = vld [vmem:[%s101 + $0x638] sm:$0xf]
                %516 = vst [vmem:[%s102 + $0x338] sm:$0xf] %v515
                %v517 = vld [vmem:[%s101 + $0x63c] sm:$0xf]
                %518 = vst [vmem:[%s102 + $0x33c] sm:$0xf] %v517
                %v519 = vld [vmem:[%s101 + $0x640] sm:$0xf]
                %520 = vst [vmem:[%s102 + $0x340] sm:$0xf] %v519
                %v521 = vld [vmem:[%s101 + $0x644] sm:$0xf]
                %522 = vst [vmem:[%s102 + $0x344] sm:$0xf] %v521
                %v523 = vld [vmem:[%s101 + $0x648] sm:$0xf]
                %524 = vst [vmem:[%s102 + $0x348] sm:$0xf] %v523
                %v525 = vld [vmem:[%s101 + $0x64c] sm:$0xf]
                %526 = vst [vmem:[%s102 + $0x34c] sm:$0xf] %v525
                %v527 = vld [vmem:[%s101 + $0x650] sm:$0xf]
                %528 = vst [vmem:[%s102 + $0x350] sm:$0xf] %v527
                %v529 = vld [vmem:[%s101 + $0x654] sm:$0xf]
                %530 = vst [vmem:[%s102 + $0x354] sm:$0xf] %v529
                %v531 = vld [vmem:[%s101 + $0x658] sm:$0xf]
                %532 = vst [vmem:[%s102 + $0x358] sm:$0xf] %v531
                %v533 = vld [vmem:[%s101 + $0x65c] sm:$0xf]
                %534 = vst [vmem:[%s102 + $0x35c] sm:$0xf] %v533
                %v535 = vld [vmem:[%s101 + $0x660] sm:$0xf]
                %536 = vst [vmem:[%s102 + $0x360] sm:$0xf] %v535
                %v537 = vld [vmem:[%s101 + $0x664] sm:$0xf]
                %538 = vst [vmem:[%s102 + $0x364] sm:$0xf] %v537
                %v539 = vld [vmem:[%s101 + $0x668] sm:$0xf]
                %540 = vst [vmem:[%s102 + $0x368] sm:$0xf] %v539
                %v541 = vld [vmem:[%s101 + $0x66c] sm:$0xf]
                %542 = vst [vmem:[%s102 + $0x36c] sm:$0xf] %v541
                %v543 = vld [vmem:[%s101 + $0x670] sm:$0xf]
                %544 = vst [vmem:[%s102 + $0x370] sm:$0xf] %v543
                %v545 = vld [vmem:[%s101 + $0x674] sm:$0xf]
                %546 = vst [vmem:[%s102 + $0x374] sm:$0xf] %v545
                %v547 = vld [vmem:[%s101 + $0x678] sm:$0xf]
                %548 = vst [vmem:[%s102 + $0x378] sm:$0xf] %v547
                %v549 = vld [vmem:[%s101 + $0x67c] sm:$0xf]
                %550 = vst [vmem:[%s102 + $0x37c] sm:$0xf] %v549
                %v551 = vld [vmem:[%s101 + $0x700] sm:$0xf]
                %552 = vst [vmem:[%s102 + $0x380] sm:$0xf] %v551
                %v553 = vld [vmem:[%s101 + $0x704] sm:$0xf]
                %554 = vst [vmem:[%s102 + $0x384] sm:$0xf] %v553
                %v555 = vld [vmem:[%s101 + $0x708] sm:$0xf]
                %556 = vst [vmem:[%s102 + $0x388] sm:$0xf] %v555
                %v557 = vld [vmem:[%s101 + $0x70c] sm:$0xf]
                %558 = vst [vmem:[%s102 + $0x38c] sm:$0xf] %v557
                %v559 = vld [vmem:[%s101 + $0x710] sm:$0xf]
                %560 = vst [vmem:[%s102 + $0x390] sm:$0xf] %v559
                %v561 = vld [vmem:[%s101 + $0x714] sm:$0xf]
                %562 = vst [vmem:[%s102 + $0x394] sm:$0xf] %v561
                %v563 = vld [vmem:[%s101 + $0x718] sm:$0xf]
                %564 = vst [vmem:[%s102 + $0x398] sm:$0xf] %v563
                %v565 = vld [vmem:[%s101 + $0x71c] sm:$0xf]
                %566 = vst [vmem:[%s102 + $0x39c] sm:$0xf] %v565
                %v567 = vld [vmem:[%s101 + $0x720] sm:$0xf]
                %568 = vst [vmem:[%s102 + $0x3a0] sm:$0xf] %v567
                %v569 = vld [vmem:[%s101 + $0x724] sm:$0xf]
                %570 = vst [vmem:[%s102 + $0x3a4] sm:$0xf] %v569
                %v571 = vld [vmem:[%s101 + $0x728] sm:$0xf]
                %572 = vst [vmem:[%s102 + $0x3a8] sm:$0xf] %v571
                %v573 = vld [vmem:[%s101 + $0x72c] sm:$0xf]
                %574 = vst [vmem:[%s102 + $0x3ac] sm:$0xf] %v573
                %v575 = vld [vmem:[%s101 + $0x730] sm:$0xf]
                %576 = vst [vmem:[%s102 + $0x3b0] sm:$0xf] %v575
                %v577 = vld [vmem:[%s101 + $0x734] sm:$0xf]
                %578 = vst [vmem:[%s102 + $0x3b4] sm:$0xf] %v577
                %v579 = vld [vmem:[%s101 + $0x738] sm:$0xf]
                %580 = vst [vmem:[%s102 + $0x3b8] sm:$0xf] %v579
                %v581 = vld [vmem:[%s101 + $0x73c] sm:$0xf]
                %582 = vst [vmem:[%s102 + $0x3bc] sm:$0xf] %v581
                %v583 = vld [vmem:[%s101 + $0x740] sm:$0xf]
                %584 = vst [vmem:[%s102 + $0x3c0] sm:$0xf] %v583
                %v585 = vld [vmem:[%s101 + $0x744] sm:$0xf]
                %586 = vst [vmem:[%s102 + $0x3c4] sm:$0xf] %v585
                %v587 = vld [vmem:[%s101 + $0x748] sm:$0xf]
                %588 = vst [vmem:[%s102 + $0x3c8] sm:$0xf] %v587
                %v589 = vld [vmem:[%s101 + $0x74c] sm:$0xf]
                %590 = vst [vmem:[%s102 + $0x3cc] sm:$0xf] %v589
                %v591 = vld [vmem:[%s101 + $0x750] sm:$0xf]
                %592 = vst [vmem:[%s102 + $0x3d0] sm:$0xf] %v591
                %v593 = vld [vmem:[%s101 + $0x754] sm:$0xf]
                %594 = vst [vmem:[%s102 + $0x3d4] sm:$0xf] %v593
                %v595 = vld [vmem:[%s101 + $0x758] sm:$0xf]
                %596 = vst [vmem:[%s102 + $0x3d8] sm:$0xf] %v595
                %v597 = vld [vmem:[%s101 + $0x75c] sm:$0xf]
                %598 = vst [vmem:[%s102 + $0x3dc] sm:$0xf] %v597
                %v599 = vld [vmem:[%s101 + $0x760] sm:$0xf]
                %600 = vst [vmem:[%s102 + $0x3e0] sm:$0xf] %v599
                %v601 = vld [vmem:[%s101 + $0x764] sm:$0xf]
                %602 = vst [vmem:[%s102 + $0x3e4] sm:$0xf] %v601
                %v603 = vld [vmem:[%s101 + $0x768] sm:$0xf]
                %604 = vst [vmem:[%s102 + $0x3e8] sm:$0xf] %v603
                %v605 = vld [vmem:[%s101 + $0x76c] sm:$0xf]
                %606 = vst [vmem:[%s102 + $0x3ec] sm:$0xf] %v605
                %v607 = vld [vmem:[%s101 + $0x770] sm:$0xf]
                %608 = vst [vmem:[%s102 + $0x3f0] sm:$0xf] %v607
                %v609 = vld [vmem:[%s101 + $0x774] sm:$0xf]
                %610 = vst [vmem:[%s102 + $0x3f4] sm:$0xf] %v609
                %v611 = vld [vmem:[%s101 + $0x778] sm:$0xf]
                %612 = vst [vmem:[%s102 + $0x3f8] sm:$0xf] %v611
                %v613 = vld [vmem:[%s101 + $0x77c] sm:$0xf]
                %614 = vst [vmem:[%s102 + $0x3fc] sm:$0xf] %v613
                %v615 = vld [vmem:[%s101 + $0x800] sm:$0xf]
                %616 = vst [vmem:[%s102 + $0x400] sm:$0xf] %v615
                %v617 = vld [vmem:[%s101 + $0x804] sm:$0xf]
                %618 = vst [vmem:[%s102 + $0x404] sm:$0xf] %v617
                %v619 = vld [vmem:[%s101 + $0x808] sm:$0xf]
                %620 = vst [vmem:[%s102 + $0x408] sm:$0xf] %v619
                %v621 = vld [vmem:[%s101 + $0x80c] sm:$0xf]
                %622 = vst [vmem:[%s102 + $0x40c] sm:$0xf] %v621
                %v623 = vld [vmem:[%s101 + $0x810] sm:$0xf]
                %624 = vst [vmem:[%s102 + $0x410] sm:$0xf] %v623
                %v625 = vld [vmem:[%s101 + $0x814] sm:$0xf]
                %626 = vst [vmem:[%s102 + $0x414] sm:$0xf] %v625
                %v627 = vld [vmem:[%s101 + $0x818] sm:$0xf]
                %628 = vst [vmem:[%s102 + $0x418] sm:$0xf] %v627
                %v629 = vld [vmem:[%s101 + $0x81c] sm:$0xf]
                %630 = vst [vmem:[%s102 + $0x41c] sm:$0xf] %v629
                %v631 = vld [vmem:[%s101 + $0x820] sm:$0xf]
                %632 = vst [vmem:[%s102 + $0x420] sm:$0xf] %v631
                %v633 = vld [vmem:[%s101 + $0x824] sm:$0xf]
                %634 = vst [vmem:[%s102 + $0x424] sm:$0xf] %v633
                %v635 = vld [vmem:[%s101 + $0x828] sm:$0xf]
                %636 = vst [vmem:[%s102 + $0x428] sm:$0xf] %v635
                %v637 = vld [vmem:[%s101 + $0x82c] sm:$0xf]
                %638 = vst [vmem:[%s102 + $0x42c] sm:$0xf] %v637
                %v639 = vld [vmem:[%s101 + $0x830] sm:$0xf]
                %640 = vst [vmem:[%s102 + $0x430] sm:$0xf] %v639
                %v641 = vld [vmem:[%s101 + $0x834] sm:$0xf]
                %642 = vst [vmem:[%s102 + $0x434] sm:$0xf] %v641
                %v643 = vld [vmem:[%s101 + $0x838] sm:$0xf]
                %644 = vst [vmem:[%s102 + $0x438] sm:$0xf] %v643
                %v645 = vld [vmem:[%s101 + $0x83c] sm:$0xf]
                %646 = vst [vmem:[%s102 + $0x43c] sm:$0xf] %v645
                %v647 = vld [vmem:[%s101 + $0x840] sm:$0xf]
                %648 = vst [vmem:[%s102 + $0x440] sm:$0xf] %v647
                %v649 = vld [vmem:[%s101 + $0x844] sm:$0xf]
                %650 = vst [vmem:[%s102 + $0x444] sm:$0xf] %v649
                %v651 = vld [vmem:[%s101 + $0x848] sm:$0xf]
                %652 = vst [vmem:[%s102 + $0x448] sm:$0xf] %v651
                %v653 = vld [vmem:[%s101 + $0x84c] sm:$0xf]
                %654 = vst [vmem:[%s102 + $0x44c] sm:$0xf] %v653
                %v655 = vld [vmem:[%s101 + $0x850] sm:$0xf]
                %656 = vst [vmem:[%s102 + $0x450] sm:$0xf] %v655
                %v657 = vld [vmem:[%s101 + $0x854] sm:$0xf]
                %658 = vst [vmem:[%s102 + $0x454] sm:$0xf] %v657
                %v659 = vld [vmem:[%s101 + $0x858] sm:$0xf]
                %660 = vst [vmem:[%s102 + $0x458] sm:$0xf] %v659
                %v661 = vld [vmem:[%s101 + $0x85c] sm:$0xf]
                %662 = vst [vmem:[%s102 + $0x45c] sm:$0xf] %v661
                %v663 = vld [vmem:[%s101 + $0x860] sm:$0xf]
                %664 = vst [vmem:[%s102 + $0x460] sm:$0xf] %v663
                %v665 = vld [vmem:[%s101 + $0x864] sm:$0xf]
                %666 = vst [vmem:[%s102 + $0x464] sm:$0xf] %v665
                %v667 = vld [vmem:[%s101 + $0x868] sm:$0xf]
                %668 = vst [vmem:[%s102 + $0x468] sm:$0xf] %v667
                %v669 = vld [vmem:[%s101 + $0x86c] sm:$0xf]
                %670 = vst [vmem:[%s102 + $0x46c] sm:$0xf] %v669
                %v671 = vld [vmem:[%s101 + $0x870] sm:$0xf]
                %672 = vst [vmem:[%s102 + $0x470] sm:$0xf] %v671
                %v673 = vld [vmem:[%s101 + $0x874] sm:$0xf]
                %674 = vst [vmem:[%s102 + $0x474] sm:$0xf] %v673
                %v675 = vld [vmem:[%s101 + $0x878] sm:$0xf]
                %676 = vst [vmem:[%s102 + $0x478] sm:$0xf] %v675
                %v677 = vld [vmem:[%s101 + $0x87c] sm:$0xf]
                %678 = vst [vmem:[%s102 + $0x47c] sm:$0xf] %v677
              $region37: #{stem_forward.18} parent=31 // loop_footer
                %s100 = sadd.s32 1, %s96
              $region38: #{stem_forward.18} parent=31 // loop_footer_branch
                %95 = sbr.rel target = $region34
              $region39: #{stem_forward.18} parent=31 // loop_exit
                _
            $region32: #{stem_forward.18} parent=23 // pred_fallthru
              _
          $region24: #{stem_forward.18} parent=19 // pred_fallthru
            _
          %1274 = vnop
        $region20: #{stem_forward.18} parent=15 // pred_fallthru
          _
      $region16: #{stem_forward.18} parent=5 // pred_fallthru
        _
      %p1275 = scmp.le.s32.totalorder 1, %s7
      %p1276 = scmp.lt.s32.totalorder %s7, 3
      %p1277 = pnand %p1275, %p1276
      %p1278 = pneg %p1277
      // Predicated region
      $region58: #{stem_forward.18} parent=5 // pred_check
        _
      $region59: #{stem_forward.18} parent=5 // pred_check_branch
        %1280 = sbr.rel (%p1277) target = $region61
      $region60: #{stem_forward.18} parent=5 // pred_region
        %s1281 = ssub.s32 %s7, 1
        %s1282 = sand.u32 %s20, 1
        %s1283 = sand.u32 %s20, 1
        %s1284 = smul.addr %s1283, 1152
        %s1285 = scalar_lea.vmem [#allocation2], %s1284
        // Predicated region
        $region62: #{stem_forward.18} parent=60 // pred_check
          %p1286 = pneg %p33
        $region63: #{stem_forward.18} parent=60 // pred_check_branch
          %1288 = sbr.rel (%p1286) target = $region65
        $region64: #{stem_forward.18} parent=60 // pred_region
          _
        $region65: #{stem_forward.18} parent=60 // pred_fallthru
          _
        %s1289 = sand.u32 %s20, 1
        %s1290 = sand.u32 %s20, 1
        %s1291 = smul.addr %s1290, 1152
        %s1292 = scalar_lea.vmem [#allocation2], %s1291
        %p1293 = pneg %p33
        %p1294 = pneg %p30
        %p1295 = pneg %p59
        %p1296 = pneg %p56
        %s1297 = smul.u32 32, %s12
        %p1298 = scmp.lt.s32.totalorder %s1297, 63
        %s1299 = scalar_select %p1298, %s1297, 63
        %s1300 = smul.addr %s1299, 4
        %s1301 = scalar_lea.vmem %s1, %s1300
        %s1302 = smul.u32 32, %s12
        %s1303 = smul.u32 32, %s12
        %p1304 = scmp.lt.s32.totalorder %s1303, 63
        %s1305 = scalar_select %p1304, %s1303, 63
        %s1306 = smul.addr %s1305, 4
        %s1307 = scalar_lea.vmem %s1, %s1306
        %s1308 = smul.u32 32, %s12
        %v1310 = vld [vmem:[%s1285] sm:$0xf]
        %v1311 = vld [vmem:[%s1285 + $0x4] sm:$0xf]
        %v1312 = vld [vmem:[%s1285 + $0x8] sm:$0xf]
        %v1313 = vld [vmem:[%s1285 + $0xc] sm:$0xf]
        %v1314 = vld [vmem:[%s1285 + $0x10] sm:$0xf]
        %v1315 = vld [vmem:[%s1285 + $0x14] sm:$0xf]
        %v1316 = vld [vmem:[%s1285 + $0x18] sm:$0xf]
        %v1317 = vld [vmem:[%s1285 + $0x1c] sm:$0xf]
        %v1318 = vld [vmem:[%s1285 + $0x20] sm:$0xf]
        %v1319 = vld [vmem:[%s1285 + $0x24] sm:$0xf]
        %v1320 = vld [vmem:[%s1285 + $0x28] sm:$0xf]
        %v1321 = vld [vmem:[%s1285 + $0x2c] sm:$0xf]
        %v1322 = vld [vmem:[%s1285 + $0x30] sm:$0xf]
        %v1323 = vld [vmem:[%s1285 + $0x34] sm:$0xf]
        %v1324 = vld [vmem:[%s1285 + $0x38] sm:$0xf]
        %v1325 = vld [vmem:[%s1285 + $0x3c] sm:$0xf]
        %v1326 = vld [vmem:[%s1285 + $0x40] sm:$0xf]
        %v1327 = vld [vmem:[%s1285 + $0x44] sm:$0xf]
        %v1328 = vld [vmem:[%s1285 + $0x48] sm:$0xf]
        %v1329 = vld [vmem:[%s1285 + $0x4c] sm:$0xf]
        %v1330 = vld [vmem:[%s1285 + $0x50] sm:$0xf]
        %v1331 = vld [vmem:[%s1285 + $0x54] sm:$0xf]
        %v1332 = vld [vmem:[%s1285 + $0x58] sm:$0xf]
        %v1333 = vld [vmem:[%s1285 + $0x5c] sm:$0xf]
        %v1334 = vld [vmem:[%s1285 + $0x60] sm:$0xf]
        %v1335 = vld [vmem:[%s1285 + $0x64] sm:$0xf]
        %v1336 = vld [vmem:[%s1285 + $0x68] sm:$0xf]
        %v1337 = vld [vmem:[%s1285 + $0x6c] sm:$0xf]
        %v1338 = vld [vmem:[%s1285 + $0x70] sm:$0xf]
        %v1339 = vld [vmem:[%s1285 + $0x74] sm:$0xf]
        %v1340 = vld [vmem:[%s1285 + $0x78] sm:$0xf]
        %v1341 = vld [vmem:[%s1285 + $0x7c] sm:$0xf]
        %v1342 = vld [vmem:[%s1285 + $0x80] sm:$0xf]
        %v1343 = vld [vmem:[%s1285 + $0x84] sm:$0xf]
        %v1344 = vld [vmem:[%s1285 + $0x88] sm:$0xf]
        %v1345 = vld [vmem:[%s1285 + $0x8c] sm:$0xf]
        %v1346 = vld [vmem:[%s1285 + $0x90] sm:$0xf]
        %v1347 = vld [vmem:[%s1285 + $0x94] sm:$0xf]
        %v1348 = vld [vmem:[%s1285 + $0x98] sm:$0xf]
        %v1349 = vld [vmem:[%s1285 + $0x9c] sm:$0xf]
        %v1350 = vld [vmem:[%s1285 + $0xa0] sm:$0xf]
        %v1351 = vld [vmem:[%s1285 + $0xa4] sm:$0xf]
        %v1352 = vld [vmem:[%s1285 + $0xa8] sm:$0xf]
        %v1353 = vld [vmem:[%s1285 + $0xac] sm:$0xf]
        %v1354 = vld [vmem:[%s1285 + $0xb0] sm:$0xf]
        %v1355 = vld [vmem:[%s1285 + $0xb4] sm:$0xf]
        %v1356 = vld [vmem:[%s1285 + $0xb8] sm:$0xf]
        %v1357 = vld [vmem:[%s1285 + $0xbc] sm:$0xf]
        %v1358 = vld [vmem:[%s1285 + $0xc0] sm:$0xf]
        %v1359 = vld [vmem:[%s1285 + $0xc4] sm:$0xf]
        %v1360 = vld [vmem:[%s1285 + $0xc8] sm:$0xf]
        %v1361 = vld [vmem:[%s1285 + $0xcc] sm:$0xf]
        %v1362 = vld [vmem:[%s1285 + $0xd0] sm:$0xf]
        %v1363 = vld [vmem:[%s1285 + $0xd4] sm:$0xf]
        %v1364 = vld [vmem:[%s1285 + $0xd8] sm:$0xf]
        %v1365 = vld [vmem:[%s1285 + $0xdc] sm:$0xf]
        %v1366 = vld [vmem:[%s1285 + $0xe0] sm:$0xf]
        %v1367 = vld [vmem:[%s1285 + $0xe4] sm:$0xf]
        %v1368 = vld [vmem:[%s1285 + $0xe8] sm:$0xf]
        %v1369 = vld [vmem:[%s1285 + $0xec] sm:$0xf]
        %v1370 = vld [vmem:[%s1285 + $0xf0] sm:$0xf]
        %v1371 = vld [vmem:[%s1285 + $0xf4] sm:$0xf]
        %v1372 = vld [vmem:[%s1285 + $0xf8] sm:$0xf]
        %v1373 = vld [vmem:[%s1285 + $0xfc] sm:$0xf]
        %v1374 = vld [vmem:[%s1285 + $0x100] sm:$0xf]
        %v1375 = vld [vmem:[%s1285 + $0x104] sm:$0xf]
        %v1376 = vld [vmem:[%s1285 + $0x108] sm:$0xf]
        %v1377 = vld [vmem:[%s1285 + $0x10c] sm:$0xf]
        %v1378 = vld [vmem:[%s1285 + $0x110] sm:$0xf]
        %v1379 = vld [vmem:[%s1285 + $0x114] sm:$0xf]
        %v1380 = vld [vmem:[%s1285 + $0x118] sm:$0xf]
        %v1381 = vld [vmem:[%s1285 + $0x11c] sm:$0xf]
        %v1382 = vld [vmem:[%s1285 + $0x120] sm:$0xf]
        %v1383 = vld [vmem:[%s1285 + $0x124] sm:$0xf]
        %v1384 = vld [vmem:[%s1285 + $0x128] sm:$0xf]
        %v1385 = vld [vmem:[%s1285 + $0x12c] sm:$0xf]
        %v1386 = vld [vmem:[%s1285 + $0x130] sm:$0xf]
        %v1387 = vld [vmem:[%s1285 + $0x134] sm:$0xf]
        %v1388 = vld [vmem:[%s1285 + $0x138] sm:$0xf]
        %v1389 = vld [vmem:[%s1285 + $0x13c] sm:$0xf]
        %v1390 = vld [vmem:[%s1285 + $0x140] sm:$0xf]
        %v1391 = vld [vmem:[%s1285 + $0x144] sm:$0xf]
        %v1392 = vld [vmem:[%s1285 + $0x148] sm:$0xf]
        %v1393 = vld [vmem:[%s1285 + $0x14c] sm:$0xf]
        %v1394 = vld [vmem:[%s1285 + $0x150] sm:$0xf]
        %v1395 = vld [vmem:[%s1285 + $0x154] sm:$0xf]
        %v1396 = vld [vmem:[%s1285 + $0x158] sm:$0xf]
        %v1397 = vld [vmem:[%s1285 + $0x15c] sm:$0xf]
        %v1398 = vld [vmem:[%s1285 + $0x160] sm:$0xf]
        %v1399 = vld [vmem:[%s1285 + $0x164] sm:$0xf]
        %v1400 = vld [vmem:[%s1285 + $0x168] sm:$0xf]
        %v1401 = vld [vmem:[%s1285 + $0x16c] sm:$0xf]
        %v1402 = vld [vmem:[%s1285 + $0x170] sm:$0xf]
        %v1403 = vld [vmem:[%s1285 + $0x174] sm:$0xf]
        %v1404 = vld [vmem:[%s1285 + $0x178] sm:$0xf]
        %v1405 = vld [vmem:[%s1285 + $0x17c] sm:$0xf]
        %v1406 = vld [vmem:[%s1285 + $0x180] sm:$0xf]
        %v1407 = vld [vmem:[%s1285 + $0x184] sm:$0xf]
        %v1408 = vld [vmem:[%s1285 + $0x188] sm:$0xf]
        %v1409 = vld [vmem:[%s1285 + $0x18c] sm:$0xf]
        %v1410 = vld [vmem:[%s1285 + $0x190] sm:$0xf]
        %v1411 = vld [vmem:[%s1285 + $0x194] sm:$0xf]
        %v1412 = vld [vmem:[%s1285 + $0x198] sm:$0xf]
        %v1413 = vld [vmem:[%s1285 + $0x19c] sm:$0xf]
        %v1414 = vld [vmem:[%s1285 + $0x1a0] sm:$0xf]
        %v1415 = vld [vmem:[%s1285 + $0x1a4] sm:$0xf]
        %v1416 = vld [vmem:[%s1285 + $0x1a8] sm:$0xf]
        %v1417 = vld [vmem:[%s1285 + $0x1ac] sm:$0xf]
        %v1418 = vld [vmem:[%s1285 + $0x1b0] sm:$0xf]
        %v1419 = vld [vmem:[%s1285 + $0x1b4] sm:$0xf]
        %v1420 = vld [vmem:[%s1285 + $0x1b8] sm:$0xf]
        %v1421 = vld [vmem:[%s1285 + $0x1bc] sm:$0xf]
        %v1422 = vld [vmem:[%s1285 + $0x1c0] sm:$0xf]
        %v1423 = vld [vmem:[%s1285 + $0x1c4] sm:$0xf]
        %v1424 = vld [vmem:[%s1285 + $0x1c8] sm:$0xf]
        %v1425 = vld [vmem:[%s1285 + $0x1cc] sm:$0xf]
        %v1426 = vld [vmem:[%s1285 + $0x1d0] sm:$0xf]
        %v1427 = vld [vmem:[%s1285 + $0x1d4] sm:$0xf]
        %v1428 = vld [vmem:[%s1285 + $0x1d8] sm:$0xf]
        %v1429 = vld [vmem:[%s1285 + $0x1dc] sm:$0xf]
        %v1430 = vld [vmem:[%s1285 + $0x1e0] sm:$0xf]
        %v1431 = vld [vmem:[%s1285 + $0x1e4] sm:$0xf]
        %v1432 = vld [vmem:[%s1285 + $0x1e8] sm:$0xf]
        %v1433 = vld [vmem:[%s1285 + $0x1ec] sm:$0xf]
        %v1434 = vld [vmem:[%s1285 + $0x1f0] sm:$0xf]
        %v1435 = vld [vmem:[%s1285 + $0x1f4] sm:$0xf]
        %v1436 = vld [vmem:[%s1285 + $0x1f8] sm:$0xf]
        %v1437 = vld [vmem:[%s1285 + $0x1fc] sm:$0xf]
        %v1438 = vld [vmem:[%s1285 + $0x200] sm:$0xf]
        %v1439 = vld [vmem:[%s1285 + $0x204] sm:$0xf]
        %v1440 = vld [vmem:[%s1285 + $0x208] sm:$0xf]
        %v1441 = vld [vmem:[%s1285 + $0x20c] sm:$0xf]
        %v1442 = vld [vmem:[%s1285 + $0x210] sm:$0xf]
        %v1443 = vld [vmem:[%s1285 + $0x214] sm:$0xf]
        %v1444 = vld [vmem:[%s1285 + $0x218] sm:$0xf]
        %v1445 = vld [vmem:[%s1285 + $0x21c] sm:$0xf]
        %v1446 = vld [vmem:[%s1285 + $0x220] sm:$0xf]
        %v1447 = vld [vmem:[%s1285 + $0x224] sm:$0xf]
        %v1448 = vld [vmem:[%s1285 + $0x228] sm:$0xf]
        %v1449 = vld [vmem:[%s1285 + $0x22c] sm:$0xf]
        %v1450 = vld [vmem:[%s1285 + $0x230] sm:$0xf]
        %v1451 = vld [vmem:[%s1285 + $0x234] sm:$0xf]
        %v1452 = vld [vmem:[%s1285 + $0x238] sm:$0xf]
        %v1453 = vld [vmem:[%s1285 + $0x23c] sm:$0xf]
        %v1454 = vld [vmem:[%s1285 + $0x240] sm:$0xf]
        %v1455 = vld [vmem:[%s1285 + $0x244] sm:$0xf]
        %v1456 = vld [vmem:[%s1285 + $0x248] sm:$0xf]
        %v1457 = vld [vmem:[%s1285 + $0x24c] sm:$0xf]
        %v1458 = vld [vmem:[%s1285 + $0x250] sm:$0xf]
        %v1459 = vld [vmem:[%s1285 + $0x254] sm:$0xf]
        %v1460 = vld [vmem:[%s1285 + $0x258] sm:$0xf]
        %v1461 = vld [vmem:[%s1285 + $0x25c] sm:$0xf]
        %v1462 = vld [vmem:[%s1285 + $0x260] sm:$0xf]
        %v1463 = vld [vmem:[%s1285 + $0x264] sm:$0xf]
        %v1464 = vld [vmem:[%s1285 + $0x268] sm:$0xf]
        %v1465 = vld [vmem:[%s1285 + $0x26c] sm:$0xf]
        %v1466 = vld [vmem:[%s1285 + $0x270] sm:$0xf]
        %v1467 = vld [vmem:[%s1285 + $0x274] sm:$0xf]
        %v1468 = vld [vmem:[%s1285 + $0x278] sm:$0xf]
        %v1469 = vld [vmem:[%s1285 + $0x27c] sm:$0xf]
        %v1470 = vld [vmem:[%s1285 + $0x280] sm:$0xf]
        %v1471 = vld [vmem:[%s1285 + $0x284] sm:$0xf]
        %v1472 = vld [vmem:[%s1285 + $0x288] sm:$0xf]
        %v1473 = vld [vmem:[%s1285 + $0x28c] sm:$0xf]
        %v1474 = vld [vmem:[%s1285 + $0x290] sm:$0xf]
        %v1475 = vld [vmem:[%s1285 + $0x294] sm:$0xf]
        %v1476 = vld [vmem:[%s1285 + $0x298] sm:$0xf]
        %v1477 = vld [vmem:[%s1285 + $0x29c] sm:$0xf]
        %v1478 = vld [vmem:[%s1285 + $0x2a0] sm:$0xf]
        %v1479 = vld [vmem:[%s1285 + $0x2a4] sm:$0xf]
        %v1480 = vld [vmem:[%s1285 + $0x2a8] sm:$0xf]
        %v1481 = vld [vmem:[%s1285 + $0x2ac] sm:$0xf]
        %v1482 = vld [vmem:[%s1285 + $0x2b0] sm:$0xf]
        %v1483 = vld [vmem:[%s1285 + $0x2b4] sm:$0xf]
        %v1484 = vld [vmem:[%s1285 + $0x2b8] sm:$0xf]
        %v1485 = vld [vmem:[%s1285 + $0x2bc] sm:$0xf]
        %v1486 = vld [vmem:[%s1285 + $0x2c0] sm:$0xf]
        %v1487 = vld [vmem:[%s1285 + $0x2c4] sm:$0xf]
        %v1488 = vld [vmem:[%s1285 + $0x2c8] sm:$0xf]
        %v1489 = vld [vmem:[%s1285 + $0x2cc] sm:$0xf]
        %v1490 = vld [vmem:[%s1285 + $0x2d0] sm:$0xf]
        %v1491 = vld [vmem:[%s1285 + $0x2d4] sm:$0xf]
        %v1492 = vld [vmem:[%s1285 + $0x2d8] sm:$0xf]
        %v1493 = vld [vmem:[%s1285 + $0x2dc] sm:$0xf]
        %v1494 = vld [vmem:[%s1285 + $0x2e0] sm:$0xf]
        %v1495 = vld [vmem:[%s1285 + $0x2e4] sm:$0xf]
        %v1496 = vld [vmem:[%s1285 + $0x2e8] sm:$0xf]
        %v1497 = vld [vmem:[%s1285 + $0x2ec] sm:$0xf]
        %v1498 = vld [vmem:[%s1285 + $0x2f0] sm:$0xf]
        %v1499 = vld [vmem:[%s1285 + $0x2f4] sm:$0xf]
        %v1500 = vld [vmem:[%s1285 + $0x2f8] sm:$0xf]
        %v1501 = vld [vmem:[%s1285 + $0x2fc] sm:$0xf]
        %v1502 = vld [vmem:[%s1285 + $0x300] sm:$0xf]
        %v1503 = vld [vmem:[%s1285 + $0x304] sm:$0xf]
        %v1504 = vld [vmem:[%s1285 + $0x308] sm:$0xf]
        %v1505 = vld [vmem:[%s1285 + $0x30c] sm:$0xf]
        %v1506 = vld [vmem:[%s1285 + $0x310] sm:$0xf]
        %v1507 = vld [vmem:[%s1285 + $0x314] sm:$0xf]
        %v1508 = vld [vmem:[%s1285 + $0x318] sm:$0xf]
        %v1509 = vld [vmem:[%s1285 + $0x31c] sm:$0xf]
        %v1510 = vld [vmem:[%s1285 + $0x320] sm:$0xf]
        %v1511 = vld [vmem:[%s1285 + $0x324] sm:$0xf]
        %v1512 = vld [vmem:[%s1285 + $0x328] sm:$0xf]
        %v1513 = vld [vmem:[%s1285 + $0x32c] sm:$0xf]
        %v1514 = vld [vmem:[%s1285 + $0x330] sm:$0xf]
        %v1515 = vld [vmem:[%s1285 + $0x334] sm:$0xf]
        %v1516 = vld [vmem:[%s1285 + $0x338] sm:$0xf]
        %v1517 = vld [vmem:[%s1285 + $0x33c] sm:$0xf]
        %v1518 = vld [vmem:[%s1285 + $0x340] sm:$0xf]
        %v1519 = vld [vmem:[%s1285 + $0x344] sm:$0xf]
        %v1520 = vld [vmem:[%s1285 + $0x348] sm:$0xf]
        %v1521 = vld [vmem:[%s1285 + $0x34c] sm:$0xf]
        %v1522 = vld [vmem:[%s1285 + $0x350] sm:$0xf]
        %v1523 = vld [vmem:[%s1285 + $0x354] sm:$0xf]
        %v1524 = vld [vmem:[%s1285 + $0x358] sm:$0xf]
        %v1525 = vld [vmem:[%s1285 + $0x35c] sm:$0xf]
        %v1526 = vld [vmem:[%s1285 + $0x360] sm:$0xf]
        %v1527 = vld [vmem:[%s1285 + $0x364] sm:$0xf]
        %v1528 = vld [vmem:[%s1285 + $0x368] sm:$0xf]
        %v1529 = vld [vmem:[%s1285 + $0x36c] sm:$0xf]
        %v1530 = vld [vmem:[%s1285 + $0x370] sm:$0xf]
        %v1531 = vld [vmem:[%s1285 + $0x374] sm:$0xf]
        %v1532 = vld [vmem:[%s1285 + $0x378] sm:$0xf]
        %v1533 = vld [vmem:[%s1285 + $0x37c] sm:$0xf]
        %v1534 = vld [vmem:[%s1285 + $0x380] sm:$0xf]
        %v1535 = vld [vmem:[%s1285 + $0x384] sm:$0xf]
        %v1536 = vld [vmem:[%s1285 + $0x388] sm:$0xf]
        %v1537 = vld [vmem:[%s1285 + $0x38c] sm:$0xf]
        %v1538 = vld [vmem:[%s1285 + $0x390] sm:$0xf]
        %v1539 = vld [vmem:[%s1285 + $0x394] sm:$0xf]
        %v1540 = vld [vmem:[%s1285 + $0x398] sm:$0xf]
        %v1541 = vld [vmem:[%s1285 + $0x39c] sm:$0xf]
        %v1542 = vld [vmem:[%s1285 + $0x3a0] sm:$0xf]
        %v1543 = vld [vmem:[%s1285 + $0x3a4] sm:$0xf]
        %v1544 = vld [vmem:[%s1285 + $0x3a8] sm:$0xf]
        %v1545 = vld [vmem:[%s1285 + $0x3ac] sm:$0xf]
        %v1546 = vld [vmem:[%s1285 + $0x3b0] sm:$0xf]
        %v1547 = vld [vmem:[%s1285 + $0x3b4] sm:$0xf]
        %v1548 = vld [vmem:[%s1285 + $0x3b8] sm:$0xf]
        %v1549 = vld [vmem:[%s1285 + $0x3bc] sm:$0xf]
        %v1550 = vld [vmem:[%s1285 + $0x3c0] sm:$0xf]
        %v1551 = vld [vmem:[%s1285 + $0x3c4] sm:$0xf]
        %v1552 = vld [vmem:[%s1285 + $0x3c8] sm:$0xf]
        %v1553 = vld [vmem:[%s1285 + $0x3cc] sm:$0xf]
        %v1554 = vld [vmem:[%s1285 + $0x3d0] sm:$0xf]
        %v1555 = vld [vmem:[%s1285 + $0x3d4] sm:$0xf]
        %v1556 = vld [vmem:[%s1285 + $0x3d8] sm:$0xf]
        %v1557 = vld [vmem:[%s1285 + $0x3dc] sm:$0xf]
        %v1558 = vld [vmem:[%s1285 + $0x3e0] sm:$0xf]
        %v1559 = vld [vmem:[%s1285 + $0x3e4] sm:$0xf]
        %v1560 = vld [vmem:[%s1285 + $0x3e8] sm:$0xf]
        %v1561 = vld [vmem:[%s1285 + $0x3ec] sm:$0xf]
        %v1562 = vld [vmem:[%s1285 + $0x3f0] sm:$0xf]
        %v1563 = vld [vmem:[%s1285 + $0x3f4] sm:$0xf]
        %v1564 = vld [vmem:[%s1285 + $0x3f8] sm:$0xf]
        %v1565 = vld [vmem:[%s1285 + $0x3fc] sm:$0xf]
        %v1566 = vld [vmem:[%s1285 + $0x400] sm:$0xf]
        %v1567 = vld [vmem:[%s1285 + $0x404] sm:$0xf]
        %v1568 = vld [vmem:[%s1285 + $0x408] sm:$0xf]
        %v1569 = vld [vmem:[%s1285 + $0x40c] sm:$0xf]
        %v1570 = vld [vmem:[%s1285 + $0x410] sm:$0xf]
        %v1571 = vld [vmem:[%s1285 + $0x414] sm:$0xf]
        %v1572 = vld [vmem:[%s1285 + $0x418] sm:$0xf]
        %v1573 = vld [vmem:[%s1285 + $0x41c] sm:$0xf]
        %v1574 = vld [vmem:[%s1285 + $0x420] sm:$0xf]
        %v1575 = vld [vmem:[%s1285 + $0x424] sm:$0xf]
        %v1576 = vld [vmem:[%s1285 + $0x428] sm:$0xf]
        %v1577 = vld [vmem:[%s1285 + $0x42c] sm:$0xf]
        %v1578 = vld [vmem:[%s1285 + $0x430] sm:$0xf]
        %v1579 = vld [vmem:[%s1285 + $0x434] sm:$0xf]
        %v1580 = vld [vmem:[%s1285 + $0x438] sm:$0xf]
        %v1581 = vld [vmem:[%s1285 + $0x43c] sm:$0xf]
        %v1582 = vld [vmem:[%s1285 + $0x440] sm:$0xf]
        %v1583 = vld [vmem:[%s1285 + $0x444] sm:$0xf]
        %v1584 = vld [vmem:[%s1285 + $0x448] sm:$0xf]
        %v1585 = vld [vmem:[%s1285 + $0x44c] sm:$0xf]
        %v1586 = vld [vmem:[%s1285 + $0x450] sm:$0xf]
        %v1587 = vld [vmem:[%s1285 + $0x454] sm:$0xf]
        %v1588 = vld [vmem:[%s1285 + $0x458] sm:$0xf]
        %v1589 = vld [vmem:[%s1285 + $0x45c] sm:$0xf]
        %v1590 = vld [vmem:[%s1285 + $0x460] sm:$0xf]
        %v1591 = vld [vmem:[%s1285 + $0x464] sm:$0xf]
        %v1592 = vld [vmem:[%s1285 + $0x468] sm:$0xf]
        %v1593 = vld [vmem:[%s1285 + $0x46c] sm:$0xf]
        %v1594 = vld [vmem:[%s1285 + $0x470] sm:$0xf]
        %v1595 = vld [vmem:[%s1285 + $0x474] sm:$0xf]
        %v1596 = vld [vmem:[%s1285 + $0x478] sm:$0xf]
        %v1597 = vld [vmem:[%s1285 + $0x47c] sm:$0xf]
        %vm1598 = vcmask 519168
        %v1601 = vsel %vm1598, %v1310, 4286644096
        %v1604 = vsel %vm1598, %v1342, 4286644096
        %v1606 = vmax.bf16 %v1601, %v1604
        %v1608 = vsel %vm1598, %v1374, 4286644096
        %v1610 = vmax.bf16 %v1606, %v1608
        %v1612 = vsel %vm1598, %v1406, 4286644096
        %v1614 = vmax.bf16 %v1610, %v1612
        %v1616 = vsel %vm1598, %v1438, 4286644096
        %v1618 = vmax.bf16 %v1614, %v1616
        %v1620 = vsel %vm1598, %v1470, 4286644096
        %v1622 = vmax.bf16 %v1618, %v1620
        %v1624 = vsel %vm1598, %v1502, 4286644096
        %v1626 = vmax.bf16 %v1622, %v1624
        %v1628 = vsel %vm1598, %v1534, 4286644096
        %v1630 = vmax.bf16 %v1626, %v1628
        %v1632 = vsel %vm1598, %v1566, 4286644096
        %v1634 = vmax.bf16 %v1630, %v1632
        %v1636 = vsel %vm1598, %v1311, 4286644096
        %v1639 = vsel %vm1598, %v1343, 4286644096
        %v1641 = vmax.bf16 %v1636, %v1639
        %v1643 = vsel %vm1598, %v1375, 4286644096
        %v1645 = vmax.bf16 %v1641, %v1643
        %v1647 = vsel %vm1598, %v1407, 4286644096
        %v1649 = vmax.bf16 %v1645, %v1647
        %v1651 = vsel %vm1598, %v1439, 4286644096
        %v1653 = vmax.bf16 %v1649, %v1651
        %v1655 = vsel %vm1598, %v1471, 4286644096
        %v1657 = vmax.bf16 %v1653, %v1655
        %v1659 = vsel %vm1598, %v1503, 4286644096
        %v1661 = vmax.bf16 %v1657, %v1659
        %v1663 = vsel %vm1598, %v1535, 4286644096
        %v1665 = vmax.bf16 %v1661, %v1663
        %v1667 = vsel %vm1598, %v1567, 4286644096
        %v1669 = vmax.bf16 %v1665, %v1667
        %v1671 = vsel %vm1598, %v1312, 4286644096
        %v1674 = vsel %vm1598, %v1344, 4286644096
        %v1676 = vmax.bf16 %v1671, %v1674
        %v1678 = vsel %vm1598, %v1376, 4286644096
        %v1680 = vmax.bf16 %v1676, %v1678
        %v1682 = vsel %vm1598, %v1408, 4286644096
        %v1684 = vmax.bf16 %v1680, %v1682
        %v1686 = vsel %vm1598, %v1440, 4286644096
        %v1688 = vmax.bf16 %v1684, %v1686
        %v1690 = vsel %vm1598, %v1472, 4286644096
        %v1692 = vmax.bf16 %v1688, %v1690
        %v1694 = vsel %vm1598, %v1504, 4286644096
        %v1696 = vmax.bf16 %v1692, %v1694
        %v1698 = vsel %vm1598, %v1536, 4286644096
        %v1700 = vmax.bf16 %v1696, %v1698
        %v1702 = vsel %vm1598, %v1568, 4286644096
        %v1704 = vmax.bf16 %v1700, %v1702
        %v1706 = vsel %vm1598, %v1313, 4286644096
        %v1709 = vsel %vm1598, %v1345, 4286644096
        %v1711 = vmax.bf16 %v1706, %v1709
        %v1713 = vsel %vm1598, %v1377, 4286644096
        %v1715 = vmax.bf16 %v1711, %v1713
        %v1717 = vsel %vm1598, %v1409, 4286644096
        %v1719 = vmax.bf16 %v1715, %v1717
        %v1721 = vsel %vm1598, %v1441, 4286644096
        %v1723 = vmax.bf16 %v1719, %v1721
        %v1725 = vsel %vm1598, %v1473, 4286644096
        %v1727 = vmax.bf16 %v1723, %v1725
        %v1729 = vsel %vm1598, %v1505, 4286644096
        %v1731 = vmax.bf16 %v1727, %v1729
        %v1733 = vsel %vm1598, %v1537, 4286644096
        %v1735 = vmax.bf16 %v1731, %v1733
        %v1737 = vsel %vm1598, %v1569, 4286644096
        %v1739 = vmax.bf16 %v1735, %v1737
        %v1741 = vsel %vm1598, %v1314, 4286644096
        %v1744 = vsel %vm1598, %v1346, 4286644096
        %v1746 = vmax.bf16 %v1741, %v1744
        %v1748 = vsel %vm1598, %v1378, 4286644096
        %v1750 = vmax.bf16 %v1746, %v1748
        %v1752 = vsel %vm1598, %v1410, 4286644096
        %v1754 = vmax.bf16 %v1750, %v1752
        %v1756 = vsel %vm1598, %v1442, 4286644096
        %v1758 = vmax.bf16 %v1754, %v1756
        %v1760 = vsel %vm1598, %v1474, 4286644096
        %v1762 = vmax.bf16 %v1758, %v1760
        %v1764 = vsel %vm1598, %v1506, 4286644096
        %v1766 = vmax.bf16 %v1762, %v1764
        %v1768 = vsel %vm1598, %v1538, 4286644096
        %v1770 = vmax.bf16 %v1766, %v1768
        %v1772 = vsel %vm1598, %v1570, 4286644096
        %v1774 = vmax.bf16 %v1770, %v1772
        %v1776 = vsel %vm1598, %v1315, 4286644096
        %v1779 = vsel %vm1598, %v1347, 4286644096
        %v1781 = vmax.bf16 %v1776, %v1779
        %v1783 = vsel %vm1598, %v1379, 4286644096
        %v1785 = vmax.bf16 %v1781, %v1783
        %v1787 = vsel %vm1598, %v1411, 4286644096
        %v1789 = vmax.bf16 %v1785, %v1787
        %v1791 = vsel %vm1598, %v1443, 4286644096
        %v1793 = vmax.bf16 %v1789, %v1791
        %v1795 = vsel %vm1598, %v1475, 4286644096
        %v1797 = vmax.bf16 %v1793, %v1795
        %v1799 = vsel %vm1598, %v1507, 4286644096
        %v1801 = vmax.bf16 %v1797, %v1799
        %v1803 = vsel %vm1598, %v1539, 4286644096
        %v1805 = vmax.bf16 %v1801, %v1803
        %v1807 = vsel %vm1598, %v1571, 4286644096
        %v1809 = vmax.bf16 %v1805, %v1807
        %v1811 = vsel %vm1598, %v1316, 4286644096
        %v1814 = vsel %vm1598, %v1348, 4286644096
        %v1816 = vmax.bf16 %v1811, %v1814
        %v1818 = vsel %vm1598, %v1380, 4286644096
        %v1820 = vmax.bf16 %v1816, %v1818
        %v1822 = vsel %vm1598, %v1412, 4286644096
        %v1824 = vmax.bf16 %v1820, %v1822
        %v1826 = vsel %vm1598, %v1444, 4286644096
        %v1828 = vmax.bf16 %v1824, %v1826
        %v1830 = vsel %vm1598, %v1476, 4286644096
        %v1832 = vmax.bf16 %v1828, %v1830
        %v1834 = vsel %vm1598, %v1508, 4286644096
        %v1836 = vmax.bf16 %v1832, %v1834
        %v1838 = vsel %vm1598, %v1540, 4286644096
        %v1840 = vmax.bf16 %v1836, %v1838
        %v1842 = vsel %vm1598, %v1572, 4286644096
        %v1844 = vmax.bf16 %v1840, %v1842
        %v1846 = vsel %vm1598, %v1317, 4286644096
        %v1849 = vsel %vm1598, %v1349, 4286644096
        %v1851 = vmax.bf16 %v1846, %v1849
        %v1853 = vsel %vm1598, %v1381, 4286644096
        %v1855 = vmax.bf16 %v1851, %v1853
        %v1857 = vsel %vm1598, %v1413, 4286644096
        %v1859 = vmax.bf16 %v1855, %v1857
        %v1861 = vsel %vm1598, %v1445, 4286644096
        %v1863 = vmax.bf16 %v1859, %v1861
        %v1865 = vsel %vm1598, %v1477, 4286644096
        %v1867 = vmax.bf16 %v1863, %v1865
        %v1869 = vsel %vm1598, %v1509, 4286644096
        %v1871 = vmax.bf16 %v1867, %v1869
        %v1873 = vsel %vm1598, %v1541, 4286644096
        %v1875 = vmax.bf16 %v1871, %v1873
        %v1877 = vsel %vm1598, %v1573, 4286644096
        %v1879 = vmax.bf16 %v1875, %v1877
        %v1881 = vsel %vm1598, %v1318, 4286644096
        %v1884 = vsel %vm1598, %v1350, 4286644096
        %v1886 = vmax.bf16 %v1881, %v1884
        %v1888 = vsel %vm1598, %v1382, 4286644096
        %v1890 = vmax.bf16 %v1886, %v1888
        %v1892 = vsel %vm1598, %v1414, 4286644096
        %v1894 = vmax.bf16 %v1890, %v1892
        %v1896 = vsel %vm1598, %v1446, 4286644096
        %v1898 = vmax.bf16 %v1894, %v1896
        %v1900 = vsel %vm1598, %v1478, 4286644096
        %v1902 = vmax.bf16 %v1898, %v1900
        %v1904 = vsel %vm1598, %v1510, 4286644096
        %v1906 = vmax.bf16 %v1902, %v1904
        %v1908 = vsel %vm1598, %v1542, 4286644096
        %v1910 = vmax.bf16 %v1906, %v1908
        %v1912 = vsel %vm1598, %v1574, 4286644096
        %v1914 = vmax.bf16 %v1910, %v1912
        %v1916 = vsel %vm1598, %v1319, 4286644096
        %v1919 = vsel %vm1598, %v1351, 4286644096
        %v1921 = vmax.bf16 %v1916, %v1919
        %v1923 = vsel %vm1598, %v1383, 4286644096
        %v1925 = vmax.bf16 %v1921, %v1923
        %v1927 = vsel %vm1598, %v1415, 4286644096
        %v1929 = vmax.bf16 %v1925, %v1927
        %v1931 = vsel %vm1598, %v1447, 4286644096
        %v1933 = vmax.bf16 %v1929, %v1931
        %v1935 = vsel %vm1598, %v1479, 4286644096
        %v1937 = vmax.bf16 %v1933, %v1935
        %v1939 = vsel %vm1598, %v1511, 4286644096
        %v1941 = vmax.bf16 %v1937, %v1939
        %v1943 = vsel %vm1598, %v1543, 4286644096
        %v1945 = vmax.bf16 %v1941, %v1943
        %v1947 = vsel %vm1598, %v1575, 4286644096
        %v1949 = vmax.bf16 %v1945, %v1947
        %v1951 = vsel %vm1598, %v1320, 4286644096
        %v1954 = vsel %vm1598, %v1352, 4286644096
        %v1956 = vmax.bf16 %v1951, %v1954
        %v1958 = vsel %vm1598, %v1384, 4286644096
        %v1960 = vmax.bf16 %v1956, %v1958
        %v1962 = vsel %vm1598, %v1416, 4286644096
        %v1964 = vmax.bf16 %v1960, %v1962
        %v1966 = vsel %vm1598, %v1448, 4286644096
        %v1968 = vmax.bf16 %v1964, %v1966
        %v1970 = vsel %vm1598, %v1480, 4286644096
        %v1972 = vmax.bf16 %v1968, %v1970
        %v1974 = vsel %vm1598, %v1512, 4286644096
        %v1976 = vmax.bf16 %v1972, %v1974
        %v1978 = vsel %vm1598, %v1544, 4286644096
        %v1980 = vmax.bf16 %v1976, %v1978
        %v1982 = vsel %vm1598, %v1576, 4286644096
        %v1984 = vmax.bf16 %v1980, %v1982
        %v1986 = vsel %vm1598, %v1321, 4286644096
        %v1989 = vsel %vm1598, %v1353, 4286644096
        %v1991 = vmax.bf16 %v1986, %v1989
        %v1993 = vsel %vm1598, %v1385, 4286644096
        %v1995 = vmax.bf16 %v1991, %v1993
        %v1997 = vsel %vm1598, %v1417, 4286644096
        %v1999 = vmax.bf16 %v1995, %v1997
        %v2001 = vsel %vm1598, %v1449, 4286644096
        %v2003 = vmax.bf16 %v1999, %v2001
        %v2005 = vsel %vm1598, %v1481, 4286644096
        %v2007 = vmax.bf16 %v2003, %v2005
        %v2009 = vsel %vm1598, %v1513, 4286644096
        %v2011 = vmax.bf16 %v2007, %v2009
        %v2013 = vsel %vm1598, %v1545, 4286644096
        %v2015 = vmax.bf16 %v2011, %v2013
        %v2017 = vsel %vm1598, %v1577, 4286644096
        %v2019 = vmax.bf16 %v2015, %v2017
        %v2021 = vsel %vm1598, %v1322, 4286644096
        %v2024 = vsel %vm1598, %v1354, 4286644096
        %v2026 = vmax.bf16 %v2021, %v2024
        %v2028 = vsel %vm1598, %v1386, 4286644096
        %v2030 = vmax.bf16 %v2026, %v2028
        %v2032 = vsel %vm1598, %v1418, 4286644096
        %v2034 = vmax.bf16 %v2030, %v2032
        %v2036 = vsel %vm1598, %v1450, 4286644096
        %v2038 = vmax.bf16 %v2034, %v2036
        %v2040 = vsel %vm1598, %v1482, 4286644096
        %v2042 = vmax.bf16 %v2038, %v2040
        %v2044 = vsel %vm1598, %v1514, 4286644096
        %v2046 = vmax.bf16 %v2042, %v2044
        %v2048 = vsel %vm1598, %v1546, 4286644096
        %v2050 = vmax.bf16 %v2046, %v2048
        %v2052 = vsel %vm1598, %v1578, 4286644096
        %v2054 = vmax.bf16 %v2050, %v2052
        %v2056 = vsel %vm1598, %v1323, 4286644096
        %v2059 = vsel %vm1598, %v1355, 4286644096
        %v2061 = vmax.bf16 %v2056, %v2059
        %v2063 = vsel %vm1598, %v1387, 4286644096
        %v2065 = vmax.bf16 %v2061, %v2063
        %v2067 = vsel %vm1598, %v1419, 4286644096
        %v2069 = vmax.bf16 %v2065, %v2067
        %v2071 = vsel %vm1598, %v1451, 4286644096
        %v2073 = vmax.bf16 %v2069, %v2071
        %v2075 = vsel %vm1598, %v1483, 4286644096
        %v2077 = vmax.bf16 %v2073, %v2075
        %v2079 = vsel %vm1598, %v1515, 4286644096
        %v2081 = vmax.bf16 %v2077, %v2079
        %v2083 = vsel %vm1598, %v1547, 4286644096
        %v2085 = vmax.bf16 %v2081, %v2083
        %v2087 = vsel %vm1598, %v1579, 4286644096
        %v2089 = vmax.bf16 %v2085, %v2087
        %v2091 = vsel %vm1598, %v1324, 4286644096
        %v2094 = vsel %vm1598, %v1356, 4286644096
        %v2096 = vmax.bf16 %v2091, %v2094
        %v2098 = vsel %vm1598, %v1388, 4286644096
        %v2100 = vmax.bf16 %v2096, %v2098
        %v2102 = vsel %vm1598, %v1420, 4286644096
        %v2104 = vmax.bf16 %v2100, %v2102
        %v2106 = vsel %vm1598, %v1452, 4286644096
        %v2108 = vmax.bf16 %v2104, %v2106
        %v2110 = vsel %vm1598, %v1484, 4286644096
        %v2112 = vmax.bf16 %v2108, %v2110
        %v2114 = vsel %vm1598, %v1516, 4286644096
        %v2116 = vmax.bf16 %v2112, %v2114
        %v2118 = vsel %vm1598, %v1548, 4286644096
        %v2120 = vmax.bf16 %v2116, %v2118
        %v2122 = vsel %vm1598, %v1580, 4286644096
        %v2124 = vmax.bf16 %v2120, %v2122
        %v2126 = vsel %vm1598, %v1325, 4286644096
        %v2129 = vsel %vm1598, %v1357, 4286644096
        %v2131 = vmax.bf16 %v2126, %v2129
        %v2133 = vsel %vm1598, %v1389, 4286644096
        %v2135 = vmax.bf16 %v2131, %v2133
        %v2137 = vsel %vm1598, %v1421, 4286644096
        %v2139 = vmax.bf16 %v2135, %v2137
        %v2141 = vsel %vm1598, %v1453, 4286644096
        %v2143 = vmax.bf16 %v2139, %v2141
        %v2145 = vsel %vm1598, %v1485, 4286644096
        %v2147 = vmax.bf16 %v2143, %v2145
        %v2149 = vsel %vm1598, %v1517, 4286644096
        %v2151 = vmax.bf16 %v2147, %v2149
        %v2153 = vsel %vm1598, %v1549, 4286644096
        %v2155 = vmax.bf16 %v2151, %v2153
        %v2157 = vsel %vm1598, %v1581, 4286644096
        %v2159 = vmax.bf16 %v2155, %v2157
        %v2161 = vsel %vm1598, %v1326, 4286644096
        %v2164 = vsel %vm1598, %v1358, 4286644096
        %v2166 = vmax.bf16 %v2161, %v2164
        %v2168 = vsel %vm1598, %v1390, 4286644096
        %v2170 = vmax.bf16 %v2166, %v2168
        %v2172 = vsel %vm1598, %v1422, 4286644096
        %v2174 = vmax.bf16 %v2170, %v2172
        %v2176 = vsel %vm1598, %v1454, 4286644096
        %v2178 = vmax.bf16 %v2174, %v2176
        %v2180 = vsel %vm1598, %v1486, 4286644096
        %v2182 = vmax.bf16 %v2178, %v2180
        %v2184 = vsel %vm1598, %v1518, 4286644096
        %v2186 = vmax.bf16 %v2182, %v2184
        %v2188 = vsel %vm1598, %v1550, 4286644096
        %v2190 = vmax.bf16 %v2186, %v2188
        %v2192 = vsel %vm1598, %v1582, 4286644096
        %v2194 = vmax.bf16 %v2190, %v2192
        %v2196 = vsel %vm1598, %v1327, 4286644096
        %v2199 = vsel %vm1598, %v1359, 4286644096
        %v2201 = vmax.bf16 %v2196, %v2199
        %v2203 = vsel %vm1598, %v1391, 4286644096
        %v2205 = vmax.bf16 %v2201, %v2203
        %v2207 = vsel %vm1598, %v1423, 4286644096
        %v2209 = vmax.bf16 %v2205, %v2207
        %v2211 = vsel %vm1598, %v1455, 4286644096
        %v2213 = vmax.bf16 %v2209, %v2211
        %v2215 = vsel %vm1598, %v1487, 4286644096
        %v2217 = vmax.bf16 %v2213, %v2215
        %v2219 = vsel %vm1598, %v1519, 4286644096
        %v2221 = vmax.bf16 %v2217, %v2219
        %v2223 = vsel %vm1598, %v1551, 4286644096
        %v2225 = vmax.bf16 %v2221, %v2223
        %v2227 = vsel %vm1598, %v1583, 4286644096
        %v2229 = vmax.bf16 %v2225, %v2227
        %v2231 = vsel %vm1598, %v1328, 4286644096
        %v2234 = vsel %vm1598, %v1360, 4286644096
        %v2236 = vmax.bf16 %v2231, %v2234
        %v2238 = vsel %vm1598, %v1392, 4286644096
        %v2240 = vmax.bf16 %v2236, %v2238
        %v2242 = vsel %vm1598, %v1424, 4286644096
        %v2244 = vmax.bf16 %v2240, %v2242
        %v2246 = vsel %vm1598, %v1456, 4286644096
        %v2248 = vmax.bf16 %v2244, %v2246
        %v2250 = vsel %vm1598, %v1488, 4286644096
        %v2252 = vmax.bf16 %v2248, %v2250
        %v2254 = vsel %vm1598, %v1520, 4286644096
        %v2256 = vmax.bf16 %v2252, %v2254
        %v2258 = vsel %vm1598, %v1552, 4286644096
        %v2260 = vmax.bf16 %v2256, %v2258
        %v2262 = vsel %vm1598, %v1584, 4286644096
        %v2264 = vmax.bf16 %v2260, %v2262
        %v2266 = vsel %vm1598, %v1329, 4286644096
        %v2269 = vsel %vm1598, %v1361, 4286644096
        %v2271 = vmax.bf16 %v2266, %v2269
        %v2273 = vsel %vm1598, %v1393, 4286644096
        %v2275 = vmax.bf16 %v2271, %v2273
        %v2277 = vsel %vm1598, %v1425, 4286644096
        %v2279 = vmax.bf16 %v2275, %v2277
        %v2281 = vsel %vm1598, %v1457, 4286644096
        %v2283 = vmax.bf16 %v2279, %v2281
        %v2285 = vsel %vm1598, %v1489, 4286644096
        %v2287 = vmax.bf16 %v2283, %v2285
        %v2289 = vsel %vm1598, %v1521, 4286644096
        %v2291 = vmax.bf16 %v2287, %v2289
        %v2293 = vsel %vm1598, %v1553, 4286644096
        %v2295 = vmax.bf16 %v2291, %v2293
        %v2297 = vsel %vm1598, %v1585, 4286644096
        %v2299 = vmax.bf16 %v2295, %v2297
        %v2301 = vsel %vm1598, %v1330, 4286644096
        %v2304 = vsel %vm1598, %v1362, 4286644096
        %v2306 = vmax.bf16 %v2301, %v2304
        %v2308 = vsel %vm1598, %v1394, 4286644096
        %v2310 = vmax.bf16 %v2306, %v2308
        %v2312 = vsel %vm1598, %v1426, 4286644096
        %v2314 = vmax.bf16 %v2310, %v2312
        %v2316 = vsel %vm1598, %v1458, 4286644096
        %v2318 = vmax.bf16 %v2314, %v2316
        %v2320 = vsel %vm1598, %v1490, 4286644096
        %v2322 = vmax.bf16 %v2318, %v2320
        %v2324 = vsel %vm1598, %v1522, 4286644096
        %v2326 = vmax.bf16 %v2322, %v2324
        %v2328 = vsel %vm1598, %v1554, 4286644096
        %v2330 = vmax.bf16 %v2326, %v2328
        %v2332 = vsel %vm1598, %v1586, 4286644096
        %v2334 = vmax.bf16 %v2330, %v2332
        %v2336 = vsel %vm1598, %v1331, 4286644096
        %v2339 = vsel %vm1598, %v1363, 4286644096
        %v2341 = vmax.bf16 %v2336, %v2339
        %v2343 = vsel %vm1598, %v1395, 4286644096
        %v2345 = vmax.bf16 %v2341, %v2343
        %v2347 = vsel %vm1598, %v1427, 4286644096
        %v2349 = vmax.bf16 %v2345, %v2347
        %v2351 = vsel %vm1598, %v1459, 4286644096
        %v2353 = vmax.bf16 %v2349, %v2351
        %v2355 = vsel %vm1598, %v1491, 4286644096
        %v2357 = vmax.bf16 %v2353, %v2355
        %v2359 = vsel %vm1598, %v1523, 4286644096
        %v2361 = vmax.bf16 %v2357, %v2359
        %v2363 = vsel %vm1598, %v1555, 4286644096
        %v2365 = vmax.bf16 %v2361, %v2363
        %v2367 = vsel %vm1598, %v1587, 4286644096
        %v2369 = vmax.bf16 %v2365, %v2367
        %v2371 = vsel %vm1598, %v1332, 4286644096
        %v2374 = vsel %vm1598, %v1364, 4286644096
        %v2376 = vmax.bf16 %v2371, %v2374
        %v2378 = vsel %vm1598, %v1396, 4286644096
        %v2380 = vmax.bf16 %v2376, %v2378
        %v2382 = vsel %vm1598, %v1428, 4286644096
        %v2384 = vmax.bf16 %v2380, %v2382
        %v2386 = vsel %vm1598, %v1460, 4286644096
        %v2388 = vmax.bf16 %v2384, %v2386
        %v2390 = vsel %vm1598, %v1492, 4286644096
        %v2392 = vmax.bf16 %v2388, %v2390
        %v2394 = vsel %vm1598, %v1524, 4286644096
        %v2396 = vmax.bf16 %v2392, %v2394
        %v2398 = vsel %vm1598, %v1556, 4286644096
        %v2400 = vmax.bf16 %v2396, %v2398
        %v2402 = vsel %vm1598, %v1588, 4286644096
        %v2404 = vmax.bf16 %v2400, %v2402
        %v2406 = vsel %vm1598, %v1333, 4286644096
        %v2409 = vsel %vm1598, %v1365, 4286644096
        %v2411 = vmax.bf16 %v2406, %v2409
        %v2413 = vsel %vm1598, %v1397, 4286644096
        %v2415 = vmax.bf16 %v2411, %v2413
        %v2417 = vsel %vm1598, %v1429, 4286644096
        %v2419 = vmax.bf16 %v2415, %v2417
        %v2421 = vsel %vm1598, %v1461, 4286644096
        %v2423 = vmax.bf16 %v2419, %v2421
        %v2425 = vsel %vm1598, %v1493, 4286644096
        %v2427 = vmax.bf16 %v2423, %v2425
        %v2429 = vsel %vm1598, %v1525, 4286644096
        %v2431 = vmax.bf16 %v2427, %v2429
        %v2433 = vsel %vm1598, %v1557, 4286644096
        %v2435 = vmax.bf16 %v2431, %v2433
        %v2437 = vsel %vm1598, %v1589, 4286644096
        %v2439 = vmax.bf16 %v2435, %v2437
        %v2441 = vsel %vm1598, %v1334, 4286644096
        %v2444 = vsel %vm1598, %v1366, 4286644096
        %v2446 = vmax.bf16 %v2441, %v2444
        %v2448 = vsel %vm1598, %v1398, 4286644096
        %v2450 = vmax.bf16 %v2446, %v2448
        %v2452 = vsel %vm1598, %v1430, 4286644096
        %v2454 = vmax.bf16 %v2450, %v2452
        %v2456 = vsel %vm1598, %v1462, 4286644096
        %v2458 = vmax.bf16 %v2454, %v2456
        %v2460 = vsel %vm1598, %v1494, 4286644096
        %v2462 = vmax.bf16 %v2458, %v2460
        %v2464 = vsel %vm1598, %v1526, 4286644096
        %v2466 = vmax.bf16 %v2462, %v2464
        %v2468 = vsel %vm1598, %v1558, 4286644096
        %v2470 = vmax.bf16 %v2466, %v2468
        %v2472 = vsel %vm1598, %v1590, 4286644096
        %v2474 = vmax.bf16 %v2470, %v2472
        %v2476 = vsel %vm1598, %v1335, 4286644096
        %v2479 = vsel %vm1598, %v1367, 4286644096
        %v2481 = vmax.bf16 %v2476, %v2479
        %v2483 = vsel %vm1598, %v1399, 4286644096
        %v2485 = vmax.bf16 %v2481, %v2483
        %v2487 = vsel %vm1598, %v1431, 4286644096
        %v2489 = vmax.bf16 %v2485, %v2487
        %v2491 = vsel %vm1598, %v1463, 4286644096
        %v2493 = vmax.bf16 %v2489, %v2491
        %v2495 = vsel %vm1598, %v1495, 4286644096
        %v2497 = vmax.bf16 %v2493, %v2495
        %v2499 = vsel %vm1598, %v1527, 4286644096
        %v2501 = vmax.bf16 %v2497, %v2499
        %v2503 = vsel %vm1598, %v1559, 4286644096
        %v2505 = vmax.bf16 %v2501, %v2503
        %v2507 = vsel %vm1598, %v1591, 4286644096
        %v2509 = vmax.bf16 %v2505, %v2507
        %v2511 = vsel %vm1598, %v1336, 4286644096
        %v2514 = vsel %vm1598, %v1368, 4286644096
        %v2516 = vmax.bf16 %v2511, %v2514
        %v2518 = vsel %vm1598, %v1400, 4286644096
        %v2520 = vmax.bf16 %v2516, %v2518
        %v2522 = vsel %vm1598, %v1432, 4286644096
        %v2524 = vmax.bf16 %v2520, %v2522
        %v2526 = vsel %vm1598, %v1464, 4286644096
        %v2528 = vmax.bf16 %v2524, %v2526
        %v2530 = vsel %vm1598, %v1496, 4286644096
        %v2532 = vmax.bf16 %v2528, %v2530
        %v2534 = vsel %vm1598, %v1528, 4286644096
        %v2536 = vmax.bf16 %v2532, %v2534
        %v2538 = vsel %vm1598, %v1560, 4286644096
        %v2540 = vmax.bf16 %v2536, %v2538
        %v2542 = vsel %vm1598, %v1592, 4286644096
        %v2544 = vmax.bf16 %v2540, %v2542
        %v2546 = vsel %vm1598, %v1337, 4286644096
        %v2549 = vsel %vm1598, %v1369, 4286644096
        %v2551 = vmax.bf16 %v2546, %v2549
        %v2553 = vsel %vm1598, %v1401, 4286644096
        %v2555 = vmax.bf16 %v2551, %v2553
        %v2557 = vsel %vm1598, %v1433, 4286644096
        %v2559 = vmax.bf16 %v2555, %v2557
        %v2561 = vsel %vm1598, %v1465, 4286644096
        %v2563 = vmax.bf16 %v2559, %v2561
        %v2565 = vsel %vm1598, %v1497, 4286644096
        %v2567 = vmax.bf16 %v2563, %v2565
        %v2569 = vsel %vm1598, %v1529, 4286644096
        %v2571 = vmax.bf16 %v2567, %v2569
        %v2573 = vsel %vm1598, %v1561, 4286644096
        %v2575 = vmax.bf16 %v2571, %v2573
        %v2577 = vsel %vm1598, %v1593, 4286644096
        %v2579 = vmax.bf16 %v2575, %v2577
        %v2581 = vsel %vm1598, %v1338, 4286644096
        %v2584 = vsel %vm1598, %v1370, 4286644096
        %v2586 = vmax.bf16 %v2581, %v2584
        %v2588 = vsel %vm1598, %v1402, 4286644096
        %v2590 = vmax.bf16 %v2586, %v2588
        %v2592 = vsel %vm1598, %v1434, 4286644096
        %v2594 = vmax.bf16 %v2590, %v2592
        %v2596 = vsel %vm1598, %v1466, 4286644096
        %v2598 = vmax.bf16 %v2594, %v2596
        %v2600 = vsel %vm1598, %v1498, 4286644096
        %v2602 = vmax.bf16 %v2598, %v2600
        %v2604 = vsel %vm1598, %v1530, 4286644096
        %v2606 = vmax.bf16 %v2602, %v2604
        %v2608 = vsel %vm1598, %v1562, 4286644096
        %v2610 = vmax.bf16 %v2606, %v2608
        %v2612 = vsel %vm1598, %v1594, 4286644096
        %v2614 = vmax.bf16 %v2610, %v2612
        %v2616 = vsel %vm1598, %v1339, 4286644096
        %v2619 = vsel %vm1598, %v1371, 4286644096
        %v2621 = vmax.bf16 %v2616, %v2619
        %v2623 = vsel %vm1598, %v1403, 4286644096
        %v2625 = vmax.bf16 %v2621, %v2623
        %v2627 = vsel %vm1598, %v1435, 4286644096
        %v2629 = vmax.bf16 %v2625, %v2627
        %v2631 = vsel %vm1598, %v1467, 4286644096
        %v2633 = vmax.bf16 %v2629, %v2631
        %v2635 = vsel %vm1598, %v1499, 4286644096
        %v2637 = vmax.bf16 %v2633, %v2635
        %v2639 = vsel %vm1598, %v1531, 4286644096
        %v2641 = vmax.bf16 %v2637, %v2639
        %v2643 = vsel %vm1598, %v1563, 4286644096
        %v2645 = vmax.bf16 %v2641, %v2643
        %v2647 = vsel %vm1598, %v1595, 4286644096
        %v2649 = vmax.bf16 %v2645, %v2647
        %v2651 = vsel %vm1598, %v1340, 4286644096
        %v2654 = vsel %vm1598, %v1372, 4286644096
        %v2656 = vmax.bf16 %v2651, %v2654
        %v2658 = vsel %vm1598, %v1404, 4286644096
        %v2660 = vmax.bf16 %v2656, %v2658
        %v2662 = vsel %vm1598, %v1436, 4286644096
        %v2664 = vmax.bf16 %v2660, %v2662
        %v2666 = vsel %vm1598, %v1468, 4286644096
        %v2668 = vmax.bf16 %v2664, %v2666
        %v2670 = vsel %vm1598, %v1500, 4286644096
        %v2672 = vmax.bf16 %v2668, %v2670
        %v2674 = vsel %vm1598, %v1532, 4286644096
        %v2676 = vmax.bf16 %v2672, %v2674
        %v2678 = vsel %vm1598, %v1564, 4286644096
        %v2680 = vmax.bf16 %v2676, %v2678
        %v2682 = vsel %vm1598, %v1596, 4286644096
        %v2684 = vmax.bf16 %v2680, %v2682
        %v2686 = vsel %vm1598, %v1341, 4286644096
        %v2689 = vsel %vm1598, %v1373, 4286644096
        %v2691 = vmax.bf16 %v2686, %v2689
        %v2693 = vsel %vm1598, %v1405, 4286644096
        %v2695 = vmax.bf16 %v2691, %v2693
        %v2697 = vsel %vm1598, %v1437, 4286644096
        %v2699 = vmax.bf16 %v2695, %v2697
        %v2701 = vsel %vm1598, %v1469, 4286644096
        %v2703 = vmax.bf16 %v2699, %v2701
        %v2705 = vsel %vm1598, %v1501, 4286644096
        %v2707 = vmax.bf16 %v2703, %v2705
        %v2709 = vsel %vm1598, %v1533, 4286644096
        %v2711 = vmax.bf16 %v2707, %v2709
        %v2713 = vsel %vm1598, %v1565, 4286644096
        %v2715 = vmax.bf16 %v2711, %v2713
        %v2717 = vsel %vm1598, %v1597, 4286644096
        %v2719 = vmax.bf16 %v2715, %v2717
        %2720 = vst.msk [vmem:[%s1307] sm:$0xf] %vm1598, %v1634
        %2721 = vst.msk [vmem:[%s1307 + $0x4] sm:$0xf] %vm1598, %v1669
        %2722 = vst.msk [vmem:[%s1307 + $0x8] sm:$0xf] %vm1598, %v1704
        %2723 = vst.msk [vmem:[%s1307 + $0xc] sm:$0xf] %vm1598, %v1739
        %2724 = vst.msk [vmem:[%s1307 + $0x10] sm:$0xf] %vm1598, %v1774
        %2725 = vst.msk [vmem:[%s1307 + $0x14] sm:$0xf] %vm1598, %v1809
        %2726 = vst.msk [vmem:[%s1307 + $0x18] sm:$0xf] %vm1598, %v1844
        %2727 = vst.msk [vmem:[%s1307 + $0x1c] sm:$0xf] %vm1598, %v1879
        %2728 = vst.msk [vmem:[%s1307 + $0x20] sm:$0xf] %vm1598, %v1914
        %2729 = vst.msk [vmem:[%s1307 + $0x24] sm:$0xf] %vm1598, %v1949
        %2730 = vst.msk [vmem:[%s1307 + $0x28] sm:$0xf] %vm1598, %v1984
        %2731 = vst.msk [vmem:[%s1307 + $0x2c] sm:$0xf] %vm1598, %v2019
        %2732 = vst.msk [vmem:[%s1307 + $0x30] sm:$0xf] %vm1598, %v2054
        %2733 = vst.msk [vmem:[%s1307 + $0x34] sm:$0xf] %vm1598, %v2089
        %2734 = vst.msk [vmem:[%s1307 + $0x38] sm:$0xf] %vm1598, %v2124
        %2735 = vst.msk [vmem:[%s1307 + $0x3c] sm:$0xf] %vm1598, %v2159
        %2736 = vst.msk [vmem:[%s1307 + $0x40] sm:$0xf] %vm1598, %v2194
        %2737 = vst.msk [vmem:[%s1307 + $0x44] sm:$0xf] %vm1598, %v2229
        %2738 = vst.msk [vmem:[%s1307 + $0x48] sm:$0xf] %vm1598, %v2264
        %2739 = vst.msk [vmem:[%s1307 + $0x4c] sm:$0xf] %vm1598, %v2299
        %2740 = vst.msk [vmem:[%s1307 + $0x50] sm:$0xf] %vm1598, %v2334
        %2741 = vst.msk [vmem:[%s1307 + $0x54] sm:$0xf] %vm1598, %v2369
        %2742 = vst.msk [vmem:[%s1307 + $0x58] sm:$0xf] %vm1598, %v2404
        %2743 = vst.msk [vmem:[%s1307 + $0x5c] sm:$0xf] %vm1598, %v2439
        %2744 = vst.msk [vmem:[%s1307 + $0x60] sm:$0xf] %vm1598, %v2474
        %2745 = vst.msk [vmem:[%s1307 + $0x64] sm:$0xf] %vm1598, %v2509
        %2746 = vst.msk [vmem:[%s1307 + $0x68] sm:$0xf] %vm1598, %v2544
        %2747 = vst.msk [vmem:[%s1307 + $0x6c] sm:$0xf] %vm1598, %v2579
        %2748 = vst.msk [vmem:[%s1307 + $0x70] sm:$0xf] %vm1598, %v2614
        %2749 = vst.msk [vmem:[%s1307 + $0x74] sm:$0xf] %vm1598, %v2649
        %2750 = vst.msk [vmem:[%s1307 + $0x78] sm:$0xf] %vm1598, %v2684
        %2751 = vst.msk [vmem:[%s1307 + $0x7c] sm:$0xf] %vm1598, %v2719
        %s2752 = smul.u32 32, %s12
        %p2753 = scmp.lt.s32.totalorder %s2752, 63
        %s2754 = scalar_select %p2753, %s2752, 63
        %s2755 = smul.addr %s2754, 4
        %s2756 = scalar_lea.vmem %s1, %s2755
        // Predicated region
        $region66: #{stem_forward.18} parent=60 // pred_check
          %p2757 = pneg %p56
        $region67: #{stem_forward.18} parent=60 // pred_check_branch
          %2759 = sbr.rel (%p2757) target = $region69
        $region68: #{stem_forward.18} parent=60 // pred_region
          %s2760 = smul.u32 32, %s12
        $region69: #{stem_forward.18} parent=60 // pred_fallthru
          _
      $region61: #{stem_forward.18} parent=5 // pred_fallthru
        _
      %p2761 = scmp.le.s32.totalorder 2, %s7
      // Predicated region
      $region70: #{stem_forward.18} parent=5 // pred_check
        %p2762 = pneg %p2761
      $region71: #{stem_forward.18} parent=5 // pred_check_branch
        %2764 = sbr.rel (%p2762) target = $region73
      $region72: #{stem_forward.18} parent=5 // pred_region
        %s2765 = ssub.s32 %s7, 2
        // Predicated region
        $region74: #{stem_forward.18} parent=72 // pred_check
          %p2766 = pneg %p62
        $region75: #{stem_forward.18} parent=72 // pred_check_branch
          %2768 = sbr.rel (%p2766) target = $region77
        $region76: #{stem_forward.18} parent=72 // pred_region
          %s2769 = smul.u32 32, %s13
          %p2770 = scmp.lt.s32.totalorder %s2769, 63
          %s2771 = scalar_select %p2770, %s2769, 63
          %s2772 = smul.addr %s2771, 4
          %s2773 = scalar_lea.vmem %s1, %s2772
        $region77: #{stem_forward.18} parent=72 // pred_fallthru
          _
      $region73: #{stem_forward.18} parent=5 // pred_fallthru
        _
    $region6: #{stem_forward.18} parent=1 // loop_footer
      %s11 = sadd.s32 1, %s7
    $region7: #{stem_forward.18} parent=1 // loop_footer_branch
      %6 = sbr.rel target = $region3
    $region8: #{stem_forward.18} parent=1 // loop_exit
      _

// kernel: stem_forward.20
$region0: #{stem_forward.20}
  #allocation0 [shape = 'u32[]', space=smem, size = 0x4, offset = 0x4, fixed_abs, tag = 'smem constant byte address 0x4 - core index']
  #allocation1 [shape = 'u32[144,128]{1,0:T(1,128)}', space=vmem, size = 0x12000, scoped, tag = 'internal scratch']
  %s0 = inlined_call_operand.vmem [shape: bf16[512,720], index: 0, kind: input, shape index: {}]
  %s1 = inlined_call_operand.vmem [shape: bf16[720,256], index: 1, kind: input, shape index: {}]
  %s2 = inlined_call_operand.vmem [shape: f32[1,256], index: 2, kind: input, shape index: {}]
  %s3 = inlined_call_operand.vmem [shape: bf16[512,256], index: 3, kind: output, shape index: {}]
  %s4 = sld [smem:[#allocation0]]
  $region45: #{stem_forward.20} parent=0
    _
  %s6 = ssub.s32 1, %s4
  %s7 = scalar_select 0, %s6, %s4
  loop: start=0, step=1, limit=4
  $region2: #{stem_forward.20} parent=0 // loop_pre_header
    _
  $region3: #{stem_forward.20} parent=0 // loop_header
    %s9 = sphi 0, %s13
    %p10 = scmp.ge.s32.totalorder %s9, 4
    %s19 = sphi 0, %s21
    %s22 = sphi 0, %s19
    %s23 = sphi 0, %s22
    %s39 = sphi 0, %s23
    %s43 = sphi 0, %s43
    %s45 = sphi 0, %s43
    %s46 = sphi 0, %s45
    %s60 = sphi 0, %s46
    %s64 = sphi 0, %s64
    %s66 = sphi 0, %s64
    %s67 = sphi 0, %s66
    %s81 = sphi 0, %s67
    %s87 = sphi 0, %s89
    %s90 = sphi 0, %s87
    %s91 = sphi 0, %s90
    %s107 = sphi 0, %s91
  $region4: #{stem_forward.20} parent=0 // loop_header_branch
    %12 = sbr.rel (%p10) target = $region8
  $region5: #{stem_forward.20} parent=0 // loop_body
    %s14 = ssub.s32 %s9, 1
    %s15 = ssub.s32 %s9, 2
    %s16 = sadd.s32 %s9, 1
    %s17 = ssub.s32 %s9, %s16
    %p18 = scmp.eq.s32.totalorder %s17, 0
    %s20 = sadd.s32 %s19, 1
    %s21 = scalar_select %p18, %s19, %s20
    %p24 = pneg %p18
    %p25 = scmp.eq.s32.totalorder %s9, 1
    %p26 = por %p24, %p25
    %p27 = scmp.ne.s32.totalorder %s19, %s22
    %p28 = scmp.eq.s32.totalorder %s9, 0
    %p29 = por %p27, %p28
    %p30 = scmp.ne.s32.totalorder %s19, %s22
    %p31 = scmp.eq.s32.totalorder %s14, 1
    %p32 = por %p30, %p31
    %p33 = scmp.ne.s32.totalorder %s22, %s23
    %p34 = scmp.eq.s32.totalorder %s14, 0
    %p35 = por %p33, %p34
    %p36 = scmp.ne.s32.totalorder %s22, %s23
    %p37 = scmp.eq.s32.totalorder %s15, 1
    %p38 = por %p36, %p37
    %p40 = scmp.ne.s32.totalorder %s23, %s39
    %p41 = scmp.eq.s32.totalorder %s15, 0
    %p42 = por %p40, %p41
    %s44 = sadd.s32 %s43, 1
    %p47 = scmp.eq.s32.totalorder %s9, 1
    %p48 = scmp.ne.s32.totalorder %s43, %s45
    %p49 = scmp.eq.s32.totalorder %s9, 0
    %p50 = por %p48, %p49
    %p51 = scmp.ne.s32.totalorder %s43, %s45
    %p52 = scmp.eq.s32.totalorder %s14, 1
    %p53 = por %p51, %p52
    %p54 = scmp.ne.s32.totalorder %s45, %s46
    %p55 = scmp.eq.s32.totalorder %s14, 0
    %p56 = por %p54, %p55
    %p57 = scmp.ne.s32.totalorder %s45, %s46
    %p58 = scmp.eq.s32.totalorder %s15, 1
    %p59 = por %p57, %p58
    %p61 = scmp.ne.s32.totalorder %s46, %s60
    %p62 = scmp.eq.s32.totalorder %s15, 0
    %p63 = por %p61, %p62
    %s65 = sadd.s32 %s64, 1
    %p68 = scmp.eq.s32.totalorder %s9, 1
    %p69 = scmp.ne.s32.totalorder %s64, %s66
    %p70 = scmp.eq.s32.totalorder %s9, 0
    %p71 = por %p69, %p70
    %p72 = scmp.ne.s32.totalorder %s64, %s66
    %p73 = scmp.eq.s32.totalorder %s14, 1
    %p74 = por %p72, %p73
    %p75 = scmp.ne.s32.totalorder %s66, %s67
    %p76 = scmp.eq.s32.totalorder %s14, 0
    %p77 = por %p75, %p76
    %p78 = scmp.ne.s32.totalorder %s66, %s67
    %p79 = scmp.eq.s32.totalorder %s15, 1
    %p80 = por %p78, %p79
    %p82 = scmp.ne.s32.totalorder %s67, %s81
    %p83 = scmp.eq.s32.totalorder %s15, 0
    %p84 = por %p82, %p83
    %s85 = ssub.s32 %s9, %s16
    %p86 = scmp.eq.s32.totalorder %s85, 0
    %s88 = sadd.s32 %s87, 1
    %s89 = scalar_select %p86, %s87, %s88
    %p92 = pneg %p86
    %p93 = scmp.eq.s32.totalorder %s9, 1
    %p94 = por %p92, %p93
    %p95 = scmp.ne.s32.totalorder %s87, %s90
    %p96 = scmp.eq.s32.totalorder %s9, 0
    %p97 = por %p95, %p96
    %p98 = scmp.ne.s32.totalorder %s87, %s90
    %p99 = scmp.eq.s32.totalorder %s14, 1
    %p100 = por %p98, %p99
    %p101 = scmp.ne.s32.totalorder %s90, %s91
    %p102 = scmp.eq.s32.totalorder %s14, 0
    %p103 = por %p101, %p102
    %p104 = scmp.ne.s32.totalorder %s90, %s91
    %p105 = scmp.eq.s32.totalorder %s15, 1
    %p106 = por %p104, %p105
    %p108 = scmp.ne.s32.totalorder %s91, %s107
    %p109 = scmp.eq.s32.totalorder %s15, 0
    %p110 = por %p108, %p109
    %p111 = scmp.le.s32.totalorder 1, %s9
    %p112 = scmp.lt.s32.totalorder %s9, 3
    %p113 = pnand %p111, %p112
    %p114 = pneg %p113
    // Predicated region
    $region9: #{stem_forward.20} parent=5 // pred_check
      _
    $region10: #{stem_forward.20} parent=5 // pred_check_branch
      %116 = sbr.rel (%p113) target = $region12
    $region11: #{stem_forward.20} parent=5 // pred_region
      %s117 = ssub.s32 %s9, 1
      // Predicated region
      $region13: #{stem_forward.20} parent=11 // pred_check
        %p118 = pneg %p56
      $region14: #{stem_forward.20} parent=11 // pred_check_branch
        %120 = sbr.rel (%p118) target = $region16
      $region15: #{stem_forward.20} parent=11 // pred_region
        _
      $region16: #{stem_forward.20} parent=11 // pred_fallthru
        _
      // Predicated region
      $region17: #{stem_forward.20} parent=11 // pred_check
        %p121 = pneg %p77
      $region18: #{stem_forward.20} parent=11 // pred_check_branch
        %123 = sbr.rel (%p121) target = $region20
      $region19: #{stem_forward.20} parent=11 // pred_region
        _
      $region20: #{stem_forward.20} parent=11 // pred_fallthru
        _
    $region12: #{stem_forward.20} parent=5 // pred_fallthru
      _
    %p124 = scmp.lt.s32.totalorder %s9, 2
    // Predicated region
    $region21: #{stem_forward.20} parent=5 // pred_check
      %p125 = pneg %p124
    $region22: #{stem_forward.20} parent=5 // pred_check_branch
      %127 = sbr.rel (%p125) target = $region24
    $region23: #{stem_forward.20} parent=5 // pred_region
      // Predicated region
      $region25: #{stem_forward.20} parent=23 // pred_check
        %p128 = pneg %p29
      $region26: #{stem_forward.20} parent=23 // pred_check_branch
        %130 = sbr.rel (%p128) target = $region28
      $region27: #{stem_forward.20} parent=23 // pred_region
        %s131 = smul.u32 32, %s9
        %p132 = scmp.lt.s32.totalorder %s131, 63
        %s133 = scalar_select %p132, %s131, 63
        %s134 = smul.addr %s133, 6
        %s135 = smul.addr %s134, 4
        %s136 = scalar_lea.vmem %s0, %s135
        %s137 = smul.u32 32, %s9
      $region28: #{stem_forward.20} parent=23 // pred_fallthru
        _
    $region24: #{stem_forward.20} parent=5 // pred_fallthru
      _
    %p138 = scmp.le.s32.totalorder 1, %s9
    %p139 = scmp.lt.s32.totalorder %s9, 3
    %p140 = pnand %p138, %p139
    %p141 = pneg %p140
    // Predicated region
    $region29: #{stem_forward.20} parent=5 // pred_check
      _
    $region30: #{stem_forward.20} parent=5 // pred_check_branch
      %143 = sbr.rel (%p140) target = $region32
    $region31: #{stem_forward.20} parent=5 // pred_region
      %s144 = ssub.s32 %s9, 1
      %s145 = smul.u32 32, %s14
      %p146 = scmp.lt.s32.totalorder %s145, 63
      %s147 = scalar_select %p146, %s145, 63
      %s148 = smul.addr %s147, 6
      %s149 = smul.addr %s148, 4
      %s150 = scalar_lea.vmem %s0, %s149
      %p151 = pneg %p35
      %p152 = pneg %p32
      %p153 = pneg %p56
      %p154 = pneg %p53
      %p155 = pneg %p77
      %p156 = pneg %p74
      %p157 = pneg %p103
      %p158 = pneg %p100
      %s159 = smul.u32 32, %s14
      %p160 = scmp.lt.s32.totalorder %s159, 63
      %s161 = scalar_select %p160, %s159, 63
      %s162 = smul.addr %s161, 2
      %s163 = smul.addr %s162, 4
      %s164 = scalar_lea.vmem %s3, %s163
      %s165 = smul.u32 32, %s14
      %p166 = scmp.lt.s32.totalorder %s165, 63
      %s167 = scalar_select %p166, %s165, 63
      %s168 = smul.addr %s167, 6
      %s169 = smul.addr %s168, 4
      %s170 = scalar_lea.vmem %s0, %s169
      %s171 = smul.u32 32, %s14
      %s172 = smul.u32 32, %s14
      %p173 = scmp.lt.s32.totalorder %s172, 63
      %s174 = scalar_select %p173, %s172, 63
      %s175 = smul.addr %s174, 2
      %s176 = smul.addr %s175, 4
      %s177 = scalar_lea.vmem %s3, %s176
      %s178 = smul.u32 32, %s14
      %v180 = vld [vmem:[%s170] sm:$0xff]
      %v181 = vld [vmem:[%s170 + $0x8] sm:$0xff]
      %v182 = vld [vmem:[%s170 + $0x10] sm:$0xff]
      %v183 = vld [vmem:[%s170 + $0x18] sm:$0xff]
      %v184 = vld [vmem:[%s170 + $0x20] sm:$0xff]
      %v185 = vld [vmem:[%s170 + $0x28] sm:$0xff]
      %v186 = vld [vmem:[%s170 + $0x30] sm:$0xff]
      %v187 = vld [vmem:[%s170 + $0x38] sm:$0xff]
      %v188 = vld [vmem:[%s170 + $0x40] sm:$0xff]
      %v189 = vld [vmem:[%s170 + $0x48] sm:$0xff]
      %v190 = vld [vmem:[%s170 + $0x50] sm:$0xff]
      %v191 = vld [vmem:[%s170 + $0x58] sm:$0xff]
      %v192 = vld [vmem:[%s170 + $0x60] sm:$0xff]
      %v193 = vld [vmem:[%s170 + $0x68] sm:$0xff]
      %v194 = vld [vmem:[%s170 + $0x70] sm:$0xff]
      %v195 = vld [vmem:[%s170 + $0x78] sm:$0xff]
      %v196 = vld [vmem:[%s170 + $0x80] sm:$0xff]
      %v197 = vld [vmem:[%s170 + $0x88] sm:$0xff]
      %v198 = vld [vmem:[%s170 + $0x90] sm:$0xff]
      %v199 = vld [vmem:[%s170 + $0x98] sm:$0xff]
      %v200 = vld [vmem:[%s170 + $0xa0] sm:$0xff]
      %v201 = vld [vmem:[%s170 + $0xa8] sm:$0xff]
      %v202 = vld [vmem:[%s170 + $0xb0] sm:$0xff]
      %v203 = vld [vmem:[%s170 + $0xb8] sm:$0xff]
      %v204 = vld [vmem:[%s170 + $0xc0] sm:$0xff]
      %v205 = vld [vmem:[%s170 + $0xc8] sm:$0xff]
      %v206 = vld [vmem:[%s170 + $0xd0] sm:$0xff]
      %v207 = vld [vmem:[%s170 + $0xd8] sm:$0xff]
      %v208 = vld [vmem:[%s170 + $0xe0] sm:$0xff]
      %v209 = vld [vmem:[%s170 + $0xe8] sm:$0xff]
      %v210 = vld [vmem:[%s170 + $0xf0] sm:$0xff]
      %v211 = vld [vmem:[%s170 + $0xf8] sm:$0xff]
      %v212 = vld [vmem:[%s170 + $0x100] sm:$0xff]
      %v213 = vld [vmem:[%s170 + $0x108] sm:$0xff]
      %v214 = vld [vmem:[%s170 + $0x110] sm:$0xff]
      %v215 = vld [vmem:[%s170 + $0x118] sm:$0xff]
      %v216 = vld [vmem:[%s170 + $0x120] sm:$0xff]
      %v217 = vld [vmem:[%s170 + $0x128] sm:$0xff]
      %v218 = vld [vmem:[%s170 + $0x130] sm:$0xff]
      %v219 = vld [vmem:[%s170 + $0x138] sm:$0xff]
      %v220 = vld [vmem:[%s170 + $0x140] sm:$0xff]
      %v221 = vld [vmem:[%s170 + $0x148] sm:$0xff]
      %v222 = vld [vmem:[%s170 + $0x150] sm:$0xff]
      %v223 = vld [vmem:[%s170 + $0x158] sm:$0xff]
      %v224 = vld [vmem:[%s170 + $0x160] sm:$0xff]
      %v225 = vld [vmem:[%s170 + $0x168] sm:$0xff]
      %v226 = vld [vmem:[%s170 + $0x170] sm:$0xff]
      %v227 = vld [vmem:[%s170 + $0x178] sm:$0xff]
      %v228 = vld [vmem:[%s170 + $0x180] sm:$0xff]
      %v229 = vld [vmem:[%s170 + $0x188] sm:$0xff]
      %v230 = vld [vmem:[%s170 + $0x190] sm:$0xff]
      %v231 = vld [vmem:[%s170 + $0x198] sm:$0xff]
      %v232 = vld [vmem:[%s170 + $0x1a0] sm:$0xff]
      %v233 = vld [vmem:[%s170 + $0x1a8] sm:$0xff]
      %v234 = vld [vmem:[%s170 + $0x1b0] sm:$0xff]
      %v235 = vld [vmem:[%s170 + $0x1b8] sm:$0xff]
      %v236 = vld [vmem:[%s170 + $0x1c0] sm:$0xff]
      %v237 = vld [vmem:[%s170 + $0x1c8] sm:$0xff]
      %v238 = vld [vmem:[%s170 + $0x1d0] sm:$0xff]
      %v239 = vld [vmem:[%s170 + $0x1d8] sm:$0xff]
      %v240 = vld [vmem:[%s170 + $0x1e0] sm:$0xff]
      %v241 = vld [vmem:[%s170 + $0x1e8] sm:$0xff]
      %v242 = vld [vmem:[%s170 + $0x1f0] sm:$0xff]
      %v243 = vld [vmem:[%s170 + $0x1f8] sm:$0xff]
      %v244 = vld [vmem:[%s170 + $0x200] sm:$0xff]
      %v245 = vld [vmem:[%s170 + $0x208] sm:$0xff]
      %v246 = vld [vmem:[%s170 + $0x210] sm:$0xff]
      %v247 = vld [vmem:[%s170 + $0x218] sm:$0xff]
      %v248 = vld [vmem:[%s170 + $0x220] sm:$0xff]
      %v249 = vld [vmem:[%s170 + $0x228] sm:$0xff]
      %v250 = vld [vmem:[%s170 + $0x230] sm:$0xff]
      %v251 = vld [vmem:[%s170 + $0x238] sm:$0xff]
      %v252 = vld [vmem:[%s170 + $0x240] sm:$0xff]
      %v253 = vld [vmem:[%s170 + $0x248] sm:$0xff]
      %v254 = vld [vmem:[%s170 + $0x250] sm:$0xff]
      %v255 = vld [vmem:[%s170 + $0x258] sm:$0xff]
      %v256 = vld [vmem:[%s170 + $0x260] sm:$0xff]
      %v257 = vld [vmem:[%s170 + $0x268] sm:$0xff]
      %v258 = vld [vmem:[%s170 + $0x270] sm:$0xff]
      %v259 = vld [vmem:[%s170 + $0x278] sm:$0xff]
      %v260 = vld [vmem:[%s170 + $0x280] sm:$0xff]
      %v261 = vld [vmem:[%s170 + $0x288] sm:$0xff]
      %v262 = vld [vmem:[%s170 + $0x290] sm:$0xff]
      %v263 = vld [vmem:[%s170 + $0x298] sm:$0xff]
      %v264 = vld [vmem:[%s170 + $0x2a0] sm:$0xff]
      %v265 = vld [vmem:[%s170 + $0x2a8] sm:$0xff]
      %v266 = vld [vmem:[%s170 + $0x2b0] sm:$0xff]
      %v267 = vld [vmem:[%s170 + $0x2b8] sm:$0xff]
      %v268 = vld [vmem:[%s170 + $0x2c0] sm:$0xff]
      %v269 = vld [vmem:[%s170 + $0x2c8] sm:$0xff]
      %v270 = vld [vmem:[%s170 + $0x2d0] sm:$0xff]
      %v271 = vld [vmem:[%s170 + $0x2d8] sm:$0xff]
      %v272 = vld [vmem:[%s170 + $0x2e0] sm:$0xff]
      %v273 = vld [vmem:[%s170 + $0x2e8] sm:$0xff]
      %v274 = vld [vmem:[%s170 + $0x2f0] sm:$0xff]
      %v275 = vld [vmem:[%s170 + $0x2f8] sm:$0xff]
      %v276 = vld [vmem:[%s1] sm:$0xff]
      %v277 = vld [vmem:[%s1 + $0x8] sm:$0xff]
      %v278 = vld [vmem:[%s1 + $0x10] sm:$0xff]
      %v279 = vld [vmem:[%s1 + $0x18] sm:$0xff]
      %v280 = vld [vmem:[%s1 + $0x20] sm:$0xff]
      %v281 = vld [vmem:[%s1 + $0x28] sm:$0xff]
      %v282 = vld [vmem:[%s1 + $0x30] sm:$0xff]
      %v283 = vld [vmem:[%s1 + $0x38] sm:$0xff]
      %v284 = vld [vmem:[%s1 + $0x40] sm:$0xff]
      %v285 = vld [vmem:[%s1 + $0x48] sm:$0xff]
      %v286 = vld [vmem:[%s1 + $0x50] sm:$0xff]
      %v287 = vld [vmem:[%s1 + $0x58] sm:$0xff]
      %v288 = vld [vmem:[%s1 + $0x60] sm:$0xff]
      %v289 = vld [vmem:[%s1 + $0x68] sm:$0xff]
      %v290 = vld [vmem:[%s1 + $0x70] sm:$0xff]
      %v291 = vld [vmem:[%s1 + $0x78] sm:$0xff]
      %v292 = vld [vmem:[%s1 + $0x80] sm:$0xff]
      %v293 = vld [vmem:[%s1 + $0x88] sm:$0xff]
      %v294 = vld [vmem:[%s1 + $0x90] sm:$0xff]
      %v295 = vld [vmem:[%s1 + $0x98] sm:$0xff]
      %v296 = vld [vmem:[%s1 + $0xa0] sm:$0xff]
      %v297 = vld [vmem:[%s1 + $0xa8] sm:$0xff]
      %v298 = vld [vmem:[%s1 + $0xb0] sm:$0xff]
      %v299 = vld [vmem:[%s1 + $0xb8] sm:$0xff]
      %v300 = vld [vmem:[%s1 + $0xc0] sm:$0xff]
      %v301 = vld [vmem:[%s1 + $0xc8] sm:$0xff]
      %v302 = vld [vmem:[%s1 + $0xd0] sm:$0xff]
      %v303 = vld [vmem:[%s1 + $0xd8] sm:$0xff]
      %v304 = vld [vmem:[%s1 + $0xe0] sm:$0xff]
      %v305 = vld [vmem:[%s1 + $0xe8] sm:$0xff]
      %v306 = vld [vmem:[%s1 + $0xf0] sm:$0xff]
      %v307 = vld [vmem:[%s1 + $0xf8] sm:$0xff]
      %v308 = vld [vmem:[%s1 + $0x100] sm:$0xff]
      %v309 = vld [vmem:[%s1 + $0x108] sm:$0xff]
      %v310 = vld [vmem:[%s1 + $0x110] sm:$0xff]
      %v311 = vld [vmem:[%s1 + $0x118] sm:$0xff]
      %v312 = vld [vmem:[%s1 + $0x120] sm:$0xff]
      %v313 = vld [vmem:[%s1 + $0x128] sm:$0xff]
      %v314 = vld [vmem:[%s1 + $0x130] sm:$0xff]
      %v315 = vld [vmem:[%s1 + $0x138] sm:$0xff]
      %v316 = vld [vmem:[%s1 + $0x140] sm:$0xff]
      %v317 = vld [vmem:[%s1 + $0x148] sm:$0xff]
      %v318 = vld [vmem:[%s1 + $0x150] sm:$0xff]
      %v319 = vld [vmem:[%s1 + $0x158] sm:$0xff]
      %v320 = vld [vmem:[%s1 + $0x160] sm:$0xff]
      %v321 = vld [vmem:[%s1 + $0x168] sm:$0xff]
      %v322 = vld [vmem:[%s1 + $0x170] sm:$0xff]
      %v323 = vld [vmem:[%s1 + $0x178] sm:$0xff]
      %v324 = vld [vmem:[%s1 + $0x180] sm:$0xff]
      %v325 = vld [vmem:[%s1 + $0x188] sm:$0xff]
      %v326 = vld [vmem:[%s1 + $0x190] sm:$0xff]
      %v327 = vld [vmem:[%s1 + $0x198] sm:$0xff]
      %v328 = vld [vmem:[%s1 + $0x1a0] sm:$0xff]
      %v329 = vld [vmem:[%s1 + $0x1a8] sm:$0xff]
      %v330 = vld [vmem:[%s1 + $0x1b0] sm:$0xff]
      %v331 = vld [vmem:[%s1 + $0x1b8] sm:$0xff]
      %v332 = vld [vmem:[%s1 + $0x1c0] sm:$0xff]
      %v333 = vld [vmem:[%s1 + $0x1c8] sm:$0xff]
      %v334 = vld [vmem:[%s1 + $0x1d0] sm:$0xff]
      %v335 = vld [vmem:[%s1 + $0x1d8] sm:$0xff]
      %v336 = vld [vmem:[%s1 + $0x1e0] sm:$0xff]
      %v337 = vld [vmem:[%s1 + $0x1e8] sm:$0xff]
      %v338 = vld [vmem:[%s1 + $0x1f0] sm:$0xff]
      %v339 = vld [vmem:[%s1 + $0x1f8] sm:$0xff]
      %v340 = vld [vmem:[%s1 + $0x200] sm:$0xff]
      %v341 = vld [vmem:[%s1 + $0x208] sm:$0xff]
      %v342 = vld [vmem:[%s1 + $0x210] sm:$0xff]
      %v343 = vld [vmem:[%s1 + $0x218] sm:$0xff]
      %v344 = vld [vmem:[%s1 + $0x220] sm:$0xff]
      %v345 = vld [vmem:[%s1 + $0x228] sm:$0xff]
      %v346 = vld [vmem:[%s1 + $0x230] sm:$0xff]
      %v347 = vld [vmem:[%s1 + $0x238] sm:$0xff]
      %v348 = vld [vmem:[%s1 + $0x240] sm:$0xff]
      %v349 = vld [vmem:[%s1 + $0x248] sm:$0xff]
      %v350 = vld [vmem:[%s1 + $0x250] sm:$0xff]
      %v351 = vld [vmem:[%s1 + $0x258] sm:$0xff]
      %v352 = vld [vmem:[%s1 + $0x260] sm:$0xff]
      %v353 = vld [vmem:[%s1 + $0x268] sm:$0xff]
      %v354 = vld [vmem:[%s1 + $0x270] sm:$0xff]
      %v355 = vld [vmem:[%s1 + $0x278] sm:$0xff]
      %v356 = vld [vmem:[%s1 + $0x280] sm:$0xff]
      %v357 = vld [vmem:[%s1 + $0x288] sm:$0xff]
      %v358 = vld [vmem:[%s1 + $0x290] sm:$0xff]
      %v359 = vld [vmem:[%s1 + $0x298] sm:$0xff]
      %v360 = vld [vmem:[%s1 + $0x2a0] sm:$0xff]
      %v361 = vld [vmem:[%s1 + $0x2a8] sm:$0xff]
      %v362 = vld [vmem:[%s1 + $0x2b0] sm:$0xff]
      %v363 = vld [vmem:[%s1 + $0x2b8] sm:$0xff]
      %v364 = vld [vmem:[%s1 + $0x2c0] sm:$0xff]
      %v365 = vld [vmem:[%s1 + $0x2c8] sm:$0xff]
      %v366 = vld [vmem:[%s2] sm:$0x3]
      %v368 = vlaneseq
      %v369 = vshrl.u32 %v368, 7
      %v370 = vsub.s32 0, %v369
      %v371 = vrot.slane %v366, %v370
      %v372 = vlaneseq
      %v373 = vshrl.u32 %v372, 7
      %v374 = vsub.s32 1, %v373
      %v375 = vrot.slane %v366, %v374
      %v474 = vunpack.c.l.b16 %v180
      %v475 = vunpack.c.h.b16 %v180
      %v476 = vunpack.c.l.b16 %v181
      %v477 = vunpack.c.h.b16 %v181
      %v478 = vunpack.c.l.b16 %v182
      %v479 = vunpack.c.h.b16 %v182
      %v480 = vunpack.c.l.b16 %v183
      %v481 = vunpack.c.h.b16 %v183
      %v482 = vunpack.c.l.b16 %v184
      %v483 = vunpack.c.h.b16 %v184
      %v484 = vunpack.c.l.b16 %v185
      %v485 = vunpack.c.h.b16 %v185
      %v486 = vunpack.c.l.b16 %v186
      %v487 = vunpack.c.h.b16 %v186
      %v488 = vunpack.c.l.b16 %v187
      %v489 = vunpack.c.h.b16 %v187
      %v490 = vunpack.c.l.b16 %v188
      %v491 = vunpack.c.h.b16 %v188
      %v492 = vunpack.c.l.b16 %v189
      %v493 = vunpack.c.h.b16 %v189
      %v494 = vunpack.c.l.b16 %v190
      %v495 = vunpack.c.h.b16 %v190
      %v496 = vunpack.c.l.b16 %v191
      %v497 = vunpack.c.h.b16 %v191
      %v498 = vunpack.c.l.b16 %v192
      %v499 = vunpack.c.h.b16 %v192
      %v500 = vunpack.c.l.b16 %v193
      %v501 = vunpack.c.h.b16 %v193
      %v502 = vunpack.c.l.b16 %v194
      %v503 = vunpack.c.h.b16 %v194
      %v504 = vunpack.c.l.b16 %v195
      %v505 = vunpack.c.h.b16 %v195
      %v506 = vunpack.c.l.b16 %v196
      %v507 = vunpack.c.h.b16 %v196
      %v508 = vunpack.c.l.b16 %v197
      %v509 = vunpack.c.h.b16 %v197
      %v510 = vunpack.c.l.b16 %v198
      %v511 = vunpack.c.h.b16 %v198
      %v512 = vunpack.c.l.b16 %v199
      %v513 = vunpack.c.h.b16 %v199
      %v514 = vunpack.c.l.b16 %v200
      %v515 = vunpack.c.h.b16 %v200
      %v516 = vunpack.c.l.b16 %v201
      %v517 = vunpack.c.h.b16 %v201
      %v518 = vunpack.c.l.b16 %v202
      %v519 = vunpack.c.h.b16 %v202
      %v520 = vunpack.c.l.b16 %v203
      %v521 = vunpack.c.h.b16 %v203
      %v522 = vunpack.c.l.b16 %v204
      %v523 = vunpack.c.h.b16 %v204
      %v524 = vunpack.c.l.b16 %v205
      %v525 = vunpack.c.h.b16 %v205
      %v526 = vunpack.c.l.b16 %v206
      %v527 = vunpack.c.h.b16 %v206
      %v528 = vunpack.c.l.b16 %v207
      %v529 = vunpack.c.h.b16 %v207
      %v530 = vunpack.c.l.b16 %v208
      %v531 = vunpack.c.h.b16 %v208
      %v532 = vunpack.c.l.b16 %v209
      %v533 = vunpack.c.h.b16 %v209
      %v534 = vunpack.c.l.b16 %v210
      %v535 = vunpack.c.h.b16 %v210
      %v536 = vunpack.c.l.b16 %v211
      %v537 = vunpack.c.h.b16 %v211
      %v538 = vunpack.c.l.b16 %v212
      %v539 = vunpack.c.h.b16 %v212
      %v540 = vunpack.c.l.b16 %v213
      %v541 = vunpack.c.h.b16 %v213
      %v542 = vunpack.c.l.b16 %v214
      %v543 = vunpack.c.h.b16 %v214
      %v544 = vunpack.c.l.b16 %v215
      %v545 = vunpack.c.h.b16 %v215
      %v546 = vunpack.c.l.b16 %v216
      %v547 = vunpack.c.h.b16 %v216
      %v548 = vunpack.c.l.b16 %v217
      %v549 = vunpack.c.h.b16 %v217
      %v550 = vunpack.c.l.b16 %v218
      %v551 = vunpack.c.h.b16 %v218
      %v552 = vunpack.c.l.b16 %v219
      %v553 = vunpack.c.h.b16 %v219
      %v554 = vunpack.c.l.b16 %v220
      %v555 = vunpack.c.h.b16 %v220
      %v556 = vunpack.c.l.b16 %v221
      %v557 = vunpack.c.h.b16 %v221
      %v558 = vunpack.c.l.b16 %v222
      %v559 = vunpack.c.h.b16 %v222
      %v560 = vunpack.c.l.b16 %v223
      %v561 = vunpack.c.h.b16 %v223
      %v562 = vunpack.c.l.b16 %v224
      %v563 = vunpack.c.h.b16 %v224
      %v564 = vunpack.c.l.b16 %v225
      %v565 = vunpack.c.h.b16 %v225
      %v566 = vunpack.c.l.b16 %v226
      %v567 = vunpack.c.h.b16 %v226
      %v568 = vunpack.c.l.b16 %v227
      %v569 = vunpack.c.h.b16 %v227
      %v570 = vunpack.c.l.b16 %v228
      %v571 = vunpack.c.h.b16 %v228
      %v572 = vunpack.c.l.b16 %v229
      %v573 = vunpack.c.h.b16 %v229
      %v574 = vunpack.c.l.b16 %v230
      %v575 = vunpack.c.h.b16 %v230
      %v576 = vunpack.c.l.b16 %v231
      %v577 = vunpack.c.h.b16 %v231
      %v578 = vunpack.c.l.b16 %v232
      %v579 = vunpack.c.h.b16 %v232
      %v580 = vunpack.c.l.b16 %v233
      %v581 = vunpack.c.h.b16 %v233
      %v582 = vunpack.c.l.b16 %v234
      %v583 = vunpack.c.h.b16 %v234
      %v584 = vunpack.c.l.b16 %v235
      %v585 = vunpack.c.h.b16 %v235
      %v586 = vunpack.c.l.b16 %v236
      %v587 = vunpack.c.h.b16 %v236
      %v588 = vunpack.c.l.b16 %v237
      %v589 = vunpack.c.h.b16 %v237
      %v590 = vunpack.c.l.b16 %v238
      %v591 = vunpack.c.h.b16 %v238
      %v592 = vunpack.c.l.b16 %v239
      %v593 = vunpack.c.h.b16 %v239
      %v594 = vunpack.c.l.b16 %v240
      %v595 = vunpack.c.h.b16 %v240
      %v596 = vunpack.c.l.b16 %v241
      %v597 = vunpack.c.h.b16 %v241
      %v598 = vunpack.c.l.b16 %v242
      %v599 = vunpack.c.h.b16 %v242
      %v600 = vunpack.c.l.b16 %v243
      %v601 = vunpack.c.h.b16 %v243
      %v602 = vunpack.c.l.b16 %v244
      %v603 = vunpack.c.h.b16 %v244
      %v604 = vunpack.c.l.b16 %v245
      %v605 = vunpack.c.h.b16 %v245
      %v606 = vunpack.c.l.b16 %v246
      %v607 = vunpack.c.h.b16 %v246
      %v608 = vunpack.c.l.b16 %v247
      %v609 = vunpack.c.h.b16 %v247
      %v610 = vunpack.c.l.b16 %v248
      %v611 = vunpack.c.h.b16 %v248
      %v612 = vunpack.c.l.b16 %v249
      %v613 = vunpack.c.h.b16 %v249
      %v614 = vunpack.c.l.b16 %v250
      %v615 = vunpack.c.h.b16 %v250
      %v616 = vunpack.c.l.b16 %v251
      %v617 = vunpack.c.h.b16 %v251
      %v618 = vunpack.c.l.b16 %v252
      %v619 = vunpack.c.h.b16 %v252
      %v620 = vunpack.c.l.b16 %v253
      %v621 = vunpack.c.h.b16 %v253
      %v622 = vunpack.c.l.b16 %v254
      %v623 = vunpack.c.h.b16 %v254
      %v624 = vunpack.c.l.b16 %v255
      %v625 = vunpack.c.h.b16 %v255
      %v626 = vunpack.c.l.b16 %v256
      %v627 = vunpack.c.h.b16 %v256
      %v628 = vunpack.c.l.b16 %v257
      %v629 = vunpack.c.h.b16 %v257
      %v630 = vunpack.c.l.b16 %v258
      %v631 = vunpack.c.h.b16 %v258
      %v632 = vunpack.c.l.b16 %v259
      %v633 = vunpack.c.h.b16 %v259
      %v634 = vunpack.c.l.b16 %v260
      %v635 = vunpack.c.h.b16 %v260
      %v636 = vunpack.c.l.b16 %v261
      %v637 = vunpack.c.h.b16 %v261
      %v638 = vunpack.c.l.b16 %v262
      %v639 = vunpack.c.h.b16 %v262
      %v640 = vunpack.c.l.b16 %v263
      %v641 = vunpack.c.h.b16 %v263
      %v642 = vunpack.c.l.b16 %v264
      %v643 = vunpack.c.h.b16 %v264
      %v644 = vunpack.c.l.b16 %v265
      %v645 = vunpack.c.h.b16 %v265
      %v646 = vunpack.c.l.b16 %v266
      %v647 = vunpack.c.h.b16 %v266
      %v648 = vunpack.c.l.b16 %v267
      %v649 = vunpack.c.h.b16 %v267
      %v650 = vunpack.c.l.b16 %v268
      %v651 = vunpack.c.h.b16 %v268
      %v652 = vunpack.c.l.b16 %v269
      %v653 = vunpack.c.h.b16 %v269
      %v654 = vunpack.c.l.b16 %v270
      %v655 = vunpack.c.h.b16 %v270
      %v656 = vunpack.c.l.b16 %v271
      %v657 = vunpack.c.h.b16 %v271
      %v658 = vunpack.c.l.b16 %v272
      %v659 = vunpack.c.h.b16 %v272
      %v660 = vunpack.c.l.b16 %v273
      %v661 = vunpack.c.h.b16 %v273
      %v662 = vunpack.c.l.b16 %v274
      %v663 = vunpack.c.h.b16 %v274
      %v664 = vunpack.c.l.b16 %v275
      %v665 = vunpack.c.h.b16 %v275
      %v666 = vpack.c.b16 %v480, %v474
      %v667 = vpack.c.b16 %v481, %v475
      %v668 = vpack.c.b16 %v482, %v476
      %v669 = vpack.c.b16 %v483, %v477
      %v670 = vpack.c.b16 %v484, %v478
      %v671 = vpack.c.b16 %v485, %v479
      %v672 = vpack.c.b16 %v492, %v486
      %v673 = vpack.c.b16 %v493, %v487
      %v674 = vpack.c.b16 %v494, %v488
      %v675 = vpack.c.b16 %v495, %v489
      %v676 = vpack.c.b16 %v496, %v490
      %v677 = vpack.c.b16 %v497, %v491
      %v678 = vpack.c.b16 %v504, %v498
      %v679 = vpack.c.b16 %v505, %v499
      %v680 = vpack.c.b16 %v506, %v500
      %v681 = vpack.c.b16 %v507, %v501
      %v682 = vpack.c.b16 %v508, %v502
      %v683 = vpack.c.b16 %v509, %v503
      %v684 = vpack.c.b16 %v516, %v510
      %v685 = vpack.c.b16 %v517, %v511
      %v686 = vpack.c.b16 %v518, %v512
      %v687 = vpack.c.b16 %v519, %v513
      %v688 = vpack.c.b16 %v520, %v514
      %v689 = vpack.c.b16 %v521, %v515
      %v690 = vpack.c.b16 %v528, %v522
      %v691 = vpack.c.b16 %v529, %v523
      %v692 = vpack.c.b16 %v530, %v524
      %v693 = vpack.c.b16 %v531, %v525
      %v694 = vpack.c.b16 %v532, %v526
      %v695 = vpack.c.b16 %v533, %v527
      %v696 = vpack.c.b16 %v540, %v534
      %v697 = vpack.c.b16 %v541, %v535
      %v698 = vpack.c.b16 %v542, %v536
      %v699 = vpack.c.b16 %v543, %v537
      %v700 = vpack.c.b16 %v544, %v538
      %v701 = vpack.c.b16 %v545, %v539
      %v702 = vpack.c.b16 %v552, %v546
      %v703 = vpack.c.b16 %v553, %v547
      %v704 = vpack.c.b16 %v554, %v548
      %v705 = vpack.c.b16 %v555, %v549
      %v706 = vpack.c.b16 %v556, %v550
      %v707 = vpack.c.b16 %v557, %v551
      %v708 = vpack.c.b16 %v564, %v558
      %v709 = vpack.c.b16 %v565, %v559
      %v710 = vpack.c.b16 %v566, %v560
      %v711 = vpack.c.b16 %v567, %v561
      %v712 = vpack.c.b16 %v568, %v562
      %v713 = vpack.c.b16 %v569, %v563
      %v714 = vpack.c.b16 %v576, %v570
      %v715 = vpack.c.b16 %v577, %v571
      %v716 = vpack.c.b16 %v578, %v572
      %v717 = vpack.c.b16 %v579, %v573
      %v718 = vpack.c.b16 %v580, %v574
      %v719 = vpack.c.b16 %v581, %v575
      %v720 = vpack.c.b16 %v588, %v582
      %v721 = vpack.c.b16 %v589, %v583
      %v722 = vpack.c.b16 %v590, %v584
      %v723 = vpack.c.b16 %v591, %v585
      %v724 = vpack.c.b16 %v592, %v586
      %v725 = vpack.c.b16 %v593, %v587
      %v726 = vpack.c.b16 %v600, %v594
      %v727 = vpack.c.b16 %v601, %v595
      %v728 = vpack.c.b16 %v602, %v596
      %v729 = vpack.c.b16 %v603, %v597
      %v730 = vpack.c.b16 %v604, %v598
      %v731 = vpack.c.b16 %v605, %v599
      %v732 = vpack.c.b16 %v612, %v606
      %v733 = vpack.c.b16 %v613, %v607
      %v734 = vpack.c.b16 %v614, %v608
      %v735 = vpack.c.b16 %v615, %v609
      %v736 = vpack.c.b16 %v616, %v610
      %v737 = vpack.c.b16 %v617, %v611
      %v738 = vpack.c.b16 %v624, %v618
      %v739 = vpack.c.b16 %v625, %v619
      %v740 = vpack.c.b16 %v626, %v620
      %v741 = vpack.c.b16 %v627, %v621
      %v742 = vpack.c.b16 %v628, %v622
      %v743 = vpack.c.b16 %v629, %v623
      %v744 = vpack.c.b16 %v636, %v630
      %v745 = vpack.c.b16 %v637, %v631
      %v746 = vpack.c.b16 %v638, %v632
      %v747 = vpack.c.b16 %v639, %v633
      %v748 = vpack.c.b16 %v640, %v634
      %v749 = vpack.c.b16 %v641, %v635
      %v750 = vpack.c.b16 %v648, %v642
      %v751 = vpack.c.b16 %v649, %v643
      %v752 = vpack.c.b16 %v650, %v644
      %v753 = vpack.c.b16 %v651, %v645
      %v754 = vpack.c.b16 %v652, %v646
      %v755 = vpack.c.b16 %v653, %v647
      %v756 = vpack.c.b16 %v660, %v654
      %v757 = vpack.c.b16 %v661, %v655
      %v758 = vpack.c.b16 %v662, %v656
      %v759 = vpack.c.b16 %v663, %v657
      %v760 = vpack.c.b16 %v664, %v658
      %v761 = vpack.c.b16 %v665, %v659
      %v932 = vunpack.c.l.b16 %v276
      %v933 = vunpack.c.h.b16 %v276
      %v934 = vunpack.c.l.b16 %v277
      %v935 = vunpack.c.h.b16 %v277
      %v936 = vunpack.c.l.b16 %v278
      %v937 = vunpack.c.h.b16 %v278
      %v938 = vunpack.c.l.b16 %v279
      %v939 = vunpack.c.h.b16 %v279
      %v940 = vunpack.c.l.b16 %v280
      %v941 = vunpack.c.h.b16 %v280
      %v942 = vunpack.c.l.b16 %v281
      %v943 = vunpack.c.h.b16 %v281
      %v944 = vunpack.c.l.b16 %v282
      %v945 = vunpack.c.h.b16 %v282
      %v946 = vunpack.c.l.b16 %v283
      %v947 = vunpack.c.h.b16 %v283
      %v948 = vunpack.c.l.b16 %v284
      %v949 = vunpack.c.h.b16 %v284
      %v950 = vunpack.c.l.b16 %v285
      %v951 = vunpack.c.h.b16 %v285
      %v952 = vunpack.c.l.b16 %v286
      %v953 = vunpack.c.h.b16 %v286
      %v954 = vunpack.c.l.b16 %v287
      %v955 = vunpack.c.h.b16 %v287
      %v956 = vunpack.c.l.b16 %v288
      %v957 = vunpack.c.h.b16 %v288
      %v958 = vunpack.c.l.b16 %v289
      %v959 = vunpack.c.h.b16 %v289
      %v960 = vunpack.c.l.b16 %v290
      %v961 = vunpack.c.h.b16 %v290
      %v962 = vunpack.c.l.b16 %v291
      %v963 = vunpack.c.h.b16 %v291
      %v964 = vunpack.c.l.b16 %v292
      %v965 = vunpack.c.h.b16 %v292
      %v966 = vunpack.c.l.b16 %v293
      %v967 = vunpack.c.h.b16 %v293
      %v968 = vunpack.c.l.b16 %v294
      %v969 = vunpack.c.h.b16 %v294
      %v970 = vunpack.c.l.b16 %v295
      %v971 = vunpack.c.h.b16 %v295
      %v972 = vunpack.c.l.b16 %v296
      %v973 = vunpack.c.h.b16 %v296
      %v974 = vunpack.c.l.b16 %v297
      %v975 = vunpack.c.h.b16 %v297
      %v976 = vunpack.c.l.b16 %v298
      %v977 = vunpack.c.h.b16 %v298
      %v978 = vunpack.c.l.b16 %v299
      %v979 = vunpack.c.h.b16 %v299
      %v980 = vunpack.c.l.b16 %v300
      %v981 = vunpack.c.h.b16 %v300
      %v982 = vunpack.c.l.b16 %v301
      %v983 = vunpack.c.h.b16 %v301
      %v984 = vunpack.c.l.b16 %v302
      %v985 = vunpack.c.h.b16 %v302
      %v986 = vunpack.c.l.b16 %v303
      %v987 = vunpack.c.h.b16 %v303
      %v988 = vunpack.c.l.b16 %v304
      %v989 = vunpack.c.h.b16 %v304
      %v990 = vunpack.c.l.b16 %v305
      %v991 = vunpack.c.h.b16 %v305
      %v992 = vunpack.c.l.b16 %v306
      %v993 = vunpack.c.h.b16 %v306
      %v994 = vunpack.c.l.b16 %v307
      %v995 = vunpack.c.h.b16 %v307
      %v996 = vunpack.c.l.b16 %v308
      %v997 = vunpack.c.h.b16 %v308
      %v998 = vunpack.c.l.b16 %v309
      %v999 = vunpack.c.h.b16 %v309
      %v1000 = vunpack.c.l.b16 %v310
      %v1001 = vunpack.c.h.b16 %v310
      %v1002 = vunpack.c.l.b16 %v311
      %v1003 = vunpack.c.h.b16 %v311
      %v1004 = vunpack.c.l.b16 %v312
      %v1005 = vunpack.c.h.b16 %v312
      %v1006 = vunpack.c.l.b16 %v313
      %v1007 = vunpack.c.h.b16 %v313
      %v1008 = vunpack.c.l.b16 %v314
      %v1009 = vunpack.c.h.b16 %v314
      %v1010 = vunpack.c.l.b16 %v315
      %v1011 = vunpack.c.h.b16 %v315
      %v1012 = vunpack.c.l.b16 %v316
      %v1013 = vunpack.c.h.b16 %v316
      %v1014 = vunpack.c.l.b16 %v317
      %v1015 = vunpack.c.h.b16 %v317
      %v1016 = vunpack.c.l.b16 %v318
      %v1017 = vunpack.c.h.b16 %v318
      %v1018 = vunpack.c.l.b16 %v319
      %v1019 = vunpack.c.h.b16 %v319
      %v1020 = vunpack.c.l.b16 %v320
      %v1021 = vunpack.c.h.b16 %v320
      %v1022 = vunpack.c.l.b16 %v321
      %v1023 = vunpack.c.h.b16 %v321
      %v1024 = vunpack.c.l.b16 %v322
      %v1025 = vunpack.c.h.b16 %v322
      %v1026 = vunpack.c.l.b16 %v323
      %v1027 = vunpack.c.h.b16 %v323
      %v1028 = vunpack.c.l.b16 %v324
      %v1029 = vunpack.c.h.b16 %v324
      %v1030 = vunpack.c.l.b16 %v325
      %v1031 = vunpack.c.h.b16 %v325
      %v1032 = vunpack.c.l.b16 %v326
      %v1033 = vunpack.c.h.b16 %v326
      %v1034 = vunpack.c.l.b16 %v327
      %v1035 = vunpack.c.h.b16 %v327
      %v1036 = vunpack.c.l.b16 %v328
      %v1037 = vunpack.c.h.b16 %v328
      %v1038 = vunpack.c.l.b16 %v329
      %v1039 = vunpack.c.h.b16 %v329
      %v1040 = vunpack.c.l.b16 %v330
      %v1041 = vunpack.c.h.b16 %v330
      %v1042 = vunpack.c.l.b16 %v331
      %v1043 = vunpack.c.h.b16 %v331
      %v1044 = vunpack.c.l.b16 %v332
      %v1045 = vunpack.c.h.b16 %v332
      %v1046 = vunpack.c.l.b16 %v333
      %v1047 = vunpack.c.h.b16 %v333
      %v1048 = vunpack.c.l.b16 %v334
      %v1049 = vunpack.c.h.b16 %v334
      %v1050 = vunpack.c.l.b16 %v335
      %v1051 = vunpack.c.h.b16 %v335
      %v1052 = vunpack.c.l.b16 %v336
      %v1053 = vunpack.c.h.b16 %v336
      %v1054 = vunpack.c.l.b16 %v337
      %v1055 = vunpack.c.h.b16 %v337
      %v1056 = vunpack.c.l.b16 %v338
      %v1057 = vunpack.c.h.b16 %v338
      %v1058 = vunpack.c.l.b16 %v339
      %v1059 = vunpack.c.h.b16 %v339
      %v1060 = vunpack.c.l.b16 %v340
      %v1061 = vunpack.c.h.b16 %v340
      %v1062 = vunpack.c.l.b16 %v341
      %v1063 = vunpack.c.h.b16 %v341
      %v1064 = vunpack.c.l.b16 %v342
      %v1065 = vunpack.c.h.b16 %v342
      %v1066 = vunpack.c.l.b16 %v343
      %v1067 = vunpack.c.h.b16 %v343
      %v1068 = vunpack.c.l.b16 %v344
      %v1069 = vunpack.c.h.b16 %v344
      %v1070 = vunpack.c.l.b16 %v345
      %v1071 = vunpack.c.h.b16 %v345
      %v1072 = vunpack.c.l.b16 %v346
      %v1073 = vunpack.c.h.b16 %v346
      %v1074 = vunpack.c.l.b16 %v347
      %v1075 = vunpack.c.h.b16 %v347
      %v1076 = vunpack.c.l.b16 %v348
      %v1077 = vunpack.c.h.b16 %v348
      %v1078 = vunpack.c.l.b16 %v349
      %v1079 = vunpack.c.h.b16 %v349
      %v1080 = vunpack.c.l.b16 %v350
      %v1081 = vunpack.c.h.b16 %v350
      %v1082 = vunpack.c.l.b16 %v351
      %v1083 = vunpack.c.h.b16 %v351
      %v1084 = vunpack.c.l.b16 %v352
      %v1085 = vunpack.c.h.b16 %v352
      %v1086 = vunpack.c.l.b16 %v353
      %v1087 = vunpack.c.h.b16 %v353
      %v1088 = vunpack.c.l.b16 %v354
      %v1089 = vunpack.c.h.b16 %v354
      %v1090 = vunpack.c.l.b16 %v355
      %v1091 = vunpack.c.h.b16 %v355
      %v1092 = vunpack.c.l.b16 %v356
      %v1093 = vunpack.c.h.b16 %v356
      %v1094 = vunpack.c.l.b16 %v357
      %v1095 = vunpack.c.h.b16 %v357
      %v1096 = vunpack.c.l.b16 %v358
      %v1097 = vunpack.c.h.b16 %v358
      %v1098 = vunpack.c.l.b16 %v359
      %v1099 = vunpack.c.h.b16 %v359
      %v1100 = vunpack.c.l.b16 %v360
      %v1101 = vunpack.c.h.b16 %v360
      %v1102 = vunpack.c.l.b16 %v361
      %v1103 = vunpack.c.h.b16 %v361
      %v1104 = vunpack.c.l.b16 %v362
      %v1105 = vunpack.c.h.b16 %v362
      %v1106 = vunpack.c.l.b16 %v363
      %v1107 = vunpack.c.h.b16 %v363
      %v1108 = vunpack.c.l.b16 %v364
      %v1109 = vunpack.c.h.b16 %v364
      %v1110 = vunpack.c.l.b16 %v365
      %v1111 = vunpack.c.h.b16 %v365
      %v1112 = vpack.c.b16 %v934, %v932
      %v1113 = vpack.c.b16 %v935, %v933
      %v1114 = vpack.c.b16 %v938, %v936
      %v1115 = vpack.c.b16 %v939, %v937
      %v1116 = vpack.c.b16 %v942, %v940
      %v1117 = vpack.c.b16 %v943, %v941
      %v1118 = vpack.c.b16 %v946, %v944
      %v1119 = vpack.c.b16 %v947, %v945
      %v1120 = vpack.c.b16 %v950, %v948
      %v1121 = vpack.c.b16 %v951, %v949
      %v1122 = vpack.c.b16 %v954, %v952
      %v1123 = vpack.c.b16 %v955, %v953
      %v1124 = vpack.c.b16 %v958, %v956
      %v1125 = vpack.c.b16 %v959, %v957
      %v1126 = vpack.c.b16 %v962, %v960
      %v1127 = vpack.c.b16 %v963, %v961
      %v1128 = vpack.c.b16 %v966, %v964
      %v1129 = vpack.c.b16 %v967, %v965
      %v1130 = vpack.c.b16 %v970, %v968
      %v1131 = vpack.c.b16 %v971, %v969
      %v1132 = vpack.c.b16 %v974, %v972
      %v1133 = vpack.c.b16 %v975, %v973
      %v1134 = vpack.c.b16 %v978, %v976
      %v1135 = vpack.c.b16 %v979, %v977
      %v1136 = vpack.c.b16 %v982, %v980
      %v1137 = vpack.c.b16 %v983, %v981
      %v1138 = vpack.c.b16 %v986, %v984
      %v1139 = vpack.c.b16 %v987, %v985
      %v1140 = vpack.c.b16 %v990, %v988
      %v1141 = vpack.c.b16 %v991, %v989
      %v1142 = vpack.c.b16 %v994, %v992
      %v1143 = vpack.c.b16 %v995, %v993
      %v1144 = vpack.c.b16 %v998, %v996
      %v1145 = vpack.c.b16 %v999, %v997
      %v1146 = vpack.c.b16 %v1002, %v1000
      %v1147 = vpack.c.b16 %v1003, %v1001
      %v1148 = vpack.c.b16 %v1006, %v1004
      %v1149 = vpack.c.b16 %v1007, %v1005
      %v1150 = vpack.c.b16 %v1010, %v1008
      %v1151 = vpack.c.b16 %v1011, %v1009
      %v1152 = vpack.c.b16 %v1014, %v1012
      %v1153 = vpack.c.b16 %v1015, %v1013
      %v1154 = vpack.c.b16 %v1018, %v1016
      %v1155 = vpack.c.b16 %v1019, %v1017
      %v1156 = vpack.c.b16 %v1022, %v1020
      %v1157 = vpack.c.b16 %v1023, %v1021
      %v1158 = vpack.c.b16 %v1026, %v1024
      %v1159 = vpack.c.b16 %v1027, %v1025
      %v1160 = vpack.c.b16 %v1030, %v1028
      %v1161 = vpack.c.b16 %v1031, %v1029
      %v1162 = vpack.c.b16 %v1034, %v1032
      %v1163 = vpack.c.b16 %v1035, %v1033
      %v1164 = vpack.c.b16 %v1038, %v1036
      %v1165 = vpack.c.b16 %v1039, %v1037
      %v1166 = vpack.c.b16 %v1042, %v1040
      %v1167 = vpack.c.b16 %v1043, %v1041
      %v1168 = vpack.c.b16 %v1046, %v1044
      %v1169 = vpack.c.b16 %v1047, %v1045
      %v1170 = vpack.c.b16 %v1050, %v1048
      %v1171 = vpack.c.b16 %v1051, %v1049
      %v1172 = vpack.c.b16 %v1054, %v1052
      %v1173 = vpack.c.b16 %v1055, %v1053
      %v1174 = vpack.c.b16 %v1058, %v1056
      %v1175 = vpack.c.b16 %v1059, %v1057
      %v1176 = vpack.c.b16 %v1062, %v1060
      %v1177 = vpack.c.b16 %v1063, %v1061
      %v1178 = vpack.c.b16 %v1066, %v1064
      %v1179 = vpack.c.b16 %v1067, %v1065
      %v1180 = vpack.c.b16 %v1070, %v1068
      %v1181 = vpack.c.b16 %v1071, %v1069
      %v1182 = vpack.c.b16 %v1074, %v1072
      %v1183 = vpack.c.b16 %v1075, %v1073
      %v1184 = vpack.c.b16 %v1078, %v1076
      %v1185 = vpack.c.b16 %v1079, %v1077
      %v1186 = vpack.c.b16 %v1082, %v1080
      %v1187 = vpack.c.b16 %v1083, %v1081
      %v1188 = vpack.c.b16 %v1086, %v1084
      %v1189 = vpack.c.b16 %v1087, %v1085
      %v1190 = vpack.c.b16 %v1090, %v1088
      %v1191 = vpack.c.b16 %v1091, %v1089
      %v1192 = vpack.c.b16 %v1094, %v1092
      %v1193 = vpack.c.b16 %v1095, %v1093
      %v1194 = vpack.c.b16 %v1098, %v1096
      %v1195 = vpack.c.b16 %v1099, %v1097
      %v1196 = vpack.c.b16 %v1102, %v1100
      %v1197 = vpack.c.b16 %v1103, %v1101
      %v1198 = vpack.c.b16 %v1106, %v1104
      %v1199 = vpack.c.b16 %v1107, %v1105
      %v1200 = vpack.c.b16 %v1110, %v1108
      %v1201 = vpack.c.b16 %v1111, %v1109
      %vm1292 = vcmask 654336
      %v1294 = vsel %vm1292, %v671, 0
      %v1297 = vsel %vm1292, %v677, 0
      %v1300 = vsel %vm1292, %v683, 0
      %v1303 = vsel %vm1292, %v689, 0
      %v1306 = vsel %vm1292, %v695, 0
      %v1309 = vsel %vm1292, %v701, 0
      %v1312 = vsel %vm1292, %v707, 0
      %v1315 = vsel %vm1292, %v713, 0
      %v1318 = vsel %vm1292, %v719, 0
      %v1321 = vsel %vm1292, %v725, 0
      %v1324 = vsel %vm1292, %v731, 0
      %v1327 = vsel %vm1292, %v737, 0
      %v1330 = vsel %vm1292, %v743, 0
      %v1333 = vsel %vm1292, %v749, 0
      %v1336 = vsel %vm1292, %v755, 0
      %v1339 = vsel %vm1292, %v761, 0
      %1341 = vmatprep.subr.bf16.mxu0 %v1113
      %1342 = vmatpush1.bf16.msra.mxu0 %v1112
      %1343 = vmatprep.subr.bf16.mxu0 %v1115
      %1344 = vmatpush1.bf16.msra.mxu0 %v1114
      %1345 = vmatprep.subr.bf16.mxu0 %v1117
      %1346 = vmatpush1.bf16.msra.mxu0 %v1116
      %1347 = vmatprep.subr.bf16.mxu0 %v1119
      %1348 = vmatpush1.bf16.msra.mxu0 %v1118
      %1349 = vmatprep.subr.bf16.mxu0 %v1121
      %1350 = vmatpush1.bf16.msra.mxu0 %v1120
      %1351 = vmatprep.subr.bf16.mxu0 %v1123
      %1352 = vmatpush1.bf16.msra.mxu0 %v1122
      %1353 = vmatprep.subr.bf16.mxu0 %v1125
      %1354 = vmatpush1.bf16.msra.mxu0 %v1124
      %1355 = vmatprep.subr.bf16.mxu0 %v1127
      %1356 = vmatpush1.bf16.msra.mxu0 %v1126
      %1357 = vmatprep.subr.bf16.mxu0 %v1129
      %1358 = vmatpush1.bf16.msra.mxu0 %v1128
      %1359 = vmatprep.subr.bf16.mxu0 %v1131
      %1360 = vmatpush1.bf16.msra.mxu0 %v1130
      %1361 = vmatprep.subr.bf16.mxu0 %v1133
      %1362 = vmatpush1.bf16.msra.mxu0 %v1132
      %1363 = vmatprep.subr.bf16.mxu0 %v1135
      %1364 = vmatpush1.bf16.msra.mxu0 %v1134
      %1365 = vmatprep.subr.bf16.mxu0 %v1137
      %1366 = vmatpush1.bf16.msra.mxu0 %v1136
      %1367 = vmatprep.subr.bf16.mxu0 %v1139
      %1368 = vmatpush1.bf16.msra.mxu0 %v1138
      %1369 = vmatprep.subr.bf16.mxu0 %v1141
      %1370 = vmatpush1.bf16.msra.mxu0 %v1140
      %1371 = vmatprep.subr.bf16.mxu0 %v1143
      %1372 = vmatpush1.bf16.msra.mxu0 %v1142
      %1373 = vmatprep.mubr.bf16.mxu0 %v667
      %1374 = vmatmul.mubr.bf16.gmra.mrb[0].mxu0 %v666
      %v1375 = vpop.f32.mrb[0].mxu0
      %v1376 = vadd.f32 %v371, %v1375
      %v1377 = vpop.f32.mrb[0].mxu0
      %v1378 = vadd.f32 %v375, %v1377
      %v1379 = vpop.f32.mrb[0].mxu0
      %v1380 = vadd.f32 %v371, %v1379
      %v1381 = vpop.f32.mrb[0].mxu0
      %v1382 = vadd.f32 %v375, %v1381
      %1383 = vmatprep.mubr.bf16.mxu0 %v673
      %1384 = vmatmul.mubr.bf16.gmra.mrb[0].mxu0 %v672
      %v1385 = vpop.f32.mrb[0].mxu0
      %v1386 = vadd.f32 %v371, %v1385
      %v1387 = vpop.f32.mrb[0].mxu0
      %v1388 = vadd.f32 %v375, %v1387
      %v1389 = vpop.f32.mrb[0].mxu0
      %v1390 = vadd.f32 %v371, %v1389
      %v1391 = vpop.f32.mrb[0].mxu0
      %v1392 = vadd.f32 %v375, %v1391
      %1393 = vmatprep.mubr.bf16.mxu0 %v679
      %1394 = vmatmul.mubr.bf16.gmra.mrb[0].mxu0 %v678
      %v1395 = vpop.f32.mrb[0].mxu0
      %v1396 = vadd.f32 %v371, %v1395
      %v1397 = vpop.f32.mrb[0].mxu0
      %v1398 = vadd.f32 %v375, %v1397
      %v1399 = vpop.f32.mrb[0].mxu0
      %v1400 = vadd.f32 %v371, %v1399
      %v1401 = vpop.f32.mrb[0].mxu0
      %v1402 = vadd.f32 %v375, %v1401
      %1403 = vmatprep.mubr.bf16.mxu0 %v685
      %1404 = vmatmul.mubr.bf16.gmra.mrb[0].mxu0 %v684
      %v1405 = vpop.f32.mrb[0].mxu0
      %v1406 = vadd.f32 %v371, %v1405
      %v1407 = vpop.f32.mrb[0].mxu0
      %v1408 = vadd.f32 %v375, %v1407
      %v1409 = vpop.f32.mrb[0].mxu0
      %v1410 = vadd.f32 %v371, %v1409
      %v1411 = vpop.f32.mrb[0].mxu0
      %v1412 = vadd.f32 %v375, %v1411
      %1413 = vmatprep.mubr.bf16.mxu0 %v691
      %1414 = vmatmul.mubr.bf16.gmra.mrb[0].mxu0 %v690
      %v1415 = vpop.f32.mrb[0].mxu0
      %v1416 = vadd.f32 %v371, %v1415
      %v1417 = vpop.f32.mrb[0].mxu0
      %v1418 = vadd.f32 %v375, %v1417
      %v1419 = vpop.f32.mrb[0].mxu0
      %v1420 = vadd.f32 %v371, %v1419
      %v1421 = vpop.f32.mrb[0].mxu0
      %v1422 = vadd.f32 %v375, %v1421
      %1423 = vmatprep.mubr.bf16.mxu0 %v697
      %1424 = vmatmul.mubr.bf16.gmra.mrb[0].mxu0 %v696
      %v1425 = vpop.f32.mrb[0].mxu0
      %v1426 = vadd.f32 %v371, %v1425
      %v1427 = vpop.f32.mrb[0].mxu0
      %v1428 = vadd.f32 %v375, %v1427
      %v1429 = vpop.f32.mrb[0].mxu0
      %v1430 = vadd.f32 %v371, %v1429
      %v1431 = vpop.f32.mrb[0].mxu0
      %v1432 = vadd.f32 %v375, %v1431
      %1433 = vmatprep.mubr.bf16.mxu0 %v703
      %1434 = vmatmul.mubr.bf16.gmra.mrb[0].mxu0 %v702
      %v1435 = vpop.f32.mrb[0].mxu0
      %v1436 = vadd.f32 %v371, %v1435
      %v1437 = vpop.f32.mrb[0].mxu0
      %v1438 = vadd.f32 %v375, %v1437
      %v1439 = vpop.f32.mrb[0].mxu0
      %v1440 = vadd.f32 %v371, %v1439
      %v1441 = vpop.f32.mrb[0].mxu0
      %v1442 = vadd.f32 %v375, %v1441
      %1443 = vmatprep.mubr.bf16.mxu0 %v709
      %1444 = vmatmul.mubr.bf16.gmra.mrb[0].mxu0 %v708
      %v1445 = vpop.f32.mrb[0].mxu0
      %v1446 = vadd.f32 %v371, %v1445
      %v1447 = vpop.f32.mrb[0].mxu0
      %v1448 = vadd.f32 %v375, %v1447
      %v1449 = vpop.f32.mrb[0].mxu0
      %v1450 = vadd.f32 %v371, %v1449
      %v1451 = vpop.f32.mrb[0].mxu0
      %v1452 = vadd.f32 %v375, %v1451
      %1453 = vmatprep.mubr.bf16.mxu0 %v715
      %1454 = vmatmul.mubr.bf16.gmra.mrb[0].mxu0 %v714
      %v1455 = vpop.f32.mrb[0].mxu0
      %v1456 = vadd.f32 %v371, %v1455
      %v1457 = vpop.f32.mrb[0].mxu0
      %v1458 = vadd.f32 %v375, %v1457
      %v1459 = vpop.f32.mrb[0].mxu0
      %v1460 = vadd.f32 %v371, %v1459
      %v1461 = vpop.f32.mrb[0].mxu0
      %v1462 = vadd.f32 %v375, %v1461
      %1463 = vmatprep.mubr.bf16.mxu0 %v721
      %1464 = vmatmul.mubr.bf16.gmra.mrb[0].mxu0 %v720
      %v1465 = vpop.f32.mrb[0].mxu0
      %v1466 = vadd.f32 %v371, %v1465
      %v1467 = vpop.f32.mrb[0].mxu0
      %v1468 = vadd.f32 %v375, %v1467
      %v1469 = vpop.f32.mrb[0].mxu0
      %v1470 = vadd.f32 %v371, %v1469
      %v1471 = vpop.f32.mrb[0].mxu0
      %v1472 = vadd.f32 %v375, %v1471
      %1473 = vmatprep.mubr.bf16.mxu0 %v727
      %1474 = vmatmul.mubr.bf16.gmra.mrb[0].mxu0 %v726
      %v1475 = vpop.f32.mrb[0].mxu0
      %v1476 = vadd.f32 %v371, %v1475
      %v1477 = vpop.f32.mrb[0].mxu0
      %v1478 = vadd.f32 %v375, %v1477
      %v1479 = vpop.f32.mrb[0].mxu0
      %v1480 = vadd.f32 %v371, %v1479
      %v1481 = vpop.f32.mrb[0].mxu0
      %v1482 = vadd.f32 %v375, %v1481
      %1483 = vmatprep.mubr.bf16.mxu0 %v733
      %1484 = vmatmul.mubr.bf16.gmra.mrb[0].mxu0 %v732
      %v1485 = vpop.f32.mrb[0].mxu0
      %v1486 = vadd.f32 %v371, %v1485
      %v1487 = vpop.f32.mrb[0].mxu0
      %v1488 = vadd.f32 %v375, %v1487
      %v1489 = vpop.f32.mrb[0].mxu0
      %v1490 = vadd.f32 %v371, %v1489
      %v1491 = vpop.f32.mrb[0].mxu0
      %v1492 = vadd.f32 %v375, %v1491
      %1493 = vmatprep.mubr.bf16.mxu0 %v739
      %1494 = vmatmul.mubr.bf16.gmra.mrb[0].mxu0 %v738
      %v1495 = vpop.f32.mrb[0].mxu0
      %v1496 = vadd.f32 %v371, %v1495
      %v1497 = vpop.f32.mrb[0].mxu0
      %v1498 = vadd.f32 %v375, %v1497
      %v1499 = vpop.f32.mrb[0].mxu0
      %v1500 = vadd.f32 %v371, %v1499
      %v1501 = vpop.f32.mrb[0].mxu0
      %v1502 = vadd.f32 %v375, %v1501
      %1503 = vmatprep.mubr.bf16.mxu0 %v745
      %1504 = vmatmul.mubr.bf16.gmra.mrb[0].mxu0 %v744
      %v1505 = vpop.f32.mrb[0].mxu0
      %v1506 = vadd.f32 %v371, %v1505
      %v1507 = vpop.f32.mrb[0].mxu0
      %v1508 = vadd.f32 %v375, %v1507
      %v1509 = vpop.f32.mrb[0].mxu0
      %v1510 = vadd.f32 %v371, %v1509
      %v1511 = vpop.f32.mrb[0].mxu0
      %v1512 = vadd.f32 %v375, %v1511
      %1513 = vmatprep.mubr.bf16.mxu0 %v751
      %1514 = vmatmul.mubr.bf16.gmra.mrb[0].mxu0 %v750
      %v1515 = vpop.f32.mrb[0].mxu0
      %v1516 = vadd.f32 %v371, %v1515
      %v1517 = vpop.f32.mrb[0].mxu0
      %v1518 = vadd.f32 %v375, %v1517
      %v1519 = vpop.f32.mrb[0].mxu0
      %v1520 = vadd.f32 %v371, %v1519
      %v1521 = vpop.f32.mrb[0].mxu0
      %v1522 = vadd.f32 %v375, %v1521
      %1523 = vmatprep.mubr.bf16.mxu0 %v757
      %1524 = vmatmul.mubr.bf16.gmra.mrb[0].mxu0 %v756
      %v1525 = vpop.f32.mrb[0].mxu0
      %v1526 = vadd.f32 %v371, %v1525
      %v1527 = vpop.f32.mrb[0].mxu0
      %v1528 = vadd.f32 %v375, %v1527
      %v1529 = vpop.f32.mrb[0].mxu0
      %v1530 = vadd.f32 %v371, %v1529
      %v1531 = vpop.f32.mrb[0].mxu0
      %v1532 = vadd.f32 %v375, %v1531
      %1533 = vdwg.mxu0
      %1534 = vmatprep.subr.bf16.mxu0 %v1145
      %1535 = vmatpush1.bf16.msra.mxu0 %v1144
      %1536 = vmatprep.subr.bf16.mxu0 %v1147
      %1537 = vmatpush1.bf16.msra.mxu0 %v1146
      %1538 = vmatprep.subr.bf16.mxu0 %v1149
      %1539 = vmatpush1.bf16.msra.mxu0 %v1148
      %1540 = vmatprep.subr.bf16.mxu0 %v1151
      %1541 = vmatpush1.bf16.msra.mxu0 %v1150
      %1542 = vmatprep.subr.bf16.mxu0 %v1153
      %1543 = vmatpush1.bf16.msra.mxu0 %v1152
      %1544 = vmatprep.subr.bf16.mxu0 %v1155
      %1545 = vmatpush1.bf16.msra.mxu0 %v1154
      %1546 = vmatprep.subr.bf16.mxu0 %v1157
      %1547 = vmatpush1.bf16.msra.mxu0 %v1156
      %1548 = vmatprep.subr.bf16.mxu0 %v1159
      %1549 = vmatpush1.bf16.msra.mxu0 %v1158
      %1550 = vmatprep.subr.bf16.mxu0 %v1161
      %1551 = vmatpush1.bf16.msra.mxu0 %v1160
      %1552 = vmatprep.subr.bf16.mxu0 %v1163
      %1553 = vmatpush1.bf16.msra.mxu0 %v1162
      %1554 = vmatprep.subr.bf16.mxu0 %v1165
      %1555 = vmatpush1.bf16.msra.mxu0 %v1164
      %1556 = vmatprep.subr.bf16.mxu0 %v1167
      %1557 = vmatpush1.bf16.msra.mxu0 %v1166
      %1558 = vmatprep.subr.bf16.mxu0 %v1169
      %1559 = vmatpush1.bf16.msra.mxu0 %v1168
      %1560 = vmatprep.subr.bf16.mxu0 %v1171
      %1561 = vmatpush1.bf16.msra.mxu0 %v1170
      %1562 = vmatprep.subr.bf16.mxu0 %v1173
      %1563 = vmatpush1.bf16.msra.mxu0 %v1172
      %1564 = vmatprep.subr.bf16.mxu0 %v1175
      %1565 = vmatpush1.bf16.msra.mxu0 %v1174
      %1566 = vmatprep.mubr.bf16.mxu0 %v669
      %1567 = vmatmul.mubr.bf16.gmra.mrb[0].mxu0 %v668
      %v1568 = vpop.f32.mrb[0].mxu0
      %v1569 = vadd.f32 %v1376, %v1568
      %v1570 = vpop.f32.mrb[0].mxu0
      %v1571 = vadd.f32 %v1378, %v1570
      %v1572 = vpop.f32.mrb[0].mxu0
      %v1573 = vadd.f32 %v1380, %v1572
      %v1574 = vpop.f32.mrb[0].mxu0
      %v1575 = vadd.f32 %v1382, %v1574
      %1576 = vmatprep.mubr.bf16.mxu0 %v675
      %1577 = vmatmul.mubr.bf16.gmra.mrb[0].mxu0 %v674
      %v1578 = vpop.f32.mrb[0].mxu0
      %v1579 = vadd.f32 %v1386, %v1578
      %v1580 = vpop.f32.mrb[0].mxu0
      %v1581 = vadd.f32 %v1388, %v1580
      %v1582 = vpop.f32.mrb[0].mxu0
      %v1583 = vadd.f32 %v1390, %v1582
      %v1584 = vpop.f32.mrb[0].mxu0
      %v1585 = vadd.f32 %v1392, %v1584
      %1586 = vmatprep.mubr.bf16.mxu0 %v681
      %1587 = vmatmul.mubr.bf16.gmra.mrb[0].mxu0 %v680
      %v1588 = vpop.f32.mrb[0].mxu0
      %v1589 = vadd.f32 %v1396, %v1588
      %v1590 = vpop.f32.mrb[0].mxu0
      %v1591 = vadd.f32 %v1398, %v1590
      %v1592 = vpop.f32.mrb[0].mxu0
      %v1593 = vadd.f32 %v1400, %v1592
      %v1594 = vpop.f32.mrb[0].mxu0
      %v1595 = vadd.f32 %v1402, %v1594
      %1596 = vmatprep.mubr.bf16.mxu0 %v687
      %1597 = vmatmul.mubr.bf16.gmra.mrb[0].mxu0 %v686
      %v1598 = vpop.f32.mrb[0].mxu0
      %v1599 = vadd.f32 %v1406, %v1598
      %v1600 = vpop.f32.mrb[0].mxu0
      %v1601 = vadd.f32 %v1408, %v1600
      %v1602 = vpop.f32.mrb[0].mxu0
      %v1603 = vadd.f32 %v1410, %v1602
      %v1604 = vpop.f32.mrb[0].mxu0
      %v1605 = vadd.f32 %v1412, %v1604
      %1606 = vmatprep.mubr.bf16.mxu0 %v693
      %1607 = vmatmul.mubr.bf16.gmra.mrb[0].mxu0 %v692
      %v1608 = vpop.f32.mrb[0].mxu0
      %v1609 = vadd.f32 %v1416, %v1608
      %v1610 = vpop.f32.mrb[0].mxu0
      %v1611 = vadd.f32 %v1418, %v1610
      %v1612 = vpop.f32.mrb[0].mxu0
      %v1613 = vadd.f32 %v1420, %v1612
      %v1614 = vpop.f32.mrb[0].mxu0
      %v1615 = vadd.f32 %v1422, %v1614
      %1616 = vmatprep.mubr.bf16.mxu0 %v699
      %1617 = vmatmul.mubr.bf16.gmra.mrb[0].mxu0 %v698
      %v1618 = vpop.f32.mrb[0].mxu0
      %v1619 = vadd.f32 %v1426, %v1618
      %v1620 = vpop.f32.mrb[0].mxu0
      %v1621 = vadd.f32 %v1428, %v1620
      %v1622 = vpop.f32.mrb[0].mxu0
      %v1623 = vadd.f32 %v1430, %v1622
      %v1624 = vpop.f32.mrb[0].mxu0
      %v1625 = vadd.f32 %v1432, %v1624
      %1626 = vmatprep.mubr.bf16.mxu0 %v705
      %1627 = vmatmul.mubr.bf16.gmra.mrb[0].mxu0 %v704
      %v1628 = vpop.f32.mrb[0].mxu0
      %v1629 = vadd.f32 %v1436, %v1628
      %v1630 = vpop.f32.mrb[0].mxu0
      %v1631 = vadd.f32 %v1438, %v1630
      %v1632 = vpop.f32.mrb[0].mxu0
      %v1633 = vadd.f32 %v1440, %v1632
      %v1634 = vpop.f32.mrb[0].mxu0
      %v1635 = vadd.f32 %v1442, %v1634
      %1636 = vmatprep.mubr.bf16.mxu0 %v711
      %1637 = vmatmul.mubr.bf16.gmra.mrb[0].mxu0 %v710
      %v1638 = vpop.f32.mrb[0].mxu0
      %v1639 = vadd.f32 %v1446, %v1638
      %v1640 = vpop.f32.mrb[0].mxu0
      %v1641 = vadd.f32 %v1448, %v1640
      %v1642 = vpop.f32.mrb[0].mxu0
      %v1643 = vadd.f32 %v1450, %v1642
      %v1644 = vpop.f32.mrb[0].mxu0
      %v1645 = vadd.f32 %v1452, %v1644
      %1646 = vmatprep.mubr.bf16.mxu0 %v717
      %1647 = vmatmul.mubr.bf16.gmra.mrb[0].mxu0 %v716
      %v1648 = vpop.f32.mrb[0].mxu0
      %v1649 = vadd.f32 %v1456, %v1648
      %v1650 = vpop.f32.mrb[0].mxu0
      %v1651 = vadd.f32 %v1458, %v1650
      %v1652 = vpop.f32.mrb[0].mxu0
      %v1653 = vadd.f32 %v1460, %v1652
      %v1654 = vpop.f32.mrb[0].mxu0
      %v1655 = vadd.f32 %v1462, %v1654
      %1656 = vmatprep.mubr.bf16.mxu0 %v723
      %1657 = vmatmul.mubr.bf16.gmra.mrb[0].mxu0 %v722
      %v1658 = vpop.f32.mrb[0].mxu0
      %v1659 = vadd.f32 %v1466, %v1658
      %v1660 = vpop.f32.mrb[0].mxu0
      %v1661 = vadd.f32 %v1468, %v1660
      %v1662 = vpop.f32.mrb[0].mxu0
      %v1663 = vadd.f32 %v1470, %v1662
      %v1664 = vpop.f32.mrb[0].mxu0
      %v1665 = vadd.f32 %v1472, %v1664
      %1666 = vmatprep.mubr.bf16.mxu0 %v729
      %1667 = vmatmul.mubr.bf16.gmra.mrb[0].mxu0 %v728
      %v1668 = vpop.f32.mrb[0].mxu0
      %v1669 = vadd.f32 %v1476, %v1668
      %v1670 = vpop.f32.mrb[0].mxu0
      %v1671 = vadd.f32 %v1478, %v1670
      %v1672 = vpop.f32.mrb[0].mxu0
      %v1673 = vadd.f32 %v1480, %v1672
      %v1674 = vpop.f32.mrb[0].mxu0
      %v1675 = vadd.f32 %v1482, %v1674
      %1676 = vmatprep.mubr.bf16.mxu0 %v735
      %1677 = vmatmul.mubr.bf16.gmra.mrb[0].mxu0 %v734
      %v1678 = vpop.f32.mrb[0].mxu0
      %v1679 = vadd.f32 %v1486, %v1678
      %v1680 = vpop.f32.mrb[0].mxu0
      %v1681 = vadd.f32 %v1488, %v1680
      %v1682 = vpop.f32.mrb[0].mxu0
      %v1683 = vadd.f32 %v1490, %v1682
      %v1684 = vpop.f32.mrb[0].mxu0
      %v1685 = vadd.f32 %v1492, %v1684
      %1686 = vmatprep.mubr.bf16.mxu0 %v741
      %1687 = vmatmul.mubr.bf16.gmra.mrb[0].mxu0 %v740
      %v1688 = vpop.f32.mrb[0].mxu0
      %v1689 = vadd.f32 %v1496, %v1688
      %v1690 = vpop.f32.mrb[0].mxu0
      %v1691 = vadd.f32 %v1498, %v1690
      %v1692 = vpop.f32.mrb[0].mxu0
      %v1693 = vadd.f32 %v1500, %v1692
      %v1694 = vpop.f32.mrb[0].mxu0
      %v1695 = vadd.f32 %v1502, %v1694
      %1696 = vmatprep.mubr.bf16.mxu0 %v747
      %1697 = vmatmul.mubr.bf16.gmra.mrb[0].mxu0 %v746
      %v1698 = vpop.f32.mrb[0].mxu0
      %v1699 = vadd.f32 %v1506, %v1698
      %v1700 = vpop.f32.mrb[0].mxu0
      %v1701 = vadd.f32 %v1508, %v1700
      %v1702 = vpop.f32.mrb[0].mxu0
      %v1703 = vadd.f32 %v1510, %v1702
      %v1704 = vpop.f32.mrb[0].mxu0
      %v1705 = vadd.f32 %v1512, %v1704
      %1706 = vmatprep.mubr.bf16.mxu0 %v753
      %1707 = vmatmul.mubr.bf16.gmra.mrb[0].mxu0 %v752
      %v1708 = vpop.f32.mrb[0].mxu0
      %v1709 = vadd.f32 %v1516, %v1708
      %v1710 = vpop.f32.mrb[0].mxu0
      %v1711 = vadd.f32 %v1518, %v1710
      %v1712 = vpop.f32.mrb[0].mxu0
      %v1713 = vadd.f32 %v1520, %v1712
      %v1714 = vpop.f32.mrb[0].mxu0
      %v1715 = vadd.f32 %v1522, %v1714
      %1716 = vmatprep.mubr.bf16.mxu0 %v759
      %1717 = vmatmul.mubr.bf16.gmra.mrb[0].mxu0 %v758
      %v1718 = vpop.f32.mrb[0].mxu0
      %v1719 = vadd.f32 %v1526, %v1718
      %v1720 = vpop.f32.mrb[0].mxu0
      %v1721 = vadd.f32 %v1528, %v1720
      %v1722 = vpop.f32.mrb[0].mxu0
      %v1723 = vadd.f32 %v1530, %v1722
      %v1724 = vpop.f32.mrb[0].mxu0
      %v1725 = vadd.f32 %v1532, %v1724
      %1726 = vdwg.mxu0
      %1727 = vmatprep.subr.bf16.mxu0 %v1177
      %1728 = vmatpush1.bf16.msra.mxu0 %v1176
      %1729 = vmatprep.subr.bf16.mxu0 %v1179
      %1730 = vmatpush1.bf16.msra.mxu0 %v1178
      %1731 = vmatprep.subr.bf16.mxu0 %v1181
      %1732 = vmatpush1.bf16.msra.mxu0 %v1180
      %1733 = vmatprep.subr.bf16.mxu0 %v1183
      %1734 = vmatpush1.bf16.msra.mxu0 %v1182
      %1735 = vmatprep.subr.bf16.mxu0 %v1185
      %1736 = vmatpush1.bf16.msra.mxu0 %v1184
      %1737 = vmatprep.subr.bf16.mxu0 %v1187
      %1738 = vmatpush1.bf16.msra.mxu0 %v1186
      %1739 = vmatprep.subr.bf16.mxu0 %v1189
      %1740 = vmatpush1.bf16.msra.mxu0 %v1188
      %1741 = vmatprep.subr.bf16.mxu0 %v1191
      %1742 = vmatpush1.bf16.msra.mxu0 %v1190
      %1743 = vmatprep.subr.bf16.mxu0 %v1193
      %1744 = vmatpush1.bf16.msra.mxu0 %v1192
      %1745 = vmatprep.subr.bf16.mxu0 %v1195
      %1746 = vmatpush1.bf16.msra.mxu0 %v1194
      %1747 = vmatprep.subr.bf16.mxu0 %v1197
      %1748 = vmatpush1.bf16.msra.mxu0 %v1196
      %1749 = vmatprep.subr.bf16.mxu0 %v1199
      %1750 = vmatpush1.bf16.msra.mxu0 %v1198
      %1751 = vmatprep.subr.bf16.mxu0 %v1201
      %1752 = vmatpush1.bf16.msra.mxu0 %v1200
      %1753 = vmatprep.subr.bf16.mxu0 0
      %1754 = vmatpush1.bf16.msra.mxu0 0
      %1755 = vmatprep.subr.bf16.mxu0 0
      %1756 = vmatpush1.bf16.msra.mxu0 0
      %1757 = vmatprep.subr.bf16.mxu0 0
      %1758 = vmatpush1.bf16.msra.mxu0 0
      %1759 = vmatprep.mubr.bf16.mxu0 %v1294
      %1760 = vmatmul.mubr.bf16.gmra.mrb[0].mxu0 %v670
      %v1761 = vpop.f32.mrb[0].mxu0
      %v1762 = vadd.f32 %v1569, %v1761
      %v1763 = vpop.f32.mrb[0].mxu0
      %v1764 = vadd.f32 %v1571, %v1763
      %v1765 = vpop.f32.mrb[0].mxu0
      %v1766 = vadd.f32 %v1573, %v1765
      %v1767 = vpop.f32.mrb[0].mxu0
      %v1768 = vadd.f32 %v1575, %v1767
      %1769 = vmatprep.mubr.bf16.mxu0 %v1297
      %1770 = vmatmul.mubr.bf16.gmra.mrb[0].mxu0 %v676
      %v1771 = vpop.f32.mrb[0].mxu0
      %v1772 = vadd.f32 %v1579, %v1771
      %v1773 = vpop.f32.mrb[0].mxu0
      %v1774 = vadd.f32 %v1581, %v1773
      %v1775 = vpop.f32.mrb[0].mxu0
      %v1776 = vadd.f32 %v1583, %v1775
      %v1777 = vpop.f32.mrb[0].mxu0
      %v1778 = vadd.f32 %v1585, %v1777
      %1779 = vmatprep.mubr.bf16.mxu0 %v1300
      %1780 = vmatmul.mubr.bf16.gmra.mrb[0].mxu0 %v682
      %v1781 = vpop.f32.mrb[0].mxu0
      %v1782 = vadd.f32 %v1589, %v1781
      %v1783 = vpop.f32.mrb[0].mxu0
      %v1784 = vadd.f32 %v1591, %v1783
      %v1785 = vpop.f32.mrb[0].mxu0
      %v1786 = vadd.f32 %v1593, %v1785
      %v1787 = vpop.f32.mrb[0].mxu0
      %v1788 = vadd.f32 %v1595, %v1787
      %1789 = vmatprep.mubr.bf16.mxu0 %v1303
      %1790 = vmatmul.mubr.bf16.gmra.mrb[0].mxu0 %v688
      %v1791 = vpop.f32.mrb[0].mxu0
      %v1792 = vadd.f32 %v1599, %v1791
      %v1793 = vpop.f32.mrb[0].mxu0
      %v1794 = vadd.f32 %v1601, %v1793
      %v1795 = vpop.f32.mrb[0].mxu0
      %v1796 = vadd.f32 %v1603, %v1795
      %v1797 = vpop.f32.mrb[0].mxu0
      %v1798 = vadd.f32 %v1605, %v1797
      %1799 = vmatprep.mubr.bf16.mxu0 %v1306
      %1800 = vmatmul.mubr.bf16.gmra.mrb[0].mxu0 %v694
      %v1801 = vpop.f32.mrb[0].mxu0
      %v1802 = vadd.f32 %v1609, %v1801
      %v1803 = vpop.f32.mrb[0].mxu0
      %v1804 = vadd.f32 %v1611, %v1803
      %v1805 = vpop.f32.mrb[0].mxu0
      %v1806 = vadd.f32 %v1613, %v1805
      %v1807 = vpop.f32.mrb[0].mxu0
      %v1808 = vadd.f32 %v1615, %v1807
      %1809 = vmatprep.mubr.bf16.mxu0 %v1309
      %1810 = vmatmul.mubr.bf16.gmra.mrb[0].mxu0 %v700
      %v1811 = vpop.f32.mrb[0].mxu0
      %v1812 = vadd.f32 %v1619, %v1811
      %v1813 = vpop.f32.mrb[0].mxu0
      %v1814 = vadd.f32 %v1621, %v1813
      %v1815 = vpop.f32.mrb[0].mxu0
      %v1816 = vadd.f32 %v1623, %v1815
      %v1817 = vpop.f32.mrb[0].mxu0
      %v1818 = vadd.f32 %v1625, %v1817
      %1819 = vmatprep.mubr.bf16.mxu0 %v1312
      %1820 = vmatmul.mubr.bf16.gmra.mrb[0].mxu0 %v706
      %v1821 = vpop.f32.mrb[0].mxu0
      %v1822 = vadd.f32 %v1629, %v1821
      %v1823 = vpop.f32.mrb[0].mxu0
      %v1824 = vadd.f32 %v1631, %v1823
      %v1825 = vpop.f32.mrb[0].mxu0
      %v1826 = vadd.f32 %v1633, %v1825
      %v1827 = vpop.f32.mrb[0].mxu0
      %v1828 = vadd.f32 %v1635, %v1827
      %1829 = vmatprep.mubr.bf16.mxu0 %v1315
      %1830 = vmatmul.mubr.bf16.gmra.mrb[0].mxu0 %v712
      %v1831 = vpop.f32.mrb[0].mxu0
      %v1832 = vadd.f32 %v1639, %v1831
      %v1833 = vpop.f32.mrb[0].mxu0
      %v1834 = vadd.f32 %v1641, %v1833
      %v1835 = vpop.f32.mrb[0].mxu0
      %v1836 = vadd.f32 %v1643, %v1835
      %v1837 = vpop.f32.mrb[0].mxu0
      %v1838 = vadd.f32 %v1645, %v1837
      %1839 = vmatprep.mubr.bf16.mxu0 %v1318
      %1840 = vmatmul.mubr.bf16.gmra.mrb[0].mxu0 %v718
      %v1841 = vpop.f32.mrb[0].mxu0
      %v1842 = vadd.f32 %v1649, %v1841
      %v1843 = vpop.f32.mrb[0].mxu0
      %v1844 = vadd.f32 %v1651, %v1843
      %v1845 = vpop.f32.mrb[0].mxu0
      %v1846 = vadd.f32 %v1653, %v1845
      %v1847 = vpop.f32.mrb[0].mxu0
      %v1848 = vadd.f32 %v1655, %v1847
      %1849 = vmatprep.mubr.bf16.mxu0 %v1321
      %1850 = vmatmul.mubr.bf16.gmra.mrb[0].mxu0 %v724
      %v1851 = vpop.f32.mrb[0].mxu0
      %v1852 = vadd.f32 %v1659, %v1851
      %v1853 = vpop.f32.mrb[0].mxu0
      %v1854 = vadd.f32 %v1661, %v1853
      %v1855 = vpop.f32.mrb[0].mxu0
      %v1856 = vadd.f32 %v1663, %v1855
      %v1857 = vpop.f32.mrb[0].mxu0
      %v1858 = vadd.f32 %v1665, %v1857
      %1859 = vmatprep.mubr.bf16.mxu0 %v1324
      %1860 = vmatmul.mubr.bf16.gmra.mrb[0].mxu0 %v730
      %v1861 = vpop.f32.mrb[0].mxu0
      %v1862 = vadd.f32 %v1669, %v1861
      %v1863 = vpop.f32.mrb[0].mxu0
      %v1864 = vadd.f32 %v1671, %v1863
      %v1865 = vpop.f32.mrb[0].mxu0
      %v1866 = vadd.f32 %v1673, %v1865
      %v1867 = vpop.f32.mrb[0].mxu0
      %v1868 = vadd.f32 %v1675, %v1867
      %1869 = vmatprep.mubr.bf16.mxu0 %v1327
      %1870 = vmatmul.mubr.bf16.gmra.mrb[0].mxu0 %v736
      %v1871 = vpop.f32.mrb[0].mxu0
      %v1872 = vadd.f32 %v1679, %v1871
      %v1873 = vpop.f32.mrb[0].mxu0
      %v1874 = vadd.f32 %v1681, %v1873
      %v1875 = vpop.f32.mrb[0].mxu0
      %v1876 = vadd.f32 %v1683, %v1875
      %v1877 = vpop.f32.mrb[0].mxu0
      %v1878 = vadd.f32 %v1685, %v1877
      %1879 = vmatprep.mubr.bf16.mxu0 %v1330
      %1880 = vmatmul.mubr.bf16.gmra.mrb[0].mxu0 %v742
      %v1881 = vpop.f32.mrb[0].mxu0
      %v1882 = vadd.f32 %v1689, %v1881
      %v1883 = vpop.f32.mrb[0].mxu0
      %v1884 = vadd.f32 %v1691, %v1883
      %v1885 = vpop.f32.mrb[0].mxu0
      %v1886 = vadd.f32 %v1693, %v1885
      %v1887 = vpop.f32.mrb[0].mxu0
      %v1888 = vadd.f32 %v1695, %v1887
      %1889 = vmatprep.mubr.bf16.mxu0 %v1333
      %1890 = vmatmul.mubr.bf16.gmra.mrb[0].mxu0 %v748
      %v1891 = vpop.f32.mrb[0].mxu0
      %v1892 = vadd.f32 %v1699, %v1891
      %v1893 = vpop.f32.mrb[0].mxu0
      %v1894 = vadd.f32 %v1701, %v1893
      %v1895 = vpop.f32.mrb[0].mxu0
      %v1896 = vadd.f32 %v1703, %v1895
      %v1897 = vpop.f32.mrb[0].mxu0
      %v1898 = vadd.f32 %v1705, %v1897
      %1899 = vmatprep.mubr.bf16.mxu0 %v1336
      %1900 = vmatmul.mubr.bf16.gmra.mrb[0].mxu0 %v754
      %v1901 = vpop.f32.mrb[0].mxu0
      %v1902 = vadd.f32 %v1709, %v1901
      %v1903 = vpop.f32.mrb[0].mxu0
      %v1904 = vadd.f32 %v1711, %v1903
      %v1905 = vpop.f32.mrb[0].mxu0
      %v1906 = vadd.f32 %v1713, %v1905
      %v1907 = vpop.f32.mrb[0].mxu0
      %v1908 = vadd.f32 %v1715, %v1907
      %1909 = vmatprep.mubr.bf16.mxu0 %v1339
      %1910 = vmatmul.mubr.bf16.gmra.mrb[0].mxu0 %v760
      %v1911 = vpop.f32.mrb[0].mxu0
      %v1912 = vadd.f32 %v1719, %v1911
      %v1913 = vpop.f32.mrb[0].mxu0
      %v1914 = vadd.f32 %v1721, %v1913
      %v1915 = vpop.f32.mrb[0].mxu0
      %v1916 = vadd.f32 %v1723, %v1915
      %v1917 = vpop.f32.mrb[0].mxu0
      %v1918 = vadd.f32 %v1725, %v1917
      %1919 = vdwg.mxu0
      %v1920 = vmax.f32 %v1762, 0.0
      %v1921 = vmax.f32 %v1764, 0.0
      %v1922 = vmax.f32 %v1766, 0.0
      %v1923 = vmax.f32 %v1768, 0.0
      %v1924 = vmax.f32 %v1772, 0.0
      %v1925 = vmax.f32 %v1774, 0.0
      %v1926 = vmax.f32 %v1776, 0.0
      %v1927 = vmax.f32 %v1778, 0.0
      %v1928 = vmax.f32 %v1782, 0.0
      %v1929 = vmax.f32 %v1784, 0.0
      %v1930 = vmax.f32 %v1786, 0.0
      %v1931 = vmax.f32 %v1788, 0.0
      %v1932 = vmax.f32 %v1792, 0.0
      %v1933 = vmax.f32 %v1794, 0.0
      %v1934 = vmax.f32 %v1796, 0.0
      %v1935 = vmax.f32 %v1798, 0.0
      %v1936 = vmax.f32 %v1802, 0.0
      %v1937 = vmax.f32 %v1804, 0.0
      %v1938 = vmax.f32 %v1806, 0.0
      %v1939 = vmax.f32 %v1808, 0.0
      %v1940 = vmax.f32 %v1812, 0.0
      %v1941 = vmax.f32 %v1814, 0.0
      %v1942 = vmax.f32 %v1816, 0.0
      %v1943 = vmax.f32 %v1818, 0.0
      %v1944 = vmax.f32 %v1822, 0.0
      %v1945 = vmax.f32 %v1824, 0.0
      %v1946 = vmax.f32 %v1826, 0.0
      %v1947 = vmax.f32 %v1828, 0.0
      %v1948 = vmax.f32 %v1832, 0.0
      %v1949 = vmax.f32 %v1834, 0.0
      %v1950 = vmax.f32 %v1836, 0.0
      %v1951 = vmax.f32 %v1838, 0.0
      %v1952 = vmax.f32 %v1842, 0.0
      %v1953 = vmax.f32 %v1844, 0.0
      %v1954 = vmax.f32 %v1846, 0.0
      %v1955 = vmax.f32 %v1848, 0.0
      %v1956 = vmax.f32 %v1852, 0.0
      %v1957 = vmax.f32 %v1854, 0.0
      %v1958 = vmax.f32 %v1856, 0.0
      %v1959 = vmax.f32 %v1858, 0.0
      %v1960 = vmax.f32 %v1862, 0.0
      %v1961 = vmax.f32 %v1864, 0.0
      %v1962 = vmax.f32 %v1866, 0.0
      %v1963 = vmax.f32 %v1868, 0.0
      %v1964 = vmax.f32 %v1872, 0.0
      %v1965 = vmax.f32 %v1874, 0.0
      %v1966 = vmax.f32 %v1876, 0.0
      %v1967 = vmax.f32 %v1878, 0.0
      %v1968 = vmax.f32 %v1882, 0.0
      %v1969 = vmax.f32 %v1884, 0.0
      %v1970 = vmax.f32 %v1886, 0.0
      %v1971 = vmax.f32 %v1888, 0.0
      %v1972 = vmax.f32 %v1892, 0.0
      %v1973 = vmax.f32 %v1894, 0.0
      %v1974 = vmax.f32 %v1896, 0.0
      %v1975 = vmax.f32 %v1898, 0.0
      %v1976 = vmax.f32 %v1902, 0.0
      %v1977 = vmax.f32 %v1904, 0.0
      %v1978 = vmax.f32 %v1906, 0.0
      %v1979 = vmax.f32 %v1908, 0.0
      %v1980 = vmax.f32 %v1912, 0.0
      %v1981 = vmax.f32 %v1914, 0.0
      %v1982 = vmax.f32 %v1916, 0.0
      %v1983 = vmax.f32 %v1918, 0.0
      %v1984 = vpack.c.bf16 %v1922, %v1920
      %v1985 = vpack.c.bf16 %v1923, %v1921
      %v1986 = vpack.c.bf16 %v1926, %v1924
      %v1987 = vpack.c.bf16 %v1927, %v1925
      %v1988 = vpack.c.bf16 %v1930, %v1928
      %v1989 = vpack.c.bf16 %v1931, %v1929
      %v1990 = vpack.c.bf16 %v1934, %v1932
      %v1991 = vpack.c.bf16 %v1935, %v1933
      %v1992 = vpack.c.bf16 %v1938, %v1936
      %v1993 = vpack.c.bf16 %v1939, %v1937
      %v1994 = vpack.c.bf16 %v1942, %v1940
      %v1995 = vpack.c.bf16 %v1943, %v1941
      %v1996 = vpack.c.bf16 %v1946, %v1944
      %v1997 = vpack.c.bf16 %v1947, %v1945
      %v1998 = vpack.c.bf16 %v1950, %v1948
      %v1999 = vpack.c.bf16 %v1951, %v1949
      %v2000 = vpack.c.bf16 %v1954, %v1952
      %v2001 = vpack.c.bf16 %v1955, %v1953
      %v2002 = vpack.c.bf16 %v1958, %v1956
      %v2003 = vpack.c.bf16 %v1959, %v1957
      %v2004 = vpack.c.bf16 %v1962, %v1960
      %v2005 = vpack.c.bf16 %v1963, %v1961
      %v2006 = vpack.c.bf16 %v1966, %v1964
      %v2007 = vpack.c.bf16 %v1967, %v1965
      %v2008 = vpack.c.bf16 %v1970, %v1968
      %v2009 = vpack.c.bf16 %v1971, %v1969
      %v2010 = vpack.c.bf16 %v1974, %v1972
      %v2011 = vpack.c.bf16 %v1975, %v1973
      %v2012 = vpack.c.bf16 %v1978, %v1976
      %v2013 = vpack.c.bf16 %v1979, %v1977
      %v2014 = vpack.c.bf16 %v1982, %v1980
      %v2015 = vpack.c.bf16 %v1983, %v1981
      %v2048 = vunpack.c.l.b16 %v1984
      %v2049 = vunpack.c.l.b16 %v1985
      %v2050 = vunpack.c.h.b16 %v1984
      %v2051 = vunpack.c.h.b16 %v1985
      %v2052 = vunpack.c.l.b16 %v1986
      %v2053 = vunpack.c.l.b16 %v1987
      %v2054 = vunpack.c.h.b16 %v1986
      %v2055 = vunpack.c.h.b16 %v1987
      %v2056 = vunpack.c.l.b16 %v1988
      %v2057 = vunpack.c.l.b16 %v1989
      %v2058 = vunpack.c.h.b16 %v1988
      %v2059 = vunpack.c.h.b16 %v1989
      %v2060 = vunpack.c.l.b16 %v1990
      %v2061 = vunpack.c.l.b16 %v1991
      %v2062 = vunpack.c.h.b16 %v1990
      %v2063 = vunpack.c.h.b16 %v1991
      %v2064 = vunpack.c.l.b16 %v1992
      %v2065 = vunpack.c.l.b16 %v1993
      %v2066 = vunpack.c.h.b16 %v1992
      %v2067 = vunpack.c.h.b16 %v1993
      %v2068 = vunpack.c.l.b16 %v1994
      %v2069 = vunpack.c.l.b16 %v1995
      %v2070 = vunpack.c.h.b16 %v1994
      %v2071 = vunpack.c.h.b16 %v1995
      %v2072 = vunpack.c.l.b16 %v1996
      %v2073 = vunpack.c.l.b16 %v1997
      %v2074 = vunpack.c.h.b16 %v1996
      %v2075 = vunpack.c.h.b16 %v1997
      %v2076 = vunpack.c.l.b16 %v1998
      %v2077 = vunpack.c.l.b16 %v1999
      %v2078 = vunpack.c.h.b16 %v1998
      %v2079 = vunpack.c.h.b16 %v1999
      %v2080 = vunpack.c.l.b16 %v2000
      %v2081 = vunpack.c.l.b16 %v2001
      %v2082 = vunpack.c.h.b16 %v2000
      %v2083 = vunpack.c.h.b16 %v2001
      %v2084 = vunpack.c.l.b16 %v2002
      %v2085 = vunpack.c.l.b16 %v2003
      %v2086 = vunpack.c.h.b16 %v2002
      %v2087 = vunpack.c.h.b16 %v2003
      %v2088 = vunpack.c.l.b16 %v2004
      %v2089 = vunpack.c.l.b16 %v2005
      %v2090 = vunpack.c.h.b16 %v2004
      %v2091 = vunpack.c.h.b16 %v2005
      %v2092 = vunpack.c.l.b16 %v2006
      %v2093 = vunpack.c.l.b16 %v2007
      %v2094 = vunpack.c.h.b16 %v2006
      %v2095 = vunpack.c.h.b16 %v2007
      %v2096 = vunpack.c.l.b16 %v2008
      %v2097 = vunpack.c.l.b16 %v2009
      %v2098 = vunpack.c.h.b16 %v2008
      %v2099 = vunpack.c.h.b16 %v2009
      %v2100 = vunpack.c.l.b16 %v2010
      %v2101 = vunpack.c.l.b16 %v2011
      %v2102 = vunpack.c.h.b16 %v2010
      %v2103 = vunpack.c.h.b16 %v2011
      %v2104 = vunpack.c.l.b16 %v2012
      %v2105 = vunpack.c.l.b16 %v2013
      %v2106 = vunpack.c.h.b16 %v2012
      %v2107 = vunpack.c.h.b16 %v2013
      %v2108 = vunpack.c.l.b16 %v2014
      %v2109 = vunpack.c.l.b16 %v2015
      %v2110 = vunpack.c.h.b16 %v2014
      %v2111 = vunpack.c.h.b16 %v2015
      %v2112 = vpack.c.b16 %v2049, %v2048
      %v2113 = vpack.c.b16 %v2051, %v2050
      %v2114 = vpack.c.b16 %v2053, %v2052
      %v2115 = vpack.c.b16 %v2055, %v2054
      %v2116 = vpack.c.b16 %v2057, %v2056
      %v2117 = vpack.c.b16 %v2059, %v2058
      %v2118 = vpack.c.b16 %v2061, %v2060
      %v2119 = vpack.c.b16 %v2063, %v2062
      %v2120 = vpack.c.b16 %v2065, %v2064
      %v2121 = vpack.c.b16 %v2067, %v2066
      %v2122 = vpack.c.b16 %v2069, %v2068
      %v2123 = vpack.c.b16 %v2071, %v2070
      %v2124 = vpack.c.b16 %v2073, %v2072
      %v2125 = vpack.c.b16 %v2075, %v2074
      %v2126 = vpack.c.b16 %v2077, %v2076
      %v2127 = vpack.c.b16 %v2079, %v2078
      %v2128 = vpack.c.b16 %v2081, %v2080
      %v2129 = vpack.c.b16 %v2083, %v2082
      %v2130 = vpack.c.b16 %v2085, %v2084
      %v2131 = vpack.c.b16 %v2087, %v2086
      %v2132 = vpack.c.b16 %v2089, %v2088
      %v2133 = vpack.c.b16 %v2091, %v2090
      %v2134 = vpack.c.b16 %v2093, %v2092
      %v2135 = vpack.c.b16 %v2095, %v2094
      %v2136 = vpack.c.b16 %v2097, %v2096
      %v2137 = vpack.c.b16 %v2099, %v2098
      %v2138 = vpack.c.b16 %v2101, %v2100
      %v2139 = vpack.c.b16 %v2103, %v2102
      %v2140 = vpack.c.b16 %v2105, %v2104
      %v2141 = vpack.c.b16 %v2107, %v2106
      %v2142 = vpack.c.b16 %v2109, %v2108
      %v2143 = vpack.c.b16 %v2111, %v2110
      %2176 = vst [vmem:[%s177] sm:$0xff] %v2112
      %2177 = vst [vmem:[%s177 + $0x8] sm:$0xff] %v2113
      %2178 = vst [vmem:[%s177 + $0x10] sm:$0xff] %v2114
      %2179 = vst [vmem:[%s177 + $0x18] sm:$0xff] %v2115
      %2180 = vst [vmem:[%s177 + $0x20] sm:$0xff] %v2116
      %2181 = vst [vmem:[%s177 + $0x28] sm:$0xff] %v2117
      %2182 = vst [vmem:[%s177 + $0x30] sm:$0xff] %v2118
      %2183 = vst [vmem:[%s177 + $0x38] sm:$0xff] %v2119
      %2184 = vst [vmem:[%s177 + $0x40] sm:$0xff] %v2120
      %2185 = vst [vmem:[%s177 + $0x48] sm:$0xff] %v2121
      %2186 = vst [vmem:[%s177 + $0x50] sm:$0xff] %v2122
      %2187 = vst [vmem:[%s177 + $0x58] sm:$0xff] %v2123
      %2188 = vst [vmem:[%s177 + $0x60] sm:$0xff] %v2124
      %2189 = vst [vmem:[%s177 + $0x68] sm:$0xff] %v2125
      %2190 = vst [vmem:[%s177 + $0x70] sm:$0xff] %v2126
      %2191 = vst [vmem:[%s177 + $0x78] sm:$0xff] %v2127
      %2192 = vst [vmem:[%s177 + $0x80] sm:$0xff] %v2128
      %2193 = vst [vmem:[%s177 + $0x88] sm:$0xff] %v2129
      %2194 = vst [vmem:[%s177 + $0x90] sm:$0xff] %v2130
      %2195 = vst [vmem:[%s177 + $0x98] sm:$0xff] %v2131
      %2196 = vst [vmem:[%s177 + $0xa0] sm:$0xff] %v2132
      %2197 = vst [vmem:[%s177 + $0xa8] sm:$0xff] %v2133
      %2198 = vst [vmem:[%s177 + $0xb0] sm:$0xff] %v2134
      %2199 = vst [vmem:[%s177 + $0xb8] sm:$0xff] %v2135
      %2200 = vst [vmem:[%s177 + $0xc0] sm:$0xff] %v2136
      %2201 = vst [vmem:[%s177 + $0xc8] sm:$0xff] %v2137
      %2202 = vst [vmem:[%s177 + $0xd0] sm:$0xff] %v2138
      %2203 = vst [vmem:[%s177 + $0xd8] sm:$0xff] %v2139
      %2204 = vst [vmem:[%s177 + $0xe0] sm:$0xff] %v2140
      %2205 = vst [vmem:[%s177 + $0xe8] sm:$0xff] %v2141
      %2206 = vst [vmem:[%s177 + $0xf0] sm:$0xff] %v2142
      %2207 = vst [vmem:[%s177 + $0xf8] sm:$0xff] %v2143
      %s2208 = smul.u32 32, %s14
      %p2209 = scmp.lt.s32.totalorder %s2208, 63
      %s2210 = scalar_select %p2209, %s2208, 63
      %s2211 = smul.addr %s2210, 2
      %s2212 = smul.addr %s2211, 4
      %s2213 = scalar_lea.vmem %s3, %s2212
      // Predicated region
      $region33: #{stem_forward.20} parent=31 // pred_check
        %p2214 = pneg %p100
      $region34: #{stem_forward.20} parent=31 // pred_check_branch
        %2216 = sbr.rel (%p2214) target = $region36
      $region35: #{stem_forward.20} parent=31 // pred_region
        %s2217 = smul.u32 32, %s14
      $region36: #{stem_forward.20} parent=31 // pred_fallthru
        _
    $region32: #{stem_forward.20} parent=5 // pred_fallthru
      _
    %p2218 = scmp.le.s32.totalorder 2, %s9
    // Predicated region
    $region37: #{stem_forward.20} parent=5 // pred_check
      %p2219 = pneg %p2218
    $region38: #{stem_forward.20} parent=5 // pred_check_branch
      %2221 = sbr.rel (%p2219) target = $region40
    $region39: #{stem_forward.20} parent=5 // pred_region
      %s2222 = ssub.s32 %s9, 2
      // Predicated region
      $region41: #{stem_forward.20} parent=39 // pred_check
        %p2223 = pneg %p106
      $region42: #{stem_forward.20} parent=39 // pred_check_branch
        %2225 = sbr.rel (%p2223) target = $region44
      $region43: #{stem_forward.20} parent=39 // pred_region
        %s2226 = smul.u32 32, %s15
        %p2227 = scmp.lt.s32.totalorder %s2226, 63
        %s2228 = scalar_select %p2227, %s2226, 63
        %s2229 = smul.addr %s2228, 2
        %s2230 = smul.addr %s2229, 4
        %s2231 = scalar_lea.vmem %s3, %s2230
      $region44: #{stem_forward.20} parent=39 // pred_fallthru
        _
    $region40: #{stem_forward.20} parent=5 // pred_fallthru
      _
  $region6: #{stem_forward.20} parent=0 // loop_footer
    %s13 = sadd.s32 1, %s9
  $region7: #{stem_forward.20} parent=0 // loop_footer_branch
    %8 = sbr.rel target = $region3
  $region8: #{stem_forward.20} parent=0 // loop_exit
    _

// kernel: stem_forward.21
$region0: #{stem_forward.21}
  #allocation0 [shape = 'u32[]', space=smem, size = 0x4, offset = 0x4, fixed_abs, tag = 'smem constant byte address 0x4 - core index']
  #allocation1 [shape = 'u32[144,128]{1,0:T(1,128)}', space=vmem, size = 0x12000, scoped, tag = 'internal scratch']
  %s0 = inlined_call_operand.vmem [shape: bf16[9,64,192], index: 0, kind: input, shape index: {}]
  %s1 = inlined_call_operand.vmem [shape: bf16[64,192], index: 1, kind: output, shape index: {}]
  %s2 = sld [smem:[#allocation0]]
  $region14: #{stem_forward.21} parent=0
    _
  %s4 = ssub.s32 1, %s2
  %s5 = scalar_select 0, %s4, %s2
  // Predicated region
  $region2: #{stem_forward.21} parent=0 // pred_check
    _
  $region3: #{stem_forward.21} parent=0 // pred_check_branch
    %7 = sbr.rel (0) target = $region5
  $region4: #{stem_forward.21} parent=0 // pred_region
    _
  $region5: #{stem_forward.21} parent=0 // pred_fallthru
    _
  %v9 = vld [vmem:[%s0] sm:$0xff]
  %v10 = vld [vmem:[%s0 + $0x8] sm:$0xff]
  %v11 = vld [vmem:[%s0 + $0x10] sm:$0xff]
  %v12 = vld [vmem:[%s0 + $0x18] sm:$0xff]
  %v13 = vld [vmem:[%s0 + $0x20] sm:$0xff]
  %v14 = vld [vmem:[%s0 + $0x28] sm:$0xff]
  %v15 = vld [vmem:[%s0 + $0x30] sm:$0xff]
  %v16 = vld [vmem:[%s0 + $0x38] sm:$0xff]
  %v17 = vld [vmem:[%s0 + $0x40] sm:$0xff]
  %v18 = vld [vmem:[%s0 + $0x48] sm:$0xff]
  %v19 = vld [vmem:[%s0 + $0x50] sm:$0xff]
  %v20 = vld [vmem:[%s0 + $0x58] sm:$0xff]
  %v21 = vld [vmem:[%s0 + $0x60] sm:$0xff]
  %v22 = vld [vmem:[%s0 + $0x68] sm:$0xff]
  %v23 = vld [vmem:[%s0 + $0x70] sm:$0xff]
  %v24 = vld [vmem:[%s0 + $0x78] sm:$0xff]
  %v25 = vld [vmem:[%s0 + $0x80] sm:$0xff]
  %v26 = vld [vmem:[%s0 + $0x88] sm:$0xff]
  %v27 = vld [vmem:[%s0 + $0x90] sm:$0xff]
  %v28 = vld [vmem:[%s0 + $0x98] sm:$0xff]
  %v29 = vld [vmem:[%s0 + $0xa0] sm:$0xff]
  %v30 = vld [vmem:[%s0 + $0xa8] sm:$0xff]
  %v31 = vld [vmem:[%s0 + $0xb0] sm:$0xff]
  %v32 = vld [vmem:[%s0 + $0xb8] sm:$0xff]
  %v33 = vld [vmem:[%s0 + $0xc0] sm:$0xff]
  %v34 = vld [vmem:[%s0 + $0xc8] sm:$0xff]
  %v35 = vld [vmem:[%s0 + $0xd0] sm:$0xff]
  %v36 = vld [vmem:[%s0 + $0xd8] sm:$0xff]
  %v37 = vld [vmem:[%s0 + $0xe0] sm:$0xff]
  %v38 = vld [vmem:[%s0 + $0xe8] sm:$0xff]
  %v39 = vld [vmem:[%s0 + $0xf0] sm:$0xff]
  %v40 = vld [vmem:[%s0 + $0xf8] sm:$0xff]
  %v41 = vld [vmem:[%s0 + $0x100] sm:$0xff]
  %v42 = vld [vmem:[%s0 + $0x108] sm:$0xff]
  %v43 = vld [vmem:[%s0 + $0x110] sm:$0xff]
  %v44 = vld [vmem:[%s0 + $0x118] sm:$0xff]
  %v45 = vld [vmem:[%s0 + $0x120] sm:$0xff]
  %v46 = vld [vmem:[%s0 + $0x128] sm:$0xff]
  %v47 = vld [vmem:[%s0 + $0x130] sm:$0xff]
  %v48 = vld [vmem:[%s0 + $0x138] sm:$0xff]
  %v49 = vld [vmem:[%s0 + $0x140] sm:$0xff]
  %v50 = vld [vmem:[%s0 + $0x148] sm:$0xff]
  %v51 = vld [vmem:[%s0 + $0x150] sm:$0xff]
  %v52 = vld [vmem:[%s0 + $0x158] sm:$0xff]
  %v53 = vld [vmem:[%s0 + $0x160] sm:$0xff]
  %v54 = vld [vmem:[%s0 + $0x168] sm:$0xff]
  %v55 = vld [vmem:[%s0 + $0x170] sm:$0xff]
  %v56 = vld [vmem:[%s0 + $0x178] sm:$0xff]
  %v57 = vld [vmem:[%s0 + $0x180] sm:$0xff]
  %v58 = vld [vmem:[%s0 + $0x188] sm:$0xff]
  %v59 = vld [vmem:[%s0 + $0x190] sm:$0xff]
  %v60 = vld [vmem:[%s0 + $0x198] sm:$0xff]
  %v61 = vld [vmem:[%s0 + $0x1a0] sm:$0xff]
  %v62 = vld [vmem:[%s0 + $0x1a8] sm:$0xff]
  %v63 = vld [vmem:[%s0 + $0x1b0] sm:$0xff]
  %v64 = vld [vmem:[%s0 + $0x1b8] sm:$0xff]
  %v65 = vld [vmem:[%s0 + $0x1c0] sm:$0xff]
  %v66 = vld [vmem:[%s0 + $0x1c8] sm:$0xff]
  %v67 = vld [vmem:[%s0 + $0x1d0] sm:$0xff]
  %v68 = vld [vmem:[%s0 + $0x1d8] sm:$0xff]
  %v69 = vld [vmem:[%s0 + $0x1e0] sm:$0xff]
  %v70 = vld [vmem:[%s0 + $0x1e8] sm:$0xff]
  %v71 = vld [vmem:[%s0 + $0x1f0] sm:$0xff]
  %v72 = vld [vmem:[%s0 + $0x1f8] sm:$0xff]
  %v73 = vld [vmem:[%s0 + $0x200] sm:$0xff]
  %v74 = vld [vmem:[%s0 + $0x208] sm:$0xff]
  %v75 = vld [vmem:[%s0 + $0x210] sm:$0xff]
  %v76 = vld [vmem:[%s0 + $0x218] sm:$0xff]
  %v77 = vld [vmem:[%s0 + $0x220] sm:$0xff]
  %v78 = vld [vmem:[%s0 + $0x228] sm:$0xff]
  %v79 = vld [vmem:[%s0 + $0x230] sm:$0xff]
  %v80 = vld [vmem:[%s0 + $0x238] sm:$0xff]
  %vm81 = vcmask 1043456
  %vm82 = vcmask 523268
  %vm83 = vmor %vm82, %vm81
  %v86 = vsel %vm83, %v9, 4286644096
  %v89 = vsel %vm83, %v17, 4286644096
  %v91 = vmax.bf16 %v86, %v89
  %v93 = vsel %vm83, %v25, 4286644096
  %v95 = vmax.bf16 %v91, %v93
  %v97 = vsel %vm83, %v33, 4286644096
  %v99 = vmax.bf16 %v95, %v97
  %v101 = vsel %vm83, %v41, 4286644096
  %v103 = vmax.bf16 %v99, %v101
  %v105 = vsel %vm83, %v49, 4286644096
  %v107 = vmax.bf16 %v103, %v105
  %v109 = vsel %vm83, %v57, 4286644096
  %v111 = vmax.bf16 %v107, %v109
  %v113 = vsel %vm83, %v65, 4286644096
  %v115 = vmax.bf16 %v111, %v113
  %v117 = vsel %vm83, %v73, 4286644096
  %v119 = vmax.bf16 %v115, %v117
  %v121 = vsel %vm83, %v10, 4286644096
  %v124 = vsel %vm83, %v18, 4286644096
  %v126 = vmax.bf16 %v121, %v124
  %v128 = vsel %vm83, %v26, 4286644096
  %v130 = vmax.bf16 %v126, %v128
  %v132 = vsel %vm83, %v34, 4286644096
  %v134 = vmax.bf16 %v130, %v132
  %v136 = vsel %vm83, %v42, 4286644096
  %v138 = vmax.bf16 %v134, %v136
  %v140 = vsel %vm83, %v50, 4286644096
  %v142 = vmax.bf16 %v138, %v140
  %v144 = vsel %vm83, %v58, 4286644096
  %v146 = vmax.bf16 %v142, %v144
  %v148 = vsel %vm83, %v66, 4286644096
  %v150 = vmax.bf16 %v146, %v148
  %v152 = vsel %vm83, %v74, 4286644096
  %v154 = vmax.bf16 %v150, %v152
  %v156 = vsel %vm83, %v11, 4286644096
  %v159 = vsel %vm83, %v19, 4286644096
  %v161 = vmax.bf16 %v156, %v159
  %v163 = vsel %vm83, %v27, 4286644096
  %v165 = vmax.bf16 %v161, %v163
  %v167 = vsel %vm83, %v35, 4286644096
  %v169 = vmax.bf16 %v165, %v167
  %v171 = vsel %vm83, %v43, 4286644096
  %v173 = vmax.bf16 %v169, %v171
  %v175 = vsel %vm83, %v51, 4286644096
  %v177 = vmax.bf16 %v173, %v175
  %v179 = vsel %vm83, %v59, 4286644096
  %v181 = vmax.bf16 %v177, %v179
  %v183 = vsel %vm83, %v67, 4286644096
  %v185 = vmax.bf16 %v181, %v183
  %v187 = vsel %vm83, %v75, 4286644096
  %v189 = vmax.bf16 %v185, %v187
  %v191 = vsel %vm83, %v12, 4286644096
  %v194 = vsel %vm83, %v20, 4286644096
  %v196 = vmax.bf16 %v191, %v194
  %v198 = vsel %vm83, %v28, 4286644096
  %v200 = vmax.bf16 %v196, %v198
  %v202 = vsel %vm83, %v36, 4286644096
  %v204 = vmax.bf16 %v200, %v202
  %v206 = vsel %vm83, %v44, 4286644096
  %v208 = vmax.bf16 %v204, %v206
  %v210 = vsel %vm83, %v52, 4286644096
  %v212 = vmax.bf16 %v208, %v210
  %v214 = vsel %vm83, %v60, 4286644096
  %v216 = vmax.bf16 %v212, %v214
  %v218 = vsel %vm83, %v68, 4286644096
  %v220 = vmax.bf16 %v216, %v218
  %v222 = vsel %vm83, %v76, 4286644096
  %v224 = vmax.bf16 %v220, %v222
  %v226 = vsel %vm83, %v13, 4286644096
  %v229 = vsel %vm83, %v21, 4286644096
  %v231 = vmax.bf16 %v226, %v229
  %v233 = vsel %vm83, %v29, 4286644096
  %v235 = vmax.bf16 %v231, %v233
  %v237 = vsel %vm83, %v37, 4286644096
  %v239 = vmax.bf16 %v235, %v237
  %v241 = vsel %vm83, %v45, 4286644096
  %v243 = vmax.bf16 %v239, %v241
  %v245 = vsel %vm83, %v53, 4286644096
  %v247 = vmax.bf16 %v243, %v245
  %v249 = vsel %vm83, %v61, 4286644096
  %v251 = vmax.bf16 %v247, %v249
  %v253 = vsel %vm83, %v69, 4286644096
  %v255 = vmax.bf16 %v251, %v253
  %v257 = vsel %vm83, %v77, 4286644096
  %v259 = vmax.bf16 %v255, %v257
  %v261 = vsel %vm83, %v14, 4286644096
  %v264 = vsel %vm83, %v22, 4286644096
  %v266 = vmax.bf16 %v261, %v264
  %v268 = vsel %vm83, %v30, 4286644096
  %v270 = vmax.bf16 %v266, %v268
  %v272 = vsel %vm83, %v38, 4286644096
  %v274 = vmax.bf16 %v270, %v272
  %v276 = vsel %vm83, %v46, 4286644096
  %v278 = vmax.bf16 %v274, %v276
  %v280 = vsel %vm83, %v54, 4286644096
  %v282 = vmax.bf16 %v278, %v280
  %v284 = vsel %vm83, %v62, 4286644096
  %v286 = vmax.bf16 %v282, %v284
  %v288 = vsel %vm83, %v70, 4286644096
  %v290 = vmax.bf16 %v286, %v288
  %v292 = vsel %vm83, %v78, 4286644096
  %v294 = vmax.bf16 %v290, %v292
  %v296 = vsel %vm83, %v15, 4286644096
  %v299 = vsel %vm83, %v23, 4286644096
  %v301 = vmax.bf16 %v296, %v299
  %v303 = vsel %vm83, %v31, 4286644096
  %v305 = vmax.bf16 %v301, %v303
  %v307 = vsel %vm83, %v39, 4286644096
  %v309 = vmax.bf16 %v305, %v307
  %v311 = vsel %vm83, %v47, 4286644096
  %v313 = vmax.bf16 %v309, %v311
  %v315 = vsel %vm83, %v55, 4286644096
  %v317 = vmax.bf16 %v313, %v315
  %v319 = vsel %vm83, %v63, 4286644096
  %v321 = vmax.bf16 %v317, %v319
  %v323 = vsel %vm83, %v71, 4286644096
  %v325 = vmax.bf16 %v321, %v323
  %v327 = vsel %vm83, %v79, 4286644096
  %v329 = vmax.bf16 %v325, %v327
  %v331 = vsel %vm83, %v16, 4286644096
  %v334 = vsel %vm83, %v24, 4286644096
  %v336 = vmax.bf16 %v331, %v334
  %v338 = vsel %vm83, %v32, 4286644096
  %v340 = vmax.bf16 %v336, %v338
  %v342 = vsel %vm83, %v40, 4286644096
  %v344 = vmax.bf16 %v340, %v342
  %v346 = vsel %vm83, %v48, 4286644096
  %v348 = vmax.bf16 %v344, %v346
  %v350 = vsel %vm83, %v56, 4286644096
  %v352 = vmax.bf16 %v348, %v350
  %v354 = vsel %vm83, %v64, 4286644096
  %v356 = vmax.bf16 %v352, %v354
  %v358 = vsel %vm83, %v72, 4286644096
  %v360 = vmax.bf16 %v356, %v358
  %v362 = vsel %vm83, %v80, 4286644096
  %v364 = vmax.bf16 %v360, %v362
  %365 = vst.msk [vmem:[%s1] sm:$0xff] %vm83, %v119
  %366 = vst.msk [vmem:[%s1 + $0x8] sm:$0xff] %vm83, %v154
  %367 = vst.msk [vmem:[%s1 + $0x10] sm:$0xff] %vm83, %v189
  %368 = vst.msk [vmem:[%s1 + $0x18] sm:$0xff] %vm83, %v224
  %369 = vst.msk [vmem:[%s1 + $0x20] sm:$0xff] %vm83, %v259
  %370 = vst.msk [vmem:[%s1 + $0x28] sm:$0xff] %vm83, %v294
  %371 = vst.msk [vmem:[%s1 + $0x30] sm:$0xff] %vm83, %v329
  %372 = vst.msk [vmem:[%s1 + $0x38] sm:$0xff] %vm83, %v364
  // Predicated region
  $region6: #{stem_forward.21} parent=0 // pred_check
    _
  $region7: #{stem_forward.21} parent=0 // pred_check_branch
    %374 = sbr.rel (0) target = $region9
  $region8: #{stem_forward.21} parent=0 // pred_region
    _
  $region9: #{stem_forward.21} parent=0 // pred_fallthru
    _
  // Predicated region
  $region10: #{stem_forward.21} parent=0 // pred_check
    _
  $region11: #{stem_forward.21} parent=0 // pred_check_branch
    %376 = sbr.rel (0) target = $region13
  $region12: #{stem_forward.21} parent=0 // pred_region
    _
  $region13: #{stem_forward.21} parent=0 // pred_fallthru
    _

// kernel: stem_forward.23
$region0: #{stem_forward.23}
  #allocation0 [shape = 'u32[]', space=smem, size = 0x4, offset = 0x4, fixed_abs, tag = 'smem constant byte address 0x4 - core index']
  #allocation1 [shape = 'u32[144,128]{1,0:T(1,128)}', space=vmem, size = 0x12000, scoped, tag = 'internal scratch']
  %s0 = inlined_call_operand.vmem [shape: bf16[64,192], index: 0, kind: input, shape index: {}]
  %s1 = inlined_call_operand.vmem [shape: bf16[192,128], index: 1, kind: input, shape index: {}]
  %s2 = inlined_call_operand.vmem [shape: f32[1,128], index: 2, kind: input, shape index: {}]
  %s3 = inlined_call_operand.vmem [shape: bf16[64,128], index: 3, kind: output, shape index: {}]
  %s4 = sld [smem:[#allocation0]]
  $region22: #{stem_forward.23} parent=0
    _
  %s6 = ssub.s32 1, %s4
  %s7 = scalar_select 0, %s6, %s4
  // Predicated region
  $region2: #{stem_forward.23} parent=0 // pred_check
    _
  $region3: #{stem_forward.23} parent=0 // pred_check_branch
    %9 = sbr.rel (0) target = $region5
  $region4: #{stem_forward.23} parent=0 // pred_region
    _
  $region5: #{stem_forward.23} parent=0 // pred_fallthru
    _
  // Predicated region
  $region6: #{stem_forward.23} parent=0 // pred_check
    _
  $region7: #{stem_forward.23} parent=0 // pred_check_branch
    %11 = sbr.rel (0) target = $region9
  $region8: #{stem_forward.23} parent=0 // pred_region
    _
  $region9: #{stem_forward.23} parent=0 // pred_fallthru
    _
  // Predicated region
  $region10: #{stem_forward.23} parent=0 // pred_check
    _
  $region11: #{stem_forward.23} parent=0 // pred_check_branch
    %13 = sbr.rel (0) target = $region13
  $region12: #{stem_forward.23} parent=0 // pred_region
    _
  $region13: #{stem_forward.23} parent=0 // pred_fallthru
    _
  %v15 = vld [vmem:[%s0] sm:$0xff]
  %v16 = vld [vmem:[%s0 + $0x8] sm:$0xff]
  %v17 = vld [vmem:[%s0 + $0x10] sm:$0xff]
  %v18 = vld [vmem:[%s0 + $0x18] sm:$0xff]
  %v19 = vld [vmem:[%s0 + $0x20] sm:$0xff]
  %v20 = vld [vmem:[%s0 + $0x28] sm:$0xff]
  %v21 = vld [vmem:[%s0 + $0x30] sm:$0xff]
  %v22 = vld [vmem:[%s0 + $0x38] sm:$0xff]
  %v23 = vld [vmem:[%s1] sm:$0xf]
  %v24 = vld [vmem:[%s1 + $0x4] sm:$0xf]
  %v25 = vld [vmem:[%s1 + $0x8] sm:$0xf]
  %v26 = vld [vmem:[%s1 + $0xc] sm:$0xf]
  %v27 = vld [vmem:[%s1 + $0x10] sm:$0xf]
  %v28 = vld [vmem:[%s1 + $0x14] sm:$0xf]
  %v29 = vld [vmem:[%s1 + $0x18] sm:$0xf]
  %v30 = vld [vmem:[%s1 + $0x1c] sm:$0xf]
  %v31 = vld [vmem:[%s1 + $0x20] sm:$0xf]
  %v32 = vld [vmem:[%s1 + $0x24] sm:$0xf]
  %v33 = vld [vmem:[%s1 + $0x28] sm:$0xf]
  %v34 = vld [vmem:[%s1 + $0x2c] sm:$0xf]
  %v35 = vld [vmem:[%s1 + $0x30] sm:$0xf]
  %v36 = vld [vmem:[%s1 + $0x34] sm:$0xf]
  %v37 = vld [vmem:[%s1 + $0x38] sm:$0xf]
  %v38 = vld [vmem:[%s1 + $0x3c] sm:$0xf]
  %v39 = vld [vmem:[%s1 + $0x40] sm:$0xf]
  %v40 = vld [vmem:[%s1 + $0x44] sm:$0xf]
  %v41 = vld [vmem:[%s1 + $0x48] sm:$0xf]
  %v42 = vld [vmem:[%s1 + $0x4c] sm:$0xf]
  %v43 = vld [vmem:[%s1 + $0x50] sm:$0xf]
  %v44 = vld [vmem:[%s1 + $0x54] sm:$0xf]
  %v45 = vld [vmem:[%s1 + $0x58] sm:$0xf]
  %v46 = vld [vmem:[%s1 + $0x5c] sm:$0xf]
  %v47 = vld [vmem:[%s2] sm:$0x1]
  %v49 = vlaneseq
  %v50 = vshrl.u32 %v49, 7
  %v51 = vsub.s32 0, %v50
  %v52 = vrot.slane %v47, %v51
  %v62 = vunpack.c.l.b16 %v15
  %v63 = vunpack.c.h.b16 %v15
  %v64 = vunpack.c.l.b16 %v16
  %v65 = vunpack.c.h.b16 %v16
  %v66 = vunpack.c.l.b16 %v17
  %v67 = vunpack.c.h.b16 %v17
  %v68 = vunpack.c.l.b16 %v18
  %v69 = vunpack.c.h.b16 %v18
  %v70 = vunpack.c.l.b16 %v19
  %v71 = vunpack.c.h.b16 %v19
  %v72 = vunpack.c.l.b16 %v20
  %v73 = vunpack.c.h.b16 %v20
  %v74 = vunpack.c.l.b16 %v21
  %v75 = vunpack.c.h.b16 %v21
  %v76 = vunpack.c.l.b16 %v22
  %v77 = vunpack.c.h.b16 %v22
  %v78 = vpack.c.b16 %v64, %v62
  %v79 = vpack.c.b16 %v65, %v63
  %v80 = vpack.c.b16 %v68, %v66
  %v81 = vpack.c.b16 %v69, %v67
  %v82 = vpack.c.b16 %v72, %v70
  %v83 = vpack.c.b16 %v73, %v71
  %v84 = vpack.c.b16 %v76, %v74
  %v85 = vpack.c.b16 %v77, %v75
  %v114 = vunpack.c.l.b16 %v23
  %v115 = vunpack.c.l.b16 %v24
  %v116 = vunpack.c.l.b16 %v25
  %v117 = vunpack.c.l.b16 %v26
  %v118 = vunpack.c.l.b16 %v27
  %v119 = vunpack.c.l.b16 %v28
  %v120 = vunpack.c.l.b16 %v29
  %v121 = vunpack.c.l.b16 %v30
  %v122 = vunpack.c.l.b16 %v31
  %v123 = vunpack.c.l.b16 %v32
  %v124 = vunpack.c.l.b16 %v33
  %v125 = vunpack.c.l.b16 %v34
  %v126 = vunpack.c.l.b16 %v35
  %v127 = vunpack.c.l.b16 %v36
  %v128 = vunpack.c.l.b16 %v37
  %v129 = vunpack.c.l.b16 %v38
  %v130 = vunpack.c.l.b16 %v39
  %v131 = vunpack.c.l.b16 %v40
  %v132 = vunpack.c.l.b16 %v41
  %v133 = vunpack.c.l.b16 %v42
  %v134 = vunpack.c.l.b16 %v43
  %v135 = vunpack.c.l.b16 %v44
  %v136 = vunpack.c.l.b16 %v45
  %v137 = vunpack.c.l.b16 %v46
  %v138 = vpack.c.b16 %v115, %v114
  %v139 = vpack.c.b16 %v117, %v116
  %v140 = vpack.c.b16 %v119, %v118
  %v141 = vpack.c.b16 %v121, %v120
  %v142 = vpack.c.b16 %v123, %v122
  %v143 = vpack.c.b16 %v125, %v124
  %v144 = vpack.c.b16 %v127, %v126
  %v145 = vpack.c.b16 %v129, %v128
  %v146 = vpack.c.b16 %v131, %v130
  %v147 = vpack.c.b16 %v133, %v132
  %v148 = vpack.c.b16 %v135, %v134
  %v149 = vpack.c.b16 %v137, %v136
  %vm162 = vcmask 523264
  %v164 = vsel %vm162, %v79, 0
  %v167 = vsel %vm162, %v81, 0
  %v170 = vsel %vm162, %v83, 0
  %v173 = vsel %vm162, %v85, 0
  %175 = vmatprep.subr.bf16.mxu0 0
  %176 = vmatpush1.bf16.msra.mxu0 %v138
  %177 = vmatprep.subr.bf16.mxu0 0
  %178 = vmatpush1.bf16.msra.mxu0 %v139
  %179 = vmatprep.subr.bf16.mxu0 0
  %180 = vmatpush1.bf16.msra.mxu0 %v140
  %181 = vmatprep.subr.bf16.mxu0 0
  %182 = vmatpush1.bf16.msra.mxu0 %v141
  %183 = vmatprep.subr.bf16.mxu0 0
  %184 = vmatpush1.bf16.msra.mxu0 %v142
  %185 = vmatprep.subr.bf16.mxu0 0
  %186 = vmatpush1.bf16.msra.mxu0 %v143
  %187 = vmatprep.subr.bf16.mxu0 0
  %188 = vmatpush1.bf16.msra.mxu0 %v144
  %189 = vmatprep.subr.bf16.mxu0 0
  %190 = vmatpush1.bf16.msra.mxu0 %v145
  %191 = vmatprep.subr.bf16.mxu0 0
  %192 = vmatpush1.bf16.msra.mxu0 %v146
  %193 = vmatprep.subr.bf16.mxu0 0
  %194 = vmatpush1.bf16.msra.mxu0 %v147
  %195 = vmatprep.subr.bf16.mxu0 0
  %196 = vmatpush1.bf16.msra.mxu0 %v148
  %197 = vmatprep.subr.bf16.mxu0 0
  %198 = vmatpush1.bf16.msra.mxu0 %v149
  %199 = vmatprep.subr.bf16.mxu0 0
  %200 = vmatpush1.bf16.msra.mxu0 0
  %201 = vmatprep.subr.bf16.mxu0 0
  %202 = vmatpush1.bf16.msra.mxu0 0
  %203 = vmatprep.subr.bf16.mxu0 0
  %204 = vmatpush1.bf16.msra.mxu0 0
  %205 = vmatprep.subr.bf16.mxu0 0
  %206 = vmatpush1.bf16.msra.mxu0 0
  %207 = vmatprep.mubr.bf16.mxu0 %v164
  %208 = vmatmul.mubr.bf16.gmra.mrb[0].mxu0 %v78
  %v209 = vpop.f32.mrb[0].mxu0
  %v210 = vadd.f32 %v52, %v209
  %v211 = vpop.f32.mrb[0].mxu0
  %v212 = vpop.f32.mrb[0].mxu0
  %v213 = vadd.f32 %v52, %v212
  %v214 = vpop.f32.mrb[0].mxu0
  %215 = vmatprep.mubr.bf16.mxu0 %v167
  %216 = vmatmul.mubr.bf16.gmra.mrb[0].mxu0 %v80
  %v217 = vpop.f32.mrb[0].mxu0
  %v218 = vadd.f32 %v52, %v217
  %v219 = vpop.f32.mrb[0].mxu0
  %v220 = vpop.f32.mrb[0].mxu0
  %v221 = vadd.f32 %v52, %v220
  %v222 = vpop.f32.mrb[0].mxu0
  %223 = vmatprep.mubr.bf16.mxu0 %v170
  %224 = vmatmul.mubr.bf16.gmra.mrb[0].mxu0 %v82
  %v225 = vpop.f32.mrb[0].mxu0
  %v226 = vadd.f32 %v52, %v225
  %v227 = vpop.f32.mrb[0].mxu0
  %v228 = vpop.f32.mrb[0].mxu0
  %v229 = vadd.f32 %v52, %v228
  %v230 = vpop.f32.mrb[0].mxu0
  %231 = vmatprep.mubr.bf16.mxu0 %v173
  %232 = vmatmul.mubr.bf16.gmra.mrb[0].mxu0 %v84
  %v233 = vpop.f32.mrb[0].mxu0
  %v234 = vadd.f32 %v52, %v233
  %v235 = vpop.f32.mrb[0].mxu0
  %v236 = vpop.f32.mrb[0].mxu0
  %v237 = vadd.f32 %v52, %v236
  %v238 = vpop.f32.mrb[0].mxu0
  %239 = vdwg.mxu0
  %v240 = vmax.f32 %v210, 0.0
  %v241 = vmax.f32 %v213, 0.0
  %v242 = vmax.f32 %v218, 0.0
  %v243 = vmax.f32 %v221, 0.0
  %v244 = vmax.f32 %v226, 0.0
  %v245 = vmax.f32 %v229, 0.0
  %v246 = vmax.f32 %v234, 0.0
  %v247 = vmax.f32 %v237, 0.0
  %v248 = vpack.c.bf16 %v241, %v240
  %v249 = vpack.c.bf16 %v243, %v242
  %v250 = vpack.c.bf16 %v245, %v244
  %v251 = vpack.c.bf16 %v247, %v246
  %v256 = vunpack.c.l.b16 %v248
  %v257 = vunpack.c.h.b16 %v248
  %v258 = vunpack.c.l.b16 %v249
  %v259 = vunpack.c.h.b16 %v249
  %v260 = vunpack.c.l.b16 %v250
  %v261 = vunpack.c.h.b16 %v250
  %v262 = vunpack.c.l.b16 %v251
  %v263 = vunpack.c.h.b16 %v251
  %v264 = vpack.c.b16 %v256, %v256
  %v265 = vpack.c.b16 %v257, %v257
  %v266 = vpack.c.b16 %v258, %v258
  %v267 = vpack.c.b16 %v259, %v259
  %v268 = vpack.c.b16 %v260, %v260
  %v269 = vpack.c.b16 %v261, %v261
  %v270 = vpack.c.b16 %v262, %v262
  %v271 = vpack.c.b16 %v263, %v263
  %280 = vst [vmem:[%s3] sm:$0xf] %v264
  %281 = vst [vmem:[%s3 + $0x4] sm:$0xf] %v265
  %282 = vst [vmem:[%s3 + $0x8] sm:$0xf] %v266
  %283 = vst [vmem:[%s3 + $0xc] sm:$0xf] %v267
  %284 = vst [vmem:[%s3 + $0x10] sm:$0xf] %v268
  %285 = vst [vmem:[%s3 + $0x14] sm:$0xf] %v269
  %286 = vst [vmem:[%s3 + $0x18] sm:$0xf] %v270
  %287 = vst [vmem:[%s3 + $0x1c] sm:$0xf] %v271
  // Predicated region
  $region14: #{stem_forward.23} parent=0 // pred_check
    _
  $region15: #{stem_forward.23} parent=0 // pred_check_branch
    %289 = sbr.rel (0) target = $region17
  $region16: #{stem_forward.23} parent=0 // pred_region
    _
  $region17: #{stem_forward.23} parent=0 // pred_fallthru
    _
  // Predicated region
  $region18: #{stem_forward.23} parent=0 // pred_check
    _
  $region19: #{stem_forward.23} parent=0 // pred_check_branch
    %291 = sbr.rel (0) target = $region21
  $region20: #{stem_forward.23} parent=0 // pred_region
    _
  $region21: #{stem_forward.23} parent=0 // pred_fallthru
    _

// kernel: stem_forward.28
$region0: #{stem_forward.28}
  #allocation0 [shape = 'u32[]', space=smem, size = 0x4, offset = 0x4, fixed_abs, tag = 'smem constant byte address 0x4 - core index']
  #allocation1 [shape = 'u32[144,128]{1,0:T(1,128)}', space=vmem, size = 0x12000, scoped, tag = 'internal scratch']
  %s0 = inlined_call_operand.vmem [shape: bf16[9,64,192], index: 0, kind: input, shape index: {}]
  %s1 = inlined_call_operand.vmem [shape: f32[64,1], index: 1, kind: input, shape index: {}]
  %s2 = inlined_call_operand.vmem [shape: bf16[64,192], index: 2, kind: output, shape index: {}]
  %s3 = sld [smem:[#allocation0]]
  $region18: #{stem_forward.28} parent=0
    _
  %s5 = ssub.s32 1, %s3
  %s6 = scalar_select 0, %s5, %s3
  // Predicated region
  $region2: #{stem_forward.28} parent=0 // pred_check
    _
  $region3: #{stem_forward.28} parent=0 // pred_check_branch
    %8 = sbr.rel (0) target = $region5
  $region4: #{stem_forward.28} parent=0 // pred_region
    _
  $region5: #{stem_forward.28} parent=0 // pred_fallthru
    _
  // Predicated region
  $region6: #{stem_forward.28} parent=0 // pred_check
    _
  $region7: #{stem_forward.28} parent=0 // pred_check_branch
    %10 = sbr.rel (0) target = $region9
  $region8: #{stem_forward.28} parent=0 // pred_region
    _
  $region9: #{stem_forward.28} parent=0 // pred_fallthru
    _
  %v11 = vld [vmem:[%s0] sm:$0xff]
  %v12 = vld [vmem:[%s0 + $0x8] sm:$0xff]
  %v13 = vld [vmem:[%s0 + $0x10] sm:$0xff]
  %v14 = vld [vmem:[%s0 + $0x18] sm:$0xff]
  %v15 = vld [vmem:[%s0 + $0x20] sm:$0xff]
  %v16 = vld [vmem:[%s0 + $0x28] sm:$0xff]
  %v17 = vld [vmem:[%s0 + $0x30] sm:$0xff]
  %v18 = vld [vmem:[%s0 + $0x38] sm:$0xff]
  %v19 = vld [vmem:[%s0 + $0x40] sm:$0xff]
  %v20 = vld [vmem:[%s0 + $0x48] sm:$0xff]
  %v21 = vld [vmem:[%s0 + $0x50] sm:$0xff]
  %v22 = vld [vmem:[%s0 + $0x58] sm:$0xff]
  %v23 = vld [vmem:[%s0 + $0x60] sm:$0xff]
  %v24 = vld [vmem:[%s0 + $0x68] sm:$0xff]
  %v25 = vld [vmem:[%s0 + $0x70] sm:$0xff]
  %v26 = vld [vmem:[%s0 + $0x78] sm:$0xff]
  %v27 = vld [vmem:[%s0 + $0x80] sm:$0xff]
  %v28 = vld [vmem:[%s0 + $0x88] sm:$0xff]
  %v29 = vld [vmem:[%s0 + $0x90] sm:$0xff]
  %v30 = vld [vmem:[%s0 + $0x98] sm:$0xff]
  %v31 = vld [vmem:[%s0 + $0xa0] sm:$0xff]
  %v32 = vld [vmem:[%s0 + $0xa8] sm:$0xff]
  %v33 = vld [vmem:[%s0 + $0xb0] sm:$0xff]
  %v34 = vld [vmem:[%s0 + $0xb8] sm:$0xff]
  %v35 = vld [vmem:[%s0 + $0xc0] sm:$0xff]
  %v36 = vld [vmem:[%s0 + $0xc8] sm:$0xff]
  %v37 = vld [vmem:[%s0 + $0xd0] sm:$0xff]
  %v38 = vld [vmem:[%s0 + $0xd8] sm:$0xff]
  %v39 = vld [vmem:[%s0 + $0xe0] sm:$0xff]
  %v40 = vld [vmem:[%s0 + $0xe8] sm:$0xff]
  %v41 = vld [vmem:[%s0 + $0xf0] sm:$0xff]
  %v42 = vld [vmem:[%s0 + $0xf8] sm:$0xff]
  %v43 = vld [vmem:[%s0 + $0x100] sm:$0xff]
  %v44 = vld [vmem:[%s0 + $0x108] sm:$0xff]
  %v45 = vld [vmem:[%s0 + $0x110] sm:$0xff]
  %v46 = vld [vmem:[%s0 + $0x118] sm:$0xff]
  %v47 = vld [vmem:[%s0 + $0x120] sm:$0xff]
  %v48 = vld [vmem:[%s0 + $0x128] sm:$0xff]
  %v49 = vld [vmem:[%s0 + $0x130] sm:$0xff]
  %v50 = vld [vmem:[%s0 + $0x138] sm:$0xff]
  %v51 = vld [vmem:[%s0 + $0x140] sm:$0xff]
  %v52 = vld [vmem:[%s0 + $0x148] sm:$0xff]
  %v53 = vld [vmem:[%s0 + $0x150] sm:$0xff]
  %v54 = vld [vmem:[%s0 + $0x158] sm:$0xff]
  %v55 = vld [vmem:[%s0 + $0x160] sm:$0xff]
  %v56 = vld [vmem:[%s0 + $0x168] sm:$0xff]
  %v57 = vld [vmem:[%s0 + $0x170] sm:$0xff]
  %v58 = vld [vmem:[%s0 + $0x178] sm:$0xff]
  %v59 = vld [vmem:[%s0 + $0x180] sm:$0xff]
  %v60 = vld [vmem:[%s0 + $0x188] sm:$0xff]
  %v61 = vld [vmem:[%s0 + $0x190] sm:$0xff]
  %v62 = vld [vmem:[%s0 + $0x198] sm:$0xff]
  %v63 = vld [vmem:[%s0 + $0x1a0] sm:$0xff]
  %v64 = vld [vmem:[%s0 + $0x1a8] sm:$0xff]
  %v65 = vld [vmem:[%s0 + $0x1b0] sm:$0xff]
  %v66 = vld [vmem:[%s0 + $0x1b8] sm:$0xff]
  %v67 = vld [vmem:[%s0 + $0x1c0] sm:$0xff]
  %v68 = vld [vmem:[%s0 + $0x1c8] sm:$0xff]
  %v69 = vld [vmem:[%s0 + $0x1d0] sm:$0xff]
  %v70 = vld [vmem:[%s0 + $0x1d8] sm:$0xff]
  %v71 = vld [vmem:[%s0 + $0x1e0] sm:$0xff]
  %v72 = vld [vmem:[%s0 + $0x1e8] sm:$0xff]
  %v73 = vld [vmem:[%s0 + $0x1f0] sm:$0xff]
  %v74 = vld [vmem:[%s0 + $0x1f8] sm:$0xff]
  %v75 = vld [vmem:[%s0 + $0x200] sm:$0xff]
  %v76 = vld [vmem:[%s0 + $0x208] sm:$0xff]
  %v77 = vld [vmem:[%s0 + $0x210] sm:$0xff]
  %v78 = vld [vmem:[%s0 + $0x218] sm:$0xff]
  %v79 = vld [vmem:[%s0 + $0x220] sm:$0xff]
  %v80 = vld [vmem:[%s0 + $0x228] sm:$0xff]
  %v81 = vld [vmem:[%s0 + $0x230] sm:$0xff]
  %v82 = vld [vmem:[%s0 + $0x238] sm:$0xff]
  %v83 = vunpack.c.l.bf16 %v11
  %v84 = vunpack.c.h.bf16 %v11
  %v85 = vunpack.c.l.bf16 %v12
  %v86 = vunpack.c.h.bf16 %v12
  %v87 = vunpack.c.l.bf16 %v13
  %v88 = vunpack.c.h.bf16 %v13
  %v89 = vunpack.c.l.bf16 %v14
  %v90 = vunpack.c.h.bf16 %v14
  %v91 = vunpack.c.l.bf16 %v15
  %v92 = vunpack.c.h.bf16 %v15
  %v93 = vunpack.c.l.bf16 %v16
  %v94 = vunpack.c.h.bf16 %v16
  %v95 = vunpack.c.l.bf16 %v17
  %v96 = vunpack.c.h.bf16 %v17
  %v97 = vunpack.c.l.bf16 %v18
  %v98 = vunpack.c.h.bf16 %v18
  %v99 = vunpack.c.l.bf16 %v19
  %v100 = vunpack.c.h.bf16 %v19
  %v101 = vunpack.c.l.bf16 %v20
  %v102 = vunpack.c.h.bf16 %v20
  %v103 = vunpack.c.l.bf16 %v21
  %v104 = vunpack.c.h.bf16 %v21
  %v105 = vunpack.c.l.bf16 %v22
  %v106 = vunpack.c.h.bf16 %v22
  %v107 = vunpack.c.l.bf16 %v23
  %v108 = vunpack.c.h.bf16 %v23
  %v109 = vunpack.c.l.bf16 %v24
  %v110 = vunpack.c.h.bf16 %v24
  %v111 = vunpack.c.l.bf16 %v25
  %v112 = vunpack.c.h.bf16 %v25
  %v113 = vunpack.c.l.bf16 %v26
  %v114 = vunpack.c.h.bf16 %v26
  %v115 = vunpack.c.l.bf16 %v27
  %v116 = vunpack.c.h.bf16 %v27
  %v117 = vunpack.c.l.bf16 %v28
  %v118 = vunpack.c.h.bf16 %v28
  %v119 = vunpack.c.l.bf16 %v29
  %v120 = vunpack.c.h.bf16 %v29
  %v121 = vunpack.c.l.bf16 %v30
  %v122 = vunpack.c.h.bf16 %v30
  %v123 = vunpack.c.l.bf16 %v31
  %v124 = vunpack.c.h.bf16 %v31
  %v125 = vunpack.c.l.bf16 %v32
  %v126 = vunpack.c.h.bf16 %v32
  %v127 = vunpack.c.l.bf16 %v33
  %v128 = vunpack.c.h.bf16 %v33
  %v129 = vunpack.c.l.bf16 %v34
  %v130 = vunpack.c.h.bf16 %v34
  %v131 = vunpack.c.l.bf16 %v35
  %v132 = vunpack.c.h.bf16 %v35
  %v133 = vunpack.c.l.bf16 %v36
  %v134 = vunpack.c.h.bf16 %v36
  %v135 = vunpack.c.l.bf16 %v37
  %v136 = vunpack.c.h.bf16 %v37
  %v137 = vunpack.c.l.bf16 %v38
  %v138 = vunpack.c.h.bf16 %v38
  %v139 = vunpack.c.l.bf16 %v39
  %v140 = vunpack.c.h.bf16 %v39
  %v141 = vunpack.c.l.bf16 %v40
  %v142 = vunpack.c.h.bf16 %v40
  %v143 = vunpack.c.l.bf16 %v41
  %v144 = vunpack.c.h.bf16 %v41
  %v145 = vunpack.c.l.bf16 %v42
  %v146 = vunpack.c.h.bf16 %v42
  %v147 = vunpack.c.l.bf16 %v43
  %v148 = vunpack.c.h.bf16 %v43
  %v149 = vunpack.c.l.bf16 %v44
  %v150 = vunpack.c.h.bf16 %v44
  %v151 = vunpack.c.l.bf16 %v45
  %v152 = vunpack.c.h.bf16 %v45
  %v153 = vunpack.c.l.bf16 %v46
  %v154 = vunpack.c.h.bf16 %v46
  %v155 = vunpack.c.l.bf16 %v47
  %v156 = vunpack.c.h.bf16 %v47
  %v157 = vunpack.c.l.bf16 %v48
  %v158 = vunpack.c.h.bf16 %v48
  %v159 = vunpack.c.l.bf16 %v49
  %v160 = vunpack.c.h.bf16 %v49
  %v161 = vunpack.c.l.bf16 %v50
  %v162 = vunpack.c.h.bf16 %v50
  %v163 = vunpack.c.l.bf16 %v51
  %v164 = vunpack.c.h.bf16 %v51
  %v165 = vunpack.c.l.bf16 %v52
  %v166 = vunpack.c.h.bf16 %v52
  %v167 = vunpack.c.l.bf16 %v53
  %v168 = vunpack.c.h.bf16 %v53
  %v169 = vunpack.c.l.bf16 %v54
  %v170 = vunpack.c.h.bf16 %v54
  %v171 = vunpack.c.l.bf16 %v55
  %v172 = vunpack.c.h.bf16 %v55
  %v173 = vunpack.c.l.bf16 %v56
  %v174 = vunpack.c.h.bf16 %v56
  %v175 = vunpack.c.l.bf16 %v57
  %v176 = vunpack.c.h.bf16 %v57
  %v177 = vunpack.c.l.bf16 %v58
  %v178 = vunpack.c.h.bf16 %v58
  %v179 = vunpack.c.l.bf16 %v59
  %v180 = vunpack.c.h.bf16 %v59
  %v181 = vunpack.c.l.bf16 %v60
  %v182 = vunpack.c.h.bf16 %v60
  %v183 = vunpack.c.l.bf16 %v61
  %v184 = vunpack.c.h.bf16 %v61
  %v185 = vunpack.c.l.bf16 %v62
  %v186 = vunpack.c.h.bf16 %v62
  %v187 = vunpack.c.l.bf16 %v63
  %v188 = vunpack.c.h.bf16 %v63
  %v189 = vunpack.c.l.bf16 %v64
  %v190 = vunpack.c.h.bf16 %v64
  %v191 = vunpack.c.l.bf16 %v65
  %v192 = vunpack.c.h.bf16 %v65
  %v193 = vunpack.c.l.bf16 %v66
  %v194 = vunpack.c.h.bf16 %v66
  %v195 = vunpack.c.l.bf16 %v67
  %v196 = vunpack.c.h.bf16 %v67
  %v197 = vunpack.c.l.bf16 %v68
  %v198 = vunpack.c.h.bf16 %v68
  %v199 = vunpack.c.l.bf16 %v69
  %v200 = vunpack.c.h.bf16 %v69
  %v201 = vunpack.c.l.bf16 %v70
  %v202 = vunpack.c.h.bf16 %v70
  %v203 = vunpack.c.l.bf16 %v71
  %v204 = vunpack.c.h.bf16 %v71
  %v205 = vunpack.c.l.bf16 %v72
  %v206 = vunpack.c.h.bf16 %v72
  %v207 = vunpack.c.l.bf16 %v73
  %v208 = vunpack.c.h.bf16 %v73
  %v209 = vunpack.c.l.bf16 %v74
  %v210 = vunpack.c.h.bf16 %v74
  %v211 = vunpack.c.l.bf16 %v75
  %v212 = vunpack.c.h.bf16 %v75
  %v213 = vunpack.c.l.bf16 %v76
  %v214 = vunpack.c.h.bf16 %v76
  %v215 = vunpack.c.l.bf16 %v77
  %v216 = vunpack.c.h.bf16 %v77
  %v217 = vunpack.c.l.bf16 %v78
  %v218 = vunpack.c.h.bf16 %v78
  %v219 = vunpack.c.l.bf16 %v79
  %v220 = vunpack.c.h.bf16 %v79
  %v221 = vunpack.c.l.bf16 %v80
  %v222 = vunpack.c.h.bf16 %v80
  %v223 = vunpack.c.l.bf16 %v81
  %v224 = vunpack.c.h.bf16 %v81
  %v225 = vunpack.c.l.bf16 %v82
  %v226 = vunpack.c.h.bf16 %v82
  %v227 = vadd.f32 %v83, %v99
  %v228 = vadd.f32 %v227, %v115
  %v229 = vadd.f32 %v228, %v131
  %v230 = vadd.f32 %v229, %v147
  %v231 = vadd.f32 %v230, %v163
  %v232 = vadd.f32 %v231, %v179
  %v233 = vadd.f32 %v232, %v195
  %v234 = vadd.f32 %v233, %v211
  %vm235 = vcmask 523264
  %v236 = vsel %vm235, %v84, 0.0
  %v237 = vsel %vm235, %v100, 0.0
  %v238 = vadd.f32 %v236, %v237
  %v239 = vsel %vm235, %v116, 0.0
  %v240 = vadd.f32 %v238, %v239
  %v241 = vsel %vm235, %v132, 0.0
  %v242 = vadd.f32 %v240, %v241
  %v243 = vsel %vm235, %v148, 0.0
  %v244 = vadd.f32 %v242, %v243
  %v245 = vsel %vm235, %v164, 0.0
  %v246 = vadd.f32 %v244, %v245
  %v247 = vsel %vm235, %v180, 0.0
  %v248 = vadd.f32 %v246, %v247
  %v249 = vsel %vm235, %v196, 0.0
  %v250 = vadd.f32 %v248, %v249
  %v251 = vsel %vm235, %v212, 0.0
  %v252 = vadd.f32 %v250, %v251
  %v253 = vadd.f32 %v85, %v101
  %v254 = vadd.f32 %v253, %v117
  %v255 = vadd.f32 %v254, %v133
  %v256 = vadd.f32 %v255, %v149
  %v257 = vadd.f32 %v256, %v165
  %v258 = vadd.f32 %v257, %v181
  %v259 = vadd.f32 %v258, %v197
  %v260 = vadd.f32 %v259, %v213
  %v261 = vsel %vm235, %v86, 0.0
  %v262 = vsel %vm235, %v102, 0.0
  %v263 = vadd.f32 %v261, %v262
  %v264 = vsel %vm235, %v118, 0.0
  %v265 = vadd.f32 %v263, %v264
  %v266 = vsel %vm235, %v134, 0.0
  %v267 = vadd.f32 %v265, %v266
  %v268 = vsel %vm235, %v150, 0.0
  %v269 = vadd.f32 %v267, %v268
  %v270 = vsel %vm235, %v166, 0.0
  %v271 = vadd.f32 %v269, %v270
  %v272 = vsel %vm235, %v182, 0.0
  %v273 = vadd.f32 %v271, %v272
  %v274 = vsel %vm235, %v198, 0.0
  %v275 = vadd.f32 %v273, %v274
  %v276 = vsel %vm235, %v214, 0.0
  %v277 = vadd.f32 %v275, %v276
  %v278 = vadd.f32 %v87, %v103
  %v279 = vadd.f32 %v278, %v119
  %v280 = vadd.f32 %v279, %v135
  %v281 = vadd.f32 %v280, %v151
  %v282 = vadd.f32 %v281, %v167
  %v283 = vadd.f32 %v282, %v183
  %v284 = vadd.f32 %v283, %v199
  %v285 = vadd.f32 %v284, %v215
  %v286 = vsel %vm235, %v88, 0.0
  %v287 = vsel %vm235, %v104, 0.0
  %v288 = vadd.f32 %v286, %v287
  %v289 = vsel %vm235, %v120, 0.0
  %v290 = vadd.f32 %v288, %v289
  %v291 = vsel %vm235, %v136, 0.0
  %v292 = vadd.f32 %v290, %v291
  %v293 = vsel %vm235, %v152, 0.0
  %v294 = vadd.f32 %v292, %v293
  %v295 = vsel %vm235, %v168, 0.0
  %v296 = vadd.f32 %v294, %v295
  %v297 = vsel %vm235, %v184, 0.0
  %v298 = vadd.f32 %v296, %v297
  %v299 = vsel %vm235, %v200, 0.0
  %v300 = vadd.f32 %v298, %v299
  %v301 = vsel %vm235, %v216, 0.0
  %v302 = vadd.f32 %v300, %v301
  %v303 = vadd.f32 %v89, %v105
  %v304 = vadd.f32 %v303, %v121
  %v305 = vadd.f32 %v304, %v137
  %v306 = vadd.f32 %v305, %v153
  %v307 = vadd.f32 %v306, %v169
  %v308 = vadd.f32 %v307, %v185
  %v309 = vadd.f32 %v308, %v201
  %v310 = vadd.f32 %v309, %v217
  %v311 = vsel %vm235, %v90, 0.0
  %v312 = vsel %vm235, %v106, 0.0
  %v313 = vadd.f32 %v311, %v312
  %v314 = vsel %vm235, %v122, 0.0
  %v315 = vadd.f32 %v313, %v314
  %v316 = vsel %vm235, %v138, 0.0
  %v317 = vadd.f32 %v315, %v316
  %v318 = vsel %vm235, %v154, 0.0
  %v319 = vadd.f32 %v317, %v318
  %v320 = vsel %vm235, %v170, 0.0
  %v321 = vadd.f32 %v319, %v320
  %v322 = vsel %vm235, %v186, 0.0
  %v323 = vadd.f32 %v321, %v322
  %v324 = vsel %vm235, %v202, 0.0
  %v325 = vadd.f32 %v323, %v324
  %v326 = vsel %vm235, %v218, 0.0
  %v327 = vadd.f32 %v325, %v326
  %v328 = vadd.f32 %v91, %v107
  %v329 = vadd.f32 %v328, %v123
  %v330 = vadd.f32 %v329, %v139
  %v331 = vadd.f32 %v330, %v155
  %v332 = vadd.f32 %v331, %v171
  %v333 = vadd.f32 %v332, %v187
  %v334 = vadd.f32 %v333, %v203
  %v335 = vadd.f32 %v334, %v219
  %v336 = vsel %vm235, %v92, 0.0
  %v337 = vsel %vm235, %v108, 0.0
  %v338 = vadd.f32 %v336, %v337
  %v339 = vsel %vm235, %v124, 0.0
  %v340 = vadd.f32 %v338, %v339
  %v341 = vsel %vm235, %v140, 0.0
  %v342 = vadd.f32 %v340, %v341
  %v343 = vsel %vm235, %v156, 0.0
  %v344 = vadd.f32 %v342, %v343
  %v345 = vsel %vm235, %v172, 0.0
  %v346 = vadd.f32 %v344, %v345
  %v347 = vsel %vm235, %v188, 0.0
  %v348 = vadd.f32 %v346, %v347
  %v349 = vsel %vm235, %v204, 0.0
  %v350 = vadd.f32 %v348, %v349
  %v351 = vsel %vm235, %v220, 0.0
  %v352 = vadd.f32 %v350, %v351
  %v353 = vadd.f32 %v93, %v109
  %v354 = vadd.f32 %v353, %v125
  %v355 = vadd.f32 %v354, %v141
  %v356 = vadd.f32 %v355, %v157
  %v357 = vadd.f32 %v356, %v173
  %v358 = vadd.f32 %v357, %v189
  %v359 = vadd.f32 %v358, %v205
  %v360 = vadd.f32 %v359, %v221
  %v361 = vsel %vm235, %v94, 0.0
  %v362 = vsel %vm235, %v110, 0.0
  %v363 = vadd.f32 %v361, %v362
  %v364 = vsel %vm235, %v126, 0.0
  %v365 = vadd.f32 %v363, %v364
  %v366 = vsel %vm235, %v142, 0.0
  %v367 = vadd.f32 %v365, %v366
  %v368 = vsel %vm235, %v158, 0.0
  %v369 = vadd.f32 %v367, %v368
  %v370 = vsel %vm235, %v174, 0.0
  %v371 = vadd.f32 %v369, %v370
  %v372 = vsel %vm235, %v190, 0.0
  %v373 = vadd.f32 %v371, %v372
  %v374 = vsel %vm235, %v206, 0.0
  %v375 = vadd.f32 %v373, %v374
  %v376 = vsel %vm235, %v222, 0.0
  %v377 = vadd.f32 %v375, %v376
  %v378 = vadd.f32 %v95, %v111
  %v379 = vadd.f32 %v378, %v127
  %v380 = vadd.f32 %v379, %v143
  %v381 = vadd.f32 %v380, %v159
  %v382 = vadd.f32 %v381, %v175
  %v383 = vadd.f32 %v382, %v191
  %v384 = vadd.f32 %v383, %v207
  %v385 = vadd.f32 %v384, %v223
  %v386 = vsel %vm235, %v96, 0.0
  %v387 = vsel %vm235, %v112, 0.0
  %v388 = vadd.f32 %v386, %v387
  %v389 = vsel %vm235, %v128, 0.0
  %v390 = vadd.f32 %v388, %v389
  %v391 = vsel %vm235, %v144, 0.0
  %v392 = vadd.f32 %v390, %v391
  %v393 = vsel %vm235, %v160, 0.0
  %v394 = vadd.f32 %v392, %v393
  %v395 = vsel %vm235, %v176, 0.0
  %v396 = vadd.f32 %v394, %v395
  %v397 = vsel %vm235, %v192, 0.0
  %v398 = vadd.f32 %v396, %v397
  %v399 = vsel %vm235, %v208, 0.0
  %v400 = vadd.f32 %v398, %v399
  %v401 = vsel %vm235, %v224, 0.0
  %v402 = vadd.f32 %v400, %v401
  %v403 = vadd.f32 %v97, %v113
  %v404 = vadd.f32 %v403, %v129
  %v405 = vadd.f32 %v404, %v145
  %v406 = vadd.f32 %v405, %v161
  %v407 = vadd.f32 %v406, %v177
  %v408 = vadd.f32 %v407, %v193
  %v409 = vadd.f32 %v408, %v209
  %v410 = vadd.f32 %v409, %v225
  %v411 = vsel %vm235, %v98, 0.0
  %v412 = vsel %vm235, %v114, 0.0
  %v413 = vadd.f32 %v411, %v412
  %v414 = vsel %vm235, %v130, 0.0
  %v415 = vadd.f32 %v413, %v414
  %v416 = vsel %vm235, %v146, 0.0
  %v417 = vadd.f32 %v415, %v416
  %v418 = vsel %vm235, %v162, 0.0
  %v419 = vadd.f32 %v417, %v418
  %v420 = vsel %vm235, %v178, 0.0
  %v421 = vadd.f32 %v419, %v420
  %v422 = vsel %vm235, %v194, 0.0
  %v423 = vadd.f32 %v421, %v422
  %v424 = vsel %vm235, %v210, 0.0
  %v425 = vadd.f32 %v423, %v424
  %v426 = vsel %vm235, %v226, 0.0
  %v427 = vadd.f32 %v425, %v426
  %v428 = vld [vmem:[%s1] sm:$0xff]
  %v429 = vld [vmem:[%s1 + $0x8] sm:$0xff]
  %v430 = vld [vmem:[%s1 + $0x10] sm:$0xff]
  %v431 = vld [vmem:[%s1 + $0x18] sm:$0xff]
  %v432 = vld [vmem:[%s1 + $0x20] sm:$0xff]
  %v433 = vld [vmem:[%s1 + $0x28] sm:$0xff]
  %v434 = vld [vmem:[%s1 + $0x30] sm:$0xff]
  %v435 = vld [vmem:[%s1 + $0x38] sm:$0xff]
  %437 = vset.pattern.permute.xlu0 0
  %438 = vperm.xlu0 %437, %v428
  %v439 = vpop.permute.xlu0 %438
  %442 = vset.pattern.permute.xlu0 0
  %443 = vperm.xlu0 %442, %v429
  %v444 = vpop.permute.xlu0 %443
  %447 = vset.pattern.permute.xlu0 0
  %448 = vperm.xlu0 %447, %v430
  %v449 = vpop.permute.xlu0 %448
  %452 = vset.pattern.permute.xlu0 0
  %453 = vperm.xlu0 %452, %v431
  %v454 = vpop.permute.xlu0 %453
  %457 = vset.pattern.permute.xlu0 0
  %458 = vperm.xlu0 %457, %v432
  %v459 = vpop.permute.xlu0 %458
  %462 = vset.pattern.permute.xlu0 0
  %463 = vperm.xlu0 %462, %v433
  %v464 = vpop.permute.xlu0 %463
  %467 = vset.pattern.permute.xlu0 0
  %468 = vperm.xlu0 %467, %v434
  %v469 = vpop.permute.xlu0 %468
  %472 = vset.pattern.permute.xlu0 0
  %473 = vperm.xlu0 %472, %v435
  %v474 = vpop.permute.xlu0 %473
  %v476 = vmul.f32 %v234, %v439
  %v477 = vmul.f32 %v252, %v439
  %v478 = vmul.f32 %v260, %v444
  %v479 = vmul.f32 %v277, %v444
  %v480 = vmul.f32 %v285, %v449
  %v481 = vmul.f32 %v302, %v449
  %v482 = vmul.f32 %v310, %v454
  %v483 = vmul.f32 %v327, %v454
  %v484 = vmul.f32 %v335, %v459
  %v485 = vmul.f32 %v352, %v459
  %v486 = vmul.f32 %v360, %v464
  %v487 = vmul.f32 %v377, %v464
  %v488 = vmul.f32 %v385, %v469
  %v489 = vmul.f32 %v402, %v469
  %v490 = vmul.f32 %v410, %v474
  %v491 = vmul.f32 %v427, %v474
  %v492 = vpack.c.bf16 %v478, %v476
  %v493 = vpack.c.bf16 %v479, %v477
  %v494 = vpack.c.bf16 %v482, %v480
  %v495 = vpack.c.bf16 %v483, %v481
  %v496 = vpack.c.bf16 %v486, %v484
  %v497 = vpack.c.bf16 %v487, %v485
  %v498 = vpack.c.bf16 %v490, %v488
  %v499 = vpack.c.bf16 %v491, %v489
  %v508 = vunpack.c.l.b16 %v492
  %v509 = vunpack.c.l.b16 %v493
  %v510 = vunpack.c.h.b16 %v492
  %v511 = vunpack.c.h.b16 %v493
  %v512 = vunpack.c.l.b16 %v494
  %v513 = vunpack.c.l.b16 %v495
  %v514 = vunpack.c.h.b16 %v494
  %v515 = vunpack.c.h.b16 %v495
  %v516 = vunpack.c.l.b16 %v496
  %v517 = vunpack.c.l.b16 %v497
  %v518 = vunpack.c.h.b16 %v496
  %v519 = vunpack.c.h.b16 %v497
  %v520 = vunpack.c.l.b16 %v498
  %v521 = vunpack.c.l.b16 %v499
  %v522 = vunpack.c.h.b16 %v498
  %v523 = vunpack.c.h.b16 %v499
  %v524 = vpack.c.b16 %v509, %v508
  %v525 = vpack.c.b16 %v511, %v510
  %v526 = vpack.c.b16 %v513, %v512
  %v527 = vpack.c.b16 %v515, %v514
  %v528 = vpack.c.b16 %v517, %v516
  %v529 = vpack.c.b16 %v519, %v518
  %v530 = vpack.c.b16 %v521, %v520
  %v531 = vpack.c.b16 %v523, %v522
  %vm540 = vcmask 1043456
  %vm541 = vcmask 523268
  %vm542 = vmor %vm541, %vm540
  %543 = vst.msk [vmem:[%s2] sm:$0xff] %vm542, %v524
  %544 = vst.msk [vmem:[%s2 + $0x8] sm:$0xff] %vm542, %v525
  %545 = vst.msk [vmem:[%s2 + $0x10] sm:$0xff] %vm542, %v526
  %546 = vst.msk [vmem:[%s2 + $0x18] sm:$0xff] %vm542, %v527
  %547 = vst.msk [vmem:[%s2 + $0x20] sm:$0xff] %vm542, %v528
  %548 = vst.msk [vmem:[%s2 + $0x28] sm:$0xff] %vm542, %v529
  %549 = vst.msk [vmem:[%s2 + $0x30] sm:$0xff] %vm542, %v530
  %550 = vst.msk [vmem:[%s2 + $0x38] sm:$0xff] %vm542, %v531
  // Predicated region
  $region10: #{stem_forward.28} parent=0 // pred_check
    _
  $region11: #{stem_forward.28} parent=0 // pred_check_branch
    %552 = sbr.rel (0) target = $region13
  $region12: #{stem_forward.28} parent=0 // pred_region
    _
  $region13: #{stem_forward.28} parent=0 // pred_fallthru
    _
  // Predicated region
  $region14: #{stem_forward.28} parent=0 // pred_check
    _
  $region15: #{stem_forward.28} parent=0 // pred_check_branch
    %554 = sbr.rel (0) target = $region17
  $region16: #{stem_forward.28} parent=0 // pred_region
    _
  $region17: #{stem_forward.28} parent=0 // pred_fallthru
    _

// kernel: stem_forward.24
$region0: #{stem_forward.24}
  #allocation0 [shape = 'u32[]', space=smem, size = 0x4, offset = 0x4, fixed_abs, tag = 'smem constant byte address 0x4 - core index']
  #allocation1 [shape = 'u32[144,128]{1,0:T(1,128)}', space=vmem, size = 0x12000, scoped, tag = 'internal scratch']
  %s0 = inlined_call_operand.vmem [shape: bf16[64,1200], index: 0, kind: input, shape index: {}]
  %s1 = inlined_call_operand.vmem [shape: bf16[1200,128], index: 1, kind: input, shape index: {}]
  %s2 = inlined_call_operand.vmem [shape: f32[1,128], index: 2, kind: input, shape index: {}]
  %s3 = inlined_call_operand.vmem [shape: bf16[64,128], index: 3, kind: output, shape index: {}]
  %s4 = sld [smem:[#allocation0]]
  $region22: #{stem_forward.24} parent=0
    _
  %s6 = ssub.s32 1, %s4
  %s7 = scalar_select 0, %s6, %s4
  // Predicated region
  $region2: #{stem_forward.24} parent=0 // pred_check
    _
  $region3: #{stem_forward.24} parent=0 // pred_check_branch
    %9 = sbr.rel (0) target = $region5
  $region4: #{stem_forward.24} parent=0 // pred_region
    _
  $region5: #{stem_forward.24} parent=0 // pred_fallthru
    _
  // Predicated region
  $region6: #{stem_forward.24} parent=0 // pred_check
    _
  $region7: #{stem_forward.24} parent=0 // pred_check_branch
    %11 = sbr.rel (0) target = $region9
  $region8: #{stem_forward.24} parent=0 // pred_region
    _
  $region9: #{stem_forward.24} parent=0 // pred_fallthru
    _
  // Predicated region
  $region10: #{stem_forward.24} parent=0 // pred_check
    _
  $region11: #{stem_forward.24} parent=0 // pred_check_branch
    %13 = sbr.rel (0) target = $region13
  $region12: #{stem_forward.24} parent=0 // pred_region
    _
  $region13: #{stem_forward.24} parent=0 // pred_fallthru
    _
  %v15 = vld [vmem:[%s0] sm:$0xff]
  %v16 = vld [vmem:[%s0 + $0x8] sm:$0xff]
  %v17 = vld [vmem:[%s0 + $0x10] sm:$0xff]
  %v18 = vld [vmem:[%s0 + $0x18] sm:$0xff]
  %v19 = vld [vmem:[%s0 + $0x20] sm:$0xff]
  %v20 = vld [vmem:[%s0 + $0x28] sm:$0xff]
  %v21 = vld [vmem:[%s0 + $0x30] sm:$0xff]
  %v22 = vld [vmem:[%s0 + $0x38] sm:$0xff]
  %v23 = vld [vmem:[%s0 + $0x40] sm:$0xff]
  %v24 = vld [vmem:[%s0 + $0x48] sm:$0xff]
  %v25 = vld [vmem:[%s0 + $0x50] sm:$0xff]
  %v26 = vld [vmem:[%s0 + $0x58] sm:$0xff]
  %v27 = vld [vmem:[%s0 + $0x60] sm:$0xff]
  %v28 = vld [vmem:[%s0 + $0x68] sm:$0xff]
  %v29 = vld [vmem:[%s0 + $0x70] sm:$0xff]
  %v30 = vld [vmem:[%s0 + $0x78] sm:$0xff]
  %v31 = vld [vmem:[%s0 + $0x80] sm:$0xff]
  %v32 = vld [vmem:[%s0 + $0x88] sm:$0xff]
  %v33 = vld [vmem:[%s0 + $0x90] sm:$0xff]
  %v34 = vld [vmem:[%s0 + $0x98] sm:$0xff]
  %v35 = vld [vmem:[%s0 + $0xa0] sm:$0xff]
  %v36 = vld [vmem:[%s0 + $0xa8] sm:$0xff]
  %v37 = vld [vmem:[%s0 + $0xb0] sm:$0xff]
  %v38 = vld [vmem:[%s0 + $0xb8] sm:$0xff]
  %v39 = vld [vmem:[%s0 + $0xc0] sm:$0xff]
  %v40 = vld [vmem:[%s0 + $0xc8] sm:$0xff]
  %v41 = vld [vmem:[%s0 + $0xd0] sm:$0xff]
  %v42 = vld [vmem:[%s0 + $0xd8] sm:$0xff]
  %v43 = vld [vmem:[%s0 + $0xe0] sm:$0xff]
  %v44 = vld [vmem:[%s0 + $0xe8] sm:$0xff]
  %v45 = vld [vmem:[%s0 + $0xf0] sm:$0xff]
  %v46 = vld [vmem:[%s0 + $0xf8] sm:$0xff]
  %v47 = vld [vmem:[%s0 + $0x100] sm:$0xff]
  %v48 = vld [vmem:[%s0 + $0x108] sm:$0xff]
  %v49 = vld [vmem:[%s0 + $0x110] sm:$0xff]
  %v50 = vld [vmem:[%s0 + $0x118] sm:$0xff]
  %v51 = vld [vmem:[%s0 + $0x120] sm:$0xff]
  %v52 = vld [vmem:[%s0 + $0x128] sm:$0xff]
  %v53 = vld [vmem:[%s0 + $0x130] sm:$0xff]
  %v54 = vld [vmem:[%s0 + $0x138] sm:$0xff]
  %v55 = vld [vmem:[%s1] sm:$0xf]
  %v56 = vld [vmem:[%s1 + $0x4] sm:$0xf]
  %v57 = vld [vmem:[%s1 + $0x8] sm:$0xf]
  %v58 = vld [vmem:[%s1 + $0xc] sm:$0xf]
  %v59 = vld [vmem:[%s1 + $0x10] sm:$0xf]
  %v60 = vld [vmem:[%s1 + $0x14] sm:$0xf]
  %v61 = vld [vmem:[%s1 + $0x18] sm:$0xf]
  %v62 = vld [vmem:[%s1 + $0x1c] sm:$0xf]
  %v63 = vld [vmem:[%s1 + $0x20] sm:$0xf]
  %v64 = vld [vmem:[%s1 + $0x24] sm:$0xf]
  %v65 = vld [vmem:[%s1 + $0x28] sm:$0xf]
  %v66 = vld [vmem:[%s1 + $0x2c] sm:$0xf]
  %v67 = vld [vmem:[%s1 + $0x30] sm:$0xf]
  %v68 = vld [vmem:[%s1 + $0x34] sm:$0xf]
  %v69 = vld [vmem:[%s1 + $0x38] sm:$0xf]
  %v70 = vld [vmem:[%s1 + $0x3c] sm:$0xf]
  %v71 = vld [vmem:[%s1 + $0x40] sm:$0xf]
  %v72 = vld [vmem:[%s1 + $0x44] sm:$0xf]
  %v73 = vld [vmem:[%s1 + $0x48] sm:$0xf]
  %v74 = vld [vmem:[%s1 + $0x4c] sm:$0xf]
  %v75 = vld [vmem:[%s1 + $0x50] sm:$0xf]
  %v76 = vld [vmem:[%s1 + $0x54] sm:$0xf]
  %v77 = vld [vmem:[%s1 + $0x58] sm:$0xf]
  %v78 = vld [vmem:[%s1 + $0x5c] sm:$0xf]
  %v79 = vld [vmem:[%s1 + $0x60] sm:$0xf]
  %v80 = vld [vmem:[%s1 + $0x64] sm:$0xf]
  %v81 = vld [vmem:[%s1 + $0x68] sm:$0xf]
  %v82 = vld [vmem:[%s1 + $0x6c] sm:$0xf]
  %v83 = vld [vmem:[%s1 + $0x70] sm:$0xf]
  %v84 = vld [vmem:[%s1 + $0x74] sm:$0xf]
  %v85 = vld [vmem:[%s1 + $0x78] sm:$0xf]
  %v86 = vld [vmem:[%s1 + $0x7c] sm:$0xf]
  %v87 = vld [vmem:[%s1 + $0x80] sm:$0xf]
  %v88 = vld [vmem:[%s1 + $0x84] sm:$0xf]
  %v89 = vld [vmem:[%s1 + $0x88] sm:$0xf]
  %v90 = vld [vmem:[%s1 + $0x8c] sm:$0xf]
  %v91 = vld [vmem:[%s1 + $0x90] sm:$0xf]
  %v92 = vld [vmem:[%s1 + $0x94] sm:$0xf]
  %v93 = vld [vmem:[%s1 + $0x98] sm:$0xf]
  %v94 = vld [vmem:[%s1 + $0x9c] sm:$0xf]
  %v95 = vld [vmem:[%s1 + $0xa0] sm:$0xf]
  %v96 = vld [vmem:[%s1 + $0xa4] sm:$0xf]
  %v97 = vld [vmem:[%s1 + $0xa8] sm:$0xf]
  %v98 = vld [vmem:[%s1 + $0xac] sm:$0xf]
  %v99 = vld [vmem:[%s1 + $0xb0] sm:$0xf]
  %v100 = vld [vmem:[%s1 + $0xb4] sm:$0xf]
  %v101 = vld [vmem:[%s1 + $0xb8] sm:$0xf]
  %v102 = vld [vmem:[%s1 + $0xbc] sm:$0xf]
  %v103 = vld [vmem:[%s1 + $0xc0] sm:$0xf]
  %v104 = vld [vmem:[%s1 + $0xc4] sm:$0xf]
  %v105 = vld [vmem:[%s1 + $0xc8] sm:$0xf]
  %v106 = vld [vmem:[%s1 + $0xcc] sm:$0xf]
  %v107 = vld [vmem:[%s1 + $0xd0] sm:$0xf]
  %v108 = vld [vmem:[%s1 + $0xd4] sm:$0xf]
  %v109 = vld [vmem:[%s1 + $0xd8] sm:$0xf]
  %v110 = vld [vmem:[%s1 + $0xdc] sm:$0xf]
  %v111 = vld [vmem:[%s1 + $0xe0] sm:$0xf]
  %v112 = vld [vmem:[%s1 + $0xe4] sm:$0xf]
  %v113 = vld [vmem:[%s1 + $0xe8] sm:$0xf]
  %v114 = vld [vmem:[%s1 + $0xec] sm:$0xf]
  %v115 = vld [vmem:[%s1 + $0xf0] sm:$0xf]
  %v116 = vld [vmem:[%s1 + $0xf4] sm:$0xf]
  %v117 = vld [vmem:[%s1 + $0xf8] sm:$0xf]
  %v118 = vld [vmem:[%s1 + $0xfc] sm:$0xf]
  %v119 = vld [vmem:[%s1 + $0x100] sm:$0xf]
  %v120 = vld [vmem:[%s1 + $0x104] sm:$0xf]
  %v121 = vld [vmem:[%s1 + $0x108] sm:$0xf]
  %v122 = vld [vmem:[%s1 + $0x10c] sm:$0xf]
  %v123 = vld [vmem:[%s1 + $0x110] sm:$0xf]
  %v124 = vld [vmem:[%s1 + $0x114] sm:$0xf]
  %v125 = vld [vmem:[%s1 + $0x118] sm:$0xf]
  %v126 = vld [vmem:[%s1 + $0x11c] sm:$0xf]
  %v127 = vld [vmem:[%s1 + $0x120] sm:$0xf]
  %v128 = vld [vmem:[%s1 + $0x124] sm:$0xf]
  %v129 = vld [vmem:[%s1 + $0x128] sm:$0xf]
  %v130 = vld [vmem:[%s1 + $0x12c] sm:$0xf]
  %v131 = vld [vmem:[%s1 + $0x130] sm:$0xf]
  %v132 = vld [vmem:[%s1 + $0x134] sm:$0xf]
  %v133 = vld [vmem:[%s1 + $0x138] sm:$0xf]
  %v134 = vld [vmem:[%s1 + $0x13c] sm:$0xf]
  %v135 = vld [vmem:[%s1 + $0x140] sm:$0xf]
  %v136 = vld [vmem:[%s1 + $0x144] sm:$0xf]
  %v137 = vld [vmem:[%s1 + $0x148] sm:$0xf]
  %v138 = vld [vmem:[%s1 + $0x14c] sm:$0xf]
  %v139 = vld [vmem:[%s1 + $0x150] sm:$0xf]
  %v140 = vld [vmem:[%s1 + $0x154] sm:$0xf]
  %v141 = vld [vmem:[%s1 + $0x158] sm:$0xf]
  %v142 = vld [vmem:[%s1 + $0x15c] sm:$0xf]
  %v143 = vld [vmem:[%s1 + $0x160] sm:$0xf]
  %v144 = vld [vmem:[%s1 + $0x164] sm:$0xf]
  %v145 = vld [vmem:[%s1 + $0x168] sm:$0xf]
  %v146 = vld [vmem:[%s1 + $0x16c] sm:$0xf]
  %v147 = vld [vmem:[%s1 + $0x170] sm:$0xf]
  %v148 = vld [vmem:[%s1 + $0x174] sm:$0xf]
  %v149 = vld [vmem:[%s1 + $0x178] sm:$0xf]
  %v150 = vld [vmem:[%s1 + $0x17c] sm:$0xf]
  %v151 = vld [vmem:[%s1 + $0x180] sm:$0xf]
  %v152 = vld [vmem:[%s1 + $0x184] sm:$0xf]
  %v153 = vld [vmem:[%s1 + $0x188] sm:$0xf]
  %v154 = vld [vmem:[%s1 + $0x18c] sm:$0xf]
  %v155 = vld [vmem:[%s1 + $0x190] sm:$0xf]
  %v156 = vld [vmem:[%s1 + $0x194] sm:$0xf]
  %v157 = vld [vmem:[%s1 + $0x198] sm:$0xf]
  %v158 = vld [vmem:[%s1 + $0x19c] sm:$0xf]
  %v159 = vld [vmem:[%s1 + $0x1a0] sm:$0xf]
  %v160 = vld [vmem:[%s1 + $0x1a4] sm:$0xf]
  %v161 = vld [vmem:[%s1 + $0x1a8] sm:$0xf]
  %v162 = vld [vmem:[%s1 + $0x1ac] sm:$0xf]
  %v163 = vld [vmem:[%s1 + $0x1b0] sm:$0xf]
  %v164 = vld [vmem:[%s1 + $0x1b4] sm:$0xf]
  %v165 = vld [vmem:[%s1 + $0x1b8] sm:$0xf]
  %v166 = vld [vmem:[%s1 + $0x1bc] sm:$0xf]
  %v167 = vld [vmem:[%s1 + $0x1c0] sm:$0xf]
  %v168 = vld [vmem:[%s1 + $0x1c4] sm:$0xf]
  %v169 = vld [vmem:[%s1 + $0x1c8] sm:$0xf]
  %v170 = vld [vmem:[%s1 + $0x1cc] sm:$0xf]
  %v171 = vld [vmem:[%s1 + $0x1d0] sm:$0xf]
  %v172 = vld [vmem:[%s1 + $0x1d4] sm:$0xf]
  %v173 = vld [vmem:[%s1 + $0x1d8] sm:$0xf]
  %v174 = vld [vmem:[%s1 + $0x1dc] sm:$0xf]
  %v175 = vld [vmem:[%s1 + $0x1e0] sm:$0xf]
  %v176 = vld [vmem:[%s1 + $0x1e4] sm:$0xf]
  %v177 = vld [vmem:[%s1 + $0x1e8] sm:$0xf]
  %v178 = vld [vmem:[%s1 + $0x1ec] sm:$0xf]
  %v179 = vld [vmem:[%s1 + $0x1f0] sm:$0xf]
  %v180 = vld [vmem:[%s1 + $0x1f4] sm:$0xf]
  %v181 = vld [vmem:[%s1 + $0x1f8] sm:$0xf]
  %v182 = vld [vmem:[%s1 + $0x1fc] sm:$0xf]
  %v183 = vld [vmem:[%s1 + $0x200] sm:$0xf]
  %v184 = vld [vmem:[%s1 + $0x204] sm:$0xf]
  %v185 = vld [vmem:[%s1 + $0x208] sm:$0xf]
  %v186 = vld [vmem:[%s1 + $0x20c] sm:$0xf]
  %v187 = vld [vmem:[%s1 + $0x210] sm:$0xf]
  %v188 = vld [vmem:[%s1 + $0x214] sm:$0xf]
  %v189 = vld [vmem:[%s1 + $0x218] sm:$0xf]
  %v190 = vld [vmem:[%s1 + $0x21c] sm:$0xf]
  %v191 = vld [vmem:[%s1 + $0x220] sm:$0xf]
  %v192 = vld [vmem:[%s1 + $0x224] sm:$0xf]
  %v193 = vld [vmem:[%s1 + $0x228] sm:$0xf]
  %v194 = vld [vmem:[%s1 + $0x22c] sm:$0xf]
  %v195 = vld [vmem:[%s1 + $0x230] sm:$0xf]
  %v196 = vld [vmem:[%s1 + $0x234] sm:$0xf]
  %v197 = vld [vmem:[%s1 + $0x238] sm:$0xf]
  %v198 = vld [vmem:[%s1 + $0x23c] sm:$0xf]
  %v199 = vld [vmem:[%s1 + $0x240] sm:$0xf]
  %v200 = vld [vmem:[%s1 + $0x244] sm:$0xf]
  %v201 = vld [vmem:[%s1 + $0x248] sm:$0xf]
  %v202 = vld [vmem:[%s1 + $0x24c] sm:$0xf]
  %v203 = vld [vmem:[%s1 + $0x250] sm:$0xf]
  %v204 = vld [vmem:[%s1 + $0x254] sm:$0xf]
  %v205 = vld [vmem:[%s2] sm:$0x1]
  %v207 = vlaneseq
  %v208 = vshrl.u32 %v207, 7
  %v209 = vsub.s32 0, %v208
  %v210 = vrot.slane %v205, %v209
  %v252 = vunpack.c.l.b16 %v15
  %v253 = vunpack.c.h.b16 %v15
  %v254 = vunpack.c.l.b16 %v16
  %v255 = vunpack.c.h.b16 %v16
  %v256 = vunpack.c.l.b16 %v17
  %v257 = vunpack.c.h.b16 %v17
  %v258 = vunpack.c.l.b16 %v18
  %v259 = vunpack.c.h.b16 %v18
  %v260 = vunpack.c.l.b16 %v19
  %v261 = vunpack.c.h.b16 %v19
  %v262 = vunpack.c.l.b16 %v20
  %v263 = vunpack.c.h.b16 %v20
  %v264 = vunpack.c.l.b16 %v21
  %v265 = vunpack.c.h.b16 %v21
  %v266 = vunpack.c.l.b16 %v22
  %v267 = vunpack.c.h.b16 %v22
  %v268 = vunpack.c.l.b16 %v23
  %v269 = vunpack.c.h.b16 %v23
  %v270 = vunpack.c.l.b16 %v24
  %v271 = vunpack.c.h.b16 %v24
  %v272 = vunpack.c.l.b16 %v25
  %v273 = vunpack.c.h.b16 %v25
  %v274 = vunpack.c.l.b16 %v26
  %v275 = vunpack.c.h.b16 %v26
  %v276 = vunpack.c.l.b16 %v27
  %v277 = vunpack.c.h.b16 %v27
  %v278 = vunpack.c.l.b16 %v28
  %v279 = vunpack.c.h.b16 %v28
  %v280 = vunpack.c.l.b16 %v29
  %v281 = vunpack.c.h.b16 %v29
  %v282 = vunpack.c.l.b16 %v30
  %v283 = vunpack.c.h.b16 %v30
  %v284 = vunpack.c.l.b16 %v31
  %v285 = vunpack.c.h.b16 %v31
  %v286 = vunpack.c.l.b16 %v32
  %v287 = vunpack.c.h.b16 %v32
  %v288 = vunpack.c.l.b16 %v33
  %v289 = vunpack.c.h.b16 %v33
  %v290 = vunpack.c.l.b16 %v34
  %v291 = vunpack.c.h.b16 %v34
  %v292 = vunpack.c.l.b16 %v35
  %v293 = vunpack.c.h.b16 %v35
  %v294 = vunpack.c.l.b16 %v36
  %v295 = vunpack.c.h.b16 %v36
  %v296 = vunpack.c.l.b16 %v37
  %v297 = vunpack.c.h.b16 %v37
  %v298 = vunpack.c.l.b16 %v38
  %v299 = vunpack.c.h.b16 %v38
  %v300 = vunpack.c.l.b16 %v39
  %v301 = vunpack.c.h.b16 %v39
  %v302 = vunpack.c.l.b16 %v40
  %v303 = vunpack.c.h.b16 %v40
  %v304 = vunpack.c.l.b16 %v41
  %v305 = vunpack.c.h.b16 %v41
  %v306 = vunpack.c.l.b16 %v42
  %v307 = vunpack.c.h.b16 %v42
  %v308 = vunpack.c.l.b16 %v43
  %v309 = vunpack.c.h.b16 %v43
  %v310 = vunpack.c.l.b16 %v44
  %v311 = vunpack.c.h.b16 %v44
  %v312 = vunpack.c.l.b16 %v45
  %v313 = vunpack.c.h.b16 %v45
  %v314 = vunpack.c.l.b16 %v46
  %v315 = vunpack.c.h.b16 %v46
  %v316 = vunpack.c.l.b16 %v47
  %v317 = vunpack.c.h.b16 %v47
  %v318 = vunpack.c.l.b16 %v48
  %v319 = vunpack.c.h.b16 %v48
  %v320 = vunpack.c.l.b16 %v49
  %v321 = vunpack.c.h.b16 %v49
  %v322 = vunpack.c.l.b16 %v50
  %v323 = vunpack.c.h.b16 %v50
  %v324 = vunpack.c.l.b16 %v51
  %v325 = vunpack.c.h.b16 %v51
  %v326 = vunpack.c.l.b16 %v52
  %v327 = vunpack.c.h.b16 %v52
  %v328 = vunpack.c.l.b16 %v53
  %v329 = vunpack.c.h.b16 %v53
  %v330 = vunpack.c.l.b16 %v54
  %v331 = vunpack.c.h.b16 %v54
  %v332 = vpack.c.b16 %v262, %v252
  %v333 = vpack.c.b16 %v263, %v253
  %v334 = vpack.c.b16 %v264, %v254
  %v335 = vpack.c.b16 %v265, %v255
  %v336 = vpack.c.b16 %v266, %v256
  %v337 = vpack.c.b16 %v267, %v257
  %v338 = vpack.c.b16 %v268, %v258
  %v339 = vpack.c.b16 %v269, %v259
  %v340 = vpack.c.b16 %v270, %v260
  %v341 = vpack.c.b16 %v271, %v261
  %v342 = vpack.c.b16 %v282, %v272
  %v343 = vpack.c.b16 %v283, %v273
  %v344 = vpack.c.b16 %v284, %v274
  %v345 = vpack.c.b16 %v285, %v275
  %v346 = vpack.c.b16 %v286, %v276
  %v347 = vpack.c.b16 %v287, %v277
  %v348 = vpack.c.b16 %v288, %v278
  %v349 = vpack.c.b16 %v289, %v279
  %v350 = vpack.c.b16 %v290, %v280
  %v351 = vpack.c.b16 %v291, %v281
  %v352 = vpack.c.b16 %v302, %v292
  %v353 = vpack.c.b16 %v303, %v293
  %v354 = vpack.c.b16 %v304, %v294
  %v355 = vpack.c.b16 %v305, %v295
  %v356 = vpack.c.b16 %v306, %v296
  %v357 = vpack.c.b16 %v307, %v297
  %v358 = vpack.c.b16 %v308, %v298
  %v359 = vpack.c.b16 %v309, %v299
  %v360 = vpack.c.b16 %v310, %v300
  %v361 = vpack.c.b16 %v311, %v301
  %v362 = vpack.c.b16 %v322, %v312
  %v363 = vpack.c.b16 %v323, %v313
  %v364 = vpack.c.b16 %v324, %v314
  %v365 = vpack.c.b16 %v325, %v315
  %v366 = vpack.c.b16 %v326, %v316
  %v367 = vpack.c.b16 %v327, %v317
  %v368 = vpack.c.b16 %v328, %v318
  %v369 = vpack.c.b16 %v329, %v319
  %v370 = vpack.c.b16 %v330, %v320
  %v371 = vpack.c.b16 %v331, %v321
  %v558 = vunpack.c.l.b16 %v55
  %v559 = vunpack.c.l.b16 %v56
  %v560 = vunpack.c.l.b16 %v57
  %v561 = vunpack.c.l.b16 %v58
  %v562 = vunpack.c.l.b16 %v59
  %v563 = vunpack.c.l.b16 %v60
  %v564 = vunpack.c.l.b16 %v61
  %v565 = vunpack.c.l.b16 %v62
  %v566 = vunpack.c.l.b16 %v63
  %v567 = vunpack.c.l.b16 %v64
  %v568 = vunpack.c.l.b16 %v65
  %v569 = vunpack.c.l.b16 %v66
  %v570 = vunpack.c.l.b16 %v67
  %v571 = vunpack.c.l.b16 %v68
  %v572 = vunpack.c.l.b16 %v69
  %v573 = vunpack.c.l.b16 %v70
  %v574 = vunpack.c.l.b16 %v71
  %v575 = vunpack.c.l.b16 %v72
  %v576 = vunpack.c.l.b16 %v73
  %v577 = vunpack.c.l.b16 %v74
  %v578 = vunpack.c.l.b16 %v75
  %v579 = vunpack.c.l.b16 %v76
  %v580 = vunpack.c.l.b16 %v77
  %v581 = vunpack.c.l.b16 %v78
  %v582 = vunpack.c.l.b16 %v79
  %v583 = vunpack.c.l.b16 %v80
  %v584 = vunpack.c.l.b16 %v81
  %v585 = vunpack.c.l.b16 %v82
  %v586 = vunpack.c.l.b16 %v83
  %v587 = vunpack.c.l.b16 %v84
  %v588 = vunpack.c.l.b16 %v85
  %v589 = vunpack.c.l.b16 %v86
  %v590 = vunpack.c.l.b16 %v87
  %v591 = vunpack.c.l.b16 %v88
  %v592 = vunpack.c.l.b16 %v89
  %v593 = vunpack.c.l.b16 %v90
  %v594 = vunpack.c.l.b16 %v91
  %v595 = vunpack.c.l.b16 %v92
  %v596 = vunpack.c.l.b16 %v93
  %v597 = vunpack.c.l.b16 %v94
  %v598 = vunpack.c.l.b16 %v95
  %v599 = vunpack.c.l.b16 %v96
  %v600 = vunpack.c.l.b16 %v97
  %v601 = vunpack.c.l.b16 %v98
  %v602 = vunpack.c.l.b16 %v99
  %v603 = vunpack.c.l.b16 %v100
  %v604 = vunpack.c.l.b16 %v101
  %v605 = vunpack.c.l.b16 %v102
  %v606 = vunpack.c.l.b16 %v103
  %v607 = vunpack.c.l.b16 %v104
  %v608 = vunpack.c.l.b16 %v105
  %v609 = vunpack.c.l.b16 %v106
  %v610 = vunpack.c.l.b16 %v107
  %v611 = vunpack.c.l.b16 %v108
  %v612 = vunpack.c.l.b16 %v109
  %v613 = vunpack.c.l.b16 %v110
  %v614 = vunpack.c.l.b16 %v111
  %v615 = vunpack.c.l.b16 %v112
  %v616 = vunpack.c.l.b16 %v113
  %v617 = vunpack.c.l.b16 %v114
  %v618 = vunpack.c.l.b16 %v115
  %v619 = vunpack.c.l.b16 %v116
  %v620 = vunpack.c.l.b16 %v117
  %v621 = vunpack.c.l.b16 %v118
  %v622 = vunpack.c.l.b16 %v119
  %v623 = vunpack.c.l.b16 %v120
  %v624 = vunpack.c.l.b16 %v121
  %v625 = vunpack.c.l.b16 %v122
  %v626 = vunpack.c.l.b16 %v123
  %v627 = vunpack.c.l.b16 %v124
  %v628 = vunpack.c.l.b16 %v125
  %v629 = vunpack.c.l.b16 %v126
  %v630 = vunpack.c.l.b16 %v127
  %v631 = vunpack.c.l.b16 %v128
  %v632 = vunpack.c.l.b16 %v129
  %v633 = vunpack.c.l.b16 %v130
  %v634 = vunpack.c.l.b16 %v131
  %v635 = vunpack.c.l.b16 %v132
  %v636 = vunpack.c.l.b16 %v133
  %v637 = vunpack.c.l.b16 %v134
  %v638 = vunpack.c.l.b16 %v135
  %v639 = vunpack.c.l.b16 %v136
  %v640 = vunpack.c.l.b16 %v137
  %v641 = vunpack.c.l.b16 %v138
  %v642 = vunpack.c.l.b16 %v139
  %v643 = vunpack.c.l.b16 %v140
  %v644 = vunpack.c.l.b16 %v141
  %v645 = vunpack.c.l.b16 %v142
  %v646 = vunpack.c.l.b16 %v143
  %v647 = vunpack.c.l.b16 %v144
  %v648 = vunpack.c.l.b16 %v145
  %v649 = vunpack.c.l.b16 %v146
  %v650 = vunpack.c.l.b16 %v147
  %v651 = vunpack.c.l.b16 %v148
  %v652 = vunpack.c.l.b16 %v149
  %v653 = vunpack.c.l.b16 %v150
  %v654 = vunpack.c.l.b16 %v151
  %v655 = vunpack.c.l.b16 %v152
  %v656 = vunpack.c.l.b16 %v153
  %v657 = vunpack.c.l.b16 %v154
  %v658 = vunpack.c.l.b16 %v155
  %v659 = vunpack.c.l.b16 %v156
  %v660 = vunpack.c.l.b16 %v157
  %v661 = vunpack.c.l.b16 %v158
  %v662 = vunpack.c.l.b16 %v159
  %v663 = vunpack.c.l.b16 %v160
  %v664 = vunpack.c.l.b16 %v161
  %v665 = vunpack.c.l.b16 %v162
  %v666 = vunpack.c.l.b16 %v163
  %v667 = vunpack.c.l.b16 %v164
  %v668 = vunpack.c.l.b16 %v165
  %v669 = vunpack.c.l.b16 %v166
  %v670 = vunpack.c.l.b16 %v167
  %v671 = vunpack.c.l.b16 %v168
  %v672 = vunpack.c.l.b16 %v169
  %v673 = vunpack.c.l.b16 %v170
  %v674 = vunpack.c.l.b16 %v171
  %v675 = vunpack.c.l.b16 %v172
  %v676 = vunpack.c.l.b16 %v173
  %v677 = vunpack.c.l.b16 %v174
  %v678 = vunpack.c.l.b16 %v175
  %v679 = vunpack.c.l.b16 %v176
  %v680 = vunpack.c.l.b16 %v177
  %v681 = vunpack.c.l.b16 %v178
  %v682 = vunpack.c.l.b16 %v179
  %v683 = vunpack.c.l.b16 %v180
  %v684 = vunpack.c.l.b16 %v181
  %v685 = vunpack.c.l.b16 %v182
  %v686 = vunpack.c.l.b16 %v183
  %v687 = vunpack.c.l.b16 %v184
  %v688 = vunpack.c.l.b16 %v185
  %v689 = vunpack.c.l.b16 %v186
  %v690 = vunpack.c.l.b16 %v187
  %v691 = vunpack.c.l.b16 %v188
  %v692 = vunpack.c.l.b16 %v189
  %v693 = vunpack.c.l.b16 %v190
  %v694 = vunpack.c.l.b16 %v191
  %v695 = vunpack.c.l.b16 %v192
  %v696 = vunpack.c.l.b16 %v193
  %v697 = vunpack.c.l.b16 %v194
  %v698 = vunpack.c.l.b16 %v195
  %v699 = vunpack.c.l.b16 %v196
  %v700 = vunpack.c.l.b16 %v197
  %v701 = vunpack.c.l.b16 %v198
  %v702 = vunpack.c.l.b16 %v199
  %v703 = vunpack.c.l.b16 %v200
  %v704 = vunpack.c.l.b16 %v201
  %v705 = vunpack.c.l.b16 %v202
  %v706 = vunpack.c.l.b16 %v203
  %v707 = vunpack.c.l.b16 %v204
  %v708 = vpack.c.b16 %v559, %v558
  %v709 = vpack.c.b16 %v561, %v560
  %v710 = vpack.c.b16 %v563, %v562
  %v711 = vpack.c.b16 %v565, %v564
  %v712 = vpack.c.b16 %v567, %v566
  %v713 = vpack.c.b16 %v569, %v568
  %v714 = vpack.c.b16 %v571, %v570
  %v715 = vpack.c.b16 %v573, %v572
  %v716 = vpack.c.b16 %v575, %v574
  %v717 = vpack.c.b16 %v577, %v576
  %v718 = vpack.c.b16 %v579, %v578
  %v719 = vpack.c.b16 %v581, %v580
  %v720 = vpack.c.b16 %v583, %v582
  %v721 = vpack.c.b16 %v585, %v584
  %v722 = vpack.c.b16 %v587, %v586
  %v723 = vpack.c.b16 %v589, %v588
  %v724 = vpack.c.b16 %v591, %v590
  %v725 = vpack.c.b16 %v593, %v592
  %v726 = vpack.c.b16 %v595, %v594
  %v727 = vpack.c.b16 %v597, %v596
  %v728 = vpack.c.b16 %v599, %v598
  %v729 = vpack.c.b16 %v601, %v600
  %v730 = vpack.c.b16 %v603, %v602
  %v731 = vpack.c.b16 %v605, %v604
  %v732 = vpack.c.b16 %v607, %v606
  %v733 = vpack.c.b16 %v609, %v608
  %v734 = vpack.c.b16 %v611, %v610
  %v735 = vpack.c.b16 %v613, %v612
  %v736 = vpack.c.b16 %v615, %v614
  %v737 = vpack.c.b16 %v617, %v616
  %v738 = vpack.c.b16 %v619, %v618
  %v739 = vpack.c.b16 %v621, %v620
  %v740 = vpack.c.b16 %v623, %v622
  %v741 = vpack.c.b16 %v625, %v624
  %v742 = vpack.c.b16 %v627, %v626
  %v743 = vpack.c.b16 %v629, %v628
  %v744 = vpack.c.b16 %v631, %v630
  %v745 = vpack.c.b16 %v633, %v632
  %v746 = vpack.c.b16 %v635, %v634
  %v747 = vpack.c.b16 %v637, %v636
  %v748 = vpack.c.b16 %v639, %v638
  %v749 = vpack.c.b16 %v641, %v640
  %v750 = vpack.c.b16 %v643, %v642
  %v751 = vpack.c.b16 %v645, %v644
  %v752 = vpack.c.b16 %v647, %v646
  %v753 = vpack.c.b16 %v649, %v648
  %v754 = vpack.c.b16 %v651, %v650
  %v755 = vpack.c.b16 %v653, %v652
  %v756 = vpack.c.b16 %v655, %v654
  %v757 = vpack.c.b16 %v657, %v656
  %v758 = vpack.c.b16 %v659, %v658
  %v759 = vpack.c.b16 %v661, %v660
  %v760 = vpack.c.b16 %v663, %v662
  %v761 = vpack.c.b16 %v665, %v664
  %v762 = vpack.c.b16 %v667, %v666
  %v763 = vpack.c.b16 %v669, %v668
  %v764 = vpack.c.b16 %v671, %v670
  %v765 = vpack.c.b16 %v673, %v672
  %v766 = vpack.c.b16 %v675, %v674
  %v767 = vpack.c.b16 %v677, %v676
  %v768 = vpack.c.b16 %v679, %v678
  %v769 = vpack.c.b16 %v681, %v680
  %v770 = vpack.c.b16 %v683, %v682
  %v771 = vpack.c.b16 %v685, %v684
  %v772 = vpack.c.b16 %v687, %v686
  %v773 = vpack.c.b16 %v689, %v688
  %v774 = vpack.c.b16 %v691, %v690
  %v775 = vpack.c.b16 %v693, %v692
  %v776 = vpack.c.b16 %v695, %v694
  %v777 = vpack.c.b16 %v697, %v696
  %v778 = vpack.c.b16 %v699, %v698
  %v779 = vpack.c.b16 %v701, %v700
  %v780 = vpack.c.b16 %v703, %v702
  %v781 = vpack.c.b16 %v705, %v704
  %v782 = vpack.c.b16 %v707, %v706
  %vm858 = vcmask 392192
  %v860 = vsel %vm858, %v341, 0
  %v863 = vsel %vm858, %v351, 0
  %v866 = vsel %vm858, %v361, 0
  %v869 = vsel %vm858, %v371, 0
  %871 = vmatprep.subr.bf16.mxu0 0
  %872 = vmatpush1.bf16.msra.mxu0 %v708
  %873 = vmatprep.subr.bf16.mxu0 0
  %874 = vmatpush1.bf16.msra.mxu0 %v709
  %875 = vmatprep.subr.bf16.mxu0 0
  %876 = vmatpush1.bf16.msra.mxu0 %v710
  %877 = vmatprep.subr.bf16.mxu0 0
  %878 = vmatpush1.bf16.msra.mxu0 %v711
  %879 = vmatprep.subr.bf16.mxu0 0
  %880 = vmatpush1.bf16.msra.mxu0 %v712
  %881 = vmatprep.subr.bf16.mxu0 0
  %882 = vmatpush1.bf16.msra.mxu0 %v713
  %883 = vmatprep.subr.bf16.mxu0 0
  %884 = vmatpush1.bf16.msra.mxu0 %v714
  %885 = vmatprep.subr.bf16.mxu0 0
  %886 = vmatpush1.bf16.msra.mxu0 %v715
  %887 = vmatprep.subr.bf16.mxu0 0
  %888 = vmatpush1.bf16.msra.mxu0 %v716
  %889 = vmatprep.subr.bf16.mxu0 0
  %890 = vmatpush1.bf16.msra.mxu0 %v717
  %891 = vmatprep.subr.bf16.mxu0 0
  %892 = vmatpush1.bf16.msra.mxu0 %v718
  %893 = vmatprep.subr.bf16.mxu0 0
  %894 = vmatpush1.bf16.msra.mxu0 %v719
  %895 = vmatprep.subr.bf16.mxu0 0
  %896 = vmatpush1.bf16.msra.mxu0 %v720
  %897 = vmatprep.subr.bf16.mxu0 0
  %898 = vmatpush1.bf16.msra.mxu0 %v721
  %899 = vmatprep.subr.bf16.mxu0 0
  %900 = vmatpush1.bf16.msra.mxu0 %v722
  %901 = vmatprep.subr.bf16.mxu0 0
  %902 = vmatpush1.bf16.msra.mxu0 %v723
  %903 = vmatprep.mubr.bf16.mxu0 %v333
  %904 = vmatmul.mubr.bf16.gmra.mrb[0].mxu0 %v332
  %v905 = vpop.f32.mrb[0].mxu0
  %v906 = vadd.f32 %v210, %v905
  %v907 = vpop.f32.mrb[0].mxu0
  %v908 = vpop.f32.mrb[0].mxu0
  %v909 = vadd.f32 %v210, %v908
  %v910 = vpop.f32.mrb[0].mxu0
  %911 = vmatprep.mubr.bf16.mxu0 %v343
  %912 = vmatmul.mubr.bf16.gmra.mrb[0].mxu0 %v342
  %v913 = vpop.f32.mrb[0].mxu0
  %v914 = vadd.f32 %v210, %v913
  %v915 = vpop.f32.mrb[0].mxu0
  %v916 = vpop.f32.mrb[0].mxu0
  %v917 = vadd.f32 %v210, %v916
  %v918 = vpop.f32.mrb[0].mxu0
  %919 = vmatprep.mubr.bf16.mxu0 %v353
  %920 = vmatmul.mubr.bf16.gmra.mrb[0].mxu0 %v352
  %v921 = vpop.f32.mrb[0].mxu0
  %v922 = vadd.f32 %v210, %v921
  %v923 = vpop.f32.mrb[0].mxu0
  %v924 = vpop.f32.mrb[0].mxu0
  %v925 = vadd.f32 %v210, %v924
  %v926 = vpop.f32.mrb[0].mxu0
  %927 = vmatprep.mubr.bf16.mxu0 %v363
  %928 = vmatmul.mubr.bf16.gmra.mrb[0].mxu0 %v362
  %v929 = vpop.f32.mrb[0].mxu0
  %v930 = vadd.f32 %v210, %v929
  %v931 = vpop.f32.mrb[0].mxu0
  %v932 = vpop.f32.mrb[0].mxu0
  %v933 = vadd.f32 %v210, %v932
  %v934 = vpop.f32.mrb[0].mxu0
  %935 = vdwg.mxu0
  %936 = vmatprep.subr.bf16.mxu0 0
  %937 = vmatpush1.bf16.msra.mxu0 %v724
  %938 = vmatprep.subr.bf16.mxu0 0
  %939 = vmatpush1.bf16.msra.mxu0 %v725
  %940 = vmatprep.subr.bf16.mxu0 0
  %941 = vmatpush1.bf16.msra.mxu0 %v726
  %942 = vmatprep.subr.bf16.mxu0 0
  %943 = vmatpush1.bf16.msra.mxu0 %v727
  %944 = vmatprep.subr.bf16.mxu0 0
  %945 = vmatpush1.bf16.msra.mxu0 %v728
  %946 = vmatprep.subr.bf16.mxu0 0
  %947 = vmatpush1.bf16.msra.mxu0 %v729
  %948 = vmatprep.subr.bf16.mxu0 0
  %949 = vmatpush1.bf16.msra.mxu0 %v730
  %950 = vmatprep.subr.bf16.mxu0 0
  %951 = vmatpush1.bf16.msra.mxu0 %v731
  %952 = vmatprep.subr.bf16.mxu0 0
  %953 = vmatpush1.bf16.msra.mxu0 %v732
  %954 = vmatprep.subr.bf16.mxu0 0
  %955 = vmatpush1.bf16.msra.mxu0 %v733
  %956 = vmatprep.subr.bf16.mxu0 0
  %957 = vmatpush1.bf16.msra.mxu0 %v734
  %958 = vmatprep.subr.bf16.mxu0 0
  %959 = vmatpush1.bf16.msra.mxu0 %v735
  %960 = vmatprep.subr.bf16.mxu0 0
  %961 = vmatpush1.bf16.msra.mxu0 %v736
  %962 = vmatprep.subr.bf16.mxu0 0
  %963 = vmatpush1.bf16.msra.mxu0 %v737
  %964 = vmatprep.subr.bf16.mxu0 0
  %965 = vmatpush1.bf16.msra.mxu0 %v738
  %966 = vmatprep.subr.bf16.mxu0 0
  %967 = vmatpush1.bf16.msra.mxu0 %v739
  %968 = vmatprep.mubr.bf16.mxu0 %v335
  %969 = vmatmul.mubr.bf16.gmra.mrb[0].mxu0 %v334
  %v970 = vpop.f32.mrb[0].mxu0
  %v971 = vadd.f32 %v906, %v970
  %v972 = vpop.f32.mrb[0].mxu0
  %v973 = vpop.f32.mrb[0].mxu0
  %v974 = vadd.f32 %v909, %v973
  %v975 = vpop.f32.mrb[0].mxu0
  %976 = vmatprep.mubr.bf16.mxu0 %v345
  %977 = vmatmul.mubr.bf16.gmra.mrb[0].mxu0 %v344
  %v978 = vpop.f32.mrb[0].mxu0
  %v979 = vadd.f32 %v914, %v978
  %v980 = vpop.f32.mrb[0].mxu0
  %v981 = vpop.f32.mrb[0].mxu0
  %v982 = vadd.f32 %v917, %v981
  %v983 = vpop.f32.mrb[0].mxu0
  %984 = vmatprep.mubr.bf16.mxu0 %v355
  %985 = vmatmul.mubr.bf16.gmra.mrb[0].mxu0 %v354
  %v986 = vpop.f32.mrb[0].mxu0
  %v987 = vadd.f32 %v922, %v986
  %v988 = vpop.f32.mrb[0].mxu0
  %v989 = vpop.f32.mrb[0].mxu0
  %v990 = vadd.f32 %v925, %v989
  %v991 = vpop.f32.mrb[0].mxu0
  %992 = vmatprep.mubr.bf16.mxu0 %v365
  %993 = vmatmul.mubr.bf16.gmra.mrb[0].mxu0 %v364
  %v994 = vpop.f32.mrb[0].mxu0
  %v995 = vadd.f32 %v930, %v994
  %v996 = vpop.f32.mrb[0].mxu0
  %v997 = vpop.f32.mrb[0].mxu0
  %v998 = vadd.f32 %v933, %v997
  %v999 = vpop.f32.mrb[0].mxu0
  %1000 = vdwg.mxu0
  %1001 = vmatprep.subr.bf16.mxu0 0
  %1002 = vmatpush1.bf16.msra.mxu0 %v740
  %1003 = vmatprep.subr.bf16.mxu0 0
  %1004 = vmatpush1.bf16.msra.mxu0 %v741
  %1005 = vmatprep.subr.bf16.mxu0 0
  %1006 = vmatpush1.bf16.msra.mxu0 %v742
  %1007 = vmatprep.subr.bf16.mxu0 0
  %1008 = vmatpush1.bf16.msra.mxu0 %v743
  %1009 = vmatprep.subr.bf16.mxu0 0
  %1010 = vmatpush1.bf16.msra.mxu0 %v744
  %1011 = vmatprep.subr.bf16.mxu0 0
  %1012 = vmatpush1.bf16.msra.mxu0 %v745
  %1013 = vmatprep.subr.bf16.mxu0 0
  %1014 = vmatpush1.bf16.msra.mxu0 %v746
  %1015 = vmatprep.subr.bf16.mxu0 0
  %1016 = vmatpush1.bf16.msra.mxu0 %v747
  %1017 = vmatprep.subr.bf16.mxu0 0
  %1018 = vmatpush1.bf16.msra.mxu0 %v748
  %1019 = vmatprep.subr.bf16.mxu0 0
  %1020 = vmatpush1.bf16.msra.mxu0 %v749
  %1021 = vmatprep.subr.bf16.mxu0 0
  %1022 = vmatpush1.bf16.msra.mxu0 %v750
  %1023 = vmatprep.subr.bf16.mxu0 0
  %1024 = vmatpush1.bf16.msra.mxu0 %v751
  %1025 = vmatprep.subr.bf16.mxu0 0
  %1026 = vmatpush1.bf16.msra.mxu0 %v752
  %1027 = vmatprep.subr.bf16.mxu0 0
  %1028 = vmatpush1.bf16.msra.mxu0 %v753
  %1029 = vmatprep.subr.bf16.mxu0 0
  %1030 = vmatpush1.bf16.msra.mxu0 %v754
  %1031 = vmatprep.subr.bf16.mxu0 0
  %1032 = vmatpush1.bf16.msra.mxu0 %v755
  %1033 = vmatprep.mubr.bf16.mxu0 %v337
  %1034 = vmatmul.mubr.bf16.gmra.mrb[0].mxu0 %v336
  %v1035 = vpop.f32.mrb[0].mxu0
  %v1036 = vadd.f32 %v971, %v1035
  %v1037 = vpop.f32.mrb[0].mxu0
  %v1038 = vpop.f32.mrb[0].mxu0
  %v1039 = vadd.f32 %v974, %v1038
  %v1040 = vpop.f32.mrb[0].mxu0
  %1041 = vmatprep.mubr.bf16.mxu0 %v347
  %1042 = vmatmul.mubr.bf16.gmra.mrb[0].mxu0 %v346
  %v1043 = vpop.f32.mrb[0].mxu0
  %v1044 = vadd.f32 %v979, %v1043
  %v1045 = vpop.f32.mrb[0].mxu0
  %v1046 = vpop.f32.mrb[0].mxu0
  %v1047 = vadd.f32 %v982, %v1046
  %v1048 = vpop.f32.mrb[0].mxu0
  %1049 = vmatprep.mubr.bf16.mxu0 %v357
  %1050 = vmatmul.mubr.bf16.gmra.mrb[0].mxu0 %v356
  %v1051 = vpop.f32.mrb[0].mxu0
  %v1052 = vadd.f32 %v987, %v1051
  %v1053 = vpop.f32.mrb[0].mxu0
  %v1054 = vpop.f32.mrb[0].mxu0
  %v1055 = vadd.f32 %v990, %v1054
  %v1056 = vpop.f32.mrb[0].mxu0
  %1057 = vmatprep.mubr.bf16.mxu0 %v367
  %1058 = vmatmul.mubr.bf16.gmra.mrb[0].mxu0 %v366
  %v1059 = vpop.f32.mrb[0].mxu0
  %v1060 = vadd.f32 %v995, %v1059
  %v1061 = vpop.f32.mrb[0].mxu0
  %v1062 = vpop.f32.mrb[0].mxu0
  %v1063 = vadd.f32 %v998, %v1062
  %v1064 = vpop.f32.mrb[0].mxu0
  %1065 = vdwg.mxu0
  %1066 = vmatprep.subr.bf16.mxu0 0
  %1067 = vmatpush1.bf16.msra.mxu0 %v756
  %1068 = vmatprep.subr.bf16.mxu0 0
  %1069 = vmatpush1.bf16.msra.mxu0 %v757
  %1070 = vmatprep.subr.bf16.mxu0 0
  %1071 = vmatpush1.bf16.msra.mxu0 %v758
  %1072 = vmatprep.subr.bf16.mxu0 0
  %1073 = vmatpush1.bf16.msra.mxu0 %v759
  %1074 = vmatprep.subr.bf16.mxu0 0
  %1075 = vmatpush1.bf16.msra.mxu0 %v760
  %1076 = vmatprep.subr.bf16.mxu0 0
  %1077 = vmatpush1.bf16.msra.mxu0 %v761
  %1078 = vmatprep.subr.bf16.mxu0 0
  %1079 = vmatpush1.bf16.msra.mxu0 %v762
  %1080 = vmatprep.subr.bf16.mxu0 0
  %1081 = vmatpush1.bf16.msra.mxu0 %v763
  %1082 = vmatprep.subr.bf16.mxu0 0
  %1083 = vmatpush1.bf16.msra.mxu0 %v764
  %1084 = vmatprep.subr.bf16.mxu0 0
  %1085 = vmatpush1.bf16.msra.mxu0 %v765
  %1086 = vmatprep.subr.bf16.mxu0 0
  %1087 = vmatpush1.bf16.msra.mxu0 %v766
  %1088 = vmatprep.subr.bf16.mxu0 0
  %1089 = vmatpush1.bf16.msra.mxu0 %v767
  %1090 = vmatprep.subr.bf16.mxu0 0
  %1091 = vmatpush1.bf16.msra.mxu0 %v768
  %1092 = vmatprep.subr.bf16.mxu0 0
  %1093 = vmatpush1.bf16.msra.mxu0 %v769
  %1094 = vmatprep.subr.bf16.mxu0 0
  %1095 = vmatpush1.bf16.msra.mxu0 %v770
  %1096 = vmatprep.subr.bf16.mxu0 0
  %1097 = vmatpush1.bf16.msra.mxu0 %v771
  %1098 = vmatprep.mubr.bf16.mxu0 %v339
  %1099 = vmatmul.mubr.bf16.gmra.mrb[0].mxu0 %v338
  %v1100 = vpop.f32.mrb[0].mxu0
  %v1101 = vadd.f32 %v1036, %v1100
  %v1102 = vpop.f32.mrb[0].mxu0
  %v1103 = vpop.f32.mrb[0].mxu0
  %v1104 = vadd.f32 %v1039, %v1103
  %v1105 = vpop.f32.mrb[0].mxu0
  %1106 = vmatprep.mubr.bf16.mxu0 %v349
  %1107 = vmatmul.mubr.bf16.gmra.mrb[0].mxu0 %v348
  %v1108 = vpop.f32.mrb[0].mxu0
  %v1109 = vadd.f32 %v1044, %v1108
  %v1110 = vpop.f32.mrb[0].mxu0
  %v1111 = vpop.f32.mrb[0].mxu0
  %v1112 = vadd.f32 %v1047, %v1111
  %v1113 = vpop.f32.mrb[0].mxu0
  %1114 = vmatprep.mubr.bf16.mxu0 %v359
  %1115 = vmatmul.mubr.bf16.gmra.mrb[0].mxu0 %v358
  %v1116 = vpop.f32.mrb[0].mxu0
  %v1117 = vadd.f32 %v1052, %v1116
  %v1118 = vpop.f32.mrb[0].mxu0
  %v1119 = vpop.f32.mrb[0].mxu0
  %v1120 = vadd.f32 %v1055, %v1119
  %v1121 = vpop.f32.mrb[0].mxu0
  %1122 = vmatprep.mubr.bf16.mxu0 %v369
  %1123 = vmatmul.mubr.bf16.gmra.mrb[0].mxu0 %v368
  %v1124 = vpop.f32.mrb[0].mxu0
  %v1125 = vadd.f32 %v1060, %v1124
  %v1126 = vpop.f32.mrb[0].mxu0
  %v1127 = vpop.f32.mrb[0].mxu0
  %v1128 = vadd.f32 %v1063, %v1127
  %v1129 = vpop.f32.mrb[0].mxu0
  %1130 = vdwg.mxu0
  %1131 = vmatprep.subr.bf16.mxu0 0
  %1132 = vmatpush1.bf16.msra.mxu0 %v772
  %1133 = vmatprep.subr.bf16.mxu0 0
  %1134 = vmatpush1.bf16.msra.mxu0 %v773
  %1135 = vmatprep.subr.bf16.mxu0 0
  %1136 = vmatpush1.bf16.msra.mxu0 %v774
  %1137 = vmatprep.subr.bf16.mxu0 0
  %1138 = vmatpush1.bf16.msra.mxu0 %v775
  %1139 = vmatprep.subr.bf16.mxu0 0
  %1140 = vmatpush1.bf16.msra.mxu0 %v776
  %1141 = vmatprep.subr.bf16.mxu0 0
  %1142 = vmatpush1.bf16.msra.mxu0 %v777
  %1143 = vmatprep.subr.bf16.mxu0 0
  %1144 = vmatpush1.bf16.msra.mxu0 %v778
  %1145 = vmatprep.subr.bf16.mxu0 0
  %1146 = vmatpush1.bf16.msra.mxu0 %v779
  %1147 = vmatprep.subr.bf16.mxu0 0
  %1148 = vmatpush1.bf16.msra.mxu0 %v780
  %1149 = vmatprep.subr.bf16.mxu0 0
  %1150 = vmatpush1.bf16.msra.mxu0 %v781
  %1151 = vmatprep.subr.bf16.mxu0 0
  %1152 = vmatpush1.bf16.msra.mxu0 %v782
  %1153 = vmatprep.subr.bf16.mxu0 0
  %1154 = vmatpush1.bf16.msra.mxu0 0
  %1155 = vmatprep.subr.bf16.mxu0 0
  %1156 = vmatpush1.bf16.msra.mxu0 0
  %1157 = vmatprep.subr.bf16.mxu0 0
  %1158 = vmatpush1.bf16.msra.mxu0 0
  %1159 = vmatprep.subr.bf16.mxu0 0
  %1160 = vmatpush1.bf16.msra.mxu0 0
  %1161 = vmatprep.subr.bf16.mxu0 0
  %1162 = vmatpush1.bf16.msra.mxu0 0
  %1163 = vmatprep.mubr.bf16.mxu0 %v860
  %1164 = vmatmul.mubr.bf16.gmra.mrb[0].mxu0 %v340
  %v1165 = vpop.f32.mrb[0].mxu0
  %v1166 = vadd.f32 %v1101, %v1165
  %v1167 = vpop.f32.mrb[0].mxu0
  %v1168 = vpop.f32.mrb[0].mxu0
  %v1169 = vadd.f32 %v1104, %v1168
  %v1170 = vpop.f32.mrb[0].mxu0
  %1171 = vmatprep.mubr.bf16.mxu0 %v863
  %1172 = vmatmul.mubr.bf16.gmra.mrb[0].mxu0 %v350
  %v1173 = vpop.f32.mrb[0].mxu0
  %v1174 = vadd.f32 %v1109, %v1173
  %v1175 = vpop.f32.mrb[0].mxu0
  %v1176 = vpop.f32.mrb[0].mxu0
  %v1177 = vadd.f32 %v1112, %v1176
  %v1178 = vpop.f32.mrb[0].mxu0
  %1179 = vmatprep.mubr.bf16.mxu0 %v866
  %1180 = vmatmul.mubr.bf16.gmra.mrb[0].mxu0 %v360
  %v1181 = vpop.f32.mrb[0].mxu0
  %v1182 = vadd.f32 %v1117, %v1181
  %v1183 = vpop.f32.mrb[0].mxu0
  %v1184 = vpop.f32.mrb[0].mxu0
  %v1185 = vadd.f32 %v1120, %v1184
  %v1186 = vpop.f32.mrb[0].mxu0
  %1187 = vmatprep.mubr.bf16.mxu0 %v869
  %1188 = vmatmul.mubr.bf16.gmra.mrb[0].mxu0 %v370
  %v1189 = vpop.f32.mrb[0].mxu0
  %v1190 = vadd.f32 %v1125, %v1189
  %v1191 = vpop.f32.mrb[0].mxu0
  %v1192 = vpop.f32.mrb[0].mxu0
  %v1193 = vadd.f32 %v1128, %v1192
  %v1194 = vpop.f32.mrb[0].mxu0
  %1195 = vdwg.mxu0
  %v1196 = vmax.f32 %v1166, 0.0
  %v1197 = vmax.f32 %v1169, 0.0
  %v1198 = vmax.f32 %v1174, 0.0
  %v1199 = vmax.f32 %v1177, 0.0
  %v1200 = vmax.f32 %v1182, 0.0
  %v1201 = vmax.f32 %v1185, 0.0
  %v1202 = vmax.f32 %v1190, 0.0
  %v1203 = vmax.f32 %v1193, 0.0
  %v1204 = vpack.c.bf16 %v1197, %v1196
  %v1205 = vpack.c.bf16 %v1199, %v1198
  %v1206 = vpack.c.bf16 %v1201, %v1200
  %v1207 = vpack.c.bf16 %v1203, %v1202
  %v1212 = vunpack.c.l.b16 %v1204
  %v1213 = vunpack.c.h.b16 %v1204
  %v1214 = vunpack.c.l.b16 %v1205
  %v1215 = vunpack.c.h.b16 %v1205
  %v1216 = vunpack.c.l.b16 %v1206
  %v1217 = vunpack.c.h.b16 %v1206
  %v1218 = vunpack.c.l.b16 %v1207
  %v1219 = vunpack.c.h.b16 %v1207
  %v1220 = vpack.c.b16 %v1212, %v1212
  %v1221 = vpack.c.b16 %v1213, %v1213
  %v1222 = vpack.c.b16 %v1214, %v1214
  %v1223 = vpack.c.b16 %v1215, %v1215
  %v1224 = vpack.c.b16 %v1216, %v1216
  %v1225 = vpack.c.b16 %v1217, %v1217
  %v1226 = vpack.c.b16 %v1218, %v1218
  %v1227 = vpack.c.b16 %v1219, %v1219
  %1236 = vst [vmem:[%s3] sm:$0xf] %v1220
  %1237 = vst [vmem:[%s3 + $0x4] sm:$0xf] %v1221
  %1238 = vst [vmem:[%s3 + $0x8] sm:$0xf] %v1222
  %1239 = vst [vmem:[%s3 + $0xc] sm:$0xf] %v1223
  %1240 = vst [vmem:[%s3 + $0x10] sm:$0xf] %v1224
  %1241 = vst [vmem:[%s3 + $0x14] sm:$0xf] %v1225
  %1242 = vst [vmem:[%s3 + $0x18] sm:$0xf] %v1226
  %1243 = vst [vmem:[%s3 + $0x1c] sm:$0xf] %v1227
  // Predicated region
  $region14: #{stem_forward.24} parent=0 // pred_check
    _
  $region15: #{stem_forward.24} parent=0 // pred_check_branch
    %1245 = sbr.rel (0) target = $region17
  $region16: #{stem_forward.24} parent=0 // pred_region
    _
  $region17: #{stem_forward.24} parent=0 // pred_fallthru
    _
  // Predicated region
  $region18: #{stem_forward.24} parent=0 // pred_check
    _
  $region19: #{stem_forward.24} parent=0 // pred_check_branch
    %1247 = sbr.rel (0) target = $region21
  $region20: #{stem_forward.24} parent=0 // pred_region
    _
  $region21: #{stem_forward.24} parent=0 // pred_fallthru
    _

// kernel: stem_forward.26
$region0: #{stem_forward.26}
  #allocation0 [shape = 'u32[]', space=smem, size = 0x4, offset = 0x4, fixed_abs, tag = 'smem constant byte address 0x4 - core index']
  #allocation1 [shape = 'u32[144,128]{1,0:T(1,128)}', space=vmem, size = 0x12000, scoped, tag = 'internal scratch']
  %s0 = inlined_call_operand.vmem [shape: bf16[64,576], index: 0, kind: input, shape index: {}]
  %s1 = inlined_call_operand.vmem [shape: bf16[576,128], index: 1, kind: input, shape index: {}]
  %s2 = inlined_call_operand.vmem [shape: f32[1,128], index: 2, kind: input, shape index: {}]
  %s3 = inlined_call_operand.vmem [shape: bf16[64,128], index: 3, kind: output, shape index: {}]
  %s4 = sld [smem:[#allocation0]]
  $region22: #{stem_forward.26} parent=0
    _
  %s6 = ssub.s32 1, %s4
  %s7 = scalar_select 0, %s6, %s4
  // Predicated region
  $region2: #{stem_forward.26} parent=0 // pred_check
    _
  $region3: #{stem_forward.26} parent=0 // pred_check_branch
    %9 = sbr.rel (0) target = $region5
  $region4: #{stem_forward.26} parent=0 // pred_region
    _
  $region5: #{stem_forward.26} parent=0 // pred_fallthru
    _
  // Predicated region
  $region6: #{stem_forward.26} parent=0 // pred_check
    _
  $region7: #{stem_forward.26} parent=0 // pred_check_branch
    %11 = sbr.rel (0) target = $region9
  $region8: #{stem_forward.26} parent=0 // pred_region
    _
  $region9: #{stem_forward.26} parent=0 // pred_fallthru
    _
  // Predicated region
  $region10: #{stem_forward.26} parent=0 // pred_check
    _
  $region11: #{stem_forward.26} parent=0 // pred_check_branch
    %13 = sbr.rel (0) target = $region13
  $region12: #{stem_forward.26} parent=0 // pred_region
    _
  $region13: #{stem_forward.26} parent=0 // pred_fallthru
    _
  %v15 = vld [vmem:[%s0] sm:$0xff]
  %v16 = vld [vmem:[%s0 + $0x8] sm:$0xff]
  %v17 = vld [vmem:[%s0 + $0x10] sm:$0xf]
  %v18 = vld [vmem:[%s0 + $0x14] sm:$0xff]
  %v19 = vld [vmem:[%s0 + $0x1c] sm:$0xff]
  %v20 = vld [vmem:[%s0 + $0x24] sm:$0xf]
  %v21 = vld [vmem:[%s0 + $0x28] sm:$0xff]
  %v22 = vld [vmem:[%s0 + $0x30] sm:$0xff]
  %v23 = vld [vmem:[%s0 + $0x38] sm:$0xf]
  %v24 = vld [vmem:[%s0 + $0x3c] sm:$0xff]
  %v25 = vld [vmem:[%s0 + $0x44] sm:$0xff]
  %v26 = vld [vmem:[%s0 + $0x4c] sm:$0xf]
  %v27 = vld [vmem:[%s0 + $0x50] sm:$0xff]
  %v28 = vld [vmem:[%s0 + $0x58] sm:$0xff]
  %v29 = vld [vmem:[%s0 + $0x60] sm:$0xf]
  %v30 = vld [vmem:[%s0 + $0x64] sm:$0xff]
  %v31 = vld [vmem:[%s0 + $0x6c] sm:$0xff]
  %v32 = vld [vmem:[%s0 + $0x74] sm:$0xf]
  %v33 = vld [vmem:[%s0 + $0x78] sm:$0xff]
  %v34 = vld [vmem:[%s0 + $0x80] sm:$0xff]
  %v35 = vld [vmem:[%s0 + $0x88] sm:$0xf]
  %v36 = vld [vmem:[%s0 + $0x8c] sm:$0xff]
  %v37 = vld [vmem:[%s0 + $0x94] sm:$0xff]
  %v38 = vld [vmem:[%s0 + $0x9c] sm:$0xf]
  %v39 = vld [vmem:[%s1] sm:$0xf]
  %v40 = vld [vmem:[%s1 + $0x4] sm:$0xf]
  %v41 = vld [vmem:[%s1 + $0x8] sm:$0xf]
  %v42 = vld [vmem:[%s1 + $0xc] sm:$0xf]
  %v43 = vld [vmem:[%s1 + $0x10] sm:$0xf]
  %v44 = vld [vmem:[%s1 + $0x14] sm:$0xf]
  %v45 = vld [vmem:[%s1 + $0x18] sm:$0xf]
  %v46 = vld [vmem:[%s1 + $0x1c] sm:$0xf]
  %v47 = vld [vmem:[%s1 + $0x20] sm:$0xf]
  %v48 = vld [vmem:[%s1 + $0x24] sm:$0xf]
  %v49 = vld [vmem:[%s1 + $0x28] sm:$0xf]
  %v50 = vld [vmem:[%s1 + $0x2c] sm:$0xf]
  %v51 = vld [vmem:[%s1 + $0x30] sm:$0xf]
  %v52 = vld [vmem:[%s1 + $0x34] sm:$0xf]
  %v53 = vld [vmem:[%s1 + $0x38] sm:$0xf]
  %v54 = vld [vmem:[%s1 + $0x3c] sm:$0xf]
  %v55 = vld [vmem:[%s1 + $0x40] sm:$0xf]
  %v56 = vld [vmem:[%s1 + $0x44] sm:$0xf]
  %v57 = vld [vmem:[%s1 + $0x48] sm:$0xf]
  %v58 = vld [vmem:[%s1 + $0x4c] sm:$0xf]
  %v59 = vld [vmem:[%s1 + $0x50] sm:$0xf]
  %v60 = vld [vmem:[%s1 + $0x54] sm:$0xf]
  %v61 = vld [vmem:[%s1 + $0x58] sm:$0xf]
  %v62 = vld [vmem:[%s1 + $0x5c] sm:$0xf]
  %v63 = vld [vmem:[%s1 + $0x60] sm:$0xf]
  %v64 = vld [vmem:[%s1 + $0x64] sm:$0xf]
  %v65 = vld [vmem:[%s1 + $0x68] sm:$0xf]
  %v66 = vld [vmem:[%s1 + $0x6c] sm:$0xf]
  %v67 = vld [vmem:[%s1 + $0x70] sm:$0xf]
  %v68 = vld [vmem:[%s1 + $0x74] sm:$0xf]
  %v69 = vld [vmem:[%s1 + $0x78] sm:$0xf]
  %v70 = vld [vmem:[%s1 + $0x7c] sm:$0xf]
  %v71 = vld [vmem:[%s1 + $0x80] sm:$0xf]
  %v72 = vld [vmem:[%s1 + $0x84] sm:$0xf]
  %v73 = vld [vmem:[%s1 + $0x88] sm:$0xf]
  %v74 = vld [vmem:[%s1 + $0x8c] sm:$0xf]
  %v75 = vld [vmem:[%s1 + $0x90] sm:$0xf]
  %v76 = vld [vmem:[%s1 + $0x94] sm:$0xf]
  %v77 = vld [vmem:[%s1 + $0x98] sm:$0xf]
  %v78 = vld [vmem:[%s1 + $0x9c] sm:$0xf]
  %v79 = vld [vmem:[%s1 + $0xa0] sm:$0xf]
  %v80 = vld [vmem:[%s1 + $0xa4] sm:$0xf]
  %v81 = vld [vmem:[%s1 + $0xa8] sm:$0xf]
  %v82 = vld [vmem:[%s1 + $0xac] sm:$0xf]
  %v83 = vld [vmem:[%s1 + $0xb0] sm:$0xf]
  %v84 = vld [vmem:[%s1 + $0xb4] sm:$0xf]
  %v85 = vld [vmem:[%s1 + $0xb8] sm:$0xf]
  %v86 = vld [vmem:[%s1 + $0xbc] sm:$0xf]
  %v87 = vld [vmem:[%s1 + $0xc0] sm:$0xf]
  %v88 = vld [vmem:[%s1 + $0xc4] sm:$0xf]
  %v89 = vld [vmem:[%s1 + $0xc8] sm:$0xf]
  %v90 = vld [vmem:[%s1 + $0xcc] sm:$0xf]
  %v91 = vld [vmem:[%s1 + $0xd0] sm:$0xf]
  %v92 = vld [vmem:[%s1 + $0xd4] sm:$0xf]
  %v93 = vld [vmem:[%s1 + $0xd8] sm:$0xf]
  %v94 = vld [vmem:[%s1 + $0xdc] sm:$0xf]
  %v95 = vld [vmem:[%s1 + $0xe0] sm:$0xf]
  %v96 = vld [vmem:[%s1 + $0xe4] sm:$0xf]
  %v97 = vld [vmem:[%s1 + $0xe8] sm:$0xf]
  %v98 = vld [vmem:[%s1 + $0xec] sm:$0xf]
  %v99 = vld [vmem:[%s1 + $0xf0] sm:$0xf]
  %v100 = vld [vmem:[%s1 + $0xf4] sm:$0xf]
  %v101 = vld [vmem:[%s1 + $0xf8] sm:$0xf]
  %v102 = vld [vmem:[%s1 + $0xfc] sm:$0xf]
  %v103 = vld [vmem:[%s1 + $0x100] sm:$0xf]
  %v104 = vld [vmem:[%s1 + $0x104] sm:$0xf]
  %v105 = vld [vmem:[%s1 + $0x108] sm:$0xf]
  %v106 = vld [vmem:[%s1 + $0x10c] sm:$0xf]
  %v107 = vld [vmem:[%s1 + $0x110] sm:$0xf]
  %v108 = vld [vmem:[%s1 + $0x114] sm:$0xf]
  %v109 = vld [vmem:[%s1 + $0x118] sm:$0xf]
  %v110 = vld [vmem:[%s1 + $0x11c] sm:$0xf]
  %v111 = vld [vmem:[%s2] sm:$0x1]
  %v113 = vlaneseq
  %v114 = vshrl.u32 %v113, 7
  %v115 = vsub.s32 0, %v114
  %v116 = vrot.slane %v111, %v115
  %v142 = vunpack.c.l.b16 %v15
  %v143 = vunpack.c.h.b16 %v15
  %v144 = vunpack.c.l.b16 %v16
  %v145 = vunpack.c.h.b16 %v16
  %v146 = vunpack.c.l.b16 %v17
  %v147 = vunpack.c.l.b16 %v18
  %v148 = vunpack.c.h.b16 %v18
  %v149 = vunpack.c.l.b16 %v19
  %v150 = vunpack.c.h.b16 %v19
  %v151 = vunpack.c.l.b16 %v20
  %v152 = vunpack.c.l.b16 %v21
  %v153 = vunpack.c.h.b16 %v21
  %v154 = vunpack.c.l.b16 %v22
  %v155 = vunpack.c.h.b16 %v22
  %v156 = vunpack.c.l.b16 %v23
  %v157 = vunpack.c.l.b16 %v24
  %v158 = vunpack.c.h.b16 %v24
  %v159 = vunpack.c.l.b16 %v25
  %v160 = vunpack.c.h.b16 %v25
  %v161 = vunpack.c.l.b16 %v26
  %v162 = vunpack.c.l.b16 %v27
  %v163 = vunpack.c.h.b16 %v27
  %v164 = vunpack.c.l.b16 %v28
  %v165 = vunpack.c.h.b16 %v28
  %v166 = vunpack.c.l.b16 %v29
  %v167 = vunpack.c.l.b16 %v30
  %v168 = vunpack.c.h.b16 %v30
  %v169 = vunpack.c.l.b16 %v31
  %v170 = vunpack.c.h.b16 %v31
  %v171 = vunpack.c.l.b16 %v32
  %v172 = vunpack.c.l.b16 %v33
  %v173 = vunpack.c.h.b16 %v33
  %v174 = vunpack.c.l.b16 %v34
  %v175 = vunpack.c.h.b16 %v34
  %v176 = vunpack.c.l.b16 %v35
  %v177 = vunpack.c.l.b16 %v36
  %v178 = vunpack.c.h.b16 %v36
  %v179 = vunpack.c.l.b16 %v37
  %v180 = vunpack.c.h.b16 %v37
  %v181 = vunpack.c.l.b16 %v38
  %v182 = vpack.c.b16 %v147, %v142
  %v183 = vpack.c.b16 %v148, %v143
  %v184 = vpack.c.b16 %v149, %v144
  %v185 = vpack.c.b16 %v150, %v145
  %v186 = vpack.c.b16 %v151, %v146
  %v187 = vpack.c.b16 %v157, %v152
  %v188 = vpack.c.b16 %v158, %v153
  %v189 = vpack.c.b16 %v159, %v154
  %v190 = vpack.c.b16 %v160, %v155
  %v191 = vpack.c.b16 %v161, %v156
  %v192 = vpack.c.b16 %v167, %v162
  %v193 = vpack.c.b16 %v168, %v163
  %v194 = vpack.c.b16 %v169, %v164
  %v195 = vpack.c.b16 %v170, %v165
  %v196 = vpack.c.b16 %v171, %v166
  %v197 = vpack.c.b16 %v177, %v172
  %v198 = vpack.c.b16 %v178, %v173
  %v199 = vpack.c.b16 %v179, %v174
  %v200 = vpack.c.b16 %v180, %v175
  %v201 = vpack.c.b16 %v181, %v176
  %v290 = vunpack.c.l.b16 %v39
  %v291 = vunpack.c.l.b16 %v40
  %v292 = vunpack.c.l.b16 %v41
  %v293 = vunpack.c.l.b16 %v42
  %v294 = vunpack.c.l.b16 %v43
  %v295 = vunpack.c.l.b16 %v44
  %v296 = vunpack.c.l.b16 %v45
  %v297 = vunpack.c.l.b16 %v46
  %v298 = vunpack.c.l.b16 %v47
  %v299 = vunpack.c.l.b16 %v48
  %v300 = vunpack.c.l.b16 %v49
  %v301 = vunpack.c.l.b16 %v50
  %v302 = vunpack.c.l.b16 %v51
  %v303 = vunpack.c.l.b16 %v52
  %v304 = vunpack.c.l.b16 %v53
  %v305 = vunpack.c.l.b16 %v54
  %v306 = vunpack.c.l.b16 %v55
  %v307 = vunpack.c.l.b16 %v56
  %v308 = vunpack.c.l.b16 %v57
  %v309 = vunpack.c.l.b16 %v58
  %v310 = vunpack.c.l.b16 %v59
  %v311 = vunpack.c.l.b16 %v60
  %v312 = vunpack.c.l.b16 %v61
  %v313 = vunpack.c.l.b16 %v62
  %v314 = vunpack.c.l.b16 %v63
  %v315 = vunpack.c.l.b16 %v64
  %v316 = vunpack.c.l.b16 %v65
  %v317 = vunpack.c.l.b16 %v66
  %v318 = vunpack.c.l.b16 %v67
  %v319 = vunpack.c.l.b16 %v68
  %v320 = vunpack.c.l.b16 %v69
  %v321 = vunpack.c.l.b16 %v70
  %v322 = vunpack.c.l.b16 %v71
  %v323 = vunpack.c.l.b16 %v72
  %v324 = vunpack.c.l.b16 %v73
  %v325 = vunpack.c.l.b16 %v74
  %v326 = vunpack.c.l.b16 %v75
  %v327 = vunpack.c.l.b16 %v76
  %v328 = vunpack.c.l.b16 %v77
  %v329 = vunpack.c.l.b16 %v78
  %v330 = vunpack.c.l.b16 %v79
  %v331 = vunpack.c.l.b16 %v80
  %v332 = vunpack.c.l.b16 %v81
  %v333 = vunpack.c.l.b16 %v82
  %v334 = vunpack.c.l.b16 %v83
  %v335 = vunpack.c.l.b16 %v84
  %v336 = vunpack.c.l.b16 %v85
  %v337 = vunpack.c.l.b16 %v86
  %v338 = vunpack.c.l.b16 %v87
  %v339 = vunpack.c.l.b16 %v88
  %v340 = vunpack.c.l.b16 %v89
  %v341 = vunpack.c.l.b16 %v90
  %v342 = vunpack.c.l.b16 %v91
  %v343 = vunpack.c.l.b16 %v92
  %v344 = vunpack.c.l.b16 %v93
  %v345 = vunpack.c.l.b16 %v94
  %v346 = vunpack.c.l.b16 %v95
  %v347 = vunpack.c.l.b16 %v96
  %v348 = vunpack.c.l.b16 %v97
  %v349 = vunpack.c.l.b16 %v98
  %v350 = vunpack.c.l.b16 %v99
  %v351 = vunpack.c.l.b16 %v100
  %v352 = vunpack.c.l.b16 %v101
  %v353 = vunpack.c.l.b16 %v102
  %v354 = vunpack.c.l.b16 %v103
  %v355 = vunpack.c.l.b16 %v104
  %v356 = vunpack.c.l.b16 %v105
  %v357 = vunpack.c.l.b16 %v106
  %v358 = vunpack.c.l.b16 %v107
  %v359 = vunpack.c.l.b16 %v108
  %v360 = vunpack.c.l.b16 %v109
  %v361 = vunpack.c.l.b16 %v110
  %v362 = vpack.c.b16 %v291, %v290
  %v363 = vpack.c.b16 %v293, %v292
  %v364 = vpack.c.b16 %v295, %v294
  %v365 = vpack.c.b16 %v297, %v296
  %v366 = vpack.c.b16 %v299, %v298
  %v367 = vpack.c.b16 %v301, %v300
  %v368 = vpack.c.b16 %v303, %v302
  %v369 = vpack.c.b16 %v305, %v304
  %v370 = vpack.c.b16 %v307, %v306
  %v371 = vpack.c.b16 %v309, %v308
  %v372 = vpack.c.b16 %v311, %v310
  %v373 = vpack.c.b16 %v313, %v312
  %v374 = vpack.c.b16 %v315, %v314
  %v375 = vpack.c.b16 %v317, %v316
  %v376 = vpack.c.b16 %v319, %v318
  %v377 = vpack.c.b16 %v321, %v320
  %v378 = vpack.c.b16 %v323, %v322
  %v379 = vpack.c.b16 %v325, %v324
  %v380 = vpack.c.b16 %v327, %v326
  %v381 = vpack.c.b16 %v329, %v328
  %v382 = vpack.c.b16 %v331, %v330
  %v383 = vpack.c.b16 %v333, %v332
  %v384 = vpack.c.b16 %v335, %v334
  %v385 = vpack.c.b16 %v337, %v336
  %v386 = vpack.c.b16 %v339, %v338
  %v387 = vpack.c.b16 %v341, %v340
  %v388 = vpack.c.b16 %v343, %v342
  %v389 = vpack.c.b16 %v345, %v344
  %v390 = vpack.c.b16 %v347, %v346
  %v391 = vpack.c.b16 %v349, %v348
  %v392 = vpack.c.b16 %v351, %v350
  %v393 = vpack.c.b16 %v353, %v352
  %v394 = vpack.c.b16 %v355, %v354
  %v395 = vpack.c.b16 %v357, %v356
  %v396 = vpack.c.b16 %v359, %v358
  %v397 = vpack.c.b16 %v361, %v360
  %vm434 = vcmask 523264
  %v436 = vsel %vm434, %v186, 0
  %v439 = vsel %vm434, %v191, 0
  %v442 = vsel %vm434, %v196, 0
  %v445 = vsel %vm434, %v201, 0
  %447 = vmatprep.subr.bf16.mxu0 0
  %448 = vmatpush1.bf16.msra.mxu0 %v362
  %449 = vmatprep.subr.bf16.mxu0 0
  %450 = vmatpush1.bf16.msra.mxu0 %v363
  %451 = vmatprep.subr.bf16.mxu0 0
  %452 = vmatpush1.bf16.msra.mxu0 %v364
  %453 = vmatprep.subr.bf16.mxu0 0
  %454 = vmatpush1.bf16.msra.mxu0 %v365
  %455 = vmatprep.subr.bf16.mxu0 0
  %456 = vmatpush1.bf16.msra.mxu0 %v366
  %457 = vmatprep.subr.bf16.mxu0 0
  %458 = vmatpush1.bf16.msra.mxu0 %v367
  %459 = vmatprep.subr.bf16.mxu0 0
  %460 = vmatpush1.bf16.msra.mxu0 %v368
  %461 = vmatprep.subr.bf16.mxu0 0
  %462 = vmatpush1.bf16.msra.mxu0 %v369
  %463 = vmatprep.subr.bf16.mxu0 0
  %464 = vmatpush1.bf16.msra.mxu0 %v370
  %465 = vmatprep.subr.bf16.mxu0 0
  %466 = vmatpush1.bf16.msra.mxu0 %v371
  %467 = vmatprep.subr.bf16.mxu0 0
  %468 = vmatpush1.bf16.msra.mxu0 %v372
  %469 = vmatprep.subr.bf16.mxu0 0
  %470 = vmatpush1.bf16.msra.mxu0 %v373
  %471 = vmatprep.subr.bf16.mxu0 0
  %472 = vmatpush1.bf16.msra.mxu0 %v374
  %473 = vmatprep.subr.bf16.mxu0 0
  %474 = vmatpush1.bf16.msra.mxu0 %v375
  %475 = vmatprep.subr.bf16.mxu0 0
  %476 = vmatpush1.bf16.msra.mxu0 %v376
  %477 = vmatprep.subr.bf16.mxu0 0
  %478 = vmatpush1.bf16.msra.mxu0 %v377
  %479 = vmatprep.mubr.bf16.mxu0 %v183
  %480 = vmatmul.mubr.bf16.gmra.mrb[0].mxu0 %v182
  %v481 = vpop.f32.mrb[0].mxu0
  %v482 = vadd.f32 %v116, %v481
  %v483 = vpop.f32.mrb[0].mxu0
  %v484 = vpop.f32.mrb[0].mxu0
  %v485 = vadd.f32 %v116, %v484
  %v486 = vpop.f32.mrb[0].mxu0
  %487 = vmatprep.mubr.bf16.mxu0 %v188
  %488 = vmatmul.mubr.bf16.gmra.mrb[0].mxu0 %v187
  %v489 = vpop.f32.mrb[0].mxu0
  %v490 = vadd.f32 %v116, %v489
  %v491 = vpop.f32.mrb[0].mxu0
  %v492 = vpop.f32.mrb[0].mxu0
  %v493 = vadd.f32 %v116, %v492
  %v494 = vpop.f32.mrb[0].mxu0
  %495 = vmatprep.mubr.bf16.mxu0 %v193
  %496 = vmatmul.mubr.bf16.gmra.mrb[0].mxu0 %v192
  %v497 = vpop.f32.mrb[0].mxu0
  %v498 = vadd.f32 %v116, %v497
  %v499 = vpop.f32.mrb[0].mxu0
  %v500 = vpop.f32.mrb[0].mxu0
  %v501 = vadd.f32 %v116, %v500
  %v502 = vpop.f32.mrb[0].mxu0
  %503 = vmatprep.mubr.bf16.mxu0 %v198
  %504 = vmatmul.mubr.bf16.gmra.mrb[0].mxu0 %v197
  %v505 = vpop.f32.mrb[0].mxu0
  %v506 = vadd.f32 %v116, %v505
  %v507 = vpop.f32.mrb[0].mxu0
  %v508 = vpop.f32.mrb[0].mxu0
  %v509 = vadd.f32 %v116, %v508
  %v510 = vpop.f32.mrb[0].mxu0
  %511 = vdwg.mxu0
  %512 = vmatprep.subr.bf16.mxu0 0
  %513 = vmatpush1.bf16.msra.mxu0 %v378
  %514 = vmatprep.subr.bf16.mxu0 0
  %515 = vmatpush1.bf16.msra.mxu0 %v379
  %516 = vmatprep.subr.bf16.mxu0 0
  %517 = vmatpush1.bf16.msra.mxu0 %v380
  %518 = vmatprep.subr.bf16.mxu0 0
  %519 = vmatpush1.bf16.msra.mxu0 %v381
  %520 = vmatprep.subr.bf16.mxu0 0
  %521 = vmatpush1.bf16.msra.mxu0 %v382
  %522 = vmatprep.subr.bf16.mxu0 0
  %523 = vmatpush1.bf16.msra.mxu0 %v383
  %524 = vmatprep.subr.bf16.mxu0 0
  %525 = vmatpush1.bf16.msra.mxu0 %v384
  %526 = vmatprep.subr.bf16.mxu0 0
  %527 = vmatpush1.bf16.msra.mxu0 %v385
  %528 = vmatprep.subr.bf16.mxu0 0
  %529 = vmatpush1.bf16.msra.mxu0 %v386
  %530 = vmatprep.subr.bf16.mxu0 0
  %531 = vmatpush1.bf16.msra.mxu0 %v387
  %532 = vmatprep.subr.bf16.mxu0 0
  %533 = vmatpush1.bf16.msra.mxu0 %v388
  %534 = vmatprep.subr.bf16.mxu0 0
  %535 = vmatpush1.bf16.msra.mxu0 %v389
  %536 = vmatprep.subr.bf16.mxu0 0
  %537 = vmatpush1.bf16.msra.mxu0 %v390
  %538 = vmatprep.subr.bf16.mxu0 0
  %539 = vmatpush1.bf16.msra.mxu0 %v391
  %540 = vmatprep.subr.bf16.mxu0 0
  %541 = vmatpush1.bf16.msra.mxu0 %v392
  %542 = vmatprep.subr.bf16.mxu0 0
  %543 = vmatpush1.bf16.msra.mxu0 %v393
  %544 = vmatprep.mubr.bf16.mxu0 %v185
  %545 = vmatmul.mubr.bf16.gmra.mrb[0].mxu0 %v184
  %v546 = vpop.f32.mrb[0].mxu0
  %v547 = vadd.f32 %v482, %v546
  %v548 = vpop.f32.mrb[0].mxu0
  %v549 = vpop.f32.mrb[0].mxu0
  %v550 = vadd.f32 %v485, %v549
  %v551 = vpop.f32.mrb[0].mxu0
  %552 = vmatprep.mubr.bf16.mxu0 %v190
  %553 = vmatmul.mubr.bf16.gmra.mrb[0].mxu0 %v189
  %v554 = vpop.f32.mrb[0].mxu0
  %v555 = vadd.f32 %v490, %v554
  %v556 = vpop.f32.mrb[0].mxu0
  %v557 = vpop.f32.mrb[0].mxu0
  %v558 = vadd.f32 %v493, %v557
  %v559 = vpop.f32.mrb[0].mxu0
  %560 = vmatprep.mubr.bf16.mxu0 %v195
  %561 = vmatmul.mubr.bf16.gmra.mrb[0].mxu0 %v194
  %v562 = vpop.f32.mrb[0].mxu0
  %v563 = vadd.f32 %v498, %v562
  %v564 = vpop.f32.mrb[0].mxu0
  %v565 = vpop.f32.mrb[0].mxu0
  %v566 = vadd.f32 %v501, %v565
  %v567 = vpop.f32.mrb[0].mxu0
  %568 = vmatprep.mubr.bf16.mxu0 %v200
  %569 = vmatmul.mubr.bf16.gmra.mrb[0].mxu0 %v199
  %v570 = vpop.f32.mrb[0].mxu0
  %v571 = vadd.f32 %v506, %v570
  %v572 = vpop.f32.mrb[0].mxu0
  %v573 = vpop.f32.mrb[0].mxu0
  %v574 = vadd.f32 %v509, %v573
  %v575 = vpop.f32.mrb[0].mxu0
  %576 = vdwg.mxu0
  %577 = vmatprep.subr.bf16.mxu0 0
  %578 = vmatpush1.bf16.msra.mxu0 %v394
  %579 = vmatprep.subr.bf16.mxu0 0
  %580 = vmatpush1.bf16.msra.mxu0 %v395
  %581 = vmatprep.subr.bf16.mxu0 0
  %582 = vmatpush1.bf16.msra.mxu0 %v396
  %583 = vmatprep.subr.bf16.mxu0 0
  %584 = vmatpush1.bf16.msra.mxu0 %v397
  %585 = vmatprep.subr.bf16.mxu0 0
  %586 = vmatpush1.bf16.msra.mxu0 0
  %587 = vmatprep.subr.bf16.mxu0 0
  %588 = vmatpush1.bf16.msra.mxu0 0
  %589 = vmatprep.subr.bf16.mxu0 0
  %590 = vmatpush1.bf16.msra.mxu0 0
  %591 = vmatprep.subr.bf16.mxu0 0
  %592 = vmatpush1.bf16.msra.mxu0 0
  %593 = vmatprep.subr.bf16.mxu0 0
  %594 = vmatpush1.bf16.msra.mxu0 0
  %595 = vmatprep.subr.bf16.mxu0 0
  %596 = vmatpush1.bf16.msra.mxu0 0
  %597 = vmatprep.subr.bf16.mxu0 0
  %598 = vmatpush1.bf16.msra.mxu0 0
  %599 = vmatprep.subr.bf16.mxu0 0
  %600 = vmatpush1.bf16.msra.mxu0 0
  %601 = vmatprep.subr.bf16.mxu0 0
  %602 = vmatpush1.bf16.msra.mxu0 0
  %603 = vmatprep.subr.bf16.mxu0 0
  %604 = vmatpush1.bf16.msra.mxu0 0
  %605 = vmatprep.subr.bf16.mxu0 0
  %606 = vmatpush1.bf16.msra.mxu0 0
  %607 = vmatprep.subr.bf16.mxu0 0
  %608 = vmatpush1.bf16.msra.mxu0 0
  %609 = vmatprep.mubr.bf16.mxu0 0
  %610 = vmatmul.mubr.bf16.gmra.mrb[0].mxu0 %v436
  %v611 = vpop.f32.mrb[0].mxu0
  %v612 = vadd.f32 %v547, %v611
  %v613 = vpop.f32.mrb[0].mxu0
  %v614 = vpop.f32.mrb[0].mxu0
  %v615 = vadd.f32 %v550, %v614
  %v616 = vpop.f32.mrb[0].mxu0
  %617 = vmatprep.mubr.bf16.mxu0 0
  %618 = vmatmul.mubr.bf16.gmra.mrb[0].mxu0 %v439
  %v619 = vpop.f32.mrb[0].mxu0
  %v620 = vadd.f32 %v555, %v619
  %v621 = vpop.f32.mrb[0].mxu0
  %v622 = vpop.f32.mrb[0].mxu0
  %v623 = vadd.f32 %v558, %v622
  %v624 = vpop.f32.mrb[0].mxu0
  %625 = vmatprep.mubr.bf16.mxu0 0
  %626 = vmatmul.mubr.bf16.gmra.mrb[0].mxu0 %v442
  %v627 = vpop.f32.mrb[0].mxu0
  %v628 = vadd.f32 %v563, %v627
  %v629 = vpop.f32.mrb[0].mxu0
  %v630 = vpop.f32.mrb[0].mxu0
  %v631 = vadd.f32 %v566, %v630
  %v632 = vpop.f32.mrb[0].mxu0
  %633 = vmatprep.mubr.bf16.mxu0 0
  %634 = vmatmul.mubr.bf16.gmra.mrb[0].mxu0 %v445
  %v635 = vpop.f32.mrb[0].mxu0
  %v636 = vadd.f32 %v571, %v635
  %v637 = vpop.f32.mrb[0].mxu0
  %v638 = vpop.f32.mrb[0].mxu0
  %v639 = vadd.f32 %v574, %v638
  %v640 = vpop.f32.mrb[0].mxu0
  %641 = vdwg.mxu0
  %v642 = vmax.f32 %v612, 0.0
  %v643 = vmax.f32 %v615, 0.0
  %v644 = vmax.f32 %v620, 0.0
  %v645 = vmax.f32 %v623, 0.0
  %v646 = vmax.f32 %v628, 0.0
  %v647 = vmax.f32 %v631, 0.0
  %v648 = vmax.f32 %v636, 0.0
  %v649 = vmax.f32 %v639, 0.0
  %v650 = vpack.c.bf16 %v643, %v642
  %v651 = vpack.c.bf16 %v645, %v644
  %v652 = vpack.c.bf16 %v647, %v646
  %v653 = vpack.c.bf16 %v649, %v648
  %v658 = vunpack.c.l.b16 %v650
  %v659 = vunpack.c.h.b16 %v650
  %v660 = vunpack.c.l.b16 %v651
  %v661 = vunpack.c.h.b16 %v651
  %v662 = vunpack.c.l.b16 %v652
  %v663 = vunpack.c.h.b16 %v652
  %v664 = vunpack.c.l.b16 %v653
  %v665 = vunpack.c.h.b16 %v653
  %v666 = vpack.c.b16 %v658, %v658
  %v667 = vpack.c.b16 %v659, %v659
  %v668 = vpack.c.b16 %v660, %v660
  %v669 = vpack.c.b16 %v661, %v661
  %v670 = vpack.c.b16 %v662, %v662
  %v671 = vpack.c.b16 %v663, %v663
  %v672 = vpack.c.b16 %v664, %v664
  %v673 = vpack.c.b16 %v665, %v665
  %682 = vst [vmem:[%s3] sm:$0xf] %v666
  %683 = vst [vmem:[%s3 + $0x4] sm:$0xf] %v667
  %684 = vst [vmem:[%s3 + $0x8] sm:$0xf] %v668
  %685 = vst [vmem:[%s3 + $0xc] sm:$0xf] %v669
  %686 = vst [vmem:[%s3 + $0x10] sm:$0xf] %v670
  %687 = vst [vmem:[%s3 + $0x14] sm:$0xf] %v671
  %688 = vst [vmem:[%s3 + $0x18] sm:$0xf] %v672
  %689 = vst [vmem:[%s3 + $0x1c] sm:$0xf] %v673
  // Predicated region
  $region14: #{stem_forward.26} parent=0 // pred_check
    _
  $region15: #{stem_forward.26} parent=0 // pred_check_branch
    %691 = sbr.rel (0) target = $region17
  $region16: #{stem_forward.26} parent=0 // pred_region
    _
  $region17: #{stem_forward.26} parent=0 // pred_fallthru
    _
  // Predicated region
  $region18: #{stem_forward.26} parent=0 // pred_check
    _
  $region19: #{stem_forward.26} parent=0 // pred_check_branch
    %693 = sbr.rel (0) target = $region21
  $region20: #{stem_forward.26} parent=0 // pred_region
    _
  $region21: #{stem_forward.26} parent=0 // pred_fallthru
    _

// kernel: stem_forward.27
$region0: #{stem_forward.27}
  #allocation0 [shape = 'u32[]', space=smem, size = 0x4, offset = 0x4, fixed_abs, tag = 'smem constant byte address 0x4 - core index']
  #allocation1 [shape = 'u32[144,128]{1,0:T(1,128)}', space=vmem, size = 0x12000, scoped, tag = 'internal scratch']
  %s0 = inlined_call_operand.vmem [shape: bf16[64,864], index: 0, kind: input, shape index: {}]
  %s1 = inlined_call_operand.vmem [shape: bf16[864,128], index: 1, kind: input, shape index: {}]
  %s2 = inlined_call_operand.vmem [shape: f32[1,128], index: 2, kind: input, shape index: {}]
  %s3 = inlined_call_operand.vmem [shape: bf16[64,128], index: 3, kind: output, shape index: {}]
  %s4 = sld [smem:[#allocation0]]
  $region22: #{stem_forward.27} parent=0
    _
  %s6 = ssub.s32 1, %s4
  %s7 = scalar_select 0, %s6, %s4
  // Predicated region
  $region2: #{stem_forward.27} parent=0 // pred_check
    _
  $region3: #{stem_forward.27} parent=0 // pred_check_branch
    %9 = sbr.rel (0) target = $region5
  $region4: #{stem_forward.27} parent=0 // pred_region
    _
  $region5: #{stem_forward.27} parent=0 // pred_fallthru
    _
  // Predicated region
  $region6: #{stem_forward.27} parent=0 // pred_check
    _
  $region7: #{stem_forward.27} parent=0 // pred_check_branch
    %11 = sbr.rel (0) target = $region9
  $region8: #{stem_forward.27} parent=0 // pred_region
    _
  $region9: #{stem_forward.27} parent=0 // pred_fallthru
    _
  // Predicated region
  $region10: #{stem_forward.27} parent=0 // pred_check
    _
  $region11: #{stem_forward.27} parent=0 // pred_check_branch
    %13 = sbr.rel (0) target = $region13
  $region12: #{stem_forward.27} parent=0 // pred_region
    _
  $region13: #{stem_forward.27} parent=0 // pred_fallthru
    _
  %v15 = vld [vmem:[%s0] sm:$0xff]
  %v16 = vld [vmem:[%s0 + $0x8] sm:$0xff]
  %v17 = vld [vmem:[%s0 + $0x10] sm:$0xff]
  %v18 = vld [vmem:[%s0 + $0x18] sm:$0xf]
  %v19 = vld [vmem:[%s0 + $0x1c] sm:$0xff]
  %v20 = vld [vmem:[%s0 + $0x24] sm:$0xff]
  %v21 = vld [vmem:[%s0 + $0x2c] sm:$0xff]
  %v22 = vld [vmem:[%s0 + $0x34] sm:$0xf]
  %v23 = vld [vmem:[%s0 + $0x38] sm:$0xff]
  %v24 = vld [vmem:[%s0 + $0x40] sm:$0xff]
  %v25 = vld [vmem:[%s0 + $0x48] sm:$0xff]
  %v26 = vld [vmem:[%s0 + $0x50] sm:$0xf]
  %v27 = vld [vmem:[%s0 + $0x54] sm:$0xff]
  %v28 = vld [vmem:[%s0 + $0x5c] sm:$0xff]
  %v29 = vld [vmem:[%s0 + $0x64] sm:$0xff]
  %v30 = vld [vmem:[%s0 + $0x6c] sm:$0xf]
  %v31 = vld [vmem:[%s0 + $0x70] sm:$0xff]
  %v32 = vld [vmem:[%s0 + $0x78] sm:$0xff]
  %v33 = vld [vmem:[%s0 + $0x80] sm:$0xff]
  %v34 = vld [vmem:[%s0 + $0x88] sm:$0xf]
  %v35 = vld [vmem:[%s0 + $0x8c] sm:$0xff]
  %v36 = vld [vmem:[%s0 + $0x94] sm:$0xff]
  %v37 = vld [vmem:[%s0 + $0x9c] sm:$0xff]
  %v38 = vld [vmem:[%s0 + $0xa4] sm:$0xf]
  %v39 = vld [vmem:[%s0 + $0xa8] sm:$0xff]
  %v40 = vld [vmem:[%s0 + $0xb0] sm:$0xff]
  %v41 = vld [vmem:[%s0 + $0xb8] sm:$0xff]
  %v42 = vld [vmem:[%s0 + $0xc0] sm:$0xf]
  %v43 = vld [vmem:[%s0 + $0xc4] sm:$0xff]
  %v44 = vld [vmem:[%s0 + $0xcc] sm:$0xff]
  %v45 = vld [vmem:[%s0 + $0xd4] sm:$0xff]
  %v46 = vld [vmem:[%s0 + $0xdc] sm:$0xf]
  %v47 = vld [vmem:[%s1] sm:$0xf]
  %v48 = vld [vmem:[%s1 + $0x4] sm:$0xf]
  %v49 = vld [vmem:[%s1 + $0x8] sm:$0xf]
  %v50 = vld [vmem:[%s1 + $0xc] sm:$0xf]
  %v51 = vld [vmem:[%s1 + $0x10] sm:$0xf]
  %v52 = vld [vmem:[%s1 + $0x14] sm:$0xf]
  %v53 = vld [vmem:[%s1 + $0x18] sm:$0xf]
  %v54 = vld [vmem:[%s1 + $0x1c] sm:$0xf]
  %v55 = vld [vmem:[%s1 + $0x20] sm:$0xf]
  %v56 = vld [vmem:[%s1 + $0x24] sm:$0xf]
  %v57 = vld [vmem:[%s1 + $0x28] sm:$0xf]
  %v58 = vld [vmem:[%s1 + $0x2c] sm:$0xf]
  %v59 = vld [vmem:[%s1 + $0x30] sm:$0xf]
  %v60 = vld [vmem:[%s1 + $0x34] sm:$0xf]
  %v61 = vld [vmem:[%s1 + $0x38] sm:$0xf]
  %v62 = vld [vmem:[%s1 + $0x3c] sm:$0xf]
  %v63 = vld [vmem:[%s1 + $0x40] sm:$0xf]
  %v64 = vld [vmem:[%s1 + $0x44] sm:$0xf]
  %v65 = vld [vmem:[%s1 + $0x48] sm:$0xf]
  %v66 = vld [vmem:[%s1 + $0x4c] sm:$0xf]
  %v67 = vld [vmem:[%s1 + $0x50] sm:$0xf]
  %v68 = vld [vmem:[%s1 + $0x54] sm:$0xf]
  %v69 = vld [vmem:[%s1 + $0x58] sm:$0xf]
  %v70 = vld [vmem:[%s1 + $0x5c] sm:$0xf]
  %v71 = vld [vmem:[%s1 + $0x60] sm:$0xf]
  %v72 = vld [vmem:[%s1 + $0x64] sm:$0xf]
  %v73 = vld [vmem:[%s1 + $0x68] sm:$0xf]
  %v74 = vld [vmem:[%s1 + $0x6c] sm:$0xf]
  %v75 = vld [vmem:[%s1 + $0x70] sm:$0xf]
  %v76 = vld [vmem:[%s1 + $0x74] sm:$0xf]
  %v77 = vld [vmem:[%s1 + $0x78] sm:$0xf]
  %v78 = vld [vmem:[%s1 + $0x7c] sm:$0xf]
  %v79 = vld [vmem:[%s1 + $0x80] sm:$0xf]
  %v80 = vld [vmem:[%s1 + $0x84] sm:$0xf]
  %v81 = vld [vmem:[%s1 + $0x88] sm:$0xf]
  %v82 = vld [vmem:[%s1 + $0x8c] sm:$0xf]
  %v83 = vld [vmem:[%s1 + $0x90] sm:$0xf]
  %v84 = vld [vmem:[%s1 + $0x94] sm:$0xf]
  %v85 = vld [vmem:[%s1 + $0x98] sm:$0xf]
  %v86 = vld [vmem:[%s1 + $0x9c] sm:$0xf]
  %v87 = vld [vmem:[%s1 + $0xa0] sm:$0xf]
  %v88 = vld [vmem:[%s1 + $0xa4] sm:$0xf]
  %v89 = vld [vmem:[%s1 + $0xa8] sm:$0xf]
  %v90 = vld [vmem:[%s1 + $0xac] sm:$0xf]
  %v91 = vld [vmem:[%s1 + $0xb0] sm:$0xf]
  %v92 = vld [vmem:[%s1 + $0xb4] sm:$0xf]
  %v93 = vld [vmem:[%s1 + $0xb8] sm:$0xf]
  %v94 = vld [vmem:[%s1 + $0xbc] sm:$0xf]
  %v95 = vld [vmem:[%s1 + $0xc0] sm:$0xf]
  %v96 = vld [vmem:[%s1 + $0xc4] sm:$0xf]
  %v97 = vld [vmem:[%s1 + $0xc8] sm:$0xf]
  %v98 = vld [vmem:[%s1 + $0xcc] sm:$0xf]
  %v99 = vld [vmem:[%s1 + $0xd0] sm:$0xf]
  %v100 = vld [vmem:[%s1 + $0xd4] sm:$0xf]
  %v101 = vld [vmem:[%s1 + $0xd8] sm:$0xf]
  %v102 = vld [vmem:[%s1 + $0xdc] sm:$0xf]
  %v103 = vld [vmem:[%s1 + $0xe0] sm:$0xf]
  %v104 = vld [vmem:[%s1 + $0xe4] sm:$0xf]
  %v105 = vld [vmem:[%s1 + $0xe8] sm:$0xf]
  %v106 = vld [vmem:[%s1 + $0xec] sm:$0xf]
  %v107 = vld [vmem:[%s1 + $0xf0] sm:$0xf]
  %v108 = vld [vmem:[%s1 + $0xf4] sm:$0xf]
  %v109 = vld [vmem:[%s1 + $0xf8] sm:$0xf]
  %v110 = vld [vmem:[%s1 + $0xfc] sm:$0xf]
  %v111 = vld [vmem:[%s1 + $0x100] sm:$0xf]
  %v112 = vld [vmem:[%s1 + $0x104] sm:$0xf]
  %v113 = vld [vmem:[%s1 + $0x108] sm:$0xf]
  %v114 = vld [vmem:[%s1 + $0x10c] sm:$0xf]
  %v115 = vld [vmem:[%s1 + $0x110] sm:$0xf]
  %v116 = vld [vmem:[%s1 + $0x114] sm:$0xf]
  %v117 = vld [vmem:[%s1 + $0x118] sm:$0xf]
  %v118 = vld [vmem:[%s1 + $0x11c] sm:$0xf]
  %v119 = vld [vmem:[%s1 + $0x120] sm:$0xf]
  %v120 = vld [vmem:[%s1 + $0x124] sm:$0xf]
  %v121 = vld [vmem:[%s1 + $0x128] sm:$0xf]
  %v122 = vld [vmem:[%s1 + $0x12c] sm:$0xf]
  %v123 = vld [vmem:[%s1 + $0x130] sm:$0xf]
  %v124 = vld [vmem:[%s1 + $0x134] sm:$0xf]
  %v125 = vld [vmem:[%s1 + $0x138] sm:$0xf]
  %v126 = vld [vmem:[%s1 + $0x13c] sm:$0xf]
  %v127 = vld [vmem:[%s1 + $0x140] sm:$0xf]
  %v128 = vld [vmem:[%s1 + $0x144] sm:$0xf]
  %v129 = vld [vmem:[%s1 + $0x148] sm:$0xf]
  %v130 = vld [vmem:[%s1 + $0x14c] sm:$0xf]
  %v131 = vld [vmem:[%s1 + $0x150] sm:$0xf]
  %v132 = vld [vmem:[%s1 + $0x154] sm:$0xf]
  %v133 = vld [vmem:[%s1 + $0x158] sm:$0xf]
  %v134 = vld [vmem:[%s1 + $0x15c] sm:$0xf]
  %v135 = vld [vmem:[%s1 + $0x160] sm:$0xf]
  %v136 = vld [vmem:[%s1 + $0x164] sm:$0xf]
  %v137 = vld [vmem:[%s1 + $0x168] sm:$0xf]
  %v138 = vld [vmem:[%s1 + $0x16c] sm:$0xf]
  %v139 = vld [vmem:[%s1 + $0x170] sm:$0xf]
  %v140 = vld [vmem:[%s1 + $0x174] sm:$0xf]
  %v141 = vld [vmem:[%s1 + $0x178] sm:$0xf]
  %v142 = vld [vmem:[%s1 + $0x17c] sm:$0xf]
  %v143 = vld [vmem:[%s1 + $0x180] sm:$0xf]
  %v144 = vld [vmem:[%s1 + $0x184] sm:$0xf]
  %v145 = vld [vmem:[%s1 + $0x188] sm:$0xf]
  %v146 = vld [vmem:[%s1 + $0x18c] sm:$0xf]
  %v147 = vld [vmem:[%s1 + $0x190] sm:$0xf]
  %v148 = vld [vmem:[%s1 + $0x194] sm:$0xf]
  %v149 = vld [vmem:[%s1 + $0x198] sm:$0xf]
  %v150 = vld [vmem:[%s1 + $0x19c] sm:$0xf]
  %v151 = vld [vmem:[%s1 + $0x1a0] sm:$0xf]
  %v152 = vld [vmem:[%s1 + $0x1a4] sm:$0xf]
  %v153 = vld [vmem:[%s1 + $0x1a8] sm:$0xf]
  %v154 = vld [vmem:[%s1 + $0x1ac] sm:$0xf]
  %v155 = vld [vmem:[%s2] sm:$0x1]
  %v157 = vlaneseq
  %v158 = vshrl.u32 %v157, 7
  %v159 = vsub.s32 0, %v158
  %v160 = vrot.slane %v155, %v159
  %v194 = vunpack.c.l.b16 %v15
  %v195 = vunpack.c.h.b16 %v15
  %v196 = vunpack.c.l.b16 %v16
  %v197 = vunpack.c.h.b16 %v16
  %v198 = vunpack.c.l.b16 %v17
  %v199 = vunpack.c.h.b16 %v17
  %v200 = vunpack.c.l.b16 %v18
  %v201 = vunpack.c.l.b16 %v19
  %v202 = vunpack.c.h.b16 %v19
  %v203 = vunpack.c.l.b16 %v20
  %v204 = vunpack.c.h.b16 %v20
  %v205 = vunpack.c.l.b16 %v21
  %v206 = vunpack.c.h.b16 %v21
  %v207 = vunpack.c.l.b16 %v22
  %v208 = vunpack.c.l.b16 %v23
  %v209 = vunpack.c.h.b16 %v23
  %v210 = vunpack.c.l.b16 %v24
  %v211 = vunpack.c.h.b16 %v24
  %v212 = vunpack.c.l.b16 %v25
  %v213 = vunpack.c.h.b16 %v25
  %v214 = vunpack.c.l.b16 %v26
  %v215 = vunpack.c.l.b16 %v27
  %v216 = vunpack.c.h.b16 %v27
  %v217 = vunpack.c.l.b16 %v28
  %v218 = vunpack.c.h.b16 %v28
  %v219 = vunpack.c.l.b16 %v29
  %v220 = vunpack.c.h.b16 %v29
  %v221 = vunpack.c.l.b16 %v30
  %v222 = vunpack.c.l.b16 %v31
  %v223 = vunpack.c.h.b16 %v31
  %v224 = vunpack.c.l.b16 %v32
  %v225 = vunpack.c.h.b16 %v32
  %v226 = vunpack.c.l.b16 %v33
  %v227 = vunpack.c.h.b16 %v33
  %v228 = vunpack.c.l.b16 %v34
  %v229 = vunpack.c.l.b16 %v35
  %v230 = vunpack.c.h.b16 %v35
  %v231 = vunpack.c.l.b16 %v36
  %v232 = vunpack.c.h.b16 %v36
  %v233 = vunpack.c.l.b16 %v37
  %v234 = vunpack.c.h.b16 %v37
  %v235 = vunpack.c.l.b16 %v38
  %v236 = vunpack.c.l.b16 %v39
  %v237 = vunpack.c.h.b16 %v39
  %v238 = vunpack.c.l.b16 %v40
  %v239 = vunpack.c.h.b16 %v40
  %v240 = vunpack.c.l.b16 %v41
  %v241 = vunpack.c.h.b16 %v41
  %v242 = vunpack.c.l.b16 %v42
  %v243 = vunpack.c.l.b16 %v43
  %v244 = vunpack.c.h.b16 %v43
  %v245 = vunpack.c.l.b16 %v44
  %v246 = vunpack.c.h.b16 %v44
  %v247 = vunpack.c.l.b16 %v45
  %v248 = vunpack.c.h.b16 %v45
  %v249 = vunpack.c.l.b16 %v46
  %v250 = vpack.c.b16 %v201, %v194
  %v251 = vpack.c.b16 %v202, %v195
  %v252 = vpack.c.b16 %v203, %v196
  %v253 = vpack.c.b16 %v204, %v197
  %v254 = vpack.c.b16 %v205, %v198
  %v255 = vpack.c.b16 %v206, %v199
  %v256 = vpack.c.b16 %v207, %v200
  %v257 = vpack.c.b16 %v215, %v208
  %v258 = vpack.c.b16 %v216, %v209
  %v259 = vpack.c.b16 %v217, %v210
  %v260 = vpack.c.b16 %v218, %v211
  %v261 = vpack.c.b16 %v219, %v212
  %v262 = vpack.c.b16 %v220, %v213
  %v263 = vpack.c.b16 %v221, %v214
  %v264 = vpack.c.b16 %v229, %v222
  %v265 = vpack.c.b16 %v230, %v223
  %v266 = vpack.c.b16 %v231, %v224
  %v267 = vpack.c.b16 %v232, %v225
  %v268 = vpack.c.b16 %v233, %v226
  %v269 = vpack.c.b16 %v234, %v227
  %v270 = vpack.c.b16 %v235, %v228
  %v271 = vpack.c.b16 %v243, %v236
  %v272 = vpack.c.b16 %v244, %v237
  %v273 = vpack.c.b16 %v245, %v238
  %v274 = vpack.c.b16 %v246, %v239
  %v275 = vpack.c.b16 %v247, %v240
  %v276 = vpack.c.b16 %v248, %v241
  %v277 = vpack.c.b16 %v249, %v242
  %v410 = vunpack.c.l.b16 %v47
  %v411 = vunpack.c.l.b16 %v48
  %v412 = vunpack.c.l.b16 %v49
  %v413 = vunpack.c.l.b16 %v50
  %v414 = vunpack.c.l.b16 %v51
  %v415 = vunpack.c.l.b16 %v52
  %v416 = vunpack.c.l.b16 %v53
  %v417 = vunpack.c.l.b16 %v54
  %v418 = vunpack.c.l.b16 %v55
  %v419 = vunpack.c.l.b16 %v56
  %v420 = vunpack.c.l.b16 %v57
  %v421 = vunpack.c.l.b16 %v58
  %v422 = vunpack.c.l.b16 %v59
  %v423 = vunpack.c.l.b16 %v60
  %v424 = vunpack.c.l.b16 %v61
  %v425 = vunpack.c.l.b16 %v62
  %v426 = vunpack.c.l.b16 %v63
  %v427 = vunpack.c.l.b16 %v64
  %v428 = vunpack.c.l.b16 %v65
  %v429 = vunpack.c.l.b16 %v66
  %v430 = vunpack.c.l.b16 %v67
  %v431 = vunpack.c.l.b16 %v68
  %v432 = vunpack.c.l.b16 %v69
  %v433 = vunpack.c.l.b16 %v70
  %v434 = vunpack.c.l.b16 %v71
  %v435 = vunpack.c.l.b16 %v72
  %v436 = vunpack.c.l.b16 %v73
  %v437 = vunpack.c.l.b16 %v74
  %v438 = vunpack.c.l.b16 %v75
  %v439 = vunpack.c.l.b16 %v76
  %v440 = vunpack.c.l.b16 %v77
  %v441 = vunpack.c.l.b16 %v78
  %v442 = vunpack.c.l.b16 %v79
  %v443 = vunpack.c.l.b16 %v80
  %v444 = vunpack.c.l.b16 %v81
  %v445 = vunpack.c.l.b16 %v82
  %v446 = vunpack.c.l.b16 %v83
  %v447 = vunpack.c.l.b16 %v84
  %v448 = vunpack.c.l.b16 %v85
  %v449 = vunpack.c.l.b16 %v86
  %v450 = vunpack.c.l.b16 %v87
  %v451 = vunpack.c.l.b16 %v88
  %v452 = vunpack.c.l.b16 %v89
  %v453 = vunpack.c.l.b16 %v90
  %v454 = vunpack.c.l.b16 %v91
  %v455 = vunpack.c.l.b16 %v92
  %v456 = vunpack.c.l.b16 %v93
  %v457 = vunpack.c.l.b16 %v94
  %v458 = vunpack.c.l.b16 %v95
  %v459 = vunpack.c.l.b16 %v96
  %v460 = vunpack.c.l.b16 %v97
  %v461 = vunpack.c.l.b16 %v98
  %v462 = vunpack.c.l.b16 %v99
  %v463 = vunpack.c.l.b16 %v100
  %v464 = vunpack.c.l.b16 %v101
  %v465 = vunpack.c.l.b16 %v102
  %v466 = vunpack.c.l.b16 %v103
  %v467 = vunpack.c.l.b16 %v104
  %v468 = vunpack.c.l.b16 %v105
  %v469 = vunpack.c.l.b16 %v106
  %v470 = vunpack.c.l.b16 %v107
  %v471 = vunpack.c.l.b16 %v108
  %v472 = vunpack.c.l.b16 %v109
  %v473 = vunpack.c.l.b16 %v110
  %v474 = vunpack.c.l.b16 %v111
  %v475 = vunpack.c.l.b16 %v112
  %v476 = vunpack.c.l.b16 %v113
  %v477 = vunpack.c.l.b16 %v114
  %v478 = vunpack.c.l.b16 %v115
  %v479 = vunpack.c.l.b16 %v116
  %v480 = vunpack.c.l.b16 %v117
  %v481 = vunpack.c.l.b16 %v118
  %v482 = vunpack.c.l.b16 %v119
  %v483 = vunpack.c.l.b16 %v120
  %v484 = vunpack.c.l.b16 %v121
  %v485 = vunpack.c.l.b16 %v122
  %v486 = vunpack.c.l.b16 %v123
  %v487 = vunpack.c.l.b16 %v124
  %v488 = vunpack.c.l.b16 %v125
  %v489 = vunpack.c.l.b16 %v126
  %v490 = vunpack.c.l.b16 %v127
  %v491 = vunpack.c.l.b16 %v128
  %v492 = vunpack.c.l.b16 %v129
  %v493 = vunpack.c.l.b16 %v130
  %v494 = vunpack.c.l.b16 %v131
  %v495 = vunpack.c.l.b16 %v132
  %v496 = vunpack.c.l.b16 %v133
  %v497 = vunpack.c.l.b16 %v134
  %v498 = vunpack.c.l.b16 %v135
  %v499 = vunpack.c.l.b16 %v136
  %v500 = vunpack.c.l.b16 %v137
  %v501 = vunpack.c.l.b16 %v138
  %v502 = vunpack.c.l.b16 %v139
  %v503 = vunpack.c.l.b16 %v140
  %v504 = vunpack.c.l.b16 %v141
  %v505 = vunpack.c.l.b16 %v142
  %v506 = vunpack.c.l.b16 %v143
  %v507 = vunpack.c.l.b16 %v144
  %v508 = vunpack.c.l.b16 %v145
  %v509 = vunpack.c.l.b16 %v146
  %v510 = vunpack.c.l.b16 %v147
  %v511 = vunpack.c.l.b16 %v148
  %v512 = vunpack.c.l.b16 %v149
  %v513 = vunpack.c.l.b16 %v150
  %v514 = vunpack.c.l.b16 %v151
  %v515 = vunpack.c.l.b16 %v152
  %v516 = vunpack.c.l.b16 %v153
  %v517 = vunpack.c.l.b16 %v154
  %v518 = vpack.c.b16 %v411, %v410
  %v519 = vpack.c.b16 %v413, %v412
  %v520 = vpack.c.b16 %v415, %v414
  %v521 = vpack.c.b16 %v417, %v416
  %v522 = vpack.c.b16 %v419, %v418
  %v523 = vpack.c.b16 %v421, %v420
  %v524 = vpack.c.b16 %v423, %v422
  %v525 = vpack.c.b16 %v425, %v424
  %v526 = vpack.c.b16 %v427, %v426
  %v527 = vpack.c.b16 %v429, %v428
  %v528 = vpack.c.b16 %v431, %v430
  %v529 = vpack.c.b16 %v433, %v432
  %v530 = vpack.c.b16 %v435, %v434
  %v531 = vpack.c.b16 %v437, %v436
  %v532 = vpack.c.b16 %v439, %v438
  %v533 = vpack.c.b16 %v441, %v440
  %v534 = vpack.c.b16 %v443, %v442
  %v535 = vpack.c.b16 %v445, %v444
  %v536 = vpack.c.b16 %v447, %v446
  %v537 = vpack.c.b16 %v449, %v448
  %v538 = vpack.c.b16 %v451, %v450
  %v539 = vpack.c.b16 %v453, %v452
  %v540 = vpack.c.b16 %v455, %v454
  %v541 = vpack.c.b16 %v457, %v456
  %v542 = vpack.c.b16 %v459, %v458
  %v543 = vpack.c.b16 %v461, %v460
  %v544 = vpack.c.b16 %v463, %v462
  %v545 = vpack.c.b16 %v465, %v464
  %v546 = vpack.c.b16 %v467, %v466
  %v547 = vpack.c.b16 %v469, %v468
  %v548 = vpack.c.b16 %v471, %v470
  %v549 = vpack.c.b16 %v473, %v472
  %v550 = vpack.c.b16 %v475, %v474
  %v551 = vpack.c.b16 %v477, %v476
  %v552 = vpack.c.b16 %v479, %v478
  %v553 = vpack.c.b16 %v481, %v480
  %v554 = vpack.c.b16 %v483, %v482
  %v555 = vpack.c.b16 %v485, %v484
  %v556 = vpack.c.b16 %v487, %v486
  %v557 = vpack.c.b16 %v489, %v488
  %v558 = vpack.c.b16 %v491, %v490
  %v559 = vpack.c.b16 %v493, %v492
  %v560 = vpack.c.b16 %v495, %v494
  %v561 = vpack.c.b16 %v497, %v496
  %v562 = vpack.c.b16 %v499, %v498
  %v563 = vpack.c.b16 %v501, %v500
  %v564 = vpack.c.b16 %v503, %v502
  %v565 = vpack.c.b16 %v505, %v504
  %v566 = vpack.c.b16 %v507, %v506
  %v567 = vpack.c.b16 %v509, %v508
  %v568 = vpack.c.b16 %v511, %v510
  %v569 = vpack.c.b16 %v513, %v512
  %v570 = vpack.c.b16 %v515, %v514
  %v571 = vpack.c.b16 %v517, %v516
  %vm626 = vcmask 785408
  %v628 = vsel %vm626, %v256, 0
  %v631 = vsel %vm626, %v263, 0
  %v634 = vsel %vm626, %v270, 0
  %v637 = vsel %vm626, %v277, 0
  %639 = vmatprep.subr.bf16.mxu0 0
  %640 = vmatpush1.bf16.msra.mxu0 %v518
  %641 = vmatprep.subr.bf16.mxu0 0
  %642 = vmatpush1.bf16.msra.mxu0 %v519
  %643 = vmatprep.subr.bf16.mxu0 0
  %644 = vmatpush1.bf16.msra.mxu0 %v520
  %645 = vmatprep.subr.bf16.mxu0 0
  %646 = vmatpush1.bf16.msra.mxu0 %v521
  %647 = vmatprep.subr.bf16.mxu0 0
  %648 = vmatpush1.bf16.msra.mxu0 %v522
  %649 = vmatprep.subr.bf16.mxu0 0
  %650 = vmatpush1.bf16.msra.mxu0 %v523
  %651 = vmatprep.subr.bf16.mxu0 0
  %652 = vmatpush1.bf16.msra.mxu0 %v524
  %653 = vmatprep.subr.bf16.mxu0 0
  %654 = vmatpush1.bf16.msra.mxu0 %v525
  %655 = vmatprep.subr.bf16.mxu0 0
  %656 = vmatpush1.bf16.msra.mxu0 %v526
  %657 = vmatprep.subr.bf16.mxu0 0
  %658 = vmatpush1.bf16.msra.mxu0 %v527
  %659 = vmatprep.subr.bf16.mxu0 0
  %660 = vmatpush1.bf16.msra.mxu0 %v528
  %661 = vmatprep.subr.bf16.mxu0 0
  %662 = vmatpush1.bf16.msra.mxu0 %v529
  %663 = vmatprep.subr.bf16.mxu0 0
  %664 = vmatpush1.bf16.msra.mxu0 %v530
  %665 = vmatprep.subr.bf16.mxu0 0
  %666 = vmatpush1.bf16.msra.mxu0 %v531
  %667 = vmatprep.subr.bf16.mxu0 0
  %668 = vmatpush1.bf16.msra.mxu0 %v532
  %669 = vmatprep.subr.bf16.mxu0 0
  %670 = vmatpush1.bf16.msra.mxu0 %v533
  %671 = vmatprep.mubr.bf16.mxu0 %v251
  %672 = vmatmul.mubr.bf16.gmra.mrb[0].mxu0 %v250
  %v673 = vpop.f32.mrb[0].mxu0
  %v674 = vadd.f32 %v160, %v673
  %v675 = vpop.f32.mrb[0].mxu0
  %v676 = vpop.f32.mrb[0].mxu0
  %v677 = vadd.f32 %v160, %v676
  %v678 = vpop.f32.mrb[0].mxu0
  %679 = vmatprep.mubr.bf16.mxu0 %v258
  %680 = vmatmul.mubr.bf16.gmra.mrb[0].mxu0 %v257
  %v681 = vpop.f32.mrb[0].mxu0
  %v682 = vadd.f32 %v160, %v681
  %v683 = vpop.f32.mrb[0].mxu0
  %v684 = vpop.f32.mrb[0].mxu0
  %v685 = vadd.f32 %v160, %v684
  %v686 = vpop.f32.mrb[0].mxu0
  %687 = vmatprep.mubr.bf16.mxu0 %v265
  %688 = vmatmul.mubr.bf16.gmra.mrb[0].mxu0 %v264
  %v689 = vpop.f32.mrb[0].mxu0
  %v690 = vadd.f32 %v160, %v689
  %v691 = vpop.f32.mrb[0].mxu0
  %v692 = vpop.f32.mrb[0].mxu0
  %v693 = vadd.f32 %v160, %v692
  %v694 = vpop.f32.mrb[0].mxu0
  %695 = vmatprep.mubr.bf16.mxu0 %v272
  %696 = vmatmul.mubr.bf16.gmra.mrb[0].mxu0 %v271
  %v697 = vpop.f32.mrb[0].mxu0
  %v698 = vadd.f32 %v160, %v697
  %v699 = vpop.f32.mrb[0].mxu0
  %v700 = vpop.f32.mrb[0].mxu0
  %v701 = vadd.f32 %v160, %v700
  %v702 = vpop.f32.mrb[0].mxu0
  %703 = vdwg.mxu0
  %704 = vmatprep.subr.bf16.mxu0 0
  %705 = vmatpush1.bf16.msra.mxu0 %v534
  %706 = vmatprep.subr.bf16.mxu0 0
  %707 = vmatpush1.bf16.msra.mxu0 %v535
  %708 = vmatprep.subr.bf16.mxu0 0
  %709 = vmatpush1.bf16.msra.mxu0 %v536
  %710 = vmatprep.subr.bf16.mxu0 0
  %711 = vmatpush1.bf16.msra.mxu0 %v537
  %712 = vmatprep.subr.bf16.mxu0 0
  %713 = vmatpush1.bf16.msra.mxu0 %v538
  %714 = vmatprep.subr.bf16.mxu0 0
  %715 = vmatpush1.bf16.msra.mxu0 %v539
  %716 = vmatprep.subr.bf16.mxu0 0
  %717 = vmatpush1.bf16.msra.mxu0 %v540
  %718 = vmatprep.subr.bf16.mxu0 0
  %719 = vmatpush1.bf16.msra.mxu0 %v541
  %720 = vmatprep.subr.bf16.mxu0 0
  %721 = vmatpush1.bf16.msra.mxu0 %v542
  %722 = vmatprep.subr.bf16.mxu0 0
  %723 = vmatpush1.bf16.msra.mxu0 %v543
  %724 = vmatprep.subr.bf16.mxu0 0
  %725 = vmatpush1.bf16.msra.mxu0 %v544
  %726 = vmatprep.subr.bf16.mxu0 0
  %727 = vmatpush1.bf16.msra.mxu0 %v545
  %728 = vmatprep.subr.bf16.mxu0 0
  %729 = vmatpush1.bf16.msra.mxu0 %v546
  %730 = vmatprep.subr.bf16.mxu0 0
  %731 = vmatpush1.bf16.msra.mxu0 %v547
  %732 = vmatprep.subr.bf16.mxu0 0
  %733 = vmatpush1.bf16.msra.mxu0 %v548
  %734 = vmatprep.subr.bf16.mxu0 0
  %735 = vmatpush1.bf16.msra.mxu0 %v549
  %736 = vmatprep.mubr.bf16.mxu0 %v253
  %737 = vmatmul.mubr.bf16.gmra.mrb[0].mxu0 %v252
  %v738 = vpop.f32.mrb[0].mxu0
  %v739 = vadd.f32 %v674, %v738
  %v740 = vpop.f32.mrb[0].mxu0
  %v741 = vpop.f32.mrb[0].mxu0
  %v742 = vadd.f32 %v677, %v741
  %v743 = vpop.f32.mrb[0].mxu0
  %744 = vmatprep.mubr.bf16.mxu0 %v260
  %745 = vmatmul.mubr.bf16.gmra.mrb[0].mxu0 %v259
  %v746 = vpop.f32.mrb[0].mxu0
  %v747 = vadd.f32 %v682, %v746
  %v748 = vpop.f32.mrb[0].mxu0
  %v749 = vpop.f32.mrb[0].mxu0
  %v750 = vadd.f32 %v685, %v749
  %v751 = vpop.f32.mrb[0].mxu0
  %752 = vmatprep.mubr.bf16.mxu0 %v267
  %753 = vmatmul.mubr.bf16.gmra.mrb[0].mxu0 %v266
  %v754 = vpop.f32.mrb[0].mxu0
  %v755 = vadd.f32 %v690, %v754
  %v756 = vpop.f32.mrb[0].mxu0
  %v757 = vpop.f32.mrb[0].mxu0
  %v758 = vadd.f32 %v693, %v757
  %v759 = vpop.f32.mrb[0].mxu0
  %760 = vmatprep.mubr.bf16.mxu0 %v274
  %761 = vmatmul.mubr.bf16.gmra.mrb[0].mxu0 %v273
  %v762 = vpop.f32.mrb[0].mxu0
  %v763 = vadd.f32 %v698, %v762
  %v764 = vpop.f32.mrb[0].mxu0
  %v765 = vpop.f32.mrb[0].mxu0
  %v766 = vadd.f32 %v701, %v765
  %v767 = vpop.f32.mrb[0].mxu0
  %768 = vdwg.mxu0
  %769 = vmatprep.subr.bf16.mxu0 0
  %770 = vmatpush1.bf16.msra.mxu0 %v550
  %771 = vmatprep.subr.bf16.mxu0 0
  %772 = vmatpush1.bf16.msra.mxu0 %v551
  %773 = vmatprep.subr.bf16.mxu0 0
  %774 = vmatpush1.bf16.msra.mxu0 %v552
  %775 = vmatprep.subr.bf16.mxu0 0
  %776 = vmatpush1.bf16.msra.mxu0 %v553
  %777 = vmatprep.subr.bf16.mxu0 0
  %778 = vmatpush1.bf16.msra.mxu0 %v554
  %779 = vmatprep.subr.bf16.mxu0 0
  %780 = vmatpush1.bf16.msra.mxu0 %v555
  %781 = vmatprep.subr.bf16.mxu0 0
  %782 = vmatpush1.bf16.msra.mxu0 %v556
  %783 = vmatprep.subr.bf16.mxu0 0
  %784 = vmatpush1.bf16.msra.mxu0 %v557
  %785 = vmatprep.subr.bf16.mxu0 0
  %786 = vmatpush1.bf16.msra.mxu0 %v558
  %787 = vmatprep.subr.bf16.mxu0 0
  %788 = vmatpush1.bf16.msra.mxu0 %v559
  %789 = vmatprep.subr.bf16.mxu0 0
  %790 = vmatpush1.bf16.msra.mxu0 %v560
  %791 = vmatprep.subr.bf16.mxu0 0
  %792 = vmatpush1.bf16.msra.mxu0 %v561
  %793 = vmatprep.subr.bf16.mxu0 0
  %794 = vmatpush1.bf16.msra.mxu0 %v562
  %795 = vmatprep.subr.bf16.mxu0 0
  %796 = vmatpush1.bf16.msra.mxu0 %v563
  %797 = vmatprep.subr.bf16.mxu0 0
  %798 = vmatpush1.bf16.msra.mxu0 %v564
  %799 = vmatprep.subr.bf16.mxu0 0
  %800 = vmatpush1.bf16.msra.mxu0 %v565
  %801 = vmatprep.mubr.bf16.mxu0 %v255
  %802 = vmatmul.mubr.bf16.gmra.mrb[0].mxu0 %v254
  %v803 = vpop.f32.mrb[0].mxu0
  %v804 = vadd.f32 %v739, %v803
  %v805 = vpop.f32.mrb[0].mxu0
  %v806 = vpop.f32.mrb[0].mxu0
  %v807 = vadd.f32 %v742, %v806
  %v808 = vpop.f32.mrb[0].mxu0
  %809 = vmatprep.mubr.bf16.mxu0 %v262
  %810 = vmatmul.mubr.bf16.gmra.mrb[0].mxu0 %v261
  %v811 = vpop.f32.mrb[0].mxu0
  %v812 = vadd.f32 %v747, %v811
  %v813 = vpop.f32.mrb[0].mxu0
  %v814 = vpop.f32.mrb[0].mxu0
  %v815 = vadd.f32 %v750, %v814
  %v816 = vpop.f32.mrb[0].mxu0
  %817 = vmatprep.mubr.bf16.mxu0 %v269
  %818 = vmatmul.mubr.bf16.gmra.mrb[0].mxu0 %v268
  %v819 = vpop.f32.mrb[0].mxu0
  %v820 = vadd.f32 %v755, %v819
  %v821 = vpop.f32.mrb[0].mxu0
  %v822 = vpop.f32.mrb[0].mxu0
  %v823 = vadd.f32 %v758, %v822
  %v824 = vpop.f32.mrb[0].mxu0
  %825 = vmatprep.mubr.bf16.mxu0 %v276
  %826 = vmatmul.mubr.bf16.gmra.mrb[0].mxu0 %v275
  %v827 = vpop.f32.mrb[0].mxu0
  %v828 = vadd.f32 %v763, %v827
  %v829 = vpop.f32.mrb[0].mxu0
  %v830 = vpop.f32.mrb[0].mxu0
  %v831 = vadd.f32 %v766, %v830
  %v832 = vpop.f32.mrb[0].mxu0
  %833 = vdwg.mxu0
  %834 = vmatprep.subr.bf16.mxu0 0
  %835 = vmatpush1.bf16.msra.mxu0 %v566
  %836 = vmatprep.subr.bf16.mxu0 0
  %837 = vmatpush1.bf16.msra.mxu0 %v567
  %838 = vmatprep.subr.bf16.mxu0 0
  %839 = vmatpush1.bf16.msra.mxu0 %v568
  %840 = vmatprep.subr.bf16.mxu0 0
  %841 = vmatpush1.bf16.msra.mxu0 %v569
  %842 = vmatprep.subr.bf16.mxu0 0
  %843 = vmatpush1.bf16.msra.mxu0 %v570
  %844 = vmatprep.subr.bf16.mxu0 0
  %845 = vmatpush1.bf16.msra.mxu0 %v571
  %846 = vmatprep.subr.bf16.mxu0 0
  %847 = vmatpush1.bf16.msra.mxu0 0
  %848 = vmatprep.subr.bf16.mxu0 0
  %849 = vmatpush1.bf16.msra.mxu0 0
  %850 = vmatprep.subr.bf16.mxu0 0
  %851 = vmatpush1.bf16.msra.mxu0 0
  %852 = vmatprep.subr.bf16.mxu0 0
  %853 = vmatpush1.bf16.msra.mxu0 0
  %854 = vmatprep.subr.bf16.mxu0 0
  %855 = vmatpush1.bf16.msra.mxu0 0
  %856 = vmatprep.subr.bf16.mxu0 0
  %857 = vmatpush1.bf16.msra.mxu0 0
  %858 = vmatprep.subr.bf16.mxu0 0
  %859 = vmatpush1.bf16.msra.mxu0 0
  %860 = vmatprep.subr.bf16.mxu0 0
  %861 = vmatpush1.bf16.msra.mxu0 0
  %862 = vmatprep.subr.bf16.mxu0 0
  %863 = vmatpush1.bf16.msra.mxu0 0
  %864 = vmatprep.subr.bf16.mxu0 0
  %865 = vmatpush1.bf16.msra.mxu0 0
  %866 = vmatprep.mubr.bf16.mxu0 0
  %867 = vmatmul.mubr.bf16.gmra.mrb[0].mxu0 %v628
  %v868 = vpop.f32.mrb[0].mxu0
  %v869 = vadd.f32 %v804, %v868
  %v870 = vpop.f32.mrb[0].mxu0
  %v871 = vpop.f32.mrb[0].mxu0
  %v872 = vadd.f32 %v807, %v871
  %v873 = vpop.f32.mrb[0].mxu0
  %874 = vmatprep.mubr.bf16.mxu0 0
  %875 = vmatmul.mubr.bf16.gmra.mrb[0].mxu0 %v631
  %v876 = vpop.f32.mrb[0].mxu0
  %v877 = vadd.f32 %v812, %v876
  %v878 = vpop.f32.mrb[0].mxu0
  %v879 = vpop.f32.mrb[0].mxu0
  %v880 = vadd.f32 %v815, %v879
  %v881 = vpop.f32.mrb[0].mxu0
  %882 = vmatprep.mubr.bf16.mxu0 0
  %883 = vmatmul.mubr.bf16.gmra.mrb[0].mxu0 %v634
  %v884 = vpop.f32.mrb[0].mxu0
  %v885 = vadd.f32 %v820, %v884
  %v886 = vpop.f32.mrb[0].mxu0
  %v887 = vpop.f32.mrb[0].mxu0
  %v888 = vadd.f32 %v823, %v887
  %v889 = vpop.f32.mrb[0].mxu0
  %890 = vmatprep.mubr.bf16.mxu0 0
  %891 = vmatmul.mubr.bf16.gmra.mrb[0].mxu0 %v637
  %v892 = vpop.f32.mrb[0].mxu0
  %v893 = vadd.f32 %v828, %v892
  %v894 = vpop.f32.mrb[0].mxu0
  %v895 = vpop.f32.mrb[0].mxu0
  %v896 = vadd.f32 %v831, %v895
  %v897 = vpop.f32.mrb[0].mxu0
  %898 = vdwg.mxu0
  %v899 = vmax.f32 %v869, 0.0
  %v900 = vmax.f32 %v872, 0.0
  %v901 = vmax.f32 %v877, 0.0
  %v902 = vmax.f32 %v880, 0.0
  %v903 = vmax.f32 %v885, 0.0
  %v904 = vmax.f32 %v888, 0.0
  %v905 = vmax.f32 %v893, 0.0
  %v906 = vmax.f32 %v896, 0.0
  %v907 = vpack.c.bf16 %v900, %v899
  %v908 = vpack.c.bf16 %v902, %v901
  %v909 = vpack.c.bf16 %v904, %v903
  %v910 = vpack.c.bf16 %v906, %v905
  %v915 = vunpack.c.l.b16 %v907
  %v916 = vunpack.c.h.b16 %v907
  %v917 = vunpack.c.l.b16 %v908
  %v918 = vunpack.c.h.b16 %v908
  %v919 = vunpack.c.l.b16 %v909
  %v920 = vunpack.c.h.b16 %v909
  %v921 = vunpack.c.l.b16 %v910
  %v922 = vunpack.c.h.b16 %v910
  %v923 = vpack.c.b16 %v915, %v915
  %v924 = vpack.c.b16 %v916, %v916
  %v925 = vpack.c.b16 %v917, %v917
  %v926 = vpack.c.b16 %v918, %v918
  %v927 = vpack.c.b16 %v919, %v919
  %v928 = vpack.c.b16 %v920, %v920
  %v929 = vpack.c.b16 %v921, %v921
  %v930 = vpack.c.b16 %v922, %v922
  %939 = vst [vmem:[%s3] sm:$0xf] %v923
  %940 = vst [vmem:[%s3 + $0x4] sm:$0xf] %v924
  %941 = vst [vmem:[%s3 + $0x8] sm:$0xf] %v925
  %942 = vst [vmem:[%s3 + $0xc] sm:$0xf] %v926
  %943 = vst [vmem:[%s3 + $0x10] sm:$0xf] %v927
  %944 = vst [vmem:[%s3 + $0x14] sm:$0xf] %v928
  %945 = vst [vmem:[%s3 + $0x18] sm:$0xf] %v929
  %946 = vst [vmem:[%s3 + $0x1c] sm:$0xf] %v930
  // Predicated region
  $region14: #{stem_forward.27} parent=0 // pred_check
    _
  $region15: #{stem_forward.27} parent=0 // pred_check_branch
    %948 = sbr.rel (0) target = $region17
  $region16: #{stem_forward.27} parent=0 // pred_region
    _
  $region17: #{stem_forward.27} parent=0 // pred_fallthru
    _
  // Predicated region
  $region18: #{stem_forward.27} parent=0 // pred_check
    _
  $region19: #{stem_forward.27} parent=0 // pred_check_branch
    %950 = sbr.rel (0) target = $region21
  $region20: #{stem_forward.27} parent=0 // pred_region
    _
  $region21: #{stem_forward.27} parent=0 // pred_fallthru
    _

</llo_original>
